<compile_context>
chip_gen: v7x
topology: tpu7x:2x2x1
jax: 0.10.0
libtpu: 0.0.40
codegen_flags: <defaults>
</compile_context>

<pallas_src>
import math
from functools import partial

import jax
import jax.numpy as jnp
from jax import lax
from jax.experimental import pallas as pl
from jax.experimental.pallas import tpu as pltpu

MATMUL_DTYPE = jnp.bfloat16   # matmul operand dtype (f32 accumulation)
NEG_INF = -1e10
LN_EPS = 1e-5


# ----------------------------- fused decoder-layer kernel -----------------------------

def _decoder_layer_kernel(x_ref, enc_ref, m0_ref, m1_ref,
                          wqkv1_ref, wo1_ref, wq2_ref, wkv2_ref, wo2_ref,
                          w1_ref, b1_ref, w2_ref, b2_ref,
                          ln1g_ref, ln1b_ref, ln2g_ref, ln2b_ref,
                          ln3g_ref, ln3b_ref,
                          o_ref, *, num_heads, eps, neg, mm_dtype):
    x = x_ref[0]            # (sq, d)   f32
    enc = enc_ref[0]        # (sk, d)   f32
    sq, d = x.shape
    sk = enc.shape[0]
    dh = d // num_heads
    scale = 1.0 / math.sqrt(dh)

    def mm(a, b):
        # MXU matmul: bf16 inputs, f32 accumulate.
        return jnp.dot(a.astype(mm_dtype), b.astype(mm_dtype),
                       preferred_element_type=jnp.float32)

    def layer_norm(z, g_ref, b_ref):
        mean = jnp.mean(z, axis=-1, keepdims=True)
        dz = z - mean
        var = jnp.mean(dz * dz, axis=-1, keepdims=True)
        return dz * lax.rsqrt(var + eps) * g_ref[...] + b_ref[...]

    def attend(q, k, v, bias):
        # q: (Sq, d), k/v: (Sk, d), bias broadcastable to (Sq, Sk) additive.
        outs = []
        for h in range(num_heads):             # static unroll over heads
            qh = q[:, h * dh:(h + 1) * dh]
            kh = k[:, h * dh:(h + 1) * dh]
            vh = v[:, h * dh:(h + 1) * dh]
            s = mm(qh, kh.T) * scale + bias    # (Sq, Sk) f32
            mx = jnp.max(s, axis=-1, keepdims=True)
            p = jnp.exp(s - mx)
            denom = jnp.sum(p, axis=-1, keepdims=True)
            p = p * pl.reciprocal(denom, approx=True)
            outs.append(mm(p, vh))             # (Sq, Dh)
        return jnp.concatenate(outs, axis=-1)  # (Sq, d) -- torch chunk/cat order

    # --- additive masks, built in-kernel (no (H*bs, Q, K) bias tensor in HBM) ---
    pm0 = m0_ref[0]                            # (1, sq)  self-attn key pad mask
    pm1 = m1_ref[0]                            # (1, sk)  cross-attn key pad mask
    row = lax.broadcasted_iota(jnp.int32, (sq, sq), 0)
    col = lax.broadcasted_iota(jnp.int32, (sq, sq), 1)
    bias_self = (jnp.where(pm0 == 0.0, neg, 0.0)      # padding
                 + jnp.where(col > row, neg, 0.0))    # causal  -> (sq, sq)
    bias_cross = jnp.where(pm1 == 0.0, neg, 0.0)      # (1, sk)

    # ---- self attention (causal) + add & norm ----
    qkv = mm(x, wqkv1_ref[...])                # (sq, 3d) one wide matmul
    q1, k1, v1 = qkv[:, :d], qkv[:, d:2 * d], qkv[:, 2 * d:]
    a1 = attend(q1, k1, v1, bias_self)
    o1 = mm(a1, wo1_ref[...])
    out = layer_norm(x + o1, ln1g_ref, ln1b_ref)

    # ---- cross attention + add & norm ----
    q2 = mm(out, wq2_ref[...])                 # (sq, d)
    kv2 = mm(enc, wkv2_ref[...])               # (sk, 2d) one wide matmul
    k2, v2 = kv2[:, :d], kv2[:, d:]
    a2 = attend(q2, k2, v2, bias_cross)
    o2 = mm(a2, wo2_ref[...])
    out = layer_norm(out + o2, ln2g_ref, ln2b_ref)

    # ---- feed forward + add & norm ----
    h1 = jnp.maximum(mm(out, w1_ref[...]) + b1_ref[...], 0.0)
    ff = mm(h1, w2_ref[...]) + b2_ref[...]
    out = layer_norm(out + ff, ln3g_ref, ln3b_ref)

    o_ref[0] = out.astype(o_ref.dtype)


# ----------------------------- wrapper -----------------------------

def decoder_layer(x, enc, mask0, mask1, p, num_heads):
    bs, sq, d = x.shape
    _, sk, _ = enc.shape
    ff = p["w1"].shape[1]

    m0 = mask0.reshape(bs, 1, sq)
    m1 = mask1.reshape(bs, 1, sk)

    weights = [
        p["wqkv1"], p["wo1"], p["wq2"], p["wkv2"], p["wo2"],
        p["w1"], p["b1"].reshape(1, ff), p["w2"], p["b2"].reshape(1, d),
        p["ln1_g"].reshape(1, d), p["ln1_b"].reshape(1, d),
        p["ln2_g"].reshape(1, d), p["ln2_b"].reshape(1, d),
        p["ln3_g"].reshape(1, d), p["ln3_b"].reshape(1, d),
    ]

    def full_spec(shape):
        zeros = (0,) * len(shape)
        return pl.BlockSpec(shape, lambda b, _z=zeros: _z)

    w_specs = [full_spec(w.shape) for w in weights]

    return pl.pallas_call(
        partial(_decoder_layer_kernel, num_heads=num_heads, eps=LN_EPS,
                neg=NEG_INF, mm_dtype=MATMUL_DTYPE),
        out_shape=jax.ShapeDtypeStruct((bs, sq, d), jnp.float32),
        grid=(bs,),
        in_specs=[
            pl.BlockSpec((1, sq, d), lambda b: (b, 0, 0)),   # x
            pl.BlockSpec((1, sk, d), lambda b: (b, 0, 0)),   # enc
            pl.BlockSpec((1, 1, sq), lambda b: (b, 0, 0)),   # pad mask (self keys)
            pl.BlockSpec((1, 1, sk), lambda b: (b, 0, 0)),   # pad mask (cross keys)
        ] + w_specs,
        out_specs=pl.BlockSpec((1, sq, d), lambda b: (b, 0, 0)),
        compiler_params=pltpu.CompilerParams(
            dimension_semantics=("parallel",),       # megacore / 2-TC sharding
            vmem_limit_bytes=32 * 1024 * 1024),      # explicit budget (fits v7x 64 MiB)
    )(x, enc, m0, m1, *weights)


def transformer_decoder(src, enc, mask, params, num_heads):
    out = src
    for p in params:
        out = decoder_layer(out, enc, mask[0], mask[1], p, num_heads)
    return out


# ----------------------------- param init -----------------------------

def xavier_uniform(key, fan_in, fan_out):
    bound = math.sqrt(6.0 / (fan_in + fan_out))
    # stored as (in, out) so the kernel computes x @ W directly
    return jax.random.uniform(key, (fan_in, fan_out), jnp.float32, -bound, bound)


def init_layer_params(key, d_model, dim_ff):
    ks = jax.random.split(key, 10)
    wq1 = xavier_uniform(ks[0], d_model, d_model)
    wk1 = xavier_uniform(ks[1], d_model, d_model)
    wv1 = xavier_uniform(ks[2], d_model, d_model)
    wo1 = xavier_uniform(ks[3], d_model, d_model)
    wq2 = xavier_uniform(ks[4], d_model, d_model)
    wk2 = xavier_uniform(ks[5], d_model, d_model)
    wv2 = xavier_uniform(ks[6], d_model, d_model)
    wo2 = xavier_uniform(ks[7], d_model, d_model)
    w1 = xavier_uniform(ks[8], d_model, dim_ff)
    w2 = xavier_uniform(ks[9], dim_ff, d_model)
    mmdt = MATMUL_DTYPE
    return {
        # matmul weights stored in bf16 (halves weight DMA; f32 accumulation in-kernel)
        "wqkv1": jnp.concatenate([wq1, wk1, wv1], axis=1).astype(mmdt),  # (d, 3d)
        "wo1": wo1.astype(mmdt),
        "wq2": wq2.astype(mmdt),
        "wkv2": jnp.concatenate([wk2, wv2], axis=1).astype(mmdt),        # (d, 2d)
        "wo2": wo2.astype(mmdt),
        "w1": w1.astype(mmdt),
        "b1": jnp.zeros((dim_ff,), jnp.float32),
        "w2": w2.astype(mmdt),
        "b2": jnp.zeros((d_model,), jnp.float32),
        "ln1_g": jnp.ones((d_model,), jnp.float32),
        "ln1_b": jnp.zeros((d_model,), jnp.float32),
        "ln2_g": jnp.ones((d_model,), jnp.float32),
        "ln2_b": jnp.zeros((d_model,), jnp.float32),
        "ln3_g": jnp.ones((d_model,), jnp.float32),
        "ln3_b": jnp.zeros((d_model,), jnp.float32),
    }


# ----------------------------- main -----------------------------

if __name__ == "__main__":
    d_model = 32
    num_heads = 4
    dim_feedforward = 64
    num_layers = 2
    bs, seq_dec, seq_enc = 2, 8, 8

    key = jax.random.PRNGKey(0)
    k_src, k_enc, k_params = jax.random.split(key, 3)

    src = jax.random.normal(k_src, (bs, seq_dec, d_model), jnp.float32)
    enc = jax.random.normal(k_enc, (bs, seq_enc, d_model), jnp.float32)

    # padding masks: 0 => masked key (matches attn_mask.eq(0) in the PyTorch code)
    mask0 = jnp.ones((bs, seq_dec), jnp.float32).at[:, -1].set(0.0)
    mask1 = jnp.ones((bs, seq_enc), jnp.float32).at[:, -2:].set(0.0)
    mask = (mask0, mask1)

    layer_keys = jax.random.split(k_params, num_layers)
    params = [init_layer_params(layer_keys[i], d_model, dim_feedforward)
              for i in range(num_layers)]

    # TODO(synk): dropout (p=0.1 in the spec) is stochastic; treated as identity here.
    fwd = jax.jit(partial(transformer_decoder, num_heads=num_heads))
    out = fwd(src, enc, mask, params)
    out = jax.block_until_ready(out)

    assert out.shape == (bs, seq_dec, d_model)
    assert bool(jnp.all(jnp.isfinite(out)))
    print("KERNEL_OK")
</pallas_src>

<mosaic_0001>
module attributes {stable_mosaic.version = 11 : i64} {
  func.func @_decoder_layer_kernel(%arg0: i32, %arg1: memref<1x8x32xf32, #tpu.memory_space<vmem>>, %arg2: memref<1x8x32xf32, #tpu.memory_space<vmem>>, %arg3: memref<1x1x8xf32, #tpu.memory_space<vmem>>, %arg4: memref<1x1x8xf32, #tpu.memory_space<vmem>>, %arg5: memref<32x96xbf16, #tpu.memory_space<vmem>>, %arg6: memref<32x32xbf16, #tpu.memory_space<vmem>>, %arg7: memref<32x32xbf16, #tpu.memory_space<vmem>>, %arg8: memref<32x64xbf16, #tpu.memory_space<vmem>>, %arg9: memref<32x32xbf16, #tpu.memory_space<vmem>>, %arg10: memref<32x64xbf16, #tpu.memory_space<vmem>>, %arg11: memref<1x64xf32, #tpu.memory_space<vmem>>, %arg12: memref<64x32xbf16, #tpu.memory_space<vmem>>, %arg13: memref<1x32xf32, #tpu.memory_space<vmem>>, %arg14: memref<1x32xf32, #tpu.memory_space<vmem>>, %arg15: memref<1x32xf32, #tpu.memory_space<vmem>>, %arg16: memref<1x32xf32, #tpu.memory_space<vmem>>, %arg17: memref<1x32xf32, #tpu.memory_space<vmem>>, %arg18: memref<1x32xf32, #tpu.memory_space<vmem>>, %arg19: memref<1x32xf32, #tpu.memory_space<vmem>>, %arg20: memref<1x8x32xf32, #tpu.memory_space<vmem>>) attributes {dimension_semantics = [#tpu.dimension_semantics<parallel>], iteration_bounds = array<i64: 2>, scalar_prefetch = 0 : i64, scratch_operands = 0 : i64, tpu.core_type = #tpu.core_type<tc>, window_params = [{transform_indices = @transform_0, window_bounds = array<i64: 1, 8, 32>}, {transform_indices = @transform_1, window_bounds = array<i64: 1, 8, 32>}, {transform_indices = @transform_2, window_bounds = array<i64: 1, 1, 8>}, {transform_indices = @transform_3, window_bounds = array<i64: 1, 1, 8>}, {pipeline_mode = #tpu.pipeline_mode<synchronous>, transform_indices = @transform_4, window_bounds = array<i64: 32, 96>}, {pipeline_mode = #tpu.pipeline_mode<synchronous>, transform_indices = @transform_5, window_bounds = array<i64: 32, 32>}, {pipeline_mode = #tpu.pipeline_mode<synchronous>, transform_indices = @transform_6, window_bounds = array<i64: 32, 32>}, {pipeline_mode = #tpu.pipeline_mode<synchronous>, transform_indices = @transform_7, window_bounds = array<i64: 32, 64>}, {pipeline_mode = #tpu.pipeline_mode<synchronous>, transform_indices = @transform_8, window_bounds = array<i64: 32, 32>}, {pipeline_mode = #tpu.pipeline_mode<synchronous>, transform_indices = @transform_9, window_bounds = array<i64: 32, 64>}, {pipeline_mode = #tpu.pipeline_mode<synchronous>, transform_indices = @transform_10, window_bounds = array<i64: 1, 64>}, {pipeline_mode = #tpu.pipeline_mode<synchronous>, transform_indices = @transform_11, window_bounds = array<i64: 64, 32>}, {pipeline_mode = #tpu.pipeline_mode<synchronous>, transform_indices = @transform_12, window_bounds = array<i64: 1, 32>}, {pipeline_mode = #tpu.pipeline_mode<synchronous>, transform_indices = @transform_13, window_bounds = array<i64: 1, 32>}, {pipeline_mode = #tpu.pipeline_mode<synchronous>, transform_indices = @transform_14, window_bounds = array<i64: 1, 32>}, {pipeline_mode = #tpu.pipeline_mode<synchronous>, transform_indices = @transform_15, window_bounds = array<i64: 1, 32>}, {pipeline_mode = #tpu.pipeline_mode<synchronous>, transform_indices = @transform_16, window_bounds = array<i64: 1, 32>}, {pipeline_mode = #tpu.pipeline_mode<synchronous>, transform_indices = @transform_17, window_bounds = array<i64: 1, 32>}, {pipeline_mode = #tpu.pipeline_mode<synchronous>, transform_indices = @transform_18, window_bounds = array<i64: 1, 32>}, {transform_indices = @transform_19, window_bounds = array<i64: 1, 8, 32>}]} {
    %c0 = arith.constant 0 : index
    %c0_0 = arith.constant 0 : index
    %c0_1 = arith.constant 0 : index
    %0 = vector.load %arg1[%c0, %c0_0, %c0_1] : memref<1x8x32xf32, #tpu.memory_space<vmem>>, vector<1x8x32xf32>
    %1 = vector.shape_cast %0 : vector<1x8x32xf32> to vector<8x32xf32>
    %c0_2 = arith.constant 0 : index
    %c0_3 = arith.constant 0 : index
    %c0_4 = arith.constant 0 : index
    %2 = vector.load %arg2[%c0_2, %c0_3, %c0_4] : memref<1x8x32xf32, #tpu.memory_space<vmem>>, vector<1x8x32xf32>
    %3 = vector.shape_cast %2 : vector<1x8x32xf32> to vector<8x32xf32>
    %c0_5 = arith.constant 0 : index
    %c0_6 = arith.constant 0 : index
    %c0_7 = arith.constant 0 : index
    %4 = vector.load %arg3[%c0_5, %c0_6, %c0_7] : memref<1x1x8xf32, #tpu.memory_space<vmem>>, vector<1x1x8xf32>
    %5 = vector.shape_cast %4 : vector<1x1x8xf32> to vector<1x8xf32>
    %c0_8 = arith.constant 0 : index
    %c0_9 = arith.constant 0 : index
    %c0_10 = arith.constant 0 : index
    %6 = vector.load %arg4[%c0_8, %c0_9, %c0_10] : memref<1x1x8xf32, #tpu.memory_space<vmem>>, vector<1x1x8xf32>
    %7 = vector.shape_cast %6 : vector<1x1x8xf32> to vector<1x8xf32>
    %8 = tpu.iota {dimensions = array<i32: 0>} : vector<8x8xi32>
    %9 = tpu.iota {dimensions = array<i32: 1>} : vector<8x8xi32>
    %cst = arith.constant 0.000000e+00 : f32
    %10 = vector.broadcast %cst : f32 to vector<1x8xf32>
    %11 = arith.cmpf oeq, %5, %10 : vector<1x8xf32>
    %cst_11 = arith.constant -1.000000e+10 : f32
    %cst_12 = arith.constant 0.000000e+00 : f32
    %12 = vector.broadcast %cst_11 : f32 to vector<1x8xf32>
    %13 = vector.broadcast %cst_12 : f32 to vector<1x8xf32>
    %14 = arith.select %11, %12, %13 : vector<1x8xi1>, vector<1x8xf32>
    %15 = arith.cmpi sgt, %9, %8 : vector<8x8xi32>
    %cst_13 = arith.constant -1.000000e+10 : f32
    %cst_14 = arith.constant 0.000000e+00 : f32
    %16 = vector.broadcast %cst_13 : f32 to vector<8x8xf32>
    %17 = vector.broadcast %cst_14 : f32 to vector<8x8xf32>
    %18 = arith.select %15, %16, %17 : vector<8x8xi1>, vector<8x8xf32>
    %19 = vector.broadcast %14 : vector<1x8xf32> to vector<8x8xf32>
    %20 = arith.addf %19, %18 : vector<8x8xf32>
    %cst_15 = arith.constant 0.000000e+00 : f32
    %21 = vector.broadcast %cst_15 : f32 to vector<1x8xf32>
    %22 = arith.cmpf oeq, %7, %21 : vector<1x8xf32>
    %cst_16 = arith.constant -1.000000e+10 : f32
    %cst_17 = arith.constant 0.000000e+00 : f32
    %23 = vector.broadcast %cst_16 : f32 to vector<1x8xf32>
    %24 = vector.broadcast %cst_17 : f32 to vector<1x8xf32>
    %25 = arith.select %22, %23, %24 : vector<1x8xi1>, vector<1x8xf32>
    %c0_18 = arith.constant 0 : index
    %c0_19 = arith.constant 0 : index
    %26 = vector.load %arg5[%c0_18, %c0_19] : memref<32x96xbf16, #tpu.memory_space<vmem>>, vector<32x96xbf16>
    %27 = arith.truncf %1 : vector<8x32xf32> to vector<8x32xbf16>
    %cst_20 = arith.constant dense<0.000000e+00> : vector<8x96xf32>
    %28 = tpu.matmul %27, %26, %cst_20 {dimension_numbers = #tpu.dot_dimension_numbers<[1], [0], [0], [1], [0, 0, 1, 1], [], []>} : vector<8x32xbf16>, vector<32x96xbf16>, vector<8x96xf32> -> vector<8x96xf32>
    %29 = vector.extract_strided_slice %28 {offsets = [0, 0], sizes = [8, 32], strides = [1, 1]} : vector<8x96xf32> to vector<8x32xf32>
    %30 = vector.extract_strided_slice %28 {offsets = [0, 32], sizes = [8, 32], strides = [1, 1]} : vector<8x96xf32> to vector<8x32xf32>
    %31 = vector.extract_strided_slice %28 {offsets = [0, 64], sizes = [8, 32], strides = [1, 1]} : vector<8x96xf32> to vector<8x32xf32>
    %32 = vector.extract_strided_slice %29 {offsets = [0, 0], sizes = [8, 8], strides = [1, 1]} : vector<8x32xf32> to vector<8x8xf32>
    %33 = vector.extract_strided_slice %30 {offsets = [0, 0], sizes = [8, 8], strides = [1, 1]} : vector<8x32xf32> to vector<8x8xf32>
    %34 = vector.extract_strided_slice %31 {offsets = [0, 0], sizes = [8, 8], strides = [1, 1]} : vector<8x32xf32> to vector<8x8xf32>
    %35 = tpu.transpose %33, [1, 0] : vector<8x8xf32> -> vector<8x8xf32>
    %36 = arith.truncf %32 : vector<8x8xf32> to vector<8x8xbf16>
    %37 = arith.truncf %35 : vector<8x8xf32> to vector<8x8xbf16>
    %cst_21 = arith.constant dense<0.000000e+00> : vector<8x8xf32>
    %38 = tpu.matmul %36, %37, %cst_21 {dimension_numbers = #tpu.dot_dimension_numbers<[1], [0], [0], [1], [0, 0, 1, 1], [], []>} : vector<8x8xbf16>, vector<8x8xbf16>, vector<8x8xf32> -> vector<8x8xf32>
    %cst_22 = arith.constant 0.353553385 : f32
    %39 = vector.broadcast %cst_22 : f32 to vector<8x8xf32>
    %40 = arith.mulf %38, %39 : vector<8x8xf32>
    %41 = arith.addf %40, %20 : vector<8x8xf32>
    %cst_23 = arith.constant dense<0xFF800000> : vector<8xf32>
    %42 = vector.multi_reduction <maximumf>, %41, %cst_23 [1] : vector<8x8xf32> to vector<8xf32>
    %43 = vector.shape_cast %42 : vector<8xf32> to vector<8x1xf32>
    %44 = vector.broadcast %43 : vector<8x1xf32> to vector<8x8xf32>
    %45 = arith.subf %41, %44 : vector<8x8xf32>
    %46 = math.exp %45 : vector<8x8xf32>
    %cst_24 = arith.constant dense<0.000000e+00> : vector<8xf32>
    %47 = vector.multi_reduction <add>, %46, %cst_24 [1] : vector<8x8xf32> to vector<8xf32>
    %48 = vector.shape_cast %47 : vector<8xf32> to vector<8x1xf32>
    %49 = tpu.reciprocal %48 {approx = true} : vector<8x1xf32> -> vector<8x1xf32>
    %50 = vector.broadcast %49 : vector<8x1xf32> to vector<8x8xf32>
    %51 = arith.mulf %46, %50 : vector<8x8xf32>
    %52 = arith.truncf %51 : vector<8x8xf32> to vector<8x8xbf16>
    %53 = arith.truncf %34 : vector<8x8xf32> to vector<8x8xbf16>
    %cst_25 = arith.constant dense<0.000000e+00> : vector<8x8xf32>
    %54 = tpu.matmul %52, %53, %cst_25 {dimension_numbers = #tpu.dot_dimension_numbers<[1], [0], [0], [1], [0, 0, 1, 1], [], []>} : vector<8x8xbf16>, vector<8x8xbf16>, vector<8x8xf32> -> vector<8x8xf32>
    %55 = vector.extract_strided_slice %29 {offsets = [0, 8], sizes = [8, 8], strides = [1, 1]} : vector<8x32xf32> to vector<8x8xf32>
    %56 = vector.extract_strided_slice %30 {offsets = [0, 8], sizes = [8, 8], strides = [1, 1]} : vector<8x32xf32> to vector<8x8xf32>
    %57 = vector.extract_strided_slice %31 {offsets = [0, 8], sizes = [8, 8], strides = [1, 1]} : vector<8x32xf32> to vector<8x8xf32>
    %58 = tpu.transpose %56, [1, 0] : vector<8x8xf32> -> vector<8x8xf32>
    %59 = arith.truncf %55 : vector<8x8xf32> to vector<8x8xbf16>
    %60 = arith.truncf %58 : vector<8x8xf32> to vector<8x8xbf16>
    %cst_26 = arith.constant dense<0.000000e+00> : vector<8x8xf32>
    %61 = tpu.matmul %59, %60, %cst_26 {dimension_numbers = #tpu.dot_dimension_numbers<[1], [0], [0], [1], [0, 0, 1, 1], [], []>} : vector<8x8xbf16>, vector<8x8xbf16>, vector<8x8xf32> -> vector<8x8xf32>
    %cst_27 = arith.constant 0.353553385 : f32
    %62 = vector.broadcast %cst_27 : f32 to vector<8x8xf32>
    %63 = arith.mulf %61, %62 : vector<8x8xf32>
    %64 = arith.addf %63, %20 : vector<8x8xf32>
    %cst_28 = arith.constant dense<0xFF800000> : vector<8xf32>
    %65 = vector.multi_reduction <maximumf>, %64, %cst_28 [1] : vector<8x8xf32> to vector<8xf32>
    %66 = vector.shape_cast %65 : vector<8xf32> to vector<8x1xf32>
    %67 = vector.broadcast %66 : vector<8x1xf32> to vector<8x8xf32>
    %68 = arith.subf %64, %67 : vector<8x8xf32>
    %69 = math.exp %68 : vector<8x8xf32>
    %cst_29 = arith.constant dense<0.000000e+00> : vector<8xf32>
    %70 = vector.multi_reduction <add>, %69, %cst_29 [1] : vector<8x8xf32> to vector<8xf32>
    %71 = vector.shape_cast %70 : vector<8xf32> to vector<8x1xf32>
    %72 = tpu.reciprocal %71 {approx = true} : vector<8x1xf32> -> vector<8x1xf32>
    %73 = vector.broadcast %72 : vector<8x1xf32> to vector<8x8xf32>
    %74 = arith.mulf %69, %73 : vector<8x8xf32>
    %75 = arith.truncf %74 : vector<8x8xf32> to vector<8x8xbf16>
    %76 = arith.truncf %57 : vector<8x8xf32> to vector<8x8xbf16>
    %cst_30 = arith.constant dense<0.000000e+00> : vector<8x8xf32>
    %77 = tpu.matmul %75, %76, %cst_30 {dimension_numbers = #tpu.dot_dimension_numbers<[1], [0], [0], [1], [0, 0, 1, 1], [], []>} : vector<8x8xbf16>, vector<8x8xbf16>, vector<8x8xf32> -> vector<8x8xf32>
    %78 = vector.extract_strided_slice %29 {offsets = [0, 16], sizes = [8, 8], strides = [1, 1]} : vector<8x32xf32> to vector<8x8xf32>
    %79 = vector.extract_strided_slice %30 {offsets = [0, 16], sizes = [8, 8], strides = [1, 1]} : vector<8x32xf32> to vector<8x8xf32>
    %80 = vector.extract_strided_slice %31 {offsets = [0, 16], sizes = [8, 8], strides = [1, 1]} : vector<8x32xf32> to vector<8x8xf32>
    %81 = tpu.transpose %79, [1, 0] : vector<8x8xf32> -> vector<8x8xf32>
    %82 = arith.truncf %78 : vector<8x8xf32> to vector<8x8xbf16>
    %83 = arith.truncf %81 : vector<8x8xf32> to vector<8x8xbf16>
    %cst_31 = arith.constant dense<0.000000e+00> : vector<8x8xf32>
    %84 = tpu.matmul %82, %83, %cst_31 {dimension_numbers = #tpu.dot_dimension_numbers<[1], [0], [0], [1], [0, 0, 1, 1], [], []>} : vector<8x8xbf16>, vector<8x8xbf16>, vector<8x8xf32> -> vector<8x8xf32>
    %cst_32 = arith.constant 0.353553385 : f32
    %85 = vector.broadcast %cst_32 : f32 to vector<8x8xf32>
    %86 = arith.mulf %84, %85 : vector<8x8xf32>
    %87 = arith.addf %86, %20 : vector<8x8xf32>
    %cst_33 = arith.constant dense<0xFF800000> : vector<8xf32>
    %88 = vector.multi_reduction <maximumf>, %87, %cst_33 [1] : vector<8x8xf32> to vector<8xf32>
    %89 = vector.shape_cast %88 : vector<8xf32> to vector<8x1xf32>
    %90 = vector.broadcast %89 : vector<8x1xf32> to vector<8x8xf32>
    %91 = arith.subf %87, %90 : vector<8x8xf32>
    %92 = math.exp %91 : vector<8x8xf32>
    %cst_34 = arith.constant dense<0.000000e+00> : vector<8xf32>
    %93 = vector.multi_reduction <add>, %92, %cst_34 [1] : vector<8x8xf32> to vector<8xf32>
    %94 = vector.shape_cast %93 : vector<8xf32> to vector<8x1xf32>
    %95 = tpu.reciprocal %94 {approx = true} : vector<8x1xf32> -> vector<8x1xf32>
    %96 = vector.broadcast %95 : vector<8x1xf32> to vector<8x8xf32>
    %97 = arith.mulf %92, %96 : vector<8x8xf32>
    %98 = arith.truncf %97 : vector<8x8xf32> to vector<8x8xbf16>
    %99 = arith.truncf %80 : vector<8x8xf32> to vector<8x8xbf16>
    %cst_35 = arith.constant dense<0.000000e+00> : vector<8x8xf32>
    %100 = tpu.matmul %98, %99, %cst_35 {dimension_numbers = #tpu.dot_dimension_numbers<[1], [0], [0], [1], [0, 0, 1, 1], [], []>} : vector<8x8xbf16>, vector<8x8xbf16>, vector<8x8xf32> -> vector<8x8xf32>
    %101 = vector.extract_strided_slice %29 {offsets = [0, 24], sizes = [8, 8], strides = [1, 1]} : vector<8x32xf32> to vector<8x8xf32>
    %102 = vector.extract_strided_slice %30 {offsets = [0, 24], sizes = [8, 8], strides = [1, 1]} : vector<8x32xf32> to vector<8x8xf32>
    %103 = vector.extract_strided_slice %31 {offsets = [0, 24], sizes = [8, 8], strides = [1, 1]} : vector<8x32xf32> to vector<8x8xf32>
    %104 = tpu.transpose %102, [1, 0] : vector<8x8xf32> -> vector<8x8xf32>
    %105 = arith.truncf %101 : vector<8x8xf32> to vector<8x8xbf16>
    %106 = arith.truncf %104 : vector<8x8xf32> to vector<8x8xbf16>
    %cst_36 = arith.constant dense<0.000000e+00> : vector<8x8xf32>
    %107 = tpu.matmul %105, %106, %cst_36 {dimension_numbers = #tpu.dot_dimension_numbers<[1], [0], [0], [1], [0, 0, 1, 1], [], []>} : vector<8x8xbf16>, vector<8x8xbf16>, vector<8x8xf32> -> vector<8x8xf32>
    %cst_37 = arith.constant 0.353553385 : f32
    %108 = vector.broadcast %cst_37 : f32 to vector<8x8xf32>
    %109 = arith.mulf %107, %108 : vector<8x8xf32>
    %110 = arith.addf %109, %20 : vector<8x8xf32>
    %cst_38 = arith.constant dense<0xFF800000> : vector<8xf32>
    %111 = vector.multi_reduction <maximumf>, %110, %cst_38 [1] : vector<8x8xf32> to vector<8xf32>
    %112 = vector.shape_cast %111 : vector<8xf32> to vector<8x1xf32>
    %113 = vector.broadcast %112 : vector<8x1xf32> to vector<8x8xf32>
    %114 = arith.subf %110, %113 : vector<8x8xf32>
    %115 = math.exp %114 : vector<8x8xf32>
    %cst_39 = arith.constant dense<0.000000e+00> : vector<8xf32>
    %116 = vector.multi_reduction <add>, %115, %cst_39 [1] : vector<8x8xf32> to vector<8xf32>
    %117 = vector.shape_cast %116 : vector<8xf32> to vector<8x1xf32>
    %118 = tpu.reciprocal %117 {approx = true} : vector<8x1xf32> -> vector<8x1xf32>
    %119 = vector.broadcast %118 : vector<8x1xf32> to vector<8x8xf32>
    %120 = arith.mulf %115, %119 : vector<8x8xf32>
    %121 = arith.truncf %120 : vector<8x8xf32> to vector<8x8xbf16>
    %122 = arith.truncf %103 : vector<8x8xf32> to vector<8x8xbf16>
    %cst_40 = arith.constant dense<0.000000e+00> : vector<8x8xf32>
    %123 = tpu.matmul %121, %122, %cst_40 {dimension_numbers = #tpu.dot_dimension_numbers<[1], [0], [0], [1], [0, 0, 1, 1], [], []>} : vector<8x8xbf16>, vector<8x8xbf16>, vector<8x8xf32> -> vector<8x8xf32>
    %124 = tpu.concatenate %54, %77, %100, %123 in 1 : vector<8x8xf32>, vector<8x8xf32>, vector<8x8xf32>, vector<8x8xf32> -> vector<8x32xf32>
    %c0_41 = arith.constant 0 : index
    %c0_42 = arith.constant 0 : index
    %125 = vector.load %arg6[%c0_41, %c0_42] : memref<32x32xbf16, #tpu.memory_space<vmem>>, vector<32x32xbf16>
    %126 = arith.truncf %124 : vector<8x32xf32> to vector<8x32xbf16>
    %cst_43 = arith.constant dense<0.000000e+00> : vector<8x32xf32>
    %127 = tpu.matmul %126, %125, %cst_43 {dimension_numbers = #tpu.dot_dimension_numbers<[1], [0], [0], [1], [0, 0, 1, 1], [], []>} : vector<8x32xbf16>, vector<32x32xbf16>, vector<8x32xf32> -> vector<8x32xf32>
    %128 = arith.addf %1, %127 : vector<8x32xf32>
    %cst_44 = arith.constant dense<0.000000e+00> : vector<8xf32>
    %129 = vector.multi_reduction <add>, %128, %cst_44 [1] : vector<8x32xf32> to vector<8xf32>
    %130 = vector.shape_cast %129 : vector<8xf32> to vector<8x1xf32>
    %cst_45 = arith.constant 3.200000e+01 : f32
    %131 = vector.broadcast %cst_45 : f32 to vector<8x1xf32>
    %132 = arith.divf %130, %131 : vector<8x1xf32>
    %133 = vector.broadcast %132 : vector<8x1xf32> to vector<8x32xf32>
    %134 = arith.subf %128, %133 : vector<8x32xf32>
    %135 = arith.mulf %134, %134 : vector<8x32xf32>
    %cst_46 = arith.constant dense<0.000000e+00> : vector<8xf32>
    %136 = vector.multi_reduction <add>, %135, %cst_46 [1] : vector<8x32xf32> to vector<8xf32>
    %137 = vector.shape_cast %136 : vector<8xf32> to vector<8x1xf32>
    %cst_47 = arith.constant 3.200000e+01 : f32
    %138 = vector.broadcast %cst_47 : f32 to vector<8x1xf32>
    %139 = arith.divf %137, %138 : vector<8x1xf32>
    %cst_48 = arith.constant 9.99999974E-6 : f32
    %140 = vector.broadcast %cst_48 : f32 to vector<8x1xf32>
    %141 = arith.addf %139, %140 : vector<8x1xf32>
    %142 = math.rsqrt %141 : vector<8x1xf32>
    %143 = vector.broadcast %142 : vector<8x1xf32> to vector<8x32xf32>
    %144 = arith.mulf %134, %143 : vector<8x32xf32>
    %c0_49 = arith.constant 0 : index
    %c0_50 = arith.constant 0 : index
    %145 = vector.load %arg14[%c0_49, %c0_50] : memref<1x32xf32, #tpu.memory_space<vmem>>, vector<1x32xf32>
    %146 = vector.broadcast %145 : vector<1x32xf32> to vector<8x32xf32>
    %147 = arith.mulf %144, %146 : vector<8x32xf32>
    %c0_51 = arith.constant 0 : index
    %c0_52 = arith.constant 0 : index
    %148 = vector.load %arg15[%c0_51, %c0_52] : memref<1x32xf32, #tpu.memory_space<vmem>>, vector<1x32xf32>
    %149 = vector.broadcast %148 : vector<1x32xf32> to vector<8x32xf32>
    %150 = arith.addf %147, %149 : vector<8x32xf32>
    %c0_53 = arith.constant 0 : index
    %c0_54 = arith.constant 0 : index
    %151 = vector.load %arg7[%c0_53, %c0_54] : memref<32x32xbf16, #tpu.memory_space<vmem>>, vector<32x32xbf16>
    %152 = arith.truncf %150 : vector<8x32xf32> to vector<8x32xbf16>
    %cst_55 = arith.constant dense<0.000000e+00> : vector<8x32xf32>
    %153 = tpu.matmul %152, %151, %cst_55 {dimension_numbers = #tpu.dot_dimension_numbers<[1], [0], [0], [1], [0, 0, 1, 1], [], []>} : vector<8x32xbf16>, vector<32x32xbf16>, vector<8x32xf32> -> vector<8x32xf32>
    %c0_56 = arith.constant 0 : index
    %c0_57 = arith.constant 0 : index
    %154 = vector.load %arg8[%c0_56, %c0_57] : memref<32x64xbf16, #tpu.memory_space<vmem>>, vector<32x64xbf16>
    %155 = arith.truncf %3 : vector<8x32xf32> to vector<8x32xbf16>
    %cst_58 = arith.constant dense<0.000000e+00> : vector<8x64xf32>
    %156 = tpu.matmul %155, %154, %cst_58 {dimension_numbers = #tpu.dot_dimension_numbers<[1], [0], [0], [1], [0, 0, 1, 1], [], []>} : vector<8x32xbf16>, vector<32x64xbf16>, vector<8x64xf32> -> vector<8x64xf32>
    %157 = vector.extract_strided_slice %156 {offsets = [0, 0], sizes = [8, 32], strides = [1, 1]} : vector<8x64xf32> to vector<8x32xf32>
    %158 = vector.extract_strided_slice %156 {offsets = [0, 32], sizes = [8, 32], strides = [1, 1]} : vector<8x64xf32> to vector<8x32xf32>
    %159 = vector.extract_strided_slice %153 {offsets = [0, 0], sizes = [8, 8], strides = [1, 1]} : vector<8x32xf32> to vector<8x8xf32>
    %160 = vector.extract_strided_slice %157 {offsets = [0, 0], sizes = [8, 8], strides = [1, 1]} : vector<8x32xf32> to vector<8x8xf32>
    %161 = vector.extract_strided_slice %158 {offsets = [0, 0], sizes = [8, 8], strides = [1, 1]} : vector<8x32xf32> to vector<8x8xf32>
    %162 = tpu.transpose %160, [1, 0] : vector<8x8xf32> -> vector<8x8xf32>
    %163 = arith.truncf %159 : vector<8x8xf32> to vector<8x8xbf16>
    %164 = arith.truncf %162 : vector<8x8xf32> to vector<8x8xbf16>
    %cst_59 = arith.constant dense<0.000000e+00> : vector<8x8xf32>
    %165 = tpu.matmul %163, %164, %cst_59 {dimension_numbers = #tpu.dot_dimension_numbers<[1], [0], [0], [1], [0, 0, 1, 1], [], []>} : vector<8x8xbf16>, vector<8x8xbf16>, vector<8x8xf32> -> vector<8x8xf32>
    %cst_60 = arith.constant 0.353553385 : f32
    %166 = vector.broadcast %cst_60 : f32 to vector<8x8xf32>
    %167 = arith.mulf %165, %166 : vector<8x8xf32>
    %168 = vector.broadcast %25 : vector<1x8xf32> to vector<8x8xf32>
    %169 = arith.addf %167, %168 : vector<8x8xf32>
    %cst_61 = arith.constant dense<0xFF800000> : vector<8xf32>
    %170 = vector.multi_reduction <maximumf>, %169, %cst_61 [1] : vector<8x8xf32> to vector<8xf32>
    %171 = vector.shape_cast %170 : vector<8xf32> to vector<8x1xf32>
    %172 = vector.broadcast %171 : vector<8x1xf32> to vector<8x8xf32>
    %173 = arith.subf %169, %172 : vector<8x8xf32>
    %174 = math.exp %173 : vector<8x8xf32>
    %cst_62 = arith.constant dense<0.000000e+00> : vector<8xf32>
    %175 = vector.multi_reduction <add>, %174, %cst_62 [1] : vector<8x8xf32> to vector<8xf32>
    %176 = vector.shape_cast %175 : vector<8xf32> to vector<8x1xf32>
    %177 = tpu.reciprocal %176 {approx = true} : vector<8x1xf32> -> vector<8x1xf32>
    %178 = vector.broadcast %177 : vector<8x1xf32> to vector<8x8xf32>
    %179 = arith.mulf %174, %178 : vector<8x8xf32>
    %180 = arith.truncf %179 : vector<8x8xf32> to vector<8x8xbf16>
    %181 = arith.truncf %161 : vector<8x8xf32> to vector<8x8xbf16>
    %cst_63 = arith.constant dense<0.000000e+00> : vector<8x8xf32>
    %182 = tpu.matmul %180, %181, %cst_63 {dimension_numbers = #tpu.dot_dimension_numbers<[1], [0], [0], [1], [0, 0, 1, 1], [], []>} : vector<8x8xbf16>, vector<8x8xbf16>, vector<8x8xf32> -> vector<8x8xf32>
    %183 = vector.extract_strided_slice %153 {offsets = [0, 8], sizes = [8, 8], strides = [1, 1]} : vector<8x32xf32> to vector<8x8xf32>
    %184 = vector.extract_strided_slice %157 {offsets = [0, 8], sizes = [8, 8], strides = [1, 1]} : vector<8x32xf32> to vector<8x8xf32>
    %185 = vector.extract_strided_slice %158 {offsets = [0, 8], sizes = [8, 8], strides = [1, 1]} : vector<8x32xf32> to vector<8x8xf32>
    %186 = tpu.transpose %184, [1, 0] : vector<8x8xf32> -> vector<8x8xf32>
    %187 = arith.truncf %183 : vector<8x8xf32> to vector<8x8xbf16>
    %188 = arith.truncf %186 : vector<8x8xf32> to vector<8x8xbf16>
    %cst_64 = arith.constant dense<0.000000e+00> : vector<8x8xf32>
    %189 = tpu.matmul %187, %188, %cst_64 {dimension_numbers = #tpu.dot_dimension_numbers<[1], [0], [0], [1], [0, 0, 1, 1], [], []>} : vector<8x8xbf16>, vector<8x8xbf16>, vector<8x8xf32> -> vector<8x8xf32>
    %cst_65 = arith.constant 0.353553385 : f32
    %190 = vector.broadcast %cst_65 : f32 to vector<8x8xf32>
    %191 = arith.mulf %189, %190 : vector<8x8xf32>
    %192 = vector.broadcast %25 : vector<1x8xf32> to vector<8x8xf32>
    %193 = arith.addf %191, %192 : vector<8x8xf32>
    %cst_66 = arith.constant dense<0xFF800000> : vector<8xf32>
    %194 = vector.multi_reduction <maximumf>, %193, %cst_66 [1] : vector<8x8xf32> to vector<8xf32>
    %195 = vector.shape_cast %194 : vector<8xf32> to vector<8x1xf32>
    %196 = vector.broadcast %195 : vector<8x1xf32> to vector<8x8xf32>
    %197 = arith.subf %193, %196 : vector<8x8xf32>
    %198 = math.exp %197 : vector<8x8xf32>
    %cst_67 = arith.constant dense<0.000000e+00> : vector<8xf32>
    %199 = vector.multi_reduction <add>, %198, %cst_67 [1] : vector<8x8xf32> to vector<8xf32>
    %200 = vector.shape_cast %199 : vector<8xf32> to vector<8x1xf32>
    %201 = tpu.reciprocal %200 {approx = true} : vector<8x1xf32> -> vector<8x1xf32>
    %202 = vector.broadcast %201 : vector<8x1xf32> to vector<8x8xf32>
    %203 = arith.mulf %198, %202 : vector<8x8xf32>
    %204 = arith.truncf %203 : vector<8x8xf32> to vector<8x8xbf16>
    %205 = arith.truncf %185 : vector<8x8xf32> to vector<8x8xbf16>
    %cst_68 = arith.constant dense<0.000000e+00> : vector<8x8xf32>
    %206 = tpu.matmul %204, %205, %cst_68 {dimension_numbers = #tpu.dot_dimension_numbers<[1], [0], [0], [1], [0, 0, 1, 1], [], []>} : vector<8x8xbf16>, vector<8x8xbf16>, vector<8x8xf32> -> vector<8x8xf32>
    %207 = vector.extract_strided_slice %153 {offsets = [0, 16], sizes = [8, 8], strides = [1, 1]} : vector<8x32xf32> to vector<8x8xf32>
    %208 = vector.extract_strided_slice %157 {offsets = [0, 16], sizes = [8, 8], strides = [1, 1]} : vector<8x32xf32> to vector<8x8xf32>
    %209 = vector.extract_strided_slice %158 {offsets = [0, 16], sizes = [8, 8], strides = [1, 1]} : vector<8x32xf32> to vector<8x8xf32>
    %210 = tpu.transpose %208, [1, 0] : vector<8x8xf32> -> vector<8x8xf32>
    %211 = arith.truncf %207 : vector<8x8xf32> to vector<8x8xbf16>
    %212 = arith.truncf %210 : vector<8x8xf32> to vector<8x8xbf16>
    %cst_69 = arith.constant dense<0.000000e+00> : vector<8x8xf32>
    %213 = tpu.matmul %211, %212, %cst_69 {dimension_numbers = #tpu.dot_dimension_numbers<[1], [0], [0], [1], [0, 0, 1, 1], [], []>} : vector<8x8xbf16>, vector<8x8xbf16>, vector<8x8xf32> -> vector<8x8xf32>
    %cst_70 = arith.constant 0.353553385 : f32
    %214 = vector.broadcast %cst_70 : f32 to vector<8x8xf32>
    %215 = arith.mulf %213, %214 : vector<8x8xf32>
    %216 = vector.broadcast %25 : vector<1x8xf32> to vector<8x8xf32>
    %217 = arith.addf %215, %216 : vector<8x8xf32>
    %cst_71 = arith.constant dense<0xFF800000> : vector<8xf32>
    %218 = vector.multi_reduction <maximumf>, %217, %cst_71 [1] : vector<8x8xf32> to vector<8xf32>
    %219 = vector.shape_cast %218 : vector<8xf32> to vector<8x1xf32>
    %220 = vector.broadcast %219 : vector<8x1xf32> to vector<8x8xf32>
    %221 = arith.subf %217, %220 : vector<8x8xf32>
    %222 = math.exp %221 : vector<8x8xf32>
    %cst_72 = arith.constant dense<0.000000e+00> : vector<8xf32>
    %223 = vector.multi_reduction <add>, %222, %cst_72 [1] : vector<8x8xf32> to vector<8xf32>
    %224 = vector.shape_cast %223 : vector<8xf32> to vector<8x1xf32>
    %225 = tpu.reciprocal %224 {approx = true} : vector<8x1xf32> -> vector<8x1xf32>
    %226 = vector.broadcast %225 : vector<8x1xf32> to vector<8x8xf32>
    %227 = arith.mulf %222, %226 : vector<8x8xf32>
    %228 = arith.truncf %227 : vector<8x8xf32> to vector<8x8xbf16>
    %229 = arith.truncf %209 : vector<8x8xf32> to vector<8x8xbf16>
    %cst_73 = arith.constant dense<0.000000e+00> : vector<8x8xf32>
    %230 = tpu.matmul %228, %229, %cst_73 {dimension_numbers = #tpu.dot_dimension_numbers<[1], [0], [0], [1], [0, 0, 1, 1], [], []>} : vector<8x8xbf16>, vector<8x8xbf16>, vector<8x8xf32> -> vector<8x8xf32>
    %231 = vector.extract_strided_slice %153 {offsets = [0, 24], sizes = [8, 8], strides = [1, 1]} : vector<8x32xf32> to vector<8x8xf32>
    %232 = vector.extract_strided_slice %157 {offsets = [0, 24], sizes = [8, 8], strides = [1, 1]} : vector<8x32xf32> to vector<8x8xf32>
    %233 = vector.extract_strided_slice %158 {offsets = [0, 24], sizes = [8, 8], strides = [1, 1]} : vector<8x32xf32> to vector<8x8xf32>
    %234 = tpu.transpose %232, [1, 0] : vector<8x8xf32> -> vector<8x8xf32>
    %235 = arith.truncf %231 : vector<8x8xf32> to vector<8x8xbf16>
    %236 = arith.truncf %234 : vector<8x8xf32> to vector<8x8xbf16>
    %cst_74 = arith.constant dense<0.000000e+00> : vector<8x8xf32>
    %237 = tpu.matmul %235, %236, %cst_74 {dimension_numbers = #tpu.dot_dimension_numbers<[1], [0], [0], [1], [0, 0, 1, 1], [], []>} : vector<8x8xbf16>, vector<8x8xbf16>, vector<8x8xf32> -> vector<8x8xf32>
    %cst_75 = arith.constant 0.353553385 : f32
    %238 = vector.broadcast %cst_75 : f32 to vector<8x8xf32>
    %239 = arith.mulf %237, %238 : vector<8x8xf32>
    %240 = vector.broadcast %25 : vector<1x8xf32> to vector<8x8xf32>
    %241 = arith.addf %239, %240 : vector<8x8xf32>
    %cst_76 = arith.constant dense<0xFF800000> : vector<8xf32>
    %242 = vector.multi_reduction <maximumf>, %241, %cst_76 [1] : vector<8x8xf32> to vector<8xf32>
    %243 = vector.shape_cast %242 : vector<8xf32> to vector<8x1xf32>
    %244 = vector.broadcast %243 : vector<8x1xf32> to vector<8x8xf32>
    %245 = arith.subf %241, %244 : vector<8x8xf32>
    %246 = math.exp %245 : vector<8x8xf32>
    %cst_77 = arith.constant dense<0.000000e+00> : vector<8xf32>
    %247 = vector.multi_reduction <add>, %246, %cst_77 [1] : vector<8x8xf32> to vector<8xf32>
    %248 = vector.shape_cast %247 : vector<8xf32> to vector<8x1xf32>
    %249 = tpu.reciprocal %248 {approx = true} : vector<8x1xf32> -> vector<8x1xf32>
    %250 = vector.broadcast %249 : vector<8x1xf32> to vector<8x8xf32>
    %251 = arith.mulf %246, %250 : vector<8x8xf32>
    %252 = arith.truncf %251 : vector<8x8xf32> to vector<8x8xbf16>
    %253 = arith.truncf %233 : vector<8x8xf32> to vector<8x8xbf16>
    %cst_78 = arith.constant dense<0.000000e+00> : vector<8x8xf32>
    %254 = tpu.matmul %252, %253, %cst_78 {dimension_numbers = #tpu.dot_dimension_numbers<[1], [0], [0], [1], [0, 0, 1, 1], [], []>} : vector<8x8xbf16>, vector<8x8xbf16>, vector<8x8xf32> -> vector<8x8xf32>
    %255 = tpu.concatenate %182, %206, %230, %254 in 1 : vector<8x8xf32>, vector<8x8xf32>, vector<8x8xf32>, vector<8x8xf32> -> vector<8x32xf32>
    %c0_79 = arith.constant 0 : index
    %c0_80 = arith.constant 0 : index
    %256 = vector.load %arg9[%c0_79, %c0_80] : memref<32x32xbf16, #tpu.memory_space<vmem>>, vector<32x32xbf16>
    %257 = arith.truncf %255 : vector<8x32xf32> to vector<8x32xbf16>
    %cst_81 = arith.constant dense<0.000000e+00> : vector<8x32xf32>
    %258 = tpu.matmul %257, %256, %cst_81 {dimension_numbers = #tpu.dot_dimension_numbers<[1], [0], [0], [1], [0, 0, 1, 1], [], []>} : vector<8x32xbf16>, vector<32x32xbf16>, vector<8x32xf32> -> vector<8x32xf32>
    %259 = arith.addf %150, %258 : vector<8x32xf32>
    %cst_82 = arith.constant dense<0.000000e+00> : vector<8xf32>
    %260 = vector.multi_reduction <add>, %259, %cst_82 [1] : vector<8x32xf32> to vector<8xf32>
    %261 = vector.shape_cast %260 : vector<8xf32> to vector<8x1xf32>
    %cst_83 = arith.constant 3.200000e+01 : f32
    %262 = vector.broadcast %cst_83 : f32 to vector<8x1xf32>
    %263 = arith.divf %261, %262 : vector<8x1xf32>
    %264 = vector.broadcast %263 : vector<8x1xf32> to vector<8x32xf32>
    %265 = arith.subf %259, %264 : vector<8x32xf32>
    %266 = arith.mulf %265, %265 : vector<8x32xf32>
    %cst_84 = arith.constant dense<0.000000e+00> : vector<8xf32>
    %267 = vector.multi_reduction <add>, %266, %cst_84 [1] : vector<8x32xf32> to vector<8xf32>
    %268 = vector.shape_cast %267 : vector<8xf32> to vector<8x1xf32>
    %cst_85 = arith.constant 3.200000e+01 : f32
    %269 = vector.broadcast %cst_85 : f32 to vector<8x1xf32>
    %270 = arith.divf %268, %269 : vector<8x1xf32>
    %cst_86 = arith.constant 9.99999974E-6 : f32
    %271 = vector.broadcast %cst_86 : f32 to vector<8x1xf32>
    %272 = arith.addf %270, %271 : vector<8x1xf32>
    %273 = math.rsqrt %272 : vector<8x1xf32>
    %274 = vector.broadcast %273 : vector<8x1xf32> to vector<8x32xf32>
    %275 = arith.mulf %265, %274 : vector<8x32xf32>
    %c0_87 = arith.constant 0 : index
    %c0_88 = arith.constant 0 : index
    %276 = vector.load %arg16[%c0_87, %c0_88] : memref<1x32xf32, #tpu.memory_space<vmem>>, vector<1x32xf32>
    %277 = vector.broadcast %276 : vector<1x32xf32> to vector<8x32xf32>
    %278 = arith.mulf %275, %277 : vector<8x32xf32>
    %c0_89 = arith.constant 0 : index
    %c0_90 = arith.constant 0 : index
    %279 = vector.load %arg17[%c0_89, %c0_90] : memref<1x32xf32, #tpu.memory_space<vmem>>, vector<1x32xf32>
    %280 = vector.broadcast %279 : vector<1x32xf32> to vector<8x32xf32>
    %281 = arith.addf %278, %280 : vector<8x32xf32>
    %c0_91 = arith.constant 0 : index
    %c0_92 = arith.constant 0 : index
    %282 = vector.load %arg10[%c0_91, %c0_92] : memref<32x64xbf16, #tpu.memory_space<vmem>>, vector<32x64xbf16>
    %283 = arith.truncf %281 : vector<8x32xf32> to vector<8x32xbf16>
    %cst_93 = arith.constant dense<0.000000e+00> : vector<8x64xf32>
    %284 = tpu.matmul %283, %282, %cst_93 {dimension_numbers = #tpu.dot_dimension_numbers<[1], [0], [0], [1], [0, 0, 1, 1], [], []>} : vector<8x32xbf16>, vector<32x64xbf16>, vector<8x64xf32> -> vector<8x64xf32>
    %c0_94 = arith.constant 0 : index
    %c0_95 = arith.constant 0 : index
    %285 = vector.load %arg11[%c0_94, %c0_95] : memref<1x64xf32, #tpu.memory_space<vmem>>, vector<1x64xf32>
    %286 = vector.broadcast %285 : vector<1x64xf32> to vector<8x64xf32>
    %287 = arith.addf %284, %286 : vector<8x64xf32>
    %cst_96 = arith.constant 0.000000e+00 : f32
    %288 = vector.broadcast %cst_96 : f32 to vector<8x64xf32>
    %289 = arith.maximumf %287, %288 : vector<8x64xf32>
    %c0_97 = arith.constant 0 : index
    %c0_98 = arith.constant 0 : index
    %290 = vector.load %arg12[%c0_97, %c0_98] : memref<64x32xbf16, #tpu.memory_space<vmem>>, vector<64x32xbf16>
    %291 = arith.truncf %289 : vector<8x64xf32> to vector<8x64xbf16>
    %cst_99 = arith.constant dense<0.000000e+00> : vector<8x32xf32>
    %292 = tpu.matmul %291, %290, %cst_99 {dimension_numbers = #tpu.dot_dimension_numbers<[1], [0], [0], [1], [0, 0, 1, 1], [], []>} : vector<8x64xbf16>, vector<64x32xbf16>, vector<8x32xf32> -> vector<8x32xf32>
    %c0_100 = arith.constant 0 : index
    %c0_101 = arith.constant 0 : index
    %293 = vector.load %arg13[%c0_100, %c0_101] : memref<1x32xf32, #tpu.memory_space<vmem>>, vector<1x32xf32>
    %294 = vector.broadcast %293 : vector<1x32xf32> to vector<8x32xf32>
    %295 = arith.addf %292, %294 : vector<8x32xf32>
    %296 = arith.addf %281, %295 : vector<8x32xf32>
    %cst_102 = arith.constant dense<0.000000e+00> : vector<8xf32>
    %297 = vector.multi_reduction <add>, %296, %cst_102 [1] : vector<8x32xf32> to vector<8xf32>
    %298 = vector.shape_cast %297 : vector<8xf32> to vector<8x1xf32>
    %cst_103 = arith.constant 3.200000e+01 : f32
    %299 = vector.broadcast %cst_103 : f32 to vector<8x1xf32>
    %300 = arith.divf %298, %299 : vector<8x1xf32>
    %301 = vector.broadcast %300 : vector<8x1xf32> to vector<8x32xf32>
    %302 = arith.subf %296, %301 : vector<8x32xf32>
    %303 = arith.mulf %302, %302 : vector<8x32xf32>
    %cst_104 = arith.constant dense<0.000000e+00> : vector<8xf32>
    %304 = vector.multi_reduction <add>, %303, %cst_104 [1] : vector<8x32xf32> to vector<8xf32>
    %305 = vector.shape_cast %304 : vector<8xf32> to vector<8x1xf32>
    %cst_105 = arith.constant 3.200000e+01 : f32
    %306 = vector.broadcast %cst_105 : f32 to vector<8x1xf32>
    %307 = arith.divf %305, %306 : vector<8x1xf32>
    %cst_106 = arith.constant 9.99999974E-6 : f32
    %308 = vector.broadcast %cst_106 : f32 to vector<8x1xf32>
    %309 = arith.addf %307, %308 : vector<8x1xf32>
    %310 = math.rsqrt %309 : vector<8x1xf32>
    %311 = vector.broadcast %310 : vector<8x1xf32> to vector<8x32xf32>
    %312 = arith.mulf %302, %311 : vector<8x32xf32>
    %c0_107 = arith.constant 0 : index
    %c0_108 = arith.constant 0 : index
    %313 = vector.load %arg18[%c0_107, %c0_108] : memref<1x32xf32, #tpu.memory_space<vmem>>, vector<1x32xf32>
    %314 = vector.broadcast %313 : vector<1x32xf32> to vector<8x32xf32>
    %315 = arith.mulf %312, %314 : vector<8x32xf32>
    %c0_109 = arith.constant 0 : index
    %c0_110 = arith.constant 0 : index
    %316 = vector.load %arg19[%c0_109, %c0_110] : memref<1x32xf32, #tpu.memory_space<vmem>>, vector<1x32xf32>
    %317 = vector.broadcast %316 : vector<1x32xf32> to vector<8x32xf32>
    %318 = arith.addf %315, %317 : vector<8x32xf32>
    %c0_111 = arith.constant 0 : index
    %c0_112 = arith.constant 0 : index
    %c0_113 = arith.constant 0 : index
    %319 = vector.load %arg20[%c0_111, %c0_112, %c0_113] : memref<1x8x32xf32, #tpu.memory_space<vmem>>, vector<1x8x32xf32>
    %320 = vector.shape_cast %319 : vector<1x8x32xf32> to vector<8x32xf32>
    %321 = vector.shape_cast %318 : vector<8x32xf32> to vector<1x8x32xf32>
    tpu.vector_store %arg20[%c0_111, %c0_112, %c0_113], %321 {strides = array<i32>} : memref<1x8x32xf32, #tpu.memory_space<vmem>>, vector<1x8x32xf32>,
    return
  }
  func.func @transform_0(%arg0: i32) -> (i32, i32, i32) {
    %c0_i32 = arith.constant 0 : i32
    %c0_i32_0 = arith.constant 0 : i32
    %c0_i32_1 = arith.constant 0 : i32
    return %arg0, %c0_i32, %c0_i32_0 : i32, i32, i32
  }
  func.func @transform_1(%arg0: i32) -> (i32, i32, i32) {
    %c0_i32 = arith.constant 0 : i32
    %c0_i32_0 = arith.constant 0 : i32
    %c0_i32_1 = arith.constant 0 : i32
    return %arg0, %c0_i32, %c0_i32_0 : i32, i32, i32
  }
  func.func @transform_2(%arg0: i32) -> (i32, i32, i32) {
    %c0_i32 = arith.constant 0 : i32
    %c0_i32_0 = arith.constant 0 : i32
    %c0_i32_1 = arith.constant 0 : i32
    return %arg0, %c0_i32, %c0_i32_0 : i32, i32, i32
  }
  func.func @transform_3(%arg0: i32) -> (i32, i32, i32) {
    %c0_i32 = arith.constant 0 : i32
    %c0_i32_0 = arith.constant 0 : i32
    %c0_i32_1 = arith.constant 0 : i32
    return %arg0, %c0_i32, %c0_i32_0 : i32, i32, i32
  }
  func.func @transform_4(%arg0: i32) -> (i32, i32) {
    %c0_i32 = arith.constant 0 : i32
    %c0_i32_0 = arith.constant 0 : i32
    %c0_i32_1 = arith.constant 0 : i32
    return %c0_i32, %c0_i32_0 : i32, i32
  }
  func.func @transform_5(%arg0: i32) -> (i32, i32) {
    %c0_i32 = arith.constant 0 : i32
    %c0_i32_0 = arith.constant 0 : i32
    %c0_i32_1 = arith.constant 0 : i32
    return %c0_i32, %c0_i32_0 : i32, i32
  }
  func.func @transform_6(%arg0: i32) -> (i32, i32) {
    %c0_i32 = arith.constant 0 : i32
    %c0_i32_0 = arith.constant 0 : i32
    %c0_i32_1 = arith.constant 0 : i32
    return %c0_i32, %c0_i32_0 : i32, i32
  }
  func.func @transform_7(%arg0: i32) -> (i32, i32) {
    %c0_i32 = arith.constant 0 : i32
    %c0_i32_0 = arith.constant 0 : i32
    %c0_i32_1 = arith.constant 0 : i32
    return %c0_i32, %c0_i32_0 : i32, i32
  }
  func.func @transform_8(%arg0: i32) -> (i32, i32) {
    %c0_i32 = arith.constant 0 : i32
    %c0_i32_0 = arith.constant 0 : i32
    %c0_i32_1 = arith.constant 0 : i32
    return %c0_i32, %c0_i32_0 : i32, i32
  }
  func.func @transform_9(%arg0: i32) -> (i32, i32) {
    %c0_i32 = arith.constant 0 : i32
    %c0_i32_0 = arith.constant 0 : i32
    %c0_i32_1 = arith.constant 0 : i32
    return %c0_i32, %c0_i32_0 : i32, i32
  }
  func.func @transform_10(%arg0: i32) -> (i32, i32) {
    %c0_i32 = arith.constant 0 : i32
    %c0_i32_0 = arith.constant 0 : i32
    %c0_i32_1 = arith.constant 0 : i32
    return %c0_i32, %c0_i32_0 : i32, i32
  }
  func.func @transform_11(%arg0: i32) -> (i32, i32) {
    %c0_i32 = arith.constant 0 : i32
    %c0_i32_0 = arith.constant 0 : i32
    %c0_i32_1 = arith.constant 0 : i32
    return %c0_i32, %c0_i32_0 : i32, i32
  }
  func.func @transform_12(%arg0: i32) -> (i32, i32) {
    %c0_i32 = arith.constant 0 : i32
    %c0_i32_0 = arith.constant 0 : i32
    %c0_i32_1 = arith.constant 0 : i32
    return %c0_i32, %c0_i32_0 : i32, i32
  }
  func.func @transform_13(%arg0: i32) -> (i32, i32) {
    %c0_i32 = arith.constant 0 : i32
    %c0_i32_0 = arith.constant 0 : i32
    %c0_i32_1 = arith.constant 0 : i32
    return %c0_i32, %c0_i32_0 : i32, i32
  }
  func.func @transform_14(%arg0: i32) -> (i32, i32) {
    %c0_i32 = arith.constant 0 : i32
    %c0_i32_0 = arith.constant 0 : i32
    %c0_i32_1 = arith.constant 0 : i32
    return %c0_i32, %c0_i32_0 : i32, i32
  }
  func.func @transform_15(%arg0: i32) -> (i32, i32) {
    %c0_i32 = arith.constant 0 : i32
    %c0_i32_0 = arith.constant 0 : i32
    %c0_i32_1 = arith.constant 0 : i32
    return %c0_i32, %c0_i32_0 : i32, i32
  }
  func.func @transform_16(%arg0: i32) -> (i32, i32) {
    %c0_i32 = arith.constant 0 : i32
    %c0_i32_0 = arith.constant 0 : i32
    %c0_i32_1 = arith.constant 0 : i32
    return %c0_i32, %c0_i32_0 : i32, i32
  }
  func.func @transform_17(%arg0: i32) -> (i32, i32) {
    %c0_i32 = arith.constant 0 : i32
    %c0_i32_0 = arith.constant 0 : i32
    %c0_i32_1 = arith.constant 0 : i32
    return %c0_i32, %c0_i32_0 : i32, i32
  }
  func.func @transform_18(%arg0: i32) -> (i32, i32) {
    %c0_i32 = arith.constant 0 : i32
    %c0_i32_0 = arith.constant 0 : i32
    %c0_i32_1 = arith.constant 0 : i32
    return %c0_i32, %c0_i32_0 : i32, i32
  }
  func.func @transform_19(%arg0: i32) -> (i32, i32, i32) {
    %c0_i32 = arith.constant 0 : i32
    %c0_i32_0 = arith.constant 0 : i32
    %c0_i32_1 = arith.constant 0 : i32
    return %arg0, %c0_i32, %c0_i32_0 : i32, i32, i32
  }
}

module attributes {stable_mosaic.version = 11 : i64} {
  func.func @_decoder_layer_kernel(%arg0: i32, %arg1: memref<1x8x32xf32, #tpu.memory_space<vmem>>, %arg2: memref<1x8x32xf32, #tpu.memory_space<vmem>>, %arg3: memref<1x1x8xf32, #tpu.memory_space<vmem>>, %arg4: memref<1x1x8xf32, #tpu.memory_space<vmem>>, %arg5: memref<32x96xbf16, #tpu.memory_space<vmem>>, %arg6: memref<32x32xbf16, #tpu.memory_space<vmem>>, %arg7: memref<32x32xbf16, #tpu.memory_space<vmem>>, %arg8: memref<32x64xbf16, #tpu.memory_space<vmem>>, %arg9: memref<32x32xbf16, #tpu.memory_space<vmem>>, %arg10: memref<32x64xbf16, #tpu.memory_space<vmem>>, %arg11: memref<1x64xf32, #tpu.memory_space<vmem>>, %arg12: memref<64x32xbf16, #tpu.memory_space<vmem>>, %arg13: memref<1x32xf32, #tpu.memory_space<vmem>>, %arg14: memref<1x32xf32, #tpu.memory_space<vmem>>, %arg15: memref<1x32xf32, #tpu.memory_space<vmem>>, %arg16: memref<1x32xf32, #tpu.memory_space<vmem>>, %arg17: memref<1x32xf32, #tpu.memory_space<vmem>>, %arg18: memref<1x32xf32, #tpu.memory_space<vmem>>, %arg19: memref<1x32xf32, #tpu.memory_space<vmem>>, %arg20: memref<1x8x32xf32, #tpu.memory_space<vmem>>) attributes {dimension_semantics = [#tpu.dimension_semantics<parallel>], iteration_bounds = array<i64: 2>, scalar_prefetch = 0 : i64, scratch_operands = 0 : i64, tpu.core_type = #tpu.core_type<tc>, window_params = [{transform_indices = @transform_0, window_bounds = array<i64: 1, 8, 32>}, {transform_indices = @transform_1, window_bounds = array<i64: 1, 8, 32>}, {transform_indices = @transform_2, window_bounds = array<i64: 1, 1, 8>}, {transform_indices = @transform_3, window_bounds = array<i64: 1, 1, 8>}, {pipeline_mode = #tpu.pipeline_mode<synchronous>, transform_indices = @transform_4, window_bounds = array<i64: 32, 96>}, {pipeline_mode = #tpu.pipeline_mode<synchronous>, transform_indices = @transform_5, window_bounds = array<i64: 32, 32>}, {pipeline_mode = #tpu.pipeline_mode<synchronous>, transform_indices = @transform_6, window_bounds = array<i64: 32, 32>}, {pipeline_mode = #tpu.pipeline_mode<synchronous>, transform_indices = @transform_7, window_bounds = array<i64: 32, 64>}, {pipeline_mode = #tpu.pipeline_mode<synchronous>, transform_indices = @transform_8, window_bounds = array<i64: 32, 32>}, {pipeline_mode = #tpu.pipeline_mode<synchronous>, transform_indices = @transform_9, window_bounds = array<i64: 32, 64>}, {pipeline_mode = #tpu.pipeline_mode<synchronous>, transform_indices = @transform_10, window_bounds = array<i64: 1, 64>}, {pipeline_mode = #tpu.pipeline_mode<synchronous>, transform_indices = @transform_11, window_bounds = array<i64: 64, 32>}, {pipeline_mode = #tpu.pipeline_mode<synchronous>, transform_indices = @transform_12, window_bounds = array<i64: 1, 32>}, {pipeline_mode = #tpu.pipeline_mode<synchronous>, transform_indices = @transform_13, window_bounds = array<i64: 1, 32>}, {pipeline_mode = #tpu.pipeline_mode<synchronous>, transform_indices = @transform_14, window_bounds = array<i64: 1, 32>}, {pipeline_mode = #tpu.pipeline_mode<synchronous>, transform_indices = @transform_15, window_bounds = array<i64: 1, 32>}, {pipeline_mode = #tpu.pipeline_mode<synchronous>, transform_indices = @transform_16, window_bounds = array<i64: 1, 32>}, {pipeline_mode = #tpu.pipeline_mode<synchronous>, transform_indices = @transform_17, window_bounds = array<i64: 1, 32>}, {pipeline_mode = #tpu.pipeline_mode<synchronous>, transform_indices = @transform_18, window_bounds = array<i64: 1, 32>}, {transform_indices = @transform_19, window_bounds = array<i64: 1, 8, 32>}]} {
    %c0 = arith.constant 0 : index
    %c0_0 = arith.constant 0 : index
    %c0_1 = arith.constant 0 : index
    %0 = vector.load %arg1[%c0, %c0_0, %c0_1] : memref<1x8x32xf32, #tpu.memory_space<vmem>>, vector<1x8x32xf32>
    %1 = vector.shape_cast %0 : vector<1x8x32xf32> to vector<8x32xf32>
    %c0_2 = arith.constant 0 : index
    %c0_3 = arith.constant 0 : index
    %c0_4 = arith.constant 0 : index
    %2 = vector.load %arg2[%c0_2, %c0_3, %c0_4] : memref<1x8x32xf32, #tpu.memory_space<vmem>>, vector<1x8x32xf32>
    %3 = vector.shape_cast %2 : vector<1x8x32xf32> to vector<8x32xf32>
    %c0_5 = arith.constant 0 : index
    %c0_6 = arith.constant 0 : index
    %c0_7 = arith.constant 0 : index
    %4 = vector.load %arg3[%c0_5, %c0_6, %c0_7] : memref<1x1x8xf32, #tpu.memory_space<vmem>>, vector<1x1x8xf32>
    %5 = vector.shape_cast %4 : vector<1x1x8xf32> to vector<1x8xf32>
    %c0_8 = arith.constant 0 : index
    %c0_9 = arith.constant 0 : index
    %c0_10 = arith.constant 0 : index
    %6 = vector.load %arg4[%c0_8, %c0_9, %c0_10] : memref<1x1x8xf32, #tpu.memory_space<vmem>>, vector<1x1x8xf32>
    %7 = vector.shape_cast %6 : vector<1x1x8xf32> to vector<1x8xf32>
    %8 = tpu.iota {dimensions = array<i32: 0>} : vector<8x8xi32>
    %9 = tpu.iota {dimensions = array<i32: 1>} : vector<8x8xi32>
    %cst = arith.constant 0.000000e+00 : f32
    %10 = vector.broadcast %cst : f32 to vector<1x8xf32>
    %11 = arith.cmpf oeq, %5, %10 : vector<1x8xf32>
    %cst_11 = arith.constant -1.000000e+10 : f32
    %cst_12 = arith.constant 0.000000e+00 : f32
    %12 = vector.broadcast %cst_11 : f32 to vector<1x8xf32>
    %13 = vector.broadcast %cst_12 : f32 to vector<1x8xf32>
    %14 = arith.select %11, %12, %13 : vector<1x8xi1>, vector<1x8xf32>
    %15 = arith.cmpi sgt, %9, %8 : vector<8x8xi32>
    %cst_13 = arith.constant -1.000000e+10 : f32
    %cst_14 = arith.constant 0.000000e+00 : f32
    %16 = vector.broadcast %cst_13 : f32 to vector<8x8xf32>
    %17 = vector.broadcast %cst_14 : f32 to vector<8x8xf32>
    %18 = arith.select %15, %16, %17 : vector<8x8xi1>, vector<8x8xf32>
    %19 = vector.broadcast %14 : vector<1x8xf32> to vector<8x8xf32>
    %20 = arith.addf %19, %18 : vector<8x8xf32>
    %cst_15 = arith.constant 0.000000e+00 : f32
    %21 = vector.broadcast %cst_15 : f32 to vector<1x8xf32>
    %22 = arith.cmpf oeq, %7, %21 : vector<1x8xf32>
    %cst_16 = arith.constant -1.000000e+10 : f32
    %cst_17 = arith.constant 0.000000e+00 : f32
    %23 = vector.broadcast %cst_16 : f32 to vector<1x8xf32>
    %24 = vector.broadcast %cst_17 : f32 to vector<1x8xf32>
    %25 = arith.select %22, %23, %24 : vector<1x8xi1>, vector<1x8xf32>
    %c0_18 = arith.constant 0 : index
    %c0_19 = arith.constant 0 : index
    %26 = vector.load %arg5[%c0_18, %c0_19] : memref<32x96xbf16, #tpu.memory_space<vmem>>, vector<32x96xbf16>
    %27 = arith.truncf %1 : vector<8x32xf32> to vector<8x32xbf16>
    %cst_20 = arith.constant dense<0.000000e+00> : vector<8x96xf32>
    %28 = tpu.matmul %27, %26, %cst_20 {dimension_numbers = #tpu.dot_dimension_numbers<[1], [0], [0], [1], [0, 0, 1, 1], [], []>} : vector<8x32xbf16>, vector<32x96xbf16>, vector<8x96xf32> -> vector<8x96xf32>
    %29 = vector.extract_strided_slice %28 {offsets = [0, 0], sizes = [8, 32], strides = [1, 1]} : vector<8x96xf32> to vector<8x32xf32>
    %30 = vector.extract_strided_slice %28 {offsets = [0, 32], sizes = [8, 32], strides = [1, 1]} : vector<8x96xf32> to vector<8x32xf32>
    %31 = vector.extract_strided_slice %28 {offsets = [0, 64], sizes = [8, 32], strides = [1, 1]} : vector<8x96xf32> to vector<8x32xf32>
    %32 = vector.extract_strided_slice %29 {offsets = [0, 0], sizes = [8, 8], strides = [1, 1]} : vector<8x32xf32> to vector<8x8xf32>
    %33 = vector.extract_strided_slice %30 {offsets = [0, 0], sizes = [8, 8], strides = [1, 1]} : vector<8x32xf32> to vector<8x8xf32>
    %34 = vector.extract_strided_slice %31 {offsets = [0, 0], sizes = [8, 8], strides = [1, 1]} : vector<8x32xf32> to vector<8x8xf32>
    %35 = tpu.transpose %33, [1, 0] : vector<8x8xf32> -> vector<8x8xf32>
    %36 = arith.truncf %32 : vector<8x8xf32> to vector<8x8xbf16>
    %37 = arith.truncf %35 : vector<8x8xf32> to vector<8x8xbf16>
    %cst_21 = arith.constant dense<0.000000e+00> : vector<8x8xf32>
    %38 = tpu.matmul %36, %37, %cst_21 {dimension_numbers = #tpu.dot_dimension_numbers<[1], [0], [0], [1], [0, 0, 1, 1], [], []>} : vector<8x8xbf16>, vector<8x8xbf16>, vector<8x8xf32> -> vector<8x8xf32>
    %cst_22 = arith.constant 0.353553385 : f32
    %39 = vector.broadcast %cst_22 : f32 to vector<8x8xf32>
    %40 = arith.mulf %38, %39 : vector<8x8xf32>
    %41 = arith.addf %40, %20 : vector<8x8xf32>
    %cst_23 = arith.constant dense<0xFF800000> : vector<8xf32>
    %42 = vector.multi_reduction <maximumf>, %41, %cst_23 [1] : vector<8x8xf32> to vector<8xf32>
    %43 = vector.shape_cast %42 : vector<8xf32> to vector<8x1xf32>
    %44 = vector.broadcast %43 : vector<8x1xf32> to vector<8x8xf32>
    %45 = arith.subf %41, %44 : vector<8x8xf32>
    %46 = math.exp %45 : vector<8x8xf32>
    %cst_24 = arith.constant dense<0.000000e+00> : vector<8xf32>
    %47 = vector.multi_reduction <add>, %46, %cst_24 [1] : vector<8x8xf32> to vector<8xf32>
    %48 = vector.shape_cast %47 : vector<8xf32> to vector<8x1xf32>
    %49 = tpu.reciprocal %48 {approx = true} : vector<8x1xf32> -> vector<8x1xf32>
    %50 = vector.broadcast %49 : vector<8x1xf32> to vector<8x8xf32>
    %51 = arith.mulf %46, %50 : vector<8x8xf32>
    %52 = arith.truncf %51 : vector<8x8xf32> to vector<8x8xbf16>
    %53 = arith.truncf %34 : vector<8x8xf32> to vector<8x8xbf16>
    %cst_25 = arith.constant dense<0.000000e+00> : vector<8x8xf32>
    %54 = tpu.matmul %52, %53, %cst_25 {dimension_numbers = #tpu.dot_dimension_numbers<[1], [0], [0], [1], [0, 0, 1, 1], [], []>} : vector<8x8xbf16>, vector<8x8xbf16>, vector<8x8xf32> -> vector<8x8xf32>
    %55 = vector.extract_strided_slice %29 {offsets = [0, 8], sizes = [8, 8], strides = [1, 1]} : vector<8x32xf32> to vector<8x8xf32>
    %56 = vector.extract_strided_slice %30 {offsets = [0, 8], sizes = [8, 8], strides = [1, 1]} : vector<8x32xf32> to vector<8x8xf32>
    %57 = vector.extract_strided_slice %31 {offsets = [0, 8], sizes = [8, 8], strides = [1, 1]} : vector<8x32xf32> to vector<8x8xf32>
    %58 = tpu.transpose %56, [1, 0] : vector<8x8xf32> -> vector<8x8xf32>
    %59 = arith.truncf %55 : vector<8x8xf32> to vector<8x8xbf16>
    %60 = arith.truncf %58 : vector<8x8xf32> to vector<8x8xbf16>
    %cst_26 = arith.constant dense<0.000000e+00> : vector<8x8xf32>
    %61 = tpu.matmul %59, %60, %cst_26 {dimension_numbers = #tpu.dot_dimension_numbers<[1], [0], [0], [1], [0, 0, 1, 1], [], []>} : vector<8x8xbf16>, vector<8x8xbf16>, vector<8x8xf32> -> vector<8x8xf32>
    %cst_27 = arith.constant 0.353553385 : f32
    %62 = vector.broadcast %cst_27 : f32 to vector<8x8xf32>
    %63 = arith.mulf %61, %62 : vector<8x8xf32>
    %64 = arith.addf %63, %20 : vector<8x8xf32>
    %cst_28 = arith.constant dense<0xFF800000> : vector<8xf32>
    %65 = vector.multi_reduction <maximumf>, %64, %cst_28 [1] : vector<8x8xf32> to vector<8xf32>
    %66 = vector.shape_cast %65 : vector<8xf32> to vector<8x1xf32>
    %67 = vector.broadcast %66 : vector<8x1xf32> to vector<8x8xf32>
    %68 = arith.subf %64, %67 : vector<8x8xf32>
    %69 = math.exp %68 : vector<8x8xf32>
    %cst_29 = arith.constant dense<0.000000e+00> : vector<8xf32>
    %70 = vector.multi_reduction <add>, %69, %cst_29 [1] : vector<8x8xf32> to vector<8xf32>
    %71 = vector.shape_cast %70 : vector<8xf32> to vector<8x1xf32>
    %72 = tpu.reciprocal %71 {approx = true} : vector<8x1xf32> -> vector<8x1xf32>
    %73 = vector.broadcast %72 : vector<8x1xf32> to vector<8x8xf32>
    %74 = arith.mulf %69, %73 : vector<8x8xf32>
    %75 = arith.truncf %74 : vector<8x8xf32> to vector<8x8xbf16>
    %76 = arith.truncf %57 : vector<8x8xf32> to vector<8x8xbf16>
    %cst_30 = arith.constant dense<0.000000e+00> : vector<8x8xf32>
    %77 = tpu.matmul %75, %76, %cst_30 {dimension_numbers = #tpu.dot_dimension_numbers<[1], [0], [0], [1], [0, 0, 1, 1], [], []>} : vector<8x8xbf16>, vector<8x8xbf16>, vector<8x8xf32> -> vector<8x8xf32>
    %78 = vector.extract_strided_slice %29 {offsets = [0, 16], sizes = [8, 8], strides = [1, 1]} : vector<8x32xf32> to vector<8x8xf32>
    %79 = vector.extract_strided_slice %30 {offsets = [0, 16], sizes = [8, 8], strides = [1, 1]} : vector<8x32xf32> to vector<8x8xf32>
    %80 = vector.extract_strided_slice %31 {offsets = [0, 16], sizes = [8, 8], strides = [1, 1]} : vector<8x32xf32> to vector<8x8xf32>
    %81 = tpu.transpose %79, [1, 0] : vector<8x8xf32> -> vector<8x8xf32>
    %82 = arith.truncf %78 : vector<8x8xf32> to vector<8x8xbf16>
    %83 = arith.truncf %81 : vector<8x8xf32> to vector<8x8xbf16>
    %cst_31 = arith.constant dense<0.000000e+00> : vector<8x8xf32>
    %84 = tpu.matmul %82, %83, %cst_31 {dimension_numbers = #tpu.dot_dimension_numbers<[1], [0], [0], [1], [0, 0, 1, 1], [], []>} : vector<8x8xbf16>, vector<8x8xbf16>, vector<8x8xf32> -> vector<8x8xf32>
    %cst_32 = arith.constant 0.353553385 : f32
    %85 = vector.broadcast %cst_32 : f32 to vector<8x8xf32>
    %86 = arith.mulf %84, %85 : vector<8x8xf32>
    %87 = arith.addf %86, %20 : vector<8x8xf32>
    %cst_33 = arith.constant dense<0xFF800000> : vector<8xf32>
    %88 = vector.multi_reduction <maximumf>, %87, %cst_33 [1] : vector<8x8xf32> to vector<8xf32>
    %89 = vector.shape_cast %88 : vector<8xf32> to vector<8x1xf32>
    %90 = vector.broadcast %89 : vector<8x1xf32> to vector<8x8xf32>
    %91 = arith.subf %87, %90 : vector<8x8xf32>
    %92 = math.exp %91 : vector<8x8xf32>
    %cst_34 = arith.constant dense<0.000000e+00> : vector<8xf32>
    %93 = vector.multi_reduction <add>, %92, %cst_34 [1] : vector<8x8xf32> to vector<8xf32>
    %94 = vector.shape_cast %93 : vector<8xf32> to vector<8x1xf32>
    %95 = tpu.reciprocal %94 {approx = true} : vector<8x1xf32> -> vector<8x1xf32>
    %96 = vector.broadcast %95 : vector<8x1xf32> to vector<8x8xf32>
    %97 = arith.mulf %92, %96 : vector<8x8xf32>
    %98 = arith.truncf %97 : vector<8x8xf32> to vector<8x8xbf16>
    %99 = arith.truncf %80 : vector<8x8xf32> to vector<8x8xbf16>
    %cst_35 = arith.constant dense<0.000000e+00> : vector<8x8xf32>
    %100 = tpu.matmul %98, %99, %cst_35 {dimension_numbers = #tpu.dot_dimension_numbers<[1], [0], [0], [1], [0, 0, 1, 1], [], []>} : vector<8x8xbf16>, vector<8x8xbf16>, vector<8x8xf32> -> vector<8x8xf32>
    %101 = vector.extract_strided_slice %29 {offsets = [0, 24], sizes = [8, 8], strides = [1, 1]} : vector<8x32xf32> to vector<8x8xf32>
    %102 = vector.extract_strided_slice %30 {offsets = [0, 24], sizes = [8, 8], strides = [1, 1]} : vector<8x32xf32> to vector<8x8xf32>
    %103 = vector.extract_strided_slice %31 {offsets = [0, 24], sizes = [8, 8], strides = [1, 1]} : vector<8x32xf32> to vector<8x8xf32>
    %104 = tpu.transpose %102, [1, 0] : vector<8x8xf32> -> vector<8x8xf32>
    %105 = arith.truncf %101 : vector<8x8xf32> to vector<8x8xbf16>
    %106 = arith.truncf %104 : vector<8x8xf32> to vector<8x8xbf16>
    %cst_36 = arith.constant dense<0.000000e+00> : vector<8x8xf32>
    %107 = tpu.matmul %105, %106, %cst_36 {dimension_numbers = #tpu.dot_dimension_numbers<[1], [0], [0], [1], [0, 0, 1, 1], [], []>} : vector<8x8xbf16>, vector<8x8xbf16>, vector<8x8xf32> -> vector<8x8xf32>
    %cst_37 = arith.constant 0.353553385 : f32
    %108 = vector.broadcast %cst_37 : f32 to vector<8x8xf32>
    %109 = arith.mulf %107, %108 : vector<8x8xf32>
    %110 = arith.addf %109, %20 : vector<8x8xf32>
    %cst_38 = arith.constant dense<0xFF800000> : vector<8xf32>
    %111 = vector.multi_reduction <maximumf>, %110, %cst_38 [1] : vector<8x8xf32> to vector<8xf32>
    %112 = vector.shape_cast %111 : vector<8xf32> to vector<8x1xf32>
    %113 = vector.broadcast %112 : vector<8x1xf32> to vector<8x8xf32>
    %114 = arith.subf %110, %113 : vector<8x8xf32>
    %115 = math.exp %114 : vector<8x8xf32>
    %cst_39 = arith.constant dense<0.000000e+00> : vector<8xf32>
    %116 = vector.multi_reduction <add>, %115, %cst_39 [1] : vector<8x8xf32> to vector<8xf32>
    %117 = vector.shape_cast %116 : vector<8xf32> to vector<8x1xf32>
    %118 = tpu.reciprocal %117 {approx = true} : vector<8x1xf32> -> vector<8x1xf32>
    %119 = vector.broadcast %118 : vector<8x1xf32> to vector<8x8xf32>
    %120 = arith.mulf %115, %119 : vector<8x8xf32>
    %121 = arith.truncf %120 : vector<8x8xf32> to vector<8x8xbf16>
    %122 = arith.truncf %103 : vector<8x8xf32> to vector<8x8xbf16>
    %cst_40 = arith.constant dense<0.000000e+00> : vector<8x8xf32>
    %123 = tpu.matmul %121, %122, %cst_40 {dimension_numbers = #tpu.dot_dimension_numbers<[1], [0], [0], [1], [0, 0, 1, 1], [], []>} : vector<8x8xbf16>, vector<8x8xbf16>, vector<8x8xf32> -> vector<8x8xf32>
    %124 = tpu.concatenate %54, %77, %100, %123 in 1 : vector<8x8xf32>, vector<8x8xf32>, vector<8x8xf32>, vector<8x8xf32> -> vector<8x32xf32>
    %c0_41 = arith.constant 0 : index
    %c0_42 = arith.constant 0 : index
    %125 = vector.load %arg6[%c0_41, %c0_42] : memref<32x32xbf16, #tpu.memory_space<vmem>>, vector<32x32xbf16>
    %126 = arith.truncf %124 : vector<8x32xf32> to vector<8x32xbf16>
    %cst_43 = arith.constant dense<0.000000e+00> : vector<8x32xf32>
    %127 = tpu.matmul %126, %125, %cst_43 {dimension_numbers = #tpu.dot_dimension_numbers<[1], [0], [0], [1], [0, 0, 1, 1], [], []>} : vector<8x32xbf16>, vector<32x32xbf16>, vector<8x32xf32> -> vector<8x32xf32>
    %128 = arith.addf %1, %127 : vector<8x32xf32>
    %cst_44 = arith.constant dense<0.000000e+00> : vector<8xf32>
    %129 = vector.multi_reduction <add>, %128, %cst_44 [1] : vector<8x32xf32> to vector<8xf32>
    %130 = vector.shape_cast %129 : vector<8xf32> to vector<8x1xf32>
    %cst_45 = arith.constant 3.200000e+01 : f32
    %131 = vector.broadcast %cst_45 : f32 to vector<8x1xf32>
    %132 = arith.divf %130, %131 : vector<8x1xf32>
    %133 = vector.broadcast %132 : vector<8x1xf32> to vector<8x32xf32>
    %134 = arith.subf %128, %133 : vector<8x32xf32>
    %135 = arith.mulf %134, %134 : vector<8x32xf32>
    %cst_46 = arith.constant dense<0.000000e+00> : vector<8xf32>
    %136 = vector.multi_reduction <add>, %135, %cst_46 [1] : vector<8x32xf32> to vector<8xf32>
    %137 = vector.shape_cast %136 : vector<8xf32> to vector<8x1xf32>
    %cst_47 = arith.constant 3.200000e+01 : f32
    %138 = vector.broadcast %cst_47 : f32 to vector<8x1xf32>
    %139 = arith.divf %137, %138 : vector<8x1xf32>
    %cst_48 = arith.constant 9.99999974E-6 : f32
    %140 = vector.broadcast %cst_48 : f32 to vector<8x1xf32>
    %141 = arith.addf %139, %140 : vector<8x1xf32>
    %142 = math.rsqrt %141 : vector<8x1xf32>
    %143 = vector.broadcast %142 : vector<8x1xf32> to vector<8x32xf32>
    %144 = arith.mulf %134, %143 : vector<8x32xf32>
    %c0_49 = arith.constant 0 : index
    %c0_50 = arith.constant 0 : index
    %145 = vector.load %arg14[%c0_49, %c0_50] : memref<1x32xf32, #tpu.memory_space<vmem>>, vector<1x32xf32>
    %146 = vector.broadcast %145 : vector<1x32xf32> to vector<8x32xf32>
    %147 = arith.mulf %144, %146 : vector<8x32xf32>
    %c0_51 = arith.constant 0 : index
    %c0_52 = arith.constant 0 : index
    %148 = vector.load %arg15[%c0_51, %c0_52] : memref<1x32xf32, #tpu.memory_space<vmem>>, vector<1x32xf32>
    %149 = vector.broadcast %148 : vector<1x32xf32> to vector<8x32xf32>
    %150 = arith.addf %147, %149 : vector<8x32xf32>
    %c0_53 = arith.constant 0 : index
    %c0_54 = arith.constant 0 : index
    %151 = vector.load %arg7[%c0_53, %c0_54] : memref<32x32xbf16, #tpu.memory_space<vmem>>, vector<32x32xbf16>
    %152 = arith.truncf %150 : vector<8x32xf32> to vector<8x32xbf16>
    %cst_55 = arith.constant dense<0.000000e+00> : vector<8x32xf32>
    %153 = tpu.matmul %152, %151, %cst_55 {dimension_numbers = #tpu.dot_dimension_numbers<[1], [0], [0], [1], [0, 0, 1, 1], [], []>} : vector<8x32xbf16>, vector<32x32xbf16>, vector<8x32xf32> -> vector<8x32xf32>
    %c0_56 = arith.constant 0 : index
    %c0_57 = arith.constant 0 : index
    %154 = vector.load %arg8[%c0_56, %c0_57] : memref<32x64xbf16, #tpu.memory_space<vmem>>, vector<32x64xbf16>
    %155 = arith.truncf %3 : vector<8x32xf32> to vector<8x32xbf16>
    %cst_58 = arith.constant dense<0.000000e+00> : vector<8x64xf32>
    %156 = tpu.matmul %155, %154, %cst_58 {dimension_numbers = #tpu.dot_dimension_numbers<[1], [0], [0], [1], [0, 0, 1, 1], [], []>} : vector<8x32xbf16>, vector<32x64xbf16>, vector<8x64xf32> -> vector<8x64xf32>
    %157 = vector.extract_strided_slice %156 {offsets = [0, 0], sizes = [8, 32], strides = [1, 1]} : vector<8x64xf32> to vector<8x32xf32>
    %158 = vector.extract_strided_slice %156 {offsets = [0, 32], sizes = [8, 32], strides = [1, 1]} : vector<8x64xf32> to vector<8x32xf32>
    %159 = vector.extract_strided_slice %153 {offsets = [0, 0], sizes = [8, 8], strides = [1, 1]} : vector<8x32xf32> to vector<8x8xf32>
    %160 = vector.extract_strided_slice %157 {offsets = [0, 0], sizes = [8, 8], strides = [1, 1]} : vector<8x32xf32> to vector<8x8xf32>
    %161 = vector.extract_strided_slice %158 {offsets = [0, 0], sizes = [8, 8], strides = [1, 1]} : vector<8x32xf32> to vector<8x8xf32>
    %162 = tpu.transpose %160, [1, 0] : vector<8x8xf32> -> vector<8x8xf32>
    %163 = arith.truncf %159 : vector<8x8xf32> to vector<8x8xbf16>
    %164 = arith.truncf %162 : vector<8x8xf32> to vector<8x8xbf16>
    %cst_59 = arith.constant dense<0.000000e+00> : vector<8x8xf32>
    %165 = tpu.matmul %163, %164, %cst_59 {dimension_numbers = #tpu.dot_dimension_numbers<[1], [0], [0], [1], [0, 0, 1, 1], [], []>} : vector<8x8xbf16>, vector<8x8xbf16>, vector<8x8xf32> -> vector<8x8xf32>
    %cst_60 = arith.constant 0.353553385 : f32
    %166 = vector.broadcast %cst_60 : f32 to vector<8x8xf32>
    %167 = arith.mulf %165, %166 : vector<8x8xf32>
    %168 = vector.broadcast %25 : vector<1x8xf32> to vector<8x8xf32>
    %169 = arith.addf %167, %168 : vector<8x8xf32>
    %cst_61 = arith.constant dense<0xFF800000> : vector<8xf32>
    %170 = vector.multi_reduction <maximumf>, %169, %cst_61 [1] : vector<8x8xf32> to vector<8xf32>
    %171 = vector.shape_cast %170 : vector<8xf32> to vector<8x1xf32>
    %172 = vector.broadcast %171 : vector<8x1xf32> to vector<8x8xf32>
    %173 = arith.subf %169, %172 : vector<8x8xf32>
    %174 = math.exp %173 : vector<8x8xf32>
    %cst_62 = arith.constant dense<0.000000e+00> : vector<8xf32>
    %175 = vector.multi_reduction <add>, %174, %cst_62 [1] : vector<8x8xf32> to vector<8xf32>
    %176 = vector.shape_cast %175 : vector<8xf32> to vector<8x1xf32>
    %177 = tpu.reciprocal %176 {approx = true} : vector<8x1xf32> -> vector<8x1xf32>
    %178 = vector.broadcast %177 : vector<8x1xf32> to vector<8x8xf32>
    %179 = arith.mulf %174, %178 : vector<8x8xf32>
    %180 = arith.truncf %179 : vector<8x8xf32> to vector<8x8xbf16>
    %181 = arith.truncf %161 : vector<8x8xf32> to vector<8x8xbf16>
    %cst_63 = arith.constant dense<0.000000e+00> : vector<8x8xf32>
    %182 = tpu.matmul %180, %181, %cst_63 {dimension_numbers = #tpu.dot_dimension_numbers<[1], [0], [0], [1], [0, 0, 1, 1], [], []>} : vector<8x8xbf16>, vector<8x8xbf16>, vector<8x8xf32> -> vector<8x8xf32>
    %183 = vector.extract_strided_slice %153 {offsets = [0, 8], sizes = [8, 8], strides = [1, 1]} : vector<8x32xf32> to vector<8x8xf32>
    %184 = vector.extract_strided_slice %157 {offsets = [0, 8], sizes = [8, 8], strides = [1, 1]} : vector<8x32xf32> to vector<8x8xf32>
    %185 = vector.extract_strided_slice %158 {offsets = [0, 8], sizes = [8, 8], strides = [1, 1]} : vector<8x32xf32> to vector<8x8xf32>
    %186 = tpu.transpose %184, [1, 0] : vector<8x8xf32> -> vector<8x8xf32>
    %187 = arith.truncf %183 : vector<8x8xf32> to vector<8x8xbf16>
    %188 = arith.truncf %186 : vector<8x8xf32> to vector<8x8xbf16>
    %cst_64 = arith.constant dense<0.000000e+00> : vector<8x8xf32>
    %189 = tpu.matmul %187, %188, %cst_64 {dimension_numbers = #tpu.dot_dimension_numbers<[1], [0], [0], [1], [0, 0, 1, 1], [], []>} : vector<8x8xbf16>, vector<8x8xbf16>, vector<8x8xf32> -> vector<8x8xf32>
    %cst_65 = arith.constant 0.353553385 : f32
    %190 = vector.broadcast %cst_65 : f32 to vector<8x8xf32>
    %191 = arith.mulf %189, %190 : vector<8x8xf32>
    %192 = vector.broadcast %25 : vector<1x8xf32> to vector<8x8xf32>
    %193 = arith.addf %191, %192 : vector<8x8xf32>
    %cst_66 = arith.constant dense<0xFF800000> : vector<8xf32>
    %194 = vector.multi_reduction <maximumf>, %193, %cst_66 [1] : vector<8x8xf32> to vector<8xf32>
    %195 = vector.shape_cast %194 : vector<8xf32> to vector<8x1xf32>
    %196 = vector.broadcast %195 : vector<8x1xf32> to vector<8x8xf32>
    %197 = arith.subf %193, %196 : vector<8x8xf32>
    %198 = math.exp %197 : vector<8x8xf32>
    %cst_67 = arith.constant dense<0.000000e+00> : vector<8xf32>
    %199 = vector.multi_reduction <add>, %198, %cst_67 [1] : vector<8x8xf32> to vector<8xf32>
    %200 = vector.shape_cast %199 : vector<8xf32> to vector<8x1xf32>
    %201 = tpu.reciprocal %200 {approx = true} : vector<8x1xf32> -> vector<8x1xf32>
    %202 = vector.broadcast %201 : vector<8x1xf32> to vector<8x8xf32>
    %203 = arith.mulf %198, %202 : vector<8x8xf32>
    %204 = arith.truncf %203 : vector<8x8xf32> to vector<8x8xbf16>
    %205 = arith.truncf %185 : vector<8x8xf32> to vector<8x8xbf16>
    %cst_68 = arith.constant dense<0.000000e+00> : vector<8x8xf32>
    %206 = tpu.matmul %204, %205, %cst_68 {dimension_numbers = #tpu.dot_dimension_numbers<[1], [0], [0], [1], [0, 0, 1, 1], [], []>} : vector<8x8xbf16>, vector<8x8xbf16>, vector<8x8xf32> -> vector<8x8xf32>
    %207 = vector.extract_strided_slice %153 {offsets = [0, 16], sizes = [8, 8], strides = [1, 1]} : vector<8x32xf32> to vector<8x8xf32>
    %208 = vector.extract_strided_slice %157 {offsets = [0, 16], sizes = [8, 8], strides = [1, 1]} : vector<8x32xf32> to vector<8x8xf32>
    %209 = vector.extract_strided_slice %158 {offsets = [0, 16], sizes = [8, 8], strides = [1, 1]} : vector<8x32xf32> to vector<8x8xf32>
    %210 = tpu.transpose %208, [1, 0] : vector<8x8xf32> -> vector<8x8xf32>
    %211 = arith.truncf %207 : vector<8x8xf32> to vector<8x8xbf16>
    %212 = arith.truncf %210 : vector<8x8xf32> to vector<8x8xbf16>
    %cst_69 = arith.constant dense<0.000000e+00> : vector<8x8xf32>
    %213 = tpu.matmul %211, %212, %cst_69 {dimension_numbers = #tpu.dot_dimension_numbers<[1], [0], [0], [1], [0, 0, 1, 1], [], []>} : vector<8x8xbf16>, vector<8x8xbf16>, vector<8x8xf32> -> vector<8x8xf32>
    %cst_70 = arith.constant 0.353553385 : f32
    %214 = vector.broadcast %cst_70 : f32 to vector<8x8xf32>
    %215 = arith.mulf %213, %214 : vector<8x8xf32>
    %216 = vector.broadcast %25 : vector<1x8xf32> to vector<8x8xf32>
    %217 = arith.addf %215, %216 : vector<8x8xf32>
    %cst_71 = arith.constant dense<0xFF800000> : vector<8xf32>
    %218 = vector.multi_reduction <maximumf>, %217, %cst_71 [1] : vector<8x8xf32> to vector<8xf32>
    %219 = vector.shape_cast %218 : vector<8xf32> to vector<8x1xf32>
    %220 = vector.broadcast %219 : vector<8x1xf32> to vector<8x8xf32>
    %221 = arith.subf %217, %220 : vector<8x8xf32>
    %222 = math.exp %221 : vector<8x8xf32>
    %cst_72 = arith.constant dense<0.000000e+00> : vector<8xf32>
    %223 = vector.multi_reduction <add>, %222, %cst_72 [1] : vector<8x8xf32> to vector<8xf32>
    %224 = vector.shape_cast %223 : vector<8xf32> to vector<8x1xf32>
    %225 = tpu.reciprocal %224 {approx = true} : vector<8x1xf32> -> vector<8x1xf32>
    %226 = vector.broadcast %225 : vector<8x1xf32> to vector<8x8xf32>
    %227 = arith.mulf %222, %226 : vector<8x8xf32>
    %228 = arith.truncf %227 : vector<8x8xf32> to vector<8x8xbf16>
    %229 = arith.truncf %209 : vector<8x8xf32> to vector<8x8xbf16>
    %cst_73 = arith.constant dense<0.000000e+00> : vector<8x8xf32>
    %230 = tpu.matmul %228, %229, %cst_73 {dimension_numbers = #tpu.dot_dimension_numbers<[1], [0], [0], [1], [0, 0, 1, 1], [], []>} : vector<8x8xbf16>, vector<8x8xbf16>, vector<8x8xf32> -> vector<8x8xf32>
    %231 = vector.extract_strided_slice %153 {offsets = [0, 24], sizes = [8, 8], strides = [1, 1]} : vector<8x32xf32> to vector<8x8xf32>
    %232 = vector.extract_strided_slice %157 {offsets = [0, 24], sizes = [8, 8], strides = [1, 1]} : vector<8x32xf32> to vector<8x8xf32>
    %233 = vector.extract_strided_slice %158 {offsets = [0, 24], sizes = [8, 8], strides = [1, 1]} : vector<8x32xf32> to vector<8x8xf32>
    %234 = tpu.transpose %232, [1, 0] : vector<8x8xf32> -> vector<8x8xf32>
    %235 = arith.truncf %231 : vector<8x8xf32> to vector<8x8xbf16>
    %236 = arith.truncf %234 : vector<8x8xf32> to vector<8x8xbf16>
    %cst_74 = arith.constant dense<0.000000e+00> : vector<8x8xf32>
    %237 = tpu.matmul %235, %236, %cst_74 {dimension_numbers = #tpu.dot_dimension_numbers<[1], [0], [0], [1], [0, 0, 1, 1], [], []>} : vector<8x8xbf16>, vector<8x8xbf16>, vector<8x8xf32> -> vector<8x8xf32>
    %cst_75 = arith.constant 0.353553385 : f32
    %238 = vector.broadcast %cst_75 : f32 to vector<8x8xf32>
    %239 = arith.mulf %237, %238 : vector<8x8xf32>
    %240 = vector.broadcast %25 : vector<1x8xf32> to vector<8x8xf32>
    %241 = arith.addf %239, %240 : vector<8x8xf32>
    %cst_76 = arith.constant dense<0xFF800000> : vector<8xf32>
    %242 = vector.multi_reduction <maximumf>, %241, %cst_76 [1] : vector<8x8xf32> to vector<8xf32>
    %243 = vector.shape_cast %242 : vector<8xf32> to vector<8x1xf32>
    %244 = vector.broadcast %243 : vector<8x1xf32> to vector<8x8xf32>
    %245 = arith.subf %241, %244 : vector<8x8xf32>
    %246 = math.exp %245 : vector<8x8xf32>
    %cst_77 = arith.constant dense<0.000000e+00> : vector<8xf32>
    %247 = vector.multi_reduction <add>, %246, %cst_77 [1] : vector<8x8xf32> to vector<8xf32>
    %248 = vector.shape_cast %247 : vector<8xf32> to vector<8x1xf32>
    %249 = tpu.reciprocal %248 {approx = true} : vector<8x1xf32> -> vector<8x1xf32>
    %250 = vector.broadcast %249 : vector<8x1xf32> to vector<8x8xf32>
    %251 = arith.mulf %246, %250 : vector<8x8xf32>
    %252 = arith.truncf %251 : vector<8x8xf32> to vector<8x8xbf16>
    %253 = arith.truncf %233 : vector<8x8xf32> to vector<8x8xbf16>
    %cst_78 = arith.constant dense<0.000000e+00> : vector<8x8xf32>
    %254 = tpu.matmul %252, %253, %cst_78 {dimension_numbers = #tpu.dot_dimension_numbers<[1], [0], [0], [1], [0, 0, 1, 1], [], []>} : vector<8x8xbf16>, vector<8x8xbf16>, vector<8x8xf32> -> vector<8x8xf32>
    %255 = tpu.concatenate %182, %206, %230, %254 in 1 : vector<8x8xf32>, vector<8x8xf32>, vector<8x8xf32>, vector<8x8xf32> -> vector<8x32xf32>
    %c0_79 = arith.constant 0 : index
    %c0_80 = arith.constant 0 : index
    %256 = vector.load %arg9[%c0_79, %c0_80] : memref<32x32xbf16, #tpu.memory_space<vmem>>, vector<32x32xbf16>
    %257 = arith.truncf %255 : vector<8x32xf32> to vector<8x32xbf16>
    %cst_81 = arith.constant dense<0.000000e+00> : vector<8x32xf32>
    %258 = tpu.matmul %257, %256, %cst_81 {dimension_numbers = #tpu.dot_dimension_numbers<[1], [0], [0], [1], [0, 0, 1, 1], [], []>} : vector<8x32xbf16>, vector<32x32xbf16>, vector<8x32xf32> -> vector<8x32xf32>
    %259 = arith.addf %150, %258 : vector<8x32xf32>
    %cst_82 = arith.constant dense<0.000000e+00> : vector<8xf32>
    %260 = vector.multi_reduction <add>, %259, %cst_82 [1] : vector<8x32xf32> to vector<8xf32>
    %261 = vector.shape_cast %260 : vector<8xf32> to vector<8x1xf32>
    %cst_83 = arith.constant 3.200000e+01 : f32
    %262 = vector.broadcast %cst_83 : f32 to vector<8x1xf32>
    %263 = arith.divf %261, %262 : vector<8x1xf32>
    %264 = vector.broadcast %263 : vector<8x1xf32> to vector<8x32xf32>
    %265 = arith.subf %259, %264 : vector<8x32xf32>
    %266 = arith.mulf %265, %265 : vector<8x32xf32>
    %cst_84 = arith.constant dense<0.000000e+00> : vector<8xf32>
    %267 = vector.multi_reduction <add>, %266, %cst_84 [1] : vector<8x32xf32> to vector<8xf32>
    %268 = vector.shape_cast %267 : vector<8xf32> to vector<8x1xf32>
    %cst_85 = arith.constant 3.200000e+01 : f32
    %269 = vector.broadcast %cst_85 : f32 to vector<8x1xf32>
    %270 = arith.divf %268, %269 : vector<8x1xf32>
    %cst_86 = arith.constant 9.99999974E-6 : f32
    %271 = vector.broadcast %cst_86 : f32 to vector<8x1xf32>
    %272 = arith.addf %270, %271 : vector<8x1xf32>
    %273 = math.rsqrt %272 : vector<8x1xf32>
    %274 = vector.broadcast %273 : vector<8x1xf32> to vector<8x32xf32>
    %275 = arith.mulf %265, %274 : vector<8x32xf32>
    %c0_87 = arith.constant 0 : index
    %c0_88 = arith.constant 0 : index
    %276 = vector.load %arg16[%c0_87, %c0_88] : memref<1x32xf32, #tpu.memory_space<vmem>>, vector<1x32xf32>
    %277 = vector.broadcast %276 : vector<1x32xf32> to vector<8x32xf32>
    %278 = arith.mulf %275, %277 : vector<8x32xf32>
    %c0_89 = arith.constant 0 : index
    %c0_90 = arith.constant 0 : index
    %279 = vector.load %arg17[%c0_89, %c0_90] : memref<1x32xf32, #tpu.memory_space<vmem>>, vector<1x32xf32>
    %280 = vector.broadcast %279 : vector<1x32xf32> to vector<8x32xf32>
    %281 = arith.addf %278, %280 : vector<8x32xf32>
    %c0_91 = arith.constant 0 : index
    %c0_92 = arith.constant 0 : index
    %282 = vector.load %arg10[%c0_91, %c0_92] : memref<32x64xbf16, #tpu.memory_space<vmem>>, vector<32x64xbf16>
    %283 = arith.truncf %281 : vector<8x32xf32> to vector<8x32xbf16>
    %cst_93 = arith.constant dense<0.000000e+00> : vector<8x64xf32>
    %284 = tpu.matmul %283, %282, %cst_93 {dimension_numbers = #tpu.dot_dimension_numbers<[1], [0], [0], [1], [0, 0, 1, 1], [], []>} : vector<8x32xbf16>, vector<32x64xbf16>, vector<8x64xf32> -> vector<8x64xf32>
    %c0_94 = arith.constant 0 : index
    %c0_95 = arith.constant 0 : index
    %285 = vector.load %arg11[%c0_94, %c0_95] : memref<1x64xf32, #tpu.memory_space<vmem>>, vector<1x64xf32>
    %286 = vector.broadcast %285 : vector<1x64xf32> to vector<8x64xf32>
    %287 = arith.addf %284, %286 : vector<8x64xf32>
    %cst_96 = arith.constant 0.000000e+00 : f32
    %288 = vector.broadcast %cst_96 : f32 to vector<8x64xf32>
    %289 = arith.maximumf %287, %288 : vector<8x64xf32>
    %c0_97 = arith.constant 0 : index
    %c0_98 = arith.constant 0 : index
    %290 = vector.load %arg12[%c0_97, %c0_98] : memref<64x32xbf16, #tpu.memory_space<vmem>>, vector<64x32xbf16>
    %291 = arith.truncf %289 : vector<8x64xf32> to vector<8x64xbf16>
    %cst_99 = arith.constant dense<0.000000e+00> : vector<8x32xf32>
    %292 = tpu.matmul %291, %290, %cst_99 {dimension_numbers = #tpu.dot_dimension_numbers<[1], [0], [0], [1], [0, 0, 1, 1], [], []>} : vector<8x64xbf16>, vector<64x32xbf16>, vector<8x32xf32> -> vector<8x32xf32>
    %c0_100 = arith.constant 0 : index
    %c0_101 = arith.constant 0 : index
    %293 = vector.load %arg13[%c0_100, %c0_101] : memref<1x32xf32, #tpu.memory_space<vmem>>, vector<1x32xf32>
    %294 = vector.broadcast %293 : vector<1x32xf32> to vector<8x32xf32>
    %295 = arith.addf %292, %294 : vector<8x32xf32>
    %296 = arith.addf %281, %295 : vector<8x32xf32>
    %cst_102 = arith.constant dense<0.000000e+00> : vector<8xf32>
    %297 = vector.multi_reduction <add>, %296, %cst_102 [1] : vector<8x32xf32> to vector<8xf32>
    %298 = vector.shape_cast %297 : vector<8xf32> to vector<8x1xf32>
    %cst_103 = arith.constant 3.200000e+01 : f32
    %299 = vector.broadcast %cst_103 : f32 to vector<8x1xf32>
    %300 = arith.divf %298, %299 : vector<8x1xf32>
    %301 = vector.broadcast %300 : vector<8x1xf32> to vector<8x32xf32>
    %302 = arith.subf %296, %301 : vector<8x32xf32>
    %303 = arith.mulf %302, %302 : vector<8x32xf32>
    %cst_104 = arith.constant dense<0.000000e+00> : vector<8xf32>
    %304 = vector.multi_reduction <add>, %303, %cst_104 [1] : vector<8x32xf32> to vector<8xf32>
    %305 = vector.shape_cast %304 : vector<8xf32> to vector<8x1xf32>
    %cst_105 = arith.constant 3.200000e+01 : f32
    %306 = vector.broadcast %cst_105 : f32 to vector<8x1xf32>
    %307 = arith.divf %305, %306 : vector<8x1xf32>
    %cst_106 = arith.constant 9.99999974E-6 : f32
    %308 = vector.broadcast %cst_106 : f32 to vector<8x1xf32>
    %309 = arith.addf %307, %308 : vector<8x1xf32>
    %310 = math.rsqrt %309 : vector<8x1xf32>
    %311 = vector.broadcast %310 : vector<8x1xf32> to vector<8x32xf32>
    %312 = arith.mulf %302, %311 : vector<8x32xf32>
    %c0_107 = arith.constant 0 : index
    %c0_108 = arith.constant 0 : index
    %313 = vector.load %arg18[%c0_107, %c0_108] : memref<1x32xf32, #tpu.memory_space<vmem>>, vector<1x32xf32>
    %314 = vector.broadcast %313 : vector<1x32xf32> to vector<8x32xf32>
    %315 = arith.mulf %312, %314 : vector<8x32xf32>
    %c0_109 = arith.constant 0 : index
    %c0_110 = arith.constant 0 : index
    %316 = vector.load %arg19[%c0_109, %c0_110] : memref<1x32xf32, #tpu.memory_space<vmem>>, vector<1x32xf32>
    %317 = vector.broadcast %316 : vector<1x32xf32> to vector<8x32xf32>
    %318 = arith.addf %315, %317 : vector<8x32xf32>
    %c0_111 = arith.constant 0 : index
    %c0_112 = arith.constant 0 : index
    %c0_113 = arith.constant 0 : index
    %319 = vector.load %arg20[%c0_111, %c0_112, %c0_113] : memref<1x8x32xf32, #tpu.memory_space<vmem>>, vector<1x8x32xf32>
    %320 = vector.shape_cast %319 : vector<1x8x32xf32> to vector<8x32xf32>
    %321 = vector.shape_cast %318 : vector<8x32xf32> to vector<1x8x32xf32>
    tpu.vector_store %arg20[%c0_111, %c0_112, %c0_113], %321 {strides = array<i32>} : memref<1x8x32xf32, #tpu.memory_space<vmem>>, vector<1x8x32xf32>,
    return
  }
  func.func @transform_0(%arg0: i32) -> (i32, i32, i32) {
    %c0_i32 = arith.constant 0 : i32
    %c0_i32_0 = arith.constant 0 : i32
    %c0_i32_1 = arith.constant 0 : i32
    return %arg0, %c0_i32, %c0_i32_0 : i32, i32, i32
  }
  func.func @transform_1(%arg0: i32) -> (i32, i32, i32) {
    %c0_i32 = arith.constant 0 : i32
    %c0_i32_0 = arith.constant 0 : i32
    %c0_i32_1 = arith.constant 0 : i32
    return %arg0, %c0_i32, %c0_i32_0 : i32, i32, i32
  }
  func.func @transform_2(%arg0: i32) -> (i32, i32, i32) {
    %c0_i32 = arith.constant 0 : i32
    %c0_i32_0 = arith.constant 0 : i32
    %c0_i32_1 = arith.constant 0 : i32
    return %arg0, %c0_i32, %c0_i32_0 : i32, i32, i32
  }
  func.func @transform_3(%arg0: i32) -> (i32, i32, i32) {
    %c0_i32 = arith.constant 0 : i32
    %c0_i32_0 = arith.constant 0 : i32
    %c0_i32_1 = arith.constant 0 : i32
    return %arg0, %c0_i32, %c0_i32_0 : i32, i32, i32
  }
  func.func @transform_4(%arg0: i32) -> (i32, i32) {
    %c0_i32 = arith.constant 0 : i32
    %c0_i32_0 = arith.constant 0 : i32
    %c0_i32_1 = arith.constant 0 : i32
    return %c0_i32, %c0_i32_0 : i32, i32
  }
  func.func @transform_5(%arg0: i32) -> (i32, i32) {
    %c0_i32 = arith.constant 0 : i32
    %c0_i32_0 = arith.constant 0 : i32
    %c0_i32_1 = arith.constant 0 : i32
    return %c0_i32, %c0_i32_0 : i32, i32
  }
  func.func @transform_6(%arg0: i32) -> (i32, i32) {
    %c0_i32 = arith.constant 0 : i32
    %c0_i32_0 = arith.constant 0 : i32
    %c0_i32_1 = arith.constant 0 : i32
    return %c0_i32, %c0_i32_0 : i32, i32
  }
  func.func @transform_7(%arg0: i32) -> (i32, i32) {
    %c0_i32 = arith.constant 0 : i32
    %c0_i32_0 = arith.constant 0 : i32
    %c0_i32_1 = arith.constant 0 : i32
    return %c0_i32, %c0_i32_0 : i32, i32
  }
  func.func @transform_8(%arg0: i32) -> (i32, i32) {
    %c0_i32 = arith.constant 0 : i32
    %c0_i32_0 = arith.constant 0 : i32
    %c0_i32_1 = arith.constant 0 : i32
    return %c0_i32, %c0_i32_0 : i32, i32
  }
  func.func @transform_9(%arg0: i32) -> (i32, i32) {
    %c0_i32 = arith.constant 0 : i32
    %c0_i32_0 = arith.constant 0 : i32
    %c0_i32_1 = arith.constant 0 : i32
    return %c0_i32, %c0_i32_0 : i32, i32
  }
  func.func @transform_10(%arg0: i32) -> (i32, i32) {
    %c0_i32 = arith.constant 0 : i32
    %c0_i32_0 = arith.constant 0 : i32
    %c0_i32_1 = arith.constant 0 : i32
    return %c0_i32, %c0_i32_0 : i32, i32
  }
  func.func @transform_11(%arg0: i32) -> (i32, i32) {
    %c0_i32 = arith.constant 0 : i32
    %c0_i32_0 = arith.constant 0 : i32
    %c0_i32_1 = arith.constant 0 : i32
    return %c0_i32, %c0_i32_0 : i32, i32
  }
  func.func @transform_12(%arg0: i32) -> (i32, i32) {
    %c0_i32 = arith.constant 0 : i32
    %c0_i32_0 = arith.constant 0 : i32
    %c0_i32_1 = arith.constant 0 : i32
    return %c0_i32, %c0_i32_0 : i32, i32
  }
  func.func @transform_13(%arg0: i32) -> (i32, i32) {
    %c0_i32 = arith.constant 0 : i32
    %c0_i32_0 = arith.constant 0 : i32
    %c0_i32_1 = arith.constant 0 : i32
    return %c0_i32, %c0_i32_0 : i32, i32
  }
  func.func @transform_14(%arg0: i32) -> (i32, i32) {
    %c0_i32 = arith.constant 0 : i32
    %c0_i32_0 = arith.constant 0 : i32
    %c0_i32_1 = arith.constant 0 : i32
    return %c0_i32, %c0_i32_0 : i32, i32
  }
  func.func @transform_15(%arg0: i32) -> (i32, i32) {
    %c0_i32 = arith.constant 0 : i32
    %c0_i32_0 = arith.constant 0 : i32
    %c0_i32_1 = arith.constant 0 : i32
    return %c0_i32, %c0_i32_0 : i32, i32
  }
  func.func @transform_16(%arg0: i32) -> (i32, i32) {
    %c0_i32 = arith.constant 0 : i32
    %c0_i32_0 = arith.constant 0 : i32
    %c0_i32_1 = arith.constant 0 : i32
    return %c0_i32, %c0_i32_0 : i32, i32
  }
  func.func @transform_17(%arg0: i32) -> (i32, i32) {
    %c0_i32 = arith.constant 0 : i32
    %c0_i32_0 = arith.constant 0 : i32
    %c0_i32_1 = arith.constant 0 : i32
    return %c0_i32, %c0_i32_0 : i32, i32
  }
  func.func @transform_18(%arg0: i32) -> (i32, i32) {
    %c0_i32 = arith.constant 0 : i32
    %c0_i32_0 = arith.constant 0 : i32
    %c0_i32_1 = arith.constant 0 : i32
    return %c0_i32, %c0_i32_0 : i32, i32
  }
  func.func @transform_19(%arg0: i32) -> (i32, i32, i32) {
    %c0_i32 = arith.constant 0 : i32
    %c0_i32_0 = arith.constant 0 : i32
    %c0_i32_1 = arith.constant 0 : i32
    return %arg0, %c0_i32, %c0_i32_0 : i32, i32, i32
  }
}

</mosaic_0001>

<llo_original>
// kernel: transformer_decoder.3
$region0: #{transformer_decoder.3}
  #allocation0 [shape = 'u32[]', space=smem, size = 0x4, offset = 0x4, fixed_abs, tag = 'smem constant byte address 0x4 - core index']
  #allocation1 [shape = 'u32[144,128]{1,0:T(1,128)}', space=vmem, size = 0x12000, scoped, tag = 'internal scratch']
  %s0 = inlined_call_operand.vmem [shape: f32[2,8,32], index: 0, kind: input, shape index: {}]
  %s1 = inlined_call_operand.vmem [shape: f32[2,8,32], index: 1, kind: input, shape index: {}]
  %s2 = inlined_call_operand.vmem [shape: f32[2,1,8], index: 2, kind: input, shape index: {}]
  %s3 = inlined_call_operand.vmem [shape: f32[2,1,8], index: 3, kind: input, shape index: {}]
  %s4 = inlined_call_operand.vmem [shape: bf16[32,96], index: 4, kind: input, shape index: {}]
  %s5 = inlined_call_operand.vmem [shape: bf16[32,32], index: 5, kind: input, shape index: {}]
  %s6 = inlined_call_operand.vmem [shape: bf16[32,32], index: 6, kind: input, shape index: {}]
  %s7 = inlined_call_operand.vmem [shape: bf16[32,64], index: 7, kind: input, shape index: {}]
  %s8 = inlined_call_operand.vmem [shape: bf16[32,32], index: 8, kind: input, shape index: {}]
  %s9 = inlined_call_operand.vmem [shape: bf16[32,64], index: 9, kind: input, shape index: {}]
  %s10 = inlined_call_operand.vmem [shape: f32[1,64], index: 10, kind: input, shape index: {}]
  %s11 = inlined_call_operand.vmem [shape: bf16[64,32], index: 11, kind: input, shape index: {}]
  %s12 = inlined_call_operand.vmem [shape: f32[1,32], index: 12, kind: input, shape index: {}]
  %s13 = inlined_call_operand.vmem [shape: f32[1,32], index: 13, kind: input, shape index: {}]
  %s14 = inlined_call_operand.vmem [shape: f32[1,32], index: 14, kind: input, shape index: {}]
  %s15 = inlined_call_operand.vmem [shape: f32[1,32], index: 15, kind: input, shape index: {}]
  %s16 = inlined_call_operand.vmem [shape: f32[1,32], index: 16, kind: input, shape index: {}]
  %s17 = inlined_call_operand.vmem [shape: f32[1,32], index: 17, kind: input, shape index: {}]
  %s18 = inlined_call_operand.vmem [shape: f32[1,32], index: 18, kind: input, shape index: {}]
  %s19 = inlined_call_operand.hbm [shape: f32[2,8,32], index: 19, kind: output, shape index: {}]
  %s20 = sld [smem:[#allocation0]]
  $region109: #{transformer_decoder.3} parent=0
    _
  %s22 = ssub.s32 1, %s20
  %s23 = scalar_select 0, %s22, %s20
  $region1: #{transformer_decoder.3} parent=0
    #allocation2 [shape = 'u8[8192]{0}', space=vmem, size = 0x2000, scoped, tag = 'output window, operand 0']
    #allocation3 [shape = 's32[2]{0}', space=sflag, size = 0x8, scoped, tag = 'scoped memory for transformer_decoder.3']
    %24 = vsyncpa [#allocation3], 0
    %s25 = scalar_lea.sflag [#allocation3], 1
    %26 = vsyncpa %s25, 0
    loop: start=0, step=1, limit=4
    $region2: #{transformer_decoder.3} parent=1 // loop_pre_header
      _
    $region3: #{transformer_decoder.3} parent=1 // loop_header
      %s28 = sphi 0, %s32
      %p29 = scmp.ge.s32.totalorder %s28, 4
      %s38 = sphi 0, %s40
      %s41 = sphi 0, %s38
      %s42 = sphi 0, %s41
      %s58 = sphi 0, %s42
      %s64 = sphi 0, %s66
      %s67 = sphi 0, %s64
      %s68 = sphi 0, %s67
      %s84 = sphi 0, %s68
      %s90 = sphi 0, %s92
      %s93 = sphi 0, %s90
      %s94 = sphi 0, %s93
      %s110 = sphi 0, %s94
      %s116 = sphi 0, %s118
      %s119 = sphi 0, %s116
      %s120 = sphi 0, %s119
      %s136 = sphi 0, %s120
      %s140 = sphi 0, %s140
      %s142 = sphi 0, %s140
      %s143 = sphi 0, %s142
      %s157 = sphi 0, %s143
      %s161 = sphi 0, %s161
      %s163 = sphi 0, %s161
      %s164 = sphi 0, %s163
      %s178 = sphi 0, %s164
      %s182 = sphi 0, %s182
      %s184 = sphi 0, %s182
      %s185 = sphi 0, %s184
      %s199 = sphi 0, %s185
      %s203 = sphi 0, %s203
      %s205 = sphi 0, %s203
      %s206 = sphi 0, %s205
      %s220 = sphi 0, %s206
      %s224 = sphi 0, %s224
      %s226 = sphi 0, %s224
      %s227 = sphi 0, %s226
      %s241 = sphi 0, %s227
      %s245 = sphi 0, %s245
      %s247 = sphi 0, %s245
      %s248 = sphi 0, %s247
      %s262 = sphi 0, %s248
      %s266 = sphi 0, %s266
      %s268 = sphi 0, %s266
      %s269 = sphi 0, %s268
      %s283 = sphi 0, %s269
      %s287 = sphi 0, %s287
      %s289 = sphi 0, %s287
      %s290 = sphi 0, %s289
      %s304 = sphi 0, %s290
      %s308 = sphi 0, %s308
      %s310 = sphi 0, %s308
      %s311 = sphi 0, %s310
      %s325 = sphi 0, %s311
      %s329 = sphi 0, %s329
      %s331 = sphi 0, %s329
      %s332 = sphi 0, %s331
      %s346 = sphi 0, %s332
      %s350 = sphi 0, %s350
      %s352 = sphi 0, %s350
      %s353 = sphi 0, %s352
      %s367 = sphi 0, %s353
      %s371 = sphi 0, %s371
      %s373 = sphi 0, %s371
      %s374 = sphi 0, %s373
      %s388 = sphi 0, %s374
      %s392 = sphi 0, %s392
      %s394 = sphi 0, %s392
      %s395 = sphi 0, %s394
      %s409 = sphi 0, %s395
      %s413 = sphi 0, %s413
      %s415 = sphi 0, %s413
      %s416 = sphi 0, %s415
      %s430 = sphi 0, %s416
      %s434 = sphi 0, %s434
      %s436 = sphi 0, %s434
      %s437 = sphi 0, %s436
      %s451 = sphi 0, %s437
      %s457 = sphi 0, %s459
      %s460 = sphi 0, %s457
      %s461 = sphi 0, %s460
      %s477 = sphi 0, %s461
    $region4: #{transformer_decoder.3} parent=1 // loop_header_branch
      %31 = sbr.rel (%p29) target = $region8
    $region5: #{transformer_decoder.3} parent=1 // loop_body
      %s33 = ssub.s32 %s28, 1
      %s34 = ssub.s32 %s28, 2
      %s35 = sadd.s32 %s28, 1
      %s36 = ssub.s32 %s28, %s35
      %p37 = scmp.eq.s32.totalorder %s36, 0
      %s39 = sadd.s32 %s38, 1
      %s40 = scalar_select %p37, %s38, %s39
      %p43 = pneg %p37
      %p44 = scmp.eq.s32.totalorder %s28, 1
      %p45 = por %p43, %p44
      %p46 = scmp.ne.s32.totalorder %s38, %s41
      %p47 = scmp.eq.s32.totalorder %s28, 0
      %p48 = por %p46, %p47
      %p49 = scmp.ne.s32.totalorder %s38, %s41
      %p50 = scmp.eq.s32.totalorder %s33, 1
      %p51 = por %p49, %p50
      %p52 = scmp.ne.s32.totalorder %s41, %s42
      %p53 = scmp.eq.s32.totalorder %s33, 0
      %p54 = por %p52, %p53
      %p55 = scmp.ne.s32.totalorder %s41, %s42
      %p56 = scmp.eq.s32.totalorder %s34, 1
      %p57 = por %p55, %p56
      %p59 = scmp.ne.s32.totalorder %s42, %s58
      %p60 = scmp.eq.s32.totalorder %s34, 0
      %p61 = por %p59, %p60
      %s62 = ssub.s32 %s28, %s35
      %p63 = scmp.eq.s32.totalorder %s62, 0
      %s65 = sadd.s32 %s64, 1
      %s66 = scalar_select %p63, %s64, %s65
      %p69 = pneg %p63
      %p70 = scmp.eq.s32.totalorder %s28, 1
      %p71 = por %p69, %p70
      %p72 = scmp.ne.s32.totalorder %s64, %s67
      %p73 = scmp.eq.s32.totalorder %s28, 0
      %p74 = por %p72, %p73
      %p75 = scmp.ne.s32.totalorder %s64, %s67
      %p76 = scmp.eq.s32.totalorder %s33, 1
      %p77 = por %p75, %p76
      %p78 = scmp.ne.s32.totalorder %s67, %s68
      %p79 = scmp.eq.s32.totalorder %s33, 0
      %p80 = por %p78, %p79
      %p81 = scmp.ne.s32.totalorder %s67, %s68
      %p82 = scmp.eq.s32.totalorder %s34, 1
      %p83 = por %p81, %p82
      %p85 = scmp.ne.s32.totalorder %s68, %s84
      %p86 = scmp.eq.s32.totalorder %s34, 0
      %p87 = por %p85, %p86
      %s88 = ssub.s32 %s28, %s35
      %p89 = scmp.eq.s32.totalorder %s88, 0
      %s91 = sadd.s32 %s90, 1
      %s92 = scalar_select %p89, %s90, %s91
      %p95 = pneg %p89
      %p96 = scmp.eq.s32.totalorder %s28, 1
      %p97 = por %p95, %p96
      %p98 = scmp.ne.s32.totalorder %s90, %s93
      %p99 = scmp.eq.s32.totalorder %s28, 0
      %p100 = por %p98, %p99
      %p101 = scmp.ne.s32.totalorder %s90, %s93
      %p102 = scmp.eq.s32.totalorder %s33, 1
      %p103 = por %p101, %p102
      %p104 = scmp.ne.s32.totalorder %s93, %s94
      %p105 = scmp.eq.s32.totalorder %s33, 0
      %p106 = por %p104, %p105
      %p107 = scmp.ne.s32.totalorder %s93, %s94
      %p108 = scmp.eq.s32.totalorder %s34, 1
      %p109 = por %p107, %p108
      %p111 = scmp.ne.s32.totalorder %s94, %s110
      %p112 = scmp.eq.s32.totalorder %s34, 0
      %p113 = por %p111, %p112
      %s114 = ssub.s32 %s28, %s35
      %p115 = scmp.eq.s32.totalorder %s114, 0
      %s117 = sadd.s32 %s116, 1
      %s118 = scalar_select %p115, %s116, %s117
      %p121 = pneg %p115
      %p122 = scmp.eq.s32.totalorder %s28, 1
      %p123 = por %p121, %p122
      %p124 = scmp.ne.s32.totalorder %s116, %s119
      %p125 = scmp.eq.s32.totalorder %s28, 0
      %p126 = por %p124, %p125
      %p127 = scmp.ne.s32.totalorder %s116, %s119
      %p128 = scmp.eq.s32.totalorder %s33, 1
      %p129 = por %p127, %p128
      %p130 = scmp.ne.s32.totalorder %s119, %s120
      %p131 = scmp.eq.s32.totalorder %s33, 0
      %p132 = por %p130, %p131
      %p133 = scmp.ne.s32.totalorder %s119, %s120
      %p134 = scmp.eq.s32.totalorder %s34, 1
      %p135 = por %p133, %p134
      %p137 = scmp.ne.s32.totalorder %s120, %s136
      %p138 = scmp.eq.s32.totalorder %s34, 0
      %p139 = por %p137, %p138
      %s141 = sadd.s32 %s140, 1
      %p144 = scmp.eq.s32.totalorder %s28, 1
      %p145 = scmp.ne.s32.totalorder %s140, %s142
      %p146 = scmp.eq.s32.totalorder %s28, 0
      %p147 = por %p145, %p146
      %p148 = scmp.ne.s32.totalorder %s140, %s142
      %p149 = scmp.eq.s32.totalorder %s33, 1
      %p150 = por %p148, %p149
      %p151 = scmp.ne.s32.totalorder %s142, %s143
      %p152 = scmp.eq.s32.totalorder %s33, 0
      %p153 = por %p151, %p152
      %p154 = scmp.ne.s32.totalorder %s142, %s143
      %p155 = scmp.eq.s32.totalorder %s34, 1
      %p156 = por %p154, %p155
      %p158 = scmp.ne.s32.totalorder %s143, %s157
      %p159 = scmp.eq.s32.totalorder %s34, 0
      %p160 = por %p158, %p159
      %s162 = sadd.s32 %s161, 1
      %p165 = scmp.eq.s32.totalorder %s28, 1
      %p166 = scmp.ne.s32.totalorder %s161, %s163
      %p167 = scmp.eq.s32.totalorder %s28, 0
      %p168 = por %p166, %p167
      %p169 = scmp.ne.s32.totalorder %s161, %s163
      %p170 = scmp.eq.s32.totalorder %s33, 1
      %p171 = por %p169, %p170
      %p172 = scmp.ne.s32.totalorder %s163, %s164
      %p173 = scmp.eq.s32.totalorder %s33, 0
      %p174 = por %p172, %p173
      %p175 = scmp.ne.s32.totalorder %s163, %s164
      %p176 = scmp.eq.s32.totalorder %s34, 1
      %p177 = por %p175, %p176
      %p179 = scmp.ne.s32.totalorder %s164, %s178
      %p180 = scmp.eq.s32.totalorder %s34, 0
      %p181 = por %p179, %p180
      %s183 = sadd.s32 %s182, 1
      %p186 = scmp.eq.s32.totalorder %s28, 1
      %p187 = scmp.ne.s32.totalorder %s182, %s184
      %p188 = scmp.eq.s32.totalorder %s28, 0
      %p189 = por %p187, %p188
      %p190 = scmp.ne.s32.totalorder %s182, %s184
      %p191 = scmp.eq.s32.totalorder %s33, 1
      %p192 = por %p190, %p191
      %p193 = scmp.ne.s32.totalorder %s184, %s185
      %p194 = scmp.eq.s32.totalorder %s33, 0
      %p195 = por %p193, %p194
      %p196 = scmp.ne.s32.totalorder %s184, %s185
      %p197 = scmp.eq.s32.totalorder %s34, 1
      %p198 = por %p196, %p197
      %p200 = scmp.ne.s32.totalorder %s185, %s199
      %p201 = scmp.eq.s32.totalorder %s34, 0
      %p202 = por %p200, %p201
      %s204 = sadd.s32 %s203, 1
      %p207 = scmp.eq.s32.totalorder %s28, 1
      %p208 = scmp.ne.s32.totalorder %s203, %s205
      %p209 = scmp.eq.s32.totalorder %s28, 0
      %p210 = por %p208, %p209
      %p211 = scmp.ne.s32.totalorder %s203, %s205
      %p212 = scmp.eq.s32.totalorder %s33, 1
      %p213 = por %p211, %p212
      %p214 = scmp.ne.s32.totalorder %s205, %s206
      %p215 = scmp.eq.s32.totalorder %s33, 0
      %p216 = por %p214, %p215
      %p217 = scmp.ne.s32.totalorder %s205, %s206
      %p218 = scmp.eq.s32.totalorder %s34, 1
      %p219 = por %p217, %p218
      %p221 = scmp.ne.s32.totalorder %s206, %s220
      %p222 = scmp.eq.s32.totalorder %s34, 0
      %p223 = por %p221, %p222
      %s225 = sadd.s32 %s224, 1
      %p228 = scmp.eq.s32.totalorder %s28, 1
      %p229 = scmp.ne.s32.totalorder %s224, %s226
      %p230 = scmp.eq.s32.totalorder %s28, 0
      %p231 = por %p229, %p230
      %p232 = scmp.ne.s32.totalorder %s224, %s226
      %p233 = scmp.eq.s32.totalorder %s33, 1
      %p234 = por %p232, %p233
      %p235 = scmp.ne.s32.totalorder %s226, %s227
      %p236 = scmp.eq.s32.totalorder %s33, 0
      %p237 = por %p235, %p236
      %p238 = scmp.ne.s32.totalorder %s226, %s227
      %p239 = scmp.eq.s32.totalorder %s34, 1
      %p240 = por %p238, %p239
      %p242 = scmp.ne.s32.totalorder %s227, %s241
      %p243 = scmp.eq.s32.totalorder %s34, 0
      %p244 = por %p242, %p243
      %s246 = sadd.s32 %s245, 1
      %p249 = scmp.eq.s32.totalorder %s28, 1
      %p250 = scmp.ne.s32.totalorder %s245, %s247
      %p251 = scmp.eq.s32.totalorder %s28, 0
      %p252 = por %p250, %p251
      %p253 = scmp.ne.s32.totalorder %s245, %s247
      %p254 = scmp.eq.s32.totalorder %s33, 1
      %p255 = por %p253, %p254
      %p256 = scmp.ne.s32.totalorder %s247, %s248
      %p257 = scmp.eq.s32.totalorder %s33, 0
      %p258 = por %p256, %p257
      %p259 = scmp.ne.s32.totalorder %s247, %s248
      %p260 = scmp.eq.s32.totalorder %s34, 1
      %p261 = por %p259, %p260
      %p263 = scmp.ne.s32.totalorder %s248, %s262
      %p264 = scmp.eq.s32.totalorder %s34, 0
      %p265 = por %p263, %p264
      %s267 = sadd.s32 %s266, 1
      %p270 = scmp.eq.s32.totalorder %s28, 1
      %p271 = scmp.ne.s32.totalorder %s266, %s268
      %p272 = scmp.eq.s32.totalorder %s28, 0
      %p273 = por %p271, %p272
      %p274 = scmp.ne.s32.totalorder %s266, %s268
      %p275 = scmp.eq.s32.totalorder %s33, 1
      %p276 = por %p274, %p275
      %p277 = scmp.ne.s32.totalorder %s268, %s269
      %p278 = scmp.eq.s32.totalorder %s33, 0
      %p279 = por %p277, %p278
      %p280 = scmp.ne.s32.totalorder %s268, %s269
      %p281 = scmp.eq.s32.totalorder %s34, 1
      %p282 = por %p280, %p281
      %p284 = scmp.ne.s32.totalorder %s269, %s283
      %p285 = scmp.eq.s32.totalorder %s34, 0
      %p286 = por %p284, %p285
      %s288 = sadd.s32 %s287, 1
      %p291 = scmp.eq.s32.totalorder %s28, 1
      %p292 = scmp.ne.s32.totalorder %s287, %s289
      %p293 = scmp.eq.s32.totalorder %s28, 0
      %p294 = por %p292, %p293
      %p295 = scmp.ne.s32.totalorder %s287, %s289
      %p296 = scmp.eq.s32.totalorder %s33, 1
      %p297 = por %p295, %p296
      %p298 = scmp.ne.s32.totalorder %s289, %s290
      %p299 = scmp.eq.s32.totalorder %s33, 0
      %p300 = por %p298, %p299
      %p301 = scmp.ne.s32.totalorder %s289, %s290
      %p302 = scmp.eq.s32.totalorder %s34, 1
      %p303 = por %p301, %p302
      %p305 = scmp.ne.s32.totalorder %s290, %s304
      %p306 = scmp.eq.s32.totalorder %s34, 0
      %p307 = por %p305, %p306
      %s309 = sadd.s32 %s308, 1
      %p312 = scmp.eq.s32.totalorder %s28, 1
      %p313 = scmp.ne.s32.totalorder %s308, %s310
      %p314 = scmp.eq.s32.totalorder %s28, 0
      %p315 = por %p313, %p314
      %p316 = scmp.ne.s32.totalorder %s308, %s310
      %p317 = scmp.eq.s32.totalorder %s33, 1
      %p318 = por %p316, %p317
      %p319 = scmp.ne.s32.totalorder %s310, %s311
      %p320 = scmp.eq.s32.totalorder %s33, 0
      %p321 = por %p319, %p320
      %p322 = scmp.ne.s32.totalorder %s310, %s311
      %p323 = scmp.eq.s32.totalorder %s34, 1
      %p324 = por %p322, %p323
      %p326 = scmp.ne.s32.totalorder %s311, %s325
      %p327 = scmp.eq.s32.totalorder %s34, 0
      %p328 = por %p326, %p327
      %s330 = sadd.s32 %s329, 1
      %p333 = scmp.eq.s32.totalorder %s28, 1
      %p334 = scmp.ne.s32.totalorder %s329, %s331
      %p335 = scmp.eq.s32.totalorder %s28, 0
      %p336 = por %p334, %p335
      %p337 = scmp.ne.s32.totalorder %s329, %s331
      %p338 = scmp.eq.s32.totalorder %s33, 1
      %p339 = por %p337, %p338
      %p340 = scmp.ne.s32.totalorder %s331, %s332
      %p341 = scmp.eq.s32.totalorder %s33, 0
      %p342 = por %p340, %p341
      %p343 = scmp.ne.s32.totalorder %s331, %s332
      %p344 = scmp.eq.s32.totalorder %s34, 1
      %p345 = por %p343, %p344
      %p347 = scmp.ne.s32.totalorder %s332, %s346
      %p348 = scmp.eq.s32.totalorder %s34, 0
      %p349 = por %p347, %p348
      %s351 = sadd.s32 %s350, 1
      %p354 = scmp.eq.s32.totalorder %s28, 1
      %p355 = scmp.ne.s32.totalorder %s350, %s352
      %p356 = scmp.eq.s32.totalorder %s28, 0
      %p357 = por %p355, %p356
      %p358 = scmp.ne.s32.totalorder %s350, %s352
      %p359 = scmp.eq.s32.totalorder %s33, 1
      %p360 = por %p358, %p359
      %p361 = scmp.ne.s32.totalorder %s352, %s353
      %p362 = scmp.eq.s32.totalorder %s33, 0
      %p363 = por %p361, %p362
      %p364 = scmp.ne.s32.totalorder %s352, %s353
      %p365 = scmp.eq.s32.totalorder %s34, 1
      %p366 = por %p364, %p365
      %p368 = scmp.ne.s32.totalorder %s353, %s367
      %p369 = scmp.eq.s32.totalorder %s34, 0
      %p370 = por %p368, %p369
      %s372 = sadd.s32 %s371, 1
      %p375 = scmp.eq.s32.totalorder %s28, 1
      %p376 = scmp.ne.s32.totalorder %s371, %s373
      %p377 = scmp.eq.s32.totalorder %s28, 0
      %p378 = por %p376, %p377
      %p379 = scmp.ne.s32.totalorder %s371, %s373
      %p380 = scmp.eq.s32.totalorder %s33, 1
      %p381 = por %p379, %p380
      %p382 = scmp.ne.s32.totalorder %s373, %s374
      %p383 = scmp.eq.s32.totalorder %s33, 0
      %p384 = por %p382, %p383
      %p385 = scmp.ne.s32.totalorder %s373, %s374
      %p386 = scmp.eq.s32.totalorder %s34, 1
      %p387 = por %p385, %p386
      %p389 = scmp.ne.s32.totalorder %s374, %s388
      %p390 = scmp.eq.s32.totalorder %s34, 0
      %p391 = por %p389, %p390
      %s393 = sadd.s32 %s392, 1
      %p396 = scmp.eq.s32.totalorder %s28, 1
      %p397 = scmp.ne.s32.totalorder %s392, %s394
      %p398 = scmp.eq.s32.totalorder %s28, 0
      %p399 = por %p397, %p398
      %p400 = scmp.ne.s32.totalorder %s392, %s394
      %p401 = scmp.eq.s32.totalorder %s33, 1
      %p402 = por %p400, %p401
      %p403 = scmp.ne.s32.totalorder %s394, %s395
      %p404 = scmp.eq.s32.totalorder %s33, 0
      %p405 = por %p403, %p404
      %p406 = scmp.ne.s32.totalorder %s394, %s395
      %p407 = scmp.eq.s32.totalorder %s34, 1
      %p408 = por %p406, %p407
      %p410 = scmp.ne.s32.totalorder %s395, %s409
      %p411 = scmp.eq.s32.totalorder %s34, 0
      %p412 = por %p410, %p411
      %s414 = sadd.s32 %s413, 1
      %p417 = scmp.eq.s32.totalorder %s28, 1
      %p418 = scmp.ne.s32.totalorder %s413, %s415
      %p419 = scmp.eq.s32.totalorder %s28, 0
      %p420 = por %p418, %p419
      %p421 = scmp.ne.s32.totalorder %s413, %s415
      %p422 = scmp.eq.s32.totalorder %s33, 1
      %p423 = por %p421, %p422
      %p424 = scmp.ne.s32.totalorder %s415, %s416
      %p425 = scmp.eq.s32.totalorder %s33, 0
      %p426 = por %p424, %p425
      %p427 = scmp.ne.s32.totalorder %s415, %s416
      %p428 = scmp.eq.s32.totalorder %s34, 1
      %p429 = por %p427, %p428
      %p431 = scmp.ne.s32.totalorder %s416, %s430
      %p432 = scmp.eq.s32.totalorder %s34, 0
      %p433 = por %p431, %p432
      %s435 = sadd.s32 %s434, 1
      %p438 = scmp.eq.s32.totalorder %s28, 1
      %p439 = scmp.ne.s32.totalorder %s434, %s436
      %p440 = scmp.eq.s32.totalorder %s28, 0
      %p441 = por %p439, %p440
      %p442 = scmp.ne.s32.totalorder %s434, %s436
      %p443 = scmp.eq.s32.totalorder %s33, 1
      %p444 = por %p442, %p443
      %p445 = scmp.ne.s32.totalorder %s436, %s437
      %p446 = scmp.eq.s32.totalorder %s33, 0
      %p447 = por %p445, %p446
      %p448 = scmp.ne.s32.totalorder %s436, %s437
      %p449 = scmp.eq.s32.totalorder %s34, 1
      %p450 = por %p448, %p449
      %p452 = scmp.ne.s32.totalorder %s437, %s451
      %p453 = scmp.eq.s32.totalorder %s34, 0
      %p454 = por %p452, %p453
      %s455 = ssub.s32 %s28, %s35
      %p456 = scmp.eq.s32.totalorder %s455, 0
      %s458 = sadd.s32 %s457, 1
      %s459 = scalar_select %p456, %s457, %s458
      %p462 = pneg %p456
      %p463 = scmp.eq.s32.totalorder %s28, 1
      %p464 = por %p462, %p463
      %p465 = scmp.ne.s32.totalorder %s457, %s460
      %p466 = scmp.eq.s32.totalorder %s28, 0
      %p467 = por %p465, %p466
      %p468 = scmp.ne.s32.totalorder %s457, %s460
      %p469 = scmp.eq.s32.totalorder %s33, 1
      %p470 = por %p468, %p469
      %p471 = scmp.ne.s32.totalorder %s460, %s461
      %p472 = scmp.eq.s32.totalorder %s33, 0
      %p473 = por %p471, %p472
      %p474 = scmp.ne.s32.totalorder %s460, %s461
      %p475 = scmp.eq.s32.totalorder %s34, 1
      %p476 = por %p474, %p475
      %p478 = scmp.ne.s32.totalorder %s461, %s477
      %p479 = scmp.eq.s32.totalorder %s34, 0
      %p480 = por %p478, %p479
      %p481 = scmp.le.s32.totalorder 1, %s28
      %p482 = scmp.lt.s32.totalorder %s28, 3
      %p483 = pnand %p481, %p482
      %p484 = pneg %p483
      // Predicated region
      $region9: #{transformer_decoder.3} parent=5 // pred_check
        _
      $region10: #{transformer_decoder.3} parent=5 // pred_check_branch
        %486 = sbr.rel (%p483) target = $region12
      $region11: #{transformer_decoder.3} parent=5 // pred_region
        %s487 = ssub.s32 %s28, 1
        // Predicated region
        $region13: #{transformer_decoder.3} parent=11 // pred_check
          %p488 = pneg %p153
        $region14: #{transformer_decoder.3} parent=11 // pred_check_branch
          %490 = sbr.rel (%p488) target = $region16
        $region15: #{transformer_decoder.3} parent=11 // pred_region
          _
        $region16: #{transformer_decoder.3} parent=11 // pred_fallthru
          _
        // Predicated region
        $region17: #{transformer_decoder.3} parent=11 // pred_check
          %p491 = pneg %p174
        $region18: #{transformer_decoder.3} parent=11 // pred_check_branch
          %493 = sbr.rel (%p491) target = $region20
        $region19: #{transformer_decoder.3} parent=11 // pred_region
          _
        $region20: #{transformer_decoder.3} parent=11 // pred_fallthru
          _
        // Predicated region
        $region21: #{transformer_decoder.3} parent=11 // pred_check
          %p494 = pneg %p195
        $region22: #{transformer_decoder.3} parent=11 // pred_check_branch
          %496 = sbr.rel (%p494) target = $region24
        $region23: #{transformer_decoder.3} parent=11 // pred_region
          _
        $region24: #{transformer_decoder.3} parent=11 // pred_fallthru
          _
        // Predicated region
        $region25: #{transformer_decoder.3} parent=11 // pred_check
          %p497 = pneg %p216
        $region26: #{transformer_decoder.3} parent=11 // pred_check_branch
          %499 = sbr.rel (%p497) target = $region28
        $region27: #{transformer_decoder.3} parent=11 // pred_region
          _
        $region28: #{transformer_decoder.3} parent=11 // pred_fallthru
          _
        // Predicated region
        $region29: #{transformer_decoder.3} parent=11 // pred_check
          %p500 = pneg %p237
        $region30: #{transformer_decoder.3} parent=11 // pred_check_branch
          %502 = sbr.rel (%p500) target = $region32
        $region31: #{transformer_decoder.3} parent=11 // pred_region
          _
        $region32: #{transformer_decoder.3} parent=11 // pred_fallthru
          _
        // Predicated region
        $region33: #{transformer_decoder.3} parent=11 // pred_check
          %p503 = pneg %p258
        $region34: #{transformer_decoder.3} parent=11 // pred_check_branch
          %505 = sbr.rel (%p503) target = $region36
        $region35: #{transformer_decoder.3} parent=11 // pred_region
          _
        $region36: #{transformer_decoder.3} parent=11 // pred_fallthru
          _
        // Predicated region
        $region37: #{transformer_decoder.3} parent=11 // pred_check
          %p506 = pneg %p279
        $region38: #{transformer_decoder.3} parent=11 // pred_check_branch
          %508 = sbr.rel (%p506) target = $region40
        $region39: #{transformer_decoder.3} parent=11 // pred_region
          _
        $region40: #{transformer_decoder.3} parent=11 // pred_fallthru
          _
        // Predicated region
        $region41: #{transformer_decoder.3} parent=11 // pred_check
          %p509 = pneg %p300
        $region42: #{transformer_decoder.3} parent=11 // pred_check_branch
          %511 = sbr.rel (%p509) target = $region44
        $region43: #{transformer_decoder.3} parent=11 // pred_region
          _
        $region44: #{transformer_decoder.3} parent=11 // pred_fallthru
          _
        // Predicated region
        $region45: #{transformer_decoder.3} parent=11 // pred_check
          %p512 = pneg %p321
        $region46: #{transformer_decoder.3} parent=11 // pred_check_branch
          %514 = sbr.rel (%p512) target = $region48
        $region47: #{transformer_decoder.3} parent=11 // pred_region
          _
        $region48: #{transformer_decoder.3} parent=11 // pred_fallthru
          _
        // Predicated region
        $region49: #{transformer_decoder.3} parent=11 // pred_check
          %p515 = pneg %p342
        $region50: #{transformer_decoder.3} parent=11 // pred_check_branch
          %517 = sbr.rel (%p515) target = $region52
        $region51: #{transformer_decoder.3} parent=11 // pred_region
          _
        $region52: #{transformer_decoder.3} parent=11 // pred_fallthru
          _
        // Predicated region
        $region53: #{transformer_decoder.3} parent=11 // pred_check
          %p518 = pneg %p363
        $region54: #{transformer_decoder.3} parent=11 // pred_check_branch
          %520 = sbr.rel (%p518) target = $region56
        $region55: #{transformer_decoder.3} parent=11 // pred_region
          _
        $region56: #{transformer_decoder.3} parent=11 // pred_fallthru
          _
        // Predicated region
        $region57: #{transformer_decoder.3} parent=11 // pred_check
          %p521 = pneg %p384
        $region58: #{transformer_decoder.3} parent=11 // pred_check_branch
          %523 = sbr.rel (%p521) target = $region60
        $region59: #{transformer_decoder.3} parent=11 // pred_region
          _
        $region60: #{transformer_decoder.3} parent=11 // pred_fallthru
          _
        // Predicated region
        $region61: #{transformer_decoder.3} parent=11 // pred_check
          %p524 = pneg %p405
        $region62: #{transformer_decoder.3} parent=11 // pred_check_branch
          %526 = sbr.rel (%p524) target = $region64
        $region63: #{transformer_decoder.3} parent=11 // pred_region
          _
        $region64: #{transformer_decoder.3} parent=11 // pred_fallthru
          _
        // Predicated region
        $region65: #{transformer_decoder.3} parent=11 // pred_check
          %p527 = pneg %p426
        $region66: #{transformer_decoder.3} parent=11 // pred_check_branch
          %529 = sbr.rel (%p527) target = $region68
        $region67: #{transformer_decoder.3} parent=11 // pred_region
          _
        $region68: #{transformer_decoder.3} parent=11 // pred_fallthru
          _
        // Predicated region
        $region69: #{transformer_decoder.3} parent=11 // pred_check
          %p530 = pneg %p447
        $region70: #{transformer_decoder.3} parent=11 // pred_check_branch
          %532 = sbr.rel (%p530) target = $region72
        $region71: #{transformer_decoder.3} parent=11 // pred_region
          _
        $region72: #{transformer_decoder.3} parent=11 // pred_fallthru
          _
      $region12: #{transformer_decoder.3} parent=5 // pred_fallthru
        _
      %p533 = scmp.lt.s32.totalorder %s28, 2
      // Predicated region
      $region73: #{transformer_decoder.3} parent=5 // pred_check
        %p534 = pneg %p533
      $region74: #{transformer_decoder.3} parent=5 // pred_check_branch
        %536 = sbr.rel (%p534) target = $region76
      $region75: #{transformer_decoder.3} parent=5 // pred_region
        // Predicated region
        $region77: #{transformer_decoder.3} parent=75 // pred_check
          %p537 = pneg %p48
        $region78: #{transformer_decoder.3} parent=75 // pred_check_branch
          %539 = sbr.rel (%p537) target = $region80
        $region79: #{transformer_decoder.3} parent=75 // pred_region
          %p540 = scmp.lt.s32.totalorder %s28, 1
          %s541 = scalar_select %p540, %s28, 1
          %s542 = smul.addr %s541, 8
          %s543 = scalar_lea.vmem %s0, %s542
        $region80: #{transformer_decoder.3} parent=75 // pred_fallthru
          _
        // Predicated region
        $region81: #{transformer_decoder.3} parent=75 // pred_check
          %p544 = pneg %p74
        $region82: #{transformer_decoder.3} parent=75 // pred_check_branch
          %546 = sbr.rel (%p544) target = $region84
        $region83: #{transformer_decoder.3} parent=75 // pred_region
          %p547 = scmp.lt.s32.totalorder %s28, 1
          %s548 = scalar_select %p547, %s28, 1
          %s549 = smul.addr %s548, 8
          %s550 = scalar_lea.vmem %s1, %s549
        $region84: #{transformer_decoder.3} parent=75 // pred_fallthru
          _
        // Predicated region
        $region85: #{transformer_decoder.3} parent=75 // pred_check
          %p551 = pneg %p100
        $region86: #{transformer_decoder.3} parent=75 // pred_check_branch
          %553 = sbr.rel (%p551) target = $region88
        $region87: #{transformer_decoder.3} parent=75 // pred_region
          %p554 = scmp.lt.s32.totalorder %s28, 1
          %s555 = scalar_select %p554, %s28, 1
          %s556 = scalar_lea.vmem %s2, %s555
        $region88: #{transformer_decoder.3} parent=75 // pred_fallthru
          _
        // Predicated region
        $region89: #{transformer_decoder.3} parent=75 // pred_check
          %p557 = pneg %p126
        $region90: #{transformer_decoder.3} parent=75 // pred_check_branch
          %559 = sbr.rel (%p557) target = $region92
        $region91: #{transformer_decoder.3} parent=75 // pred_region
          %p560 = scmp.lt.s32.totalorder %s28, 1
          %s561 = scalar_select %p560, %s28, 1
          %s562 = scalar_lea.vmem %s3, %s561
        $region92: #{transformer_decoder.3} parent=75 // pred_fallthru
          _
      $region76: #{transformer_decoder.3} parent=5 // pred_fallthru
        _
      %p563 = scmp.le.s32.totalorder 1, %s28
      %p564 = scmp.lt.s32.totalorder %s28, 3
      %p565 = pnand %p563, %p564
      %p566 = pneg %p565
      // Predicated region
      $region93: #{transformer_decoder.3} parent=5 // pred_check
        _
      $region94: #{transformer_decoder.3} parent=5 // pred_check_branch
        %568 = sbr.rel (%p565) target = $region96
      $region95: #{transformer_decoder.3} parent=5 // pred_region
        %s569 = ssub.s32 %s28, 1
        %p570 = scmp.lt.s32.totalorder %s33, 1
        %s571 = scalar_select %p570, %s33, 1
        %s572 = smul.addr %s571, 8
        %s573 = scalar_lea.vmem %s0, %s572
        %p574 = pneg %p54
        %p575 = pneg %p51
        %p576 = scmp.lt.s32.totalorder %s33, 1
        %s577 = scalar_select %p576, %s33, 1
        %s578 = smul.addr %s577, 8
        %s579 = scalar_lea.vmem %s1, %s578
        %p580 = pneg %p80
        %p581 = pneg %p77
        %p582 = scmp.lt.s32.totalorder %s33, 1
        %s583 = scalar_select %p582, %s33, 1
        %s584 = scalar_lea.vmem %s2, %s583
        %p585 = pneg %p106
        %p586 = pneg %p103
        %p587 = scmp.lt.s32.totalorder %s33, 1
        %s588 = scalar_select %p587, %s33, 1
        %s589 = scalar_lea.vmem %s3, %s588
        %p590 = pneg %p132
        %p591 = pneg %p129
        %p592 = pneg %p153
        %p593 = pneg %p150
        %p594 = pneg %p174
        %p595 = pneg %p171
        %p596 = pneg %p195
        %p597 = pneg %p192
        %p598 = pneg %p216
        %p599 = pneg %p213
        %p600 = pneg %p237
        %p601 = pneg %p234
        %p602 = pneg %p258
        %p603 = pneg %p255
        %p604 = pneg %p279
        %p605 = pneg %p276
        %p606 = pneg %p300
        %p607 = pneg %p297
        %p608 = pneg %p321
        %p609 = pneg %p318
        %p610 = pneg %p342
        %p611 = pneg %p339
        %p612 = pneg %p363
        %p613 = pneg %p360
        %p614 = pneg %p384
        %p615 = pneg %p381
        %p616 = pneg %p405
        %p617 = pneg %p402
        %p618 = pneg %p426
        %p619 = pneg %p423
        %p620 = pneg %p447
        %p621 = pneg %p444
        %p622 = pneg %p473
        %p623 = pneg %p470
        %s624 = sand.u32 %s460, 1
        %s625 = scalar_lea.sflag [#allocation3], %s624
        %s626 = sand.u32 %s460, 1
        %s627 = smul.addr %s626, 8
        %s628 = scalar_lea.vmem [#allocation2], %s627
        %p629 = scmp.lt.s32.totalorder %s33, 1
        %s630 = scalar_select %p629, %s33, 1
        %s631 = smul.addr %s630, 8
        %s632 = scalar_lea.vmem %s0, %s631
        %p633 = scmp.lt.s32.totalorder %s33, 1
        %s634 = scalar_select %p633, %s33, 1
        %s635 = smul.addr %s634, 8
        %s636 = scalar_lea.vmem %s1, %s635
        %p637 = scmp.lt.s32.totalorder %s33, 1
        %s638 = scalar_select %p637, %s33, 1
        %s639 = scalar_lea.vmem %s2, %s638
        %p640 = scmp.lt.s32.totalorder %s33, 1
        %s641 = scalar_select %p640, %s33, 1
        %s642 = scalar_lea.vmem %s3, %s641
        %v644 = vld [vmem:[%s632] sm:$0xff]
        %v645 = vld [vmem:[%s636] sm:$0xff]
        %v646 = vld [vmem:[%s639] sm:$0x1]
        %v647 = vld [vmem:[%s642] sm:$0x1]
        %v648 = vlaneseq
        %v649 = vshrl.u32 %v648, 7
        %v650 = vlaneseq
        %v651 = vand.u32 %v650, 127
        %vm652 = vcmp.eq.f32.partialorder %v646, 0.0
        %v653 = vsel %vm652, -1e+10, 0.0
        %vm654 = vcmp.gt.s32.totalorder %v651, %v649
        %v655 = vsel %vm654, -1e+10, 0.0
        %v657 = vlaneseq
        %v658 = vshrl.u32 %v657, 7
        %v659 = vsub.s32 0, %v658
        %v660 = vrot.slane %v653, %v659
        %v662 = vadd.f32 %v660, %v655
        %vm663 = vcmp.eq.f32.partialorder %v647, 0.0
        %v664 = vsel %vm663, -1e+10, 0.0
        %v665 = vld [vmem:[%s4] sm:$0xf]
        %v666 = vld [vmem:[%s4 + $0x4] sm:$0xf]
        %v667 = vld [vmem:[%s4 + $0x8] sm:$0xf]
        %v668 = vld [vmem:[%s4 + $0xc] sm:$0xf]
        %v669 = vpack.c.bf16 %v644, %v644
        %v674 = vunpack.c.l.b16 %v665
        %v675 = vunpack.c.l.b16 %v666
        %v676 = vunpack.c.l.b16 %v667
        %v677 = vunpack.c.l.b16 %v668
        %v678 = vpack.c.b16 %v675, %v674
        %v679 = vpack.c.b16 %v677, %v676
        %vm682 = vcmask 261120
        %v684 = vsel %vm682, %v669, 0
        %686 = vmatprep.subr.bf16.mxu0 0
        %687 = vmatpush1.bf16.msra.mxu0 %v678
        %688 = vmatprep.subr.bf16.mxu0 0
        %689 = vmatpush1.bf16.msra.mxu0 %v679
        %690 = vmatprep.subr.bf16.mxu0 0
        %691 = vmatpush1.bf16.msra.mxu0 0
        %692 = vmatprep.subr.bf16.mxu0 0
        %693 = vmatpush1.bf16.msra.mxu0 0
        %694 = vmatprep.subr.bf16.mxu0 0
        %695 = vmatpush1.bf16.msra.mxu0 0
        %696 = vmatprep.subr.bf16.mxu0 0
        %697 = vmatpush1.bf16.msra.mxu0 0
        %698 = vmatprep.subr.bf16.mxu0 0
        %699 = vmatpush1.bf16.msra.mxu0 0
        %700 = vmatprep.subr.bf16.mxu0 0
        %701 = vmatpush1.bf16.msra.mxu0 0
        %702 = vmatprep.subr.bf16.mxu0 0
        %703 = vmatpush1.bf16.msra.mxu0 0
        %704 = vmatprep.subr.bf16.mxu0 0
        %705 = vmatpush1.bf16.msra.mxu0 0
        %706 = vmatprep.subr.bf16.mxu0 0
        %707 = vmatpush1.bf16.msra.mxu0 0
        %708 = vmatprep.subr.bf16.mxu0 0
        %709 = vmatpush1.bf16.msra.mxu0 0
        %710 = vmatprep.subr.bf16.mxu0 0
        %711 = vmatpush1.bf16.msra.mxu0 0
        %712 = vmatprep.subr.bf16.mxu0 0
        %713 = vmatpush1.bf16.msra.mxu0 0
        %714 = vmatprep.subr.bf16.mxu0 0
        %715 = vmatpush1.bf16.msra.mxu0 0
        %716 = vmatprep.subr.bf16.mxu0 0
        %717 = vmatpush1.bf16.msra.mxu0 0
        %718 = vmatprep.mubr.bf16.mxu0 0
        %719 = vmatmul.mubr.bf16.gmra.mrb[0].mxu0 %v684
        %v720 = vpop.f32.mrb[0].mxu0
        %v721 = vadd.f32 0.0, %v720
        %v722 = vpop.f32.mrb[0].mxu0
        %v723 = vpop.f32.mrb[0].mxu0
        %v724 = vpop.f32.mrb[0].mxu0
        %725 = vdwg.mxu0
        %727 = vrot.lane.b32.xlu0 %v721, 96
        %v728 = vpop.permute.xlu0 %727
        %730 = vxpose.xlu0.b32.start [1/16] %v728, 128
        %731 = vxpose.xlu0.b32.cont [2/16] 0.0, 128
        %732 = vxpose.xlu0.b32.cont [3/16] 0.0, 128
        %733 = vxpose.xlu0.b32.cont [4/16] 0.0, 128
        %734 = vxpose.xlu0.b32.cont [5/16] 0.0, 128
        %735 = vxpose.xlu0.b32.cont [6/16] 0.0, 128
        %736 = vxpose.xlu0.b32.cont [7/16] 0.0, 128
        %737 = vxpose.xlu0.b32.cont [8/16] 0.0, 128
        %738 = vxpose.xlu0.b32.cont [9/16] 0.0, 128
        %739 = vxpose.xlu0.b32.cont [10/16] 0.0, 128
        %740 = vxpose.xlu0.b32.cont [11/16] 0.0, 128
        %741 = vxpose.xlu0.b32.cont [12/16] 0.0, 128
        %742 = vxpose.xlu0.b32.cont [13/16] 0.0, 128
        %743 = vxpose.xlu0.b32.cont [14/16] 0.0, 128
        %744 = vxpose.xlu0.b32.cont [15/16] 0.0, 128
        %745 = vxpose.xlu0.b32.end [16/16] 0.0, 128
        %v746 = vpop.trf.xlu0
        %v747 = vpop.trf.xlu0
        %v748 = vpop.trf.xlu0
        %v749 = vpop.trf.xlu0
        %v750 = vpop.trf.xlu0
        %v751 = vpop.trf.xlu0
        %v752 = vpop.trf.xlu0
        %v753 = vpop.trf.xlu0
        %v754 = vpop.trf.xlu0
        %v755 = vpop.trf.xlu0
        %v756 = vpop.trf.xlu0
        %v757 = vpop.trf.xlu0
        %v758 = vpop.trf.xlu0
        %v759 = vpop.trf.xlu0
        %v760 = vpop.trf.xlu0
        %v761 = vpop.trf.xlu0
        %v762 = vpack.c.bf16 %v721, %v721
        %v763 = vpack.c.bf16 %v746, %v746
        %vm764 = vcmask 64512
        %v766 = vsel %vm764, %v762, 0
        %vm768 = vcmask 1043456
        %v770 = vsel %vm768, %v763, 0
        %772 = vmatprep.subr.bf16.mxu0 0
        %773 = vmatpush1.bf16.msra.mxu0 %v770
        %774 = vmatprep.subr.bf16.mxu0 0
        %775 = vmatpush1.bf16.msra.mxu0 0
        %776 = vmatprep.subr.bf16.mxu0 0
        %777 = vmatpush1.bf16.msra.mxu0 0
        %778 = vmatprep.subr.bf16.mxu0 0
        %779 = vmatpush1.bf16.msra.mxu0 0
        %780 = vmatprep.subr.bf16.mxu0 0
        %781 = vmatpush1.bf16.msra.mxu0 0
        %782 = vmatprep.subr.bf16.mxu0 0
        %783 = vmatpush1.bf16.msra.mxu0 0
        %784 = vmatprep.subr.bf16.mxu0 0
        %785 = vmatpush1.bf16.msra.mxu0 0
        %786 = vmatprep.subr.bf16.mxu0 0
        %787 = vmatpush1.bf16.msra.mxu0 0
        %788 = vmatprep.subr.bf16.mxu0 0
        %789 = vmatpush1.bf16.msra.mxu0 0
        %790 = vmatprep.subr.bf16.mxu0 0
        %791 = vmatpush1.bf16.msra.mxu0 0
        %792 = vmatprep.subr.bf16.mxu0 0
        %793 = vmatpush1.bf16.msra.mxu0 0
        %794 = vmatprep.subr.bf16.mxu0 0
        %795 = vmatpush1.bf16.msra.mxu0 0
        %796 = vmatprep.subr.bf16.mxu0 0
        %797 = vmatpush1.bf16.msra.mxu0 0
        %798 = vmatprep.subr.bf16.mxu0 0
        %799 = vmatpush1.bf16.msra.mxu0 0
        %800 = vmatprep.subr.bf16.mxu0 0
        %801 = vmatpush1.bf16.msra.mxu0 0
        %802 = vmatprep.subr.bf16.mxu0 0
        %803 = vmatpush1.bf16.msra.mxu0 0
        %804 = vmatprep.mubr.bf16.mxu0 0
        %805 = vmatmul.mubr.bf16.gmra.mrb[0].mxu0 %v766
        %v806 = vpop.f32.mrb[0].mxu0
        %v807 = vadd.f32 0.0, %v806
        %v808 = vpop.f32.mrb[0].mxu0
        %v809 = vpop.f32.mrb[0].mxu0
        %v810 = vpop.f32.mrb[0].mxu0
        %811 = vdwg.mxu0
        %v812 = vmul.f32 %v807, 0.35355338
        %v813 = vadd.f32 %v812, %v662
        %v814 = vsel %vm764, %v813, -inf
        %815 = vmax.xlane.f32.xlu0 %v814
        %v816 = vpop.xlane.xlu0 %815
        %v817 = vsub.f32 %v813, %v816
        %v818 = vmul.f32 %v817, 1.442695
        %v819 = vpow.pop %v818
        %v820 = vsel %vm764, %v819, 0.0
        %821 = vadd.xlane.f32.xlu0 %v820
        %v822 = vpop.xlane.xlu0 %821
        %v823 = vrcp.pop %v822
        %v824 = vmul.f32 %v819, %v823
        %v825 = vpack.c.bf16 %v824, %v824
        %827 = vrot.lane.b32.xlu0 %v762, 64
        %v828 = vpop.permute.xlu0 %827
        %v830 = vsel %vm764, %v825, 0
        %v833 = vsel %vm768, %v828, 0
        %835 = vmatprep.subr.bf16.mxu0 0
        %836 = vmatpush1.bf16.msra.mxu0 %v833
        %837 = vmatprep.subr.bf16.mxu0 0
        %838 = vmatpush1.bf16.msra.mxu0 0
        %839 = vmatprep.subr.bf16.mxu0 0
        %840 = vmatpush1.bf16.msra.mxu0 0
        %841 = vmatprep.subr.bf16.mxu0 0
        %842 = vmatpush1.bf16.msra.mxu0 0
        %843 = vmatprep.subr.bf16.mxu0 0
        %844 = vmatpush1.bf16.msra.mxu0 0
        %845 = vmatprep.subr.bf16.mxu0 0
        %846 = vmatpush1.bf16.msra.mxu0 0
        %847 = vmatprep.subr.bf16.mxu0 0
        %848 = vmatpush1.bf16.msra.mxu0 0
        %849 = vmatprep.subr.bf16.mxu0 0
        %850 = vmatpush1.bf16.msra.mxu0 0
        %851 = vmatprep.subr.bf16.mxu0 0
        %852 = vmatpush1.bf16.msra.mxu0 0
        %853 = vmatprep.subr.bf16.mxu0 0
        %854 = vmatpush1.bf16.msra.mxu0 0
        %855 = vmatprep.subr.bf16.mxu0 0
        %856 = vmatpush1.bf16.msra.mxu0 0
        %857 = vmatprep.subr.bf16.mxu0 0
        %858 = vmatpush1.bf16.msra.mxu0 0
        %859 = vmatprep.subr.bf16.mxu0 0
        %860 = vmatpush1.bf16.msra.mxu0 0
        %861 = vmatprep.subr.bf16.mxu0 0
        %862 = vmatpush1.bf16.msra.mxu0 0
        %863 = vmatprep.subr.bf16.mxu0 0
        %864 = vmatpush1.bf16.msra.mxu0 0
        %865 = vmatprep.subr.bf16.mxu0 0
        %866 = vmatpush1.bf16.msra.mxu0 0
        %867 = vmatprep.mubr.bf16.mxu0 0
        %868 = vmatmul.mubr.bf16.gmra.mrb[0].mxu0 %v830
        %v869 = vpop.f32.mrb[0].mxu0
        %v870 = vadd.f32 0.0, %v869
        %v871 = vpop.f32.mrb[0].mxu0
        %v872 = vpop.f32.mrb[0].mxu0
        %v873 = vpop.f32.mrb[0].mxu0
        %874 = vdwg.mxu0
        %875 = vrot.lane.b32.xlu0 %v721, 88
        %v876 = vpop.permute.xlu0 %875
        %878 = vxpose.xlu0.b32.start [1/16] %v876, 128
        %879 = vxpose.xlu0.b32.cont [2/16] 0.0, 128
        %880 = vxpose.xlu0.b32.cont [3/16] 0.0, 128
        %881 = vxpose.xlu0.b32.cont [4/16] 0.0, 128
        %882 = vxpose.xlu0.b32.cont [5/16] 0.0, 128
        %883 = vxpose.xlu0.b32.cont [6/16] 0.0, 128
        %884 = vxpose.xlu0.b32.cont [7/16] 0.0, 128
        %885 = vxpose.xlu0.b32.cont [8/16] 0.0, 128
        %886 = vxpose.xlu0.b32.cont [9/16] 0.0, 128
        %887 = vxpose.xlu0.b32.cont [10/16] 0.0, 128
        %888 = vxpose.xlu0.b32.cont [11/16] 0.0, 128
        %889 = vxpose.xlu0.b32.cont [12/16] 0.0, 128
        %890 = vxpose.xlu0.b32.cont [13/16] 0.0, 128
        %891 = vxpose.xlu0.b32.cont [14/16] 0.0, 128
        %892 = vxpose.xlu0.b32.cont [15/16] 0.0, 128
        %893 = vxpose.xlu0.b32.end [16/16] 0.0, 128
        %v894 = vpop.trf.xlu0
        %v895 = vpop.trf.xlu0
        %v896 = vpop.trf.xlu0
        %v897 = vpop.trf.xlu0
        %v898 = vpop.trf.xlu0
        %v899 = vpop.trf.xlu0
        %v900 = vpop.trf.xlu0
        %v901 = vpop.trf.xlu0
        %v902 = vpop.trf.xlu0
        %v903 = vpop.trf.xlu0
        %v904 = vpop.trf.xlu0
        %v905 = vpop.trf.xlu0
        %v906 = vpop.trf.xlu0
        %v907 = vpop.trf.xlu0
        %v908 = vpop.trf.xlu0
        %v909 = vpop.trf.xlu0
        %v910 = vpack.c.bf16 %v894, %v894
        %911 = vrot.lane.b32.xlu0 %v762, 120
        %v912 = vpop.permute.xlu0 %911
        %v914 = vsel %vm764, %v912, 0
        %v917 = vsel %vm768, %v910, 0
        %919 = vmatprep.subr.bf16.mxu0 0
        %920 = vmatpush1.bf16.msra.mxu0 %v917
        %921 = vmatprep.subr.bf16.mxu0 0
        %922 = vmatpush1.bf16.msra.mxu0 0
        %923 = vmatprep.subr.bf16.mxu0 0
        %924 = vmatpush1.bf16.msra.mxu0 0
        %925 = vmatprep.subr.bf16.mxu0 0
        %926 = vmatpush1.bf16.msra.mxu0 0
        %927 = vmatprep.subr.bf16.mxu0 0
        %928 = vmatpush1.bf16.msra.mxu0 0
        %929 = vmatprep.subr.bf16.mxu0 0
        %930 = vmatpush1.bf16.msra.mxu0 0
        %931 = vmatprep.subr.bf16.mxu0 0
        %932 = vmatpush1.bf16.msra.mxu0 0
        %933 = vmatprep.subr.bf16.mxu0 0
        %934 = vmatpush1.bf16.msra.mxu0 0
        %935 = vmatprep.subr.bf16.mxu0 0
        %936 = vmatpush1.bf16.msra.mxu0 0
        %937 = vmatprep.subr.bf16.mxu0 0
        %938 = vmatpush1.bf16.msra.mxu0 0
        %939 = vmatprep.subr.bf16.mxu0 0
        %940 = vmatpush1.bf16.msra.mxu0 0
        %941 = vmatprep.subr.bf16.mxu0 0
        %942 = vmatpush1.bf16.msra.mxu0 0
        %943 = vmatprep.subr.bf16.mxu0 0
        %944 = vmatpush1.bf16.msra.mxu0 0
        %945 = vmatprep.subr.bf16.mxu0 0
        %946 = vmatpush1.bf16.msra.mxu0 0
        %947 = vmatprep.subr.bf16.mxu0 0
        %948 = vmatpush1.bf16.msra.mxu0 0
        %949 = vmatprep.subr.bf16.mxu0 0
        %950 = vmatpush1.bf16.msra.mxu0 0
        %951 = vmatprep.mubr.bf16.mxu0 0
        %952 = vmatmul.mubr.bf16.gmra.mrb[0].mxu0 %v914
        %v953 = vpop.f32.mrb[0].mxu0
        %v954 = vadd.f32 0.0, %v953
        %v955 = vpop.f32.mrb[0].mxu0
        %v956 = vpop.f32.mrb[0].mxu0
        %v957 = vpop.f32.mrb[0].mxu0
        %958 = vdwg.mxu0
        %v959 = vmul.f32 %v954, 0.35355338
        %v960 = vadd.f32 %v959, %v662
        %v961 = vsel %vm764, %v960, -inf
        %962 = vmax.xlane.f32.xlu0 %v961
        %v963 = vpop.xlane.xlu0 %962
        %v964 = vsub.f32 %v960, %v963
        %v965 = vmul.f32 %v964, 1.442695
        %v966 = vpow.pop %v965
        %v967 = vsel %vm764, %v966, 0.0
        %968 = vadd.xlane.f32.xlu0 %v967
        %v969 = vpop.xlane.xlu0 %968
        %v970 = vrcp.pop %v969
        %v971 = vmul.f32 %v966, %v970
        %v972 = vpack.c.bf16 %v971, %v971
        %973 = vrot.lane.b32.xlu0 %v762, 56
        %v974 = vpop.permute.xlu0 %973
        %v976 = vsel %vm764, %v972, 0
        %v979 = vsel %vm768, %v974, 0
        %981 = vmatprep.subr.bf16.mxu0 0
        %982 = vmatpush1.bf16.msra.mxu0 %v979
        %983 = vmatprep.subr.bf16.mxu0 0
        %984 = vmatpush1.bf16.msra.mxu0 0
        %985 = vmatprep.subr.bf16.mxu0 0
        %986 = vmatpush1.bf16.msra.mxu0 0
        %987 = vmatprep.subr.bf16.mxu0 0
        %988 = vmatpush1.bf16.msra.mxu0 0
        %989 = vmatprep.subr.bf16.mxu0 0
        %990 = vmatpush1.bf16.msra.mxu0 0
        %991 = vmatprep.subr.bf16.mxu0 0
        %992 = vmatpush1.bf16.msra.mxu0 0
        %993 = vmatprep.subr.bf16.mxu0 0
        %994 = vmatpush1.bf16.msra.mxu0 0
        %995 = vmatprep.subr.bf16.mxu0 0
        %996 = vmatpush1.bf16.msra.mxu0 0
        %997 = vmatprep.subr.bf16.mxu0 0
        %998 = vmatpush1.bf16.msra.mxu0 0
        %999 = vmatprep.subr.bf16.mxu0 0
        %1000 = vmatpush1.bf16.msra.mxu0 0
        %1001 = vmatprep.subr.bf16.mxu0 0
        %1002 = vmatpush1.bf16.msra.mxu0 0
        %1003 = vmatprep.subr.bf16.mxu0 0
        %1004 = vmatpush1.bf16.msra.mxu0 0
        %1005 = vmatprep.subr.bf16.mxu0 0
        %1006 = vmatpush1.bf16.msra.mxu0 0
        %1007 = vmatprep.subr.bf16.mxu0 0
        %1008 = vmatpush1.bf16.msra.mxu0 0
        %1009 = vmatprep.subr.bf16.mxu0 0
        %1010 = vmatpush1.bf16.msra.mxu0 0
        %1011 = vmatprep.subr.bf16.mxu0 0
        %1012 = vmatpush1.bf16.msra.mxu0 0
        %1013 = vmatprep.mubr.bf16.mxu0 0
        %1014 = vmatmul.mubr.bf16.gmra.mrb[0].mxu0 %v976
        %v1015 = vpop.f32.mrb[0].mxu0
        %v1016 = vadd.f32 0.0, %v1015
        %v1017 = vpop.f32.mrb[0].mxu0
        %v1018 = vpop.f32.mrb[0].mxu0
        %v1019 = vpop.f32.mrb[0].mxu0
        %1020 = vdwg.mxu0
        %1021 = vrot.lane.b32.xlu0 %v721, 80
        %v1022 = vpop.permute.xlu0 %1021
        %1024 = vxpose.xlu0.b32.start [1/16] %v1022, 128
        %1025 = vxpose.xlu0.b32.cont [2/16] 0.0, 128
        %1026 = vxpose.xlu0.b32.cont [3/16] 0.0, 128
        %1027 = vxpose.xlu0.b32.cont [4/16] 0.0, 128
        %1028 = vxpose.xlu0.b32.cont [5/16] 0.0, 128
        %1029 = vxpose.xlu0.b32.cont [6/16] 0.0, 128
        %1030 = vxpose.xlu0.b32.cont [7/16] 0.0, 128
        %1031 = vxpose.xlu0.b32.cont [8/16] 0.0, 128
        %1032 = vxpose.xlu0.b32.cont [9/16] 0.0, 128
        %1033 = vxpose.xlu0.b32.cont [10/16] 0.0, 128
        %1034 = vxpose.xlu0.b32.cont [11/16] 0.0, 128
        %1035 = vxpose.xlu0.b32.cont [12/16] 0.0, 128
        %1036 = vxpose.xlu0.b32.cont [13/16] 0.0, 128
        %1037 = vxpose.xlu0.b32.cont [14/16] 0.0, 128
        %1038 = vxpose.xlu0.b32.cont [15/16] 0.0, 128
        %1039 = vxpose.xlu0.b32.end [16/16] 0.0, 128
        %v1040 = vpop.trf.xlu0
        %v1041 = vpop.trf.xlu0
        %v1042 = vpop.trf.xlu0
        %v1043 = vpop.trf.xlu0
        %v1044 = vpop.trf.xlu0
        %v1045 = vpop.trf.xlu0
        %v1046 = vpop.trf.xlu0
        %v1047 = vpop.trf.xlu0
        %v1048 = vpop.trf.xlu0
        %v1049 = vpop.trf.xlu0
        %v1050 = vpop.trf.xlu0
        %v1051 = vpop.trf.xlu0
        %v1052 = vpop.trf.xlu0
        %v1053 = vpop.trf.xlu0
        %v1054 = vpop.trf.xlu0
        %v1055 = vpop.trf.xlu0
        %v1056 = vpack.c.bf16 %v1040, %v1040
        %1057 = vrot.lane.b32.xlu0 %v762, 112
        %v1058 = vpop.permute.xlu0 %1057
        %v1060 = vsel %vm764, %v1058, 0
        %v1063 = vsel %vm768, %v1056, 0
        %1065 = vmatprep.subr.bf16.mxu0 0
        %1066 = vmatpush1.bf16.msra.mxu0 %v1063
        %1067 = vmatprep.subr.bf16.mxu0 0
        %1068 = vmatpush1.bf16.msra.mxu0 0
        %1069 = vmatprep.subr.bf16.mxu0 0
        %1070 = vmatpush1.bf16.msra.mxu0 0
        %1071 = vmatprep.subr.bf16.mxu0 0
        %1072 = vmatpush1.bf16.msra.mxu0 0
        %1073 = vmatprep.subr.bf16.mxu0 0
        %1074 = vmatpush1.bf16.msra.mxu0 0
        %1075 = vmatprep.subr.bf16.mxu0 0
        %1076 = vmatpush1.bf16.msra.mxu0 0
        %1077 = vmatprep.subr.bf16.mxu0 0
        %1078 = vmatpush1.bf16.msra.mxu0 0
        %1079 = vmatprep.subr.bf16.mxu0 0
        %1080 = vmatpush1.bf16.msra.mxu0 0
        %1081 = vmatprep.subr.bf16.mxu0 0
        %1082 = vmatpush1.bf16.msra.mxu0 0
        %1083 = vmatprep.subr.bf16.mxu0 0
        %1084 = vmatpush1.bf16.msra.mxu0 0
        %1085 = vmatprep.subr.bf16.mxu0 0
        %1086 = vmatpush1.bf16.msra.mxu0 0
        %1087 = vmatprep.subr.bf16.mxu0 0
        %1088 = vmatpush1.bf16.msra.mxu0 0
        %1089 = vmatprep.subr.bf16.mxu0 0
        %1090 = vmatpush1.bf16.msra.mxu0 0
        %1091 = vmatprep.subr.bf16.mxu0 0
        %1092 = vmatpush1.bf16.msra.mxu0 0
        %1093 = vmatprep.subr.bf16.mxu0 0
        %1094 = vmatpush1.bf16.msra.mxu0 0
        %1095 = vmatprep.subr.bf16.mxu0 0
        %1096 = vmatpush1.bf16.msra.mxu0 0
        %1097 = vmatprep.mubr.bf16.mxu0 0
        %1098 = vmatmul.mubr.bf16.gmra.mrb[0].mxu0 %v1060
        %v1099 = vpop.f32.mrb[0].mxu0
        %v1100 = vadd.f32 0.0, %v1099
        %v1101 = vpop.f32.mrb[0].mxu0
        %v1102 = vpop.f32.mrb[0].mxu0
        %v1103 = vpop.f32.mrb[0].mxu0
        %1104 = vdwg.mxu0
        %v1105 = vmul.f32 %v1100, 0.35355338
        %v1106 = vadd.f32 %v1105, %v662
        %v1107 = vsel %vm764, %v1106, -inf
        %1108 = vmax.xlane.f32.xlu0 %v1107
        %v1109 = vpop.xlane.xlu0 %1108
        %v1110 = vsub.f32 %v1106, %v1109
        %v1111 = vmul.f32 %v1110, 1.442695
        %v1112 = vpow.pop %v1111
        %v1113 = vsel %vm764, %v1112, 0.0
        %1114 = vadd.xlane.f32.xlu0 %v1113
        %v1115 = vpop.xlane.xlu0 %1114
        %v1116 = vrcp.pop %v1115
        %v1117 = vmul.f32 %v1112, %v1116
        %v1118 = vpack.c.bf16 %v1117, %v1117
        %1119 = vrot.lane.b32.xlu0 %v762, 48
        %v1120 = vpop.permute.xlu0 %1119
        %v1122 = vsel %vm764, %v1118, 0
        %v1125 = vsel %vm768, %v1120, 0
        %1127 = vmatprep.subr.bf16.mxu0 0
        %1128 = vmatpush1.bf16.msra.mxu0 %v1125
        %1129 = vmatprep.subr.bf16.mxu0 0
        %1130 = vmatpush1.bf16.msra.mxu0 0
        %1131 = vmatprep.subr.bf16.mxu0 0
        %1132 = vmatpush1.bf16.msra.mxu0 0
        %1133 = vmatprep.subr.bf16.mxu0 0
        %1134 = vmatpush1.bf16.msra.mxu0 0
        %1135 = vmatprep.subr.bf16.mxu0 0
        %1136 = vmatpush1.bf16.msra.mxu0 0
        %1137 = vmatprep.subr.bf16.mxu0 0
        %1138 = vmatpush1.bf16.msra.mxu0 0
        %1139 = vmatprep.subr.bf16.mxu0 0
        %1140 = vmatpush1.bf16.msra.mxu0 0
        %1141 = vmatprep.subr.bf16.mxu0 0
        %1142 = vmatpush1.bf16.msra.mxu0 0
        %1143 = vmatprep.subr.bf16.mxu0 0
        %1144 = vmatpush1.bf16.msra.mxu0 0
        %1145 = vmatprep.subr.bf16.mxu0 0
        %1146 = vmatpush1.bf16.msra.mxu0 0
        %1147 = vmatprep.subr.bf16.mxu0 0
        %1148 = vmatpush1.bf16.msra.mxu0 0
        %1149 = vmatprep.subr.bf16.mxu0 0
        %1150 = vmatpush1.bf16.msra.mxu0 0
        %1151 = vmatprep.subr.bf16.mxu0 0
        %1152 = vmatpush1.bf16.msra.mxu0 0
        %1153 = vmatprep.subr.bf16.mxu0 0
        %1154 = vmatpush1.bf16.msra.mxu0 0
        %1155 = vmatprep.subr.bf16.mxu0 0
        %1156 = vmatpush1.bf16.msra.mxu0 0
        %1157 = vmatprep.subr.bf16.mxu0 0
        %1158 = vmatpush1.bf16.msra.mxu0 0
        %1159 = vmatprep.mubr.bf16.mxu0 0
        %1160 = vmatmul.mubr.bf16.gmra.mrb[0].mxu0 %v1122
        %v1161 = vpop.f32.mrb[0].mxu0
        %v1162 = vadd.f32 0.0, %v1161
        %v1163 = vpop.f32.mrb[0].mxu0
        %v1164 = vpop.f32.mrb[0].mxu0
        %v1165 = vpop.f32.mrb[0].mxu0
        %1166 = vdwg.mxu0
        %1167 = vrot.lane.b32.xlu0 %v721, 72
        %v1168 = vpop.permute.xlu0 %1167
        %1170 = vxpose.xlu0.b32.start [1/16] %v1168, 128
        %1171 = vxpose.xlu0.b32.cont [2/16] 0.0, 128
        %1172 = vxpose.xlu0.b32.cont [3/16] 0.0, 128
        %1173 = vxpose.xlu0.b32.cont [4/16] 0.0, 128
        %1174 = vxpose.xlu0.b32.cont [5/16] 0.0, 128
        %1175 = vxpose.xlu0.b32.cont [6/16] 0.0, 128
        %1176 = vxpose.xlu0.b32.cont [7/16] 0.0, 128
        %1177 = vxpose.xlu0.b32.cont [8/16] 0.0, 128
        %1178 = vxpose.xlu0.b32.cont [9/16] 0.0, 128
        %1179 = vxpose.xlu0.b32.cont [10/16] 0.0, 128
        %1180 = vxpose.xlu0.b32.cont [11/16] 0.0, 128
        %1181 = vxpose.xlu0.b32.cont [12/16] 0.0, 128
        %1182 = vxpose.xlu0.b32.cont [13/16] 0.0, 128
        %1183 = vxpose.xlu0.b32.cont [14/16] 0.0, 128
        %1184 = vxpose.xlu0.b32.cont [15/16] 0.0, 128
        %1185 = vxpose.xlu0.b32.end [16/16] 0.0, 128
        %v1186 = vpop.trf.xlu0
        %v1187 = vpop.trf.xlu0
        %v1188 = vpop.trf.xlu0
        %v1189 = vpop.trf.xlu0
        %v1190 = vpop.trf.xlu0
        %v1191 = vpop.trf.xlu0
        %v1192 = vpop.trf.xlu0
        %v1193 = vpop.trf.xlu0
        %v1194 = vpop.trf.xlu0
        %v1195 = vpop.trf.xlu0
        %v1196 = vpop.trf.xlu0
        %v1197 = vpop.trf.xlu0
        %v1198 = vpop.trf.xlu0
        %v1199 = vpop.trf.xlu0
        %v1200 = vpop.trf.xlu0
        %v1201 = vpop.trf.xlu0
        %v1202 = vpack.c.bf16 %v1186, %v1186
        %1203 = vrot.lane.b32.xlu0 %v762, 104
        %v1204 = vpop.permute.xlu0 %1203
        %v1206 = vsel %vm764, %v1204, 0
        %v1209 = vsel %vm768, %v1202, 0
        %1211 = vmatprep.subr.bf16.mxu0 0
        %1212 = vmatpush1.bf16.msra.mxu0 %v1209
        %1213 = vmatprep.subr.bf16.mxu0 0
        %1214 = vmatpush1.bf16.msra.mxu0 0
        %1215 = vmatprep.subr.bf16.mxu0 0
        %1216 = vmatpush1.bf16.msra.mxu0 0
        %1217 = vmatprep.subr.bf16.mxu0 0
        %1218 = vmatpush1.bf16.msra.mxu0 0
        %1219 = vmatprep.subr.bf16.mxu0 0
        %1220 = vmatpush1.bf16.msra.mxu0 0
        %1221 = vmatprep.subr.bf16.mxu0 0
        %1222 = vmatpush1.bf16.msra.mxu0 0
        %1223 = vmatprep.subr.bf16.mxu0 0
        %1224 = vmatpush1.bf16.msra.mxu0 0
        %1225 = vmatprep.subr.bf16.mxu0 0
        %1226 = vmatpush1.bf16.msra.mxu0 0
        %1227 = vmatprep.subr.bf16.mxu0 0
        %1228 = vmatpush1.bf16.msra.mxu0 0
        %1229 = vmatprep.subr.bf16.mxu0 0
        %1230 = vmatpush1.bf16.msra.mxu0 0
        %1231 = vmatprep.subr.bf16.mxu0 0
        %1232 = vmatpush1.bf16.msra.mxu0 0
        %1233 = vmatprep.subr.bf16.mxu0 0
        %1234 = vmatpush1.bf16.msra.mxu0 0
        %1235 = vmatprep.subr.bf16.mxu0 0
        %1236 = vmatpush1.bf16.msra.mxu0 0
        %1237 = vmatprep.subr.bf16.mxu0 0
        %1238 = vmatpush1.bf16.msra.mxu0 0
        %1239 = vmatprep.subr.bf16.mxu0 0
        %1240 = vmatpush1.bf16.msra.mxu0 0
        %1241 = vmatprep.subr.bf16.mxu0 0
        %1242 = vmatpush1.bf16.msra.mxu0 0
        %1243 = vmatprep.mubr.bf16.mxu0 0
        %1244 = vmatmul.mubr.bf16.gmra.mrb[0].mxu0 %v1206
        %v1245 = vpop.f32.mrb[0].mxu0
        %v1246 = vadd.f32 0.0, %v1245
        %v1247 = vpop.f32.mrb[0].mxu0
        %v1248 = vpop.f32.mrb[0].mxu0
        %v1249 = vpop.f32.mrb[0].mxu0
        %1250 = vdwg.mxu0
        %v1251 = vmul.f32 %v1246, 0.35355338
        %v1252 = vadd.f32 %v1251, %v662
        %v1253 = vsel %vm764, %v1252, -inf
        %1254 = vmax.xlane.f32.xlu0 %v1253
        %v1255 = vpop.xlane.xlu0 %1254
        %v1256 = vsub.f32 %v1252, %v1255
        %v1257 = vmul.f32 %v1256, 1.442695
        %v1258 = vpow.pop %v1257
        %v1259 = vsel %vm764, %v1258, 0.0
        %1260 = vadd.xlane.f32.xlu0 %v1259
        %v1261 = vpop.xlane.xlu0 %1260
        %v1262 = vrcp.pop %v1261
        %v1263 = vmul.f32 %v1258, %v1262
        %v1264 = vpack.c.bf16 %v1263, %v1263
        %1265 = vrot.lane.b32.xlu0 %v762, 40
        %v1266 = vpop.permute.xlu0 %1265
        %v1268 = vsel %vm764, %v1264, 0
        %v1271 = vsel %vm768, %v1266, 0
        %1273 = vmatprep.subr.bf16.mxu0 0
        %1274 = vmatpush1.bf16.msra.mxu0 %v1271
        %1275 = vmatprep.subr.bf16.mxu0 0
        %1276 = vmatpush1.bf16.msra.mxu0 0
        %1277 = vmatprep.subr.bf16.mxu0 0
        %1278 = vmatpush1.bf16.msra.mxu0 0
        %1279 = vmatprep.subr.bf16.mxu0 0
        %1280 = vmatpush1.bf16.msra.mxu0 0
        %1281 = vmatprep.subr.bf16.mxu0 0
        %1282 = vmatpush1.bf16.msra.mxu0 0
        %1283 = vmatprep.subr.bf16.mxu0 0
        %1284 = vmatpush1.bf16.msra.mxu0 0
        %1285 = vmatprep.subr.bf16.mxu0 0
        %1286 = vmatpush1.bf16.msra.mxu0 0
        %1287 = vmatprep.subr.bf16.mxu0 0
        %1288 = vmatpush1.bf16.msra.mxu0 0
        %1289 = vmatprep.subr.bf16.mxu0 0
        %1290 = vmatpush1.bf16.msra.mxu0 0
        %1291 = vmatprep.subr.bf16.mxu0 0
        %1292 = vmatpush1.bf16.msra.mxu0 0
        %1293 = vmatprep.subr.bf16.mxu0 0
        %1294 = vmatpush1.bf16.msra.mxu0 0
        %1295 = vmatprep.subr.bf16.mxu0 0
        %1296 = vmatpush1.bf16.msra.mxu0 0
        %1297 = vmatprep.subr.bf16.mxu0 0
        %1298 = vmatpush1.bf16.msra.mxu0 0
        %1299 = vmatprep.subr.bf16.mxu0 0
        %1300 = vmatpush1.bf16.msra.mxu0 0
        %1301 = vmatprep.subr.bf16.mxu0 0
        %1302 = vmatpush1.bf16.msra.mxu0 0
        %1303 = vmatprep.subr.bf16.mxu0 0
        %1304 = vmatpush1.bf16.msra.mxu0 0
        %1305 = vmatprep.mubr.bf16.mxu0 0
        %1306 = vmatmul.mubr.bf16.gmra.mrb[0].mxu0 %v1268
        %v1307 = vpop.f32.mrb[0].mxu0
        %v1308 = vadd.f32 0.0, %v1307
        %v1309 = vpop.f32.mrb[0].mxu0
        %v1310 = vpop.f32.mrb[0].mxu0
        %v1311 = vpop.f32.mrb[0].mxu0
        %1312 = vdwg.mxu0
        %1314 = vrot.lane.b32.xlu0 %v1016, 8
        %v1315 = vpop.permute.xlu0 %1314
        %1318 = vrot.lane.b32.xlu0 %v1162, 16
        %v1319 = vpop.permute.xlu0 %1318
        %1322 = vrot.lane.b32.xlu0 %v1308, 24
        %v1323 = vpop.permute.xlu0 %1322
        %v1325 = vsel %vm764, %v870, %v1315
        %vm1326 = vcmask 130048
        %v1327 = vsel %vm1326, %v1325, %v1319
        %vm1328 = vcmask 195584
        %v1329 = vsel %vm1328, %v1327, %v1323
        %v1330 = vld [vmem:[%s5] sm:$0xf]
        %v1331 = vld [vmem:[%s5 + $0x4] sm:$0xf]
        %v1332 = vld [vmem:[%s5 + $0x8] sm:$0xf]
        %v1333 = vld [vmem:[%s5 + $0xc] sm:$0xf]
        %v1334 = vpack.c.bf16 %v1329, %v1329
        %v1339 = vunpack.c.l.b16 %v1330
        %v1340 = vunpack.c.l.b16 %v1331
        %v1341 = vunpack.c.l.b16 %v1332
        %v1342 = vunpack.c.l.b16 %v1333
        %v1343 = vpack.c.b16 %v1340, %v1339
        %v1344 = vpack.c.b16 %v1342, %v1341
        %v1348 = vsel %vm682, %v1334, 0
        %1350 = vmatprep.subr.bf16.mxu0 0
        %1351 = vmatpush1.bf16.msra.mxu0 %v1343
        %1352 = vmatprep.subr.bf16.mxu0 0
        %1353 = vmatpush1.bf16.msra.mxu0 %v1344
        %1354 = vmatprep.subr.bf16.mxu0 0
        %1355 = vmatpush1.bf16.msra.mxu0 0
        %1356 = vmatprep.subr.bf16.mxu0 0
        %1357 = vmatpush1.bf16.msra.mxu0 0
        %1358 = vmatprep.subr.bf16.mxu0 0
        %1359 = vmatpush1.bf16.msra.mxu0 0
        %1360 = vmatprep.subr.bf16.mxu0 0
        %1361 = vmatpush1.bf16.msra.mxu0 0
        %1362 = vmatprep.subr.bf16.mxu0 0
        %1363 = vmatpush1.bf16.msra.mxu0 0
        %1364 = vmatprep.subr.bf16.mxu0 0
        %1365 = vmatpush1.bf16.msra.mxu0 0
        %1366 = vmatprep.subr.bf16.mxu0 0
        %1367 = vmatpush1.bf16.msra.mxu0 0
        %1368 = vmatprep.subr.bf16.mxu0 0
        %1369 = vmatpush1.bf16.msra.mxu0 0
        %1370 = vmatprep.subr.bf16.mxu0 0
        %1371 = vmatpush1.bf16.msra.mxu0 0
        %1372 = vmatprep.subr.bf16.mxu0 0
        %1373 = vmatpush1.bf16.msra.mxu0 0
        %1374 = vmatprep.subr.bf16.mxu0 0
        %1375 = vmatpush1.bf16.msra.mxu0 0
        %1376 = vmatprep.subr.bf16.mxu0 0
        %1377 = vmatpush1.bf16.msra.mxu0 0
        %1378 = vmatprep.subr.bf16.mxu0 0
        %1379 = vmatpush1.bf16.msra.mxu0 0
        %1380 = vmatprep.subr.bf16.mxu0 0
        %1381 = vmatpush1.bf16.msra.mxu0 0
        %1382 = vmatprep.mubr.bf16.mxu0 0
        %1383 = vmatmul.mubr.bf16.gmra.mrb[0].mxu0 %v1348
        %v1384 = vpop.f32.mrb[0].mxu0
        %v1385 = vadd.f32 0.0, %v1384
        %v1386 = vpop.f32.mrb[0].mxu0
        %v1387 = vpop.f32.mrb[0].mxu0
        %v1388 = vpop.f32.mrb[0].mxu0
        %1389 = vdwg.mxu0
        %v1390 = vadd.f32 %v644, %v1385
        %v1391 = vsel %vm682, %v1390, 0.0
        %1392 = vadd.xlane.f32.xlu0 %v1391
        %v1393 = vpop.xlane.xlu0 %1392
        %v1394 = vrcp.pop 32.0
        %v1395 = vmul.f32 %v1393, %v1394
        %v1396 = vsub.f32 %v1390, %v1395
        %v1397 = vmul.f32 %v1396, %v1396
        %v1398 = vsel %vm682, %v1397, 0.0
        %1399 = vadd.xlane.f32.xlu0 %v1398
        %v1400 = vpop.xlane.xlu0 %1399
        %v1401 = vmul.f32 %v1400, %v1394
        %v1402 = vadd.f32 %v1401, 1e-05
        %v1403 = vrsqrt.pop %v1402
        %v1404 = vmul.f32 %v1396, %v1403
        %v1405 = vld [vmem:[%s13] sm:$0x1]
        %v1407 = vlaneseq
        %v1408 = vshrl.u32 %v1407, 7
        %v1409 = vsub.s32 0, %v1408
        %v1410 = vrot.slane %v1405, %v1409
        %v1412 = vmul.f32 %v1404, %v1410
        %v1413 = vld [vmem:[%s14] sm:$0x1]
        %v1415 = vlaneseq
        %v1416 = vshrl.u32 %v1415, 7
        %v1417 = vsub.s32 0, %v1416
        %v1418 = vrot.slane %v1413, %v1417
        %v1420 = vadd.f32 %v1412, %v1418
        %v1421 = vld [vmem:[%s6] sm:$0xf]
        %v1422 = vld [vmem:[%s6 + $0x4] sm:$0xf]
        %v1423 = vld [vmem:[%s6 + $0x8] sm:$0xf]
        %v1424 = vld [vmem:[%s6 + $0xc] sm:$0xf]
        %v1425 = vpack.c.bf16 %v1420, %v1420
        %v1430 = vunpack.c.l.b16 %v1421
        %v1431 = vunpack.c.l.b16 %v1422
        %v1432 = vunpack.c.l.b16 %v1423
        %v1433 = vunpack.c.l.b16 %v1424
        %v1434 = vpack.c.b16 %v1431, %v1430
        %v1435 = vpack.c.b16 %v1433, %v1432
        %v1439 = vsel %vm682, %v1425, 0
        %1441 = vmatprep.subr.bf16.mxu0 0
        %1442 = vmatpush1.bf16.msra.mxu0 %v1434
        %1443 = vmatprep.subr.bf16.mxu0 0
        %1444 = vmatpush1.bf16.msra.mxu0 %v1435
        %1445 = vmatprep.subr.bf16.mxu0 0
        %1446 = vmatpush1.bf16.msra.mxu0 0
        %1447 = vmatprep.subr.bf16.mxu0 0
        %1448 = vmatpush1.bf16.msra.mxu0 0
        %1449 = vmatprep.subr.bf16.mxu0 0
        %1450 = vmatpush1.bf16.msra.mxu0 0
        %1451 = vmatprep.subr.bf16.mxu0 0
        %1452 = vmatpush1.bf16.msra.mxu0 0
        %1453 = vmatprep.subr.bf16.mxu0 0
        %1454 = vmatpush1.bf16.msra.mxu0 0
        %1455 = vmatprep.subr.bf16.mxu0 0
        %1456 = vmatpush1.bf16.msra.mxu0 0
        %1457 = vmatprep.subr.bf16.mxu0 0
        %1458 = vmatpush1.bf16.msra.mxu0 0
        %1459 = vmatprep.subr.bf16.mxu0 0
        %1460 = vmatpush1.bf16.msra.mxu0 0
        %1461 = vmatprep.subr.bf16.mxu0 0
        %1462 = vmatpush1.bf16.msra.mxu0 0
        %1463 = vmatprep.subr.bf16.mxu0 0
        %1464 = vmatpush1.bf16.msra.mxu0 0
        %1465 = vmatprep.subr.bf16.mxu0 0
        %1466 = vmatpush1.bf16.msra.mxu0 0
        %1467 = vmatprep.subr.bf16.mxu0 0
        %1468 = vmatpush1.bf16.msra.mxu0 0
        %1469 = vmatprep.subr.bf16.mxu0 0
        %1470 = vmatpush1.bf16.msra.mxu0 0
        %1471 = vmatprep.subr.bf16.mxu0 0
        %1472 = vmatpush1.bf16.msra.mxu0 0
        %1473 = vmatprep.mubr.bf16.mxu0 0
        %1474 = vmatmul.mubr.bf16.gmra.mrb[0].mxu0 %v1439
        %v1475 = vpop.f32.mrb[0].mxu0
        %v1476 = vadd.f32 0.0, %v1475
        %v1477 = vpop.f32.mrb[0].mxu0
        %v1478 = vpop.f32.mrb[0].mxu0
        %v1479 = vpop.f32.mrb[0].mxu0
        %1480 = vdwg.mxu0
        %v1481 = vld [vmem:[%s7] sm:$0xf]
        %v1482 = vld [vmem:[%s7 + $0x4] sm:$0xf]
        %v1483 = vld [vmem:[%s7 + $0x8] sm:$0xf]
        %v1484 = vld [vmem:[%s7 + $0xc] sm:$0xf]
        %v1485 = vpack.c.bf16 %v645, %v645
        %v1490 = vunpack.c.l.b16 %v1481
        %v1491 = vunpack.c.l.b16 %v1482
        %v1492 = vunpack.c.l.b16 %v1483
        %v1493 = vunpack.c.l.b16 %v1484
        %v1494 = vpack.c.b16 %v1491, %v1490
        %v1495 = vpack.c.b16 %v1493, %v1492
        %v1499 = vsel %vm682, %v1485, 0
        %1501 = vmatprep.subr.bf16.mxu0 0
        %1502 = vmatpush1.bf16.msra.mxu0 %v1494
        %1503 = vmatprep.subr.bf16.mxu0 0
        %1504 = vmatpush1.bf16.msra.mxu0 %v1495
        %1505 = vmatprep.subr.bf16.mxu0 0
        %1506 = vmatpush1.bf16.msra.mxu0 0
        %1507 = vmatprep.subr.bf16.mxu0 0
        %1508 = vmatpush1.bf16.msra.mxu0 0
        %1509 = vmatprep.subr.bf16.mxu0 0
        %1510 = vmatpush1.bf16.msra.mxu0 0
        %1511 = vmatprep.subr.bf16.mxu0 0
        %1512 = vmatpush1.bf16.msra.mxu0 0
        %1513 = vmatprep.subr.bf16.mxu0 0
        %1514 = vmatpush1.bf16.msra.mxu0 0
        %1515 = vmatprep.subr.bf16.mxu0 0
        %1516 = vmatpush1.bf16.msra.mxu0 0
        %1517 = vmatprep.subr.bf16.mxu0 0
        %1518 = vmatpush1.bf16.msra.mxu0 0
        %1519 = vmatprep.subr.bf16.mxu0 0
        %1520 = vmatpush1.bf16.msra.mxu0 0
        %1521 = vmatprep.subr.bf16.mxu0 0
        %1522 = vmatpush1.bf16.msra.mxu0 0
        %1523 = vmatprep.subr.bf16.mxu0 0
        %1524 = vmatpush1.bf16.msra.mxu0 0
        %1525 = vmatprep.subr.bf16.mxu0 0
        %1526 = vmatpush1.bf16.msra.mxu0 0
        %1527 = vmatprep.subr.bf16.mxu0 0
        %1528 = vmatpush1.bf16.msra.mxu0 0
        %1529 = vmatprep.subr.bf16.mxu0 0
        %1530 = vmatpush1.bf16.msra.mxu0 0
        %1531 = vmatprep.subr.bf16.mxu0 0
        %1532 = vmatpush1.bf16.msra.mxu0 0
        %1533 = vmatprep.mubr.bf16.mxu0 0
        %1534 = vmatmul.mubr.bf16.gmra.mrb[0].mxu0 %v1499
        %v1535 = vpop.f32.mrb[0].mxu0
        %v1536 = vadd.f32 0.0, %v1535
        %v1537 = vpop.f32.mrb[0].mxu0
        %v1538 = vpop.f32.mrb[0].mxu0
        %v1539 = vpop.f32.mrb[0].mxu0
        %1540 = vdwg.mxu0
        %1541 = vxpose.xlu0.b32.start [1/16] %v1536, 128
        %1542 = vxpose.xlu0.b32.cont [2/16] 0.0, 128
        %1543 = vxpose.xlu0.b32.cont [3/16] 0.0, 128
        %1544 = vxpose.xlu0.b32.cont [4/16] 0.0, 128
        %1545 = vxpose.xlu0.b32.cont [5/16] 0.0, 128
        %1546 = vxpose.xlu0.b32.cont [6/16] 0.0, 128
        %1547 = vxpose.xlu0.b32.cont [7/16] 0.0, 128
        %1548 = vxpose.xlu0.b32.cont [8/16] 0.0, 128
        %1549 = vxpose.xlu0.b32.cont [9/16] 0.0, 128
        %1550 = vxpose.xlu0.b32.cont [10/16] 0.0, 128
        %1551 = vxpose.xlu0.b32.cont [11/16] 0.0, 128
        %1552 = vxpose.xlu0.b32.cont [12/16] 0.0, 128
        %1553 = vxpose.xlu0.b32.cont [13/16] 0.0, 128
        %1554 = vxpose.xlu0.b32.cont [14/16] 0.0, 128
        %1555 = vxpose.xlu0.b32.cont [15/16] 0.0, 128
        %1556 = vxpose.xlu0.b32.end [16/16] 0.0, 128
        %v1557 = vpop.trf.xlu0
        %v1558 = vpop.trf.xlu0
        %v1559 = vpop.trf.xlu0
        %v1560 = vpop.trf.xlu0
        %v1561 = vpop.trf.xlu0
        %v1562 = vpop.trf.xlu0
        %v1563 = vpop.trf.xlu0
        %v1564 = vpop.trf.xlu0
        %v1565 = vpop.trf.xlu0
        %v1566 = vpop.trf.xlu0
        %v1567 = vpop.trf.xlu0
        %v1568 = vpop.trf.xlu0
        %v1569 = vpop.trf.xlu0
        %v1570 = vpop.trf.xlu0
        %v1571 = vpop.trf.xlu0
        %v1572 = vpop.trf.xlu0
        %v1573 = vpack.c.bf16 %v1476, %v1476
        %v1574 = vpack.c.bf16 %v1557, %v1557
        %v1576 = vsel %vm764, %v1573, 0
        %v1579 = vsel %vm768, %v1574, 0
        %1581 = vmatprep.subr.bf16.mxu0 0
        %1582 = vmatpush1.bf16.msra.mxu0 %v1579
        %1583 = vmatprep.subr.bf16.mxu0 0
        %1584 = vmatpush1.bf16.msra.mxu0 0
        %1585 = vmatprep.subr.bf16.mxu0 0
        %1586 = vmatpush1.bf16.msra.mxu0 0
        %1587 = vmatprep.subr.bf16.mxu0 0
        %1588 = vmatpush1.bf16.msra.mxu0 0
        %1589 = vmatprep.subr.bf16.mxu0 0
        %1590 = vmatpush1.bf16.msra.mxu0 0
        %1591 = vmatprep.subr.bf16.mxu0 0
        %1592 = vmatpush1.bf16.msra.mxu0 0
        %1593 = vmatprep.subr.bf16.mxu0 0
        %1594 = vmatpush1.bf16.msra.mxu0 0
        %1595 = vmatprep.subr.bf16.mxu0 0
        %1596 = vmatpush1.bf16.msra.mxu0 0
        %1597 = vmatprep.subr.bf16.mxu0 0
        %1598 = vmatpush1.bf16.msra.mxu0 0
        %1599 = vmatprep.subr.bf16.mxu0 0
        %1600 = vmatpush1.bf16.msra.mxu0 0
        %1601 = vmatprep.subr.bf16.mxu0 0
        %1602 = vmatpush1.bf16.msra.mxu0 0
        %1603 = vmatprep.subr.bf16.mxu0 0
        %1604 = vmatpush1.bf16.msra.mxu0 0
        %1605 = vmatprep.subr.bf16.mxu0 0
        %1606 = vmatpush1.bf16.msra.mxu0 0
        %1607 = vmatprep.subr.bf16.mxu0 0
        %1608 = vmatpush1.bf16.msra.mxu0 0
        %1609 = vmatprep.subr.bf16.mxu0 0
        %1610 = vmatpush1.bf16.msra.mxu0 0
        %1611 = vmatprep.subr.bf16.mxu0 0
        %1612 = vmatpush1.bf16.msra.mxu0 0
        %1613 = vmatprep.mubr.bf16.mxu0 0
        %1614 = vmatmul.mubr.bf16.gmra.mrb[0].mxu0 %v1576
        %v1615 = vpop.f32.mrb[0].mxu0
        %v1616 = vadd.f32 0.0, %v1615
        %v1617 = vpop.f32.mrb[0].mxu0
        %v1618 = vpop.f32.mrb[0].mxu0
        %v1619 = vpop.f32.mrb[0].mxu0
        %1620 = vdwg.mxu0
        %v1621 = vmul.f32 %v1616, 0.35355338
        %v1623 = vlaneseq
        %v1624 = vshrl.u32 %v1623, 7
        %v1625 = vsub.s32 0, %v1624
        %v1626 = vrot.slane %v664, %v1625
        %v1628 = vadd.f32 %v1621, %v1626
        %v1629 = vsel %vm764, %v1628, -inf
        %1630 = vmax.xlane.f32.xlu0 %v1629
        %v1631 = vpop.xlane.xlu0 %1630
        %v1632 = vsub.f32 %v1628, %v1631
        %v1633 = vmul.f32 %v1632, 1.442695
        %v1634 = vpow.pop %v1633
        %v1635 = vsel %vm764, %v1634, 0.0
        %1636 = vadd.xlane.f32.xlu0 %v1635
        %v1637 = vpop.xlane.xlu0 %1636
        %v1638 = vrcp.pop %v1637
        %v1639 = vmul.f32 %v1634, %v1638
        %v1640 = vpack.c.bf16 %v1639, %v1639
        %v1641 = vpack.c.bf16 %v1536, %v1536
        %1643 = vrot.lane.b32.xlu0 %v1641, 96
        %v1644 = vpop.permute.xlu0 %1643
        %v1646 = vsel %vm764, %v1640, 0
        %v1649 = vsel %vm768, %v1644, 0
        %1651 = vmatprep.subr.bf16.mxu0 0
        %1652 = vmatpush1.bf16.msra.mxu0 %v1649
        %1653 = vmatprep.subr.bf16.mxu0 0
        %1654 = vmatpush1.bf16.msra.mxu0 0
        %1655 = vmatprep.subr.bf16.mxu0 0
        %1656 = vmatpush1.bf16.msra.mxu0 0
        %1657 = vmatprep.subr.bf16.mxu0 0
        %1658 = vmatpush1.bf16.msra.mxu0 0
        %1659 = vmatprep.subr.bf16.mxu0 0
        %1660 = vmatpush1.bf16.msra.mxu0 0
        %1661 = vmatprep.subr.bf16.mxu0 0
        %1662 = vmatpush1.bf16.msra.mxu0 0
        %1663 = vmatprep.subr.bf16.mxu0 0
        %1664 = vmatpush1.bf16.msra.mxu0 0
        %1665 = vmatprep.subr.bf16.mxu0 0
        %1666 = vmatpush1.bf16.msra.mxu0 0
        %1667 = vmatprep.subr.bf16.mxu0 0
        %1668 = vmatpush1.bf16.msra.mxu0 0
        %1669 = vmatprep.subr.bf16.mxu0 0
        %1670 = vmatpush1.bf16.msra.mxu0 0
        %1671 = vmatprep.subr.bf16.mxu0 0
        %1672 = vmatpush1.bf16.msra.mxu0 0
        %1673 = vmatprep.subr.bf16.mxu0 0
        %1674 = vmatpush1.bf16.msra.mxu0 0
        %1675 = vmatprep.subr.bf16.mxu0 0
        %1676 = vmatpush1.bf16.msra.mxu0 0
        %1677 = vmatprep.subr.bf16.mxu0 0
        %1678 = vmatpush1.bf16.msra.mxu0 0
        %1679 = vmatprep.subr.bf16.mxu0 0
        %1680 = vmatpush1.bf16.msra.mxu0 0
        %1681 = vmatprep.subr.bf16.mxu0 0
        %1682 = vmatpush1.bf16.msra.mxu0 0
        %1683 = vmatprep.mubr.bf16.mxu0 0
        %1684 = vmatmul.mubr.bf16.gmra.mrb[0].mxu0 %v1646
        %v1685 = vpop.f32.mrb[0].mxu0
        %v1686 = vadd.f32 0.0, %v1685
        %v1687 = vpop.f32.mrb[0].mxu0
        %v1688 = vpop.f32.mrb[0].mxu0
        %v1689 = vpop.f32.mrb[0].mxu0
        %1690 = vdwg.mxu0
        %1692 = vrot.lane.b32.xlu0 %v1536, 120
        %v1693 = vpop.permute.xlu0 %1692
        %1695 = vxpose.xlu0.b32.start [1/16] %v1693, 128
        %1696 = vxpose.xlu0.b32.cont [2/16] 0.0, 128
        %1697 = vxpose.xlu0.b32.cont [3/16] 0.0, 128
        %1698 = vxpose.xlu0.b32.cont [4/16] 0.0, 128
        %1699 = vxpose.xlu0.b32.cont [5/16] 0.0, 128
        %1700 = vxpose.xlu0.b32.cont [6/16] 0.0, 128
        %1701 = vxpose.xlu0.b32.cont [7/16] 0.0, 128
        %1702 = vxpose.xlu0.b32.cont [8/16] 0.0, 128
        %1703 = vxpose.xlu0.b32.cont [9/16] 0.0, 128
        %1704 = vxpose.xlu0.b32.cont [10/16] 0.0, 128
        %1705 = vxpose.xlu0.b32.cont [11/16] 0.0, 128
        %1706 = vxpose.xlu0.b32.cont [12/16] 0.0, 128
        %1707 = vxpose.xlu0.b32.cont [13/16] 0.0, 128
        %1708 = vxpose.xlu0.b32.cont [14/16] 0.0, 128
        %1709 = vxpose.xlu0.b32.cont [15/16] 0.0, 128
        %1710 = vxpose.xlu0.b32.end [16/16] 0.0, 128
        %v1711 = vpop.trf.xlu0
        %v1712 = vpop.trf.xlu0
        %v1713 = vpop.trf.xlu0
        %v1714 = vpop.trf.xlu0
        %v1715 = vpop.trf.xlu0
        %v1716 = vpop.trf.xlu0
        %v1717 = vpop.trf.xlu0
        %v1718 = vpop.trf.xlu0
        %v1719 = vpop.trf.xlu0
        %v1720 = vpop.trf.xlu0
        %v1721 = vpop.trf.xlu0
        %v1722 = vpop.trf.xlu0
        %v1723 = vpop.trf.xlu0
        %v1724 = vpop.trf.xlu0
        %v1725 = vpop.trf.xlu0
        %v1726 = vpop.trf.xlu0
        %v1727 = vpack.c.bf16 %v1711, %v1711
        %1729 = vrot.lane.b32.xlu0 %v1573, 120
        %v1730 = vpop.permute.xlu0 %1729
        %v1732 = vsel %vm764, %v1730, 0
        %v1735 = vsel %vm768, %v1727, 0
        %1737 = vmatprep.subr.bf16.mxu0 0
        %1738 = vmatpush1.bf16.msra.mxu0 %v1735
        %1739 = vmatprep.subr.bf16.mxu0 0
        %1740 = vmatpush1.bf16.msra.mxu0 0
        %1741 = vmatprep.subr.bf16.mxu0 0
        %1742 = vmatpush1.bf16.msra.mxu0 0
        %1743 = vmatprep.subr.bf16.mxu0 0
        %1744 = vmatpush1.bf16.msra.mxu0 0
        %1745 = vmatprep.subr.bf16.mxu0 0
        %1746 = vmatpush1.bf16.msra.mxu0 0
        %1747 = vmatprep.subr.bf16.mxu0 0
        %1748 = vmatpush1.bf16.msra.mxu0 0
        %1749 = vmatprep.subr.bf16.mxu0 0
        %1750 = vmatpush1.bf16.msra.mxu0 0
        %1751 = vmatprep.subr.bf16.mxu0 0
        %1752 = vmatpush1.bf16.msra.mxu0 0
        %1753 = vmatprep.subr.bf16.mxu0 0
        %1754 = vmatpush1.bf16.msra.mxu0 0
        %1755 = vmatprep.subr.bf16.mxu0 0
        %1756 = vmatpush1.bf16.msra.mxu0 0
        %1757 = vmatprep.subr.bf16.mxu0 0
        %1758 = vmatpush1.bf16.msra.mxu0 0
        %1759 = vmatprep.subr.bf16.mxu0 0
        %1760 = vmatpush1.bf16.msra.mxu0 0
        %1761 = vmatprep.subr.bf16.mxu0 0
        %1762 = vmatpush1.bf16.msra.mxu0 0
        %1763 = vmatprep.subr.bf16.mxu0 0
        %1764 = vmatpush1.bf16.msra.mxu0 0
        %1765 = vmatprep.subr.bf16.mxu0 0
        %1766 = vmatpush1.bf16.msra.mxu0 0
        %1767 = vmatprep.subr.bf16.mxu0 0
        %1768 = vmatpush1.bf16.msra.mxu0 0
        %1769 = vmatprep.mubr.bf16.mxu0 0
        %1770 = vmatmul.mubr.bf16.gmra.mrb[0].mxu0 %v1732
        %v1771 = vpop.f32.mrb[0].mxu0
        %v1772 = vadd.f32 0.0, %v1771
        %v1773 = vpop.f32.mrb[0].mxu0
        %v1774 = vpop.f32.mrb[0].mxu0
        %v1775 = vpop.f32.mrb[0].mxu0
        %1776 = vdwg.mxu0
        %v1777 = vmul.f32 %v1772, 0.35355338
        %v1778 = vadd.f32 %v1777, %v1626
        %v1779 = vsel %vm764, %v1778, -inf
        %1780 = vmax.xlane.f32.xlu0 %v1779
        %v1781 = vpop.xlane.xlu0 %1780
        %v1782 = vsub.f32 %v1778, %v1781
        %v1783 = vmul.f32 %v1782, 1.442695
        %v1784 = vpow.pop %v1783
        %v1785 = vsel %vm764, %v1784, 0.0
        %1786 = vadd.xlane.f32.xlu0 %v1785
        %v1787 = vpop.xlane.xlu0 %1786
        %v1788 = vrcp.pop %v1787
        %v1789 = vmul.f32 %v1784, %v1788
        %v1790 = vpack.c.bf16 %v1789, %v1789
        %1791 = vrot.lane.b32.xlu0 %v1641, 88
        %v1792 = vpop.permute.xlu0 %1791
        %v1794 = vsel %vm764, %v1790, 0
        %v1797 = vsel %vm768, %v1792, 0
        %1799 = vmatprep.subr.bf16.mxu0 0
        %1800 = vmatpush1.bf16.msra.mxu0 %v1797
        %1801 = vmatprep.subr.bf16.mxu0 0
        %1802 = vmatpush1.bf16.msra.mxu0 0
        %1803 = vmatprep.subr.bf16.mxu0 0
        %1804 = vmatpush1.bf16.msra.mxu0 0
        %1805 = vmatprep.subr.bf16.mxu0 0
        %1806 = vmatpush1.bf16.msra.mxu0 0
        %1807 = vmatprep.subr.bf16.mxu0 0
        %1808 = vmatpush1.bf16.msra.mxu0 0
        %1809 = vmatprep.subr.bf16.mxu0 0
        %1810 = vmatpush1.bf16.msra.mxu0 0
        %1811 = vmatprep.subr.bf16.mxu0 0
        %1812 = vmatpush1.bf16.msra.mxu0 0
        %1813 = vmatprep.subr.bf16.mxu0 0
        %1814 = vmatpush1.bf16.msra.mxu0 0
        %1815 = vmatprep.subr.bf16.mxu0 0
        %1816 = vmatpush1.bf16.msra.mxu0 0
        %1817 = vmatprep.subr.bf16.mxu0 0
        %1818 = vmatpush1.bf16.msra.mxu0 0
        %1819 = vmatprep.subr.bf16.mxu0 0
        %1820 = vmatpush1.bf16.msra.mxu0 0
        %1821 = vmatprep.subr.bf16.mxu0 0
        %1822 = vmatpush1.bf16.msra.mxu0 0
        %1823 = vmatprep.subr.bf16.mxu0 0
        %1824 = vmatpush1.bf16.msra.mxu0 0
        %1825 = vmatprep.subr.bf16.mxu0 0
        %1826 = vmatpush1.bf16.msra.mxu0 0
        %1827 = vmatprep.subr.bf16.mxu0 0
        %1828 = vmatpush1.bf16.msra.mxu0 0
        %1829 = vmatprep.subr.bf16.mxu0 0
        %1830 = vmatpush1.bf16.msra.mxu0 0
        %1831 = vmatprep.mubr.bf16.mxu0 0
        %1832 = vmatmul.mubr.bf16.gmra.mrb[0].mxu0 %v1794
        %v1833 = vpop.f32.mrb[0].mxu0
        %v1834 = vadd.f32 0.0, %v1833
        %v1835 = vpop.f32.mrb[0].mxu0
        %v1836 = vpop.f32.mrb[0].mxu0
        %v1837 = vpop.f32.mrb[0].mxu0
        %1838 = vdwg.mxu0
        %1839 = vrot.lane.b32.xlu0 %v1536, 112
        %v1840 = vpop.permute.xlu0 %1839
        %1842 = vxpose.xlu0.b32.start [1/16] %v1840, 128
        %1843 = vxpose.xlu0.b32.cont [2/16] 0.0, 128
        %1844 = vxpose.xlu0.b32.cont [3/16] 0.0, 128
        %1845 = vxpose.xlu0.b32.cont [4/16] 0.0, 128
        %1846 = vxpose.xlu0.b32.cont [5/16] 0.0, 128
        %1847 = vxpose.xlu0.b32.cont [6/16] 0.0, 128
        %1848 = vxpose.xlu0.b32.cont [7/16] 0.0, 128
        %1849 = vxpose.xlu0.b32.cont [8/16] 0.0, 128
        %1850 = vxpose.xlu0.b32.cont [9/16] 0.0, 128
        %1851 = vxpose.xlu0.b32.cont [10/16] 0.0, 128
        %1852 = vxpose.xlu0.b32.cont [11/16] 0.0, 128
        %1853 = vxpose.xlu0.b32.cont [12/16] 0.0, 128
        %1854 = vxpose.xlu0.b32.cont [13/16] 0.0, 128
        %1855 = vxpose.xlu0.b32.cont [14/16] 0.0, 128
        %1856 = vxpose.xlu0.b32.cont [15/16] 0.0, 128
        %1857 = vxpose.xlu0.b32.end [16/16] 0.0, 128
        %v1858 = vpop.trf.xlu0
        %v1859 = vpop.trf.xlu0
        %v1860 = vpop.trf.xlu0
        %v1861 = vpop.trf.xlu0
        %v1862 = vpop.trf.xlu0
        %v1863 = vpop.trf.xlu0
        %v1864 = vpop.trf.xlu0
        %v1865 = vpop.trf.xlu0
        %v1866 = vpop.trf.xlu0
        %v1867 = vpop.trf.xlu0
        %v1868 = vpop.trf.xlu0
        %v1869 = vpop.trf.xlu0
        %v1870 = vpop.trf.xlu0
        %v1871 = vpop.trf.xlu0
        %v1872 = vpop.trf.xlu0
        %v1873 = vpop.trf.xlu0
        %v1874 = vpack.c.bf16 %v1858, %v1858
        %1875 = vrot.lane.b32.xlu0 %v1573, 112
        %v1876 = vpop.permute.xlu0 %1875
        %v1878 = vsel %vm764, %v1876, 0
        %v1881 = vsel %vm768, %v1874, 0
        %1883 = vmatprep.subr.bf16.mxu0 0
        %1884 = vmatpush1.bf16.msra.mxu0 %v1881
        %1885 = vmatprep.subr.bf16.mxu0 0
        %1886 = vmatpush1.bf16.msra.mxu0 0
        %1887 = vmatprep.subr.bf16.mxu0 0
        %1888 = vmatpush1.bf16.msra.mxu0 0
        %1889 = vmatprep.subr.bf16.mxu0 0
        %1890 = vmatpush1.bf16.msra.mxu0 0
        %1891 = vmatprep.subr.bf16.mxu0 0
        %1892 = vmatpush1.bf16.msra.mxu0 0
        %1893 = vmatprep.subr.bf16.mxu0 0
        %1894 = vmatpush1.bf16.msra.mxu0 0
        %1895 = vmatprep.subr.bf16.mxu0 0
        %1896 = vmatpush1.bf16.msra.mxu0 0
        %1897 = vmatprep.subr.bf16.mxu0 0
        %1898 = vmatpush1.bf16.msra.mxu0 0
        %1899 = vmatprep.subr.bf16.mxu0 0
        %1900 = vmatpush1.bf16.msra.mxu0 0
        %1901 = vmatprep.subr.bf16.mxu0 0
        %1902 = vmatpush1.bf16.msra.mxu0 0
        %1903 = vmatprep.subr.bf16.mxu0 0
        %1904 = vmatpush1.bf16.msra.mxu0 0
        %1905 = vmatprep.subr.bf16.mxu0 0
        %1906 = vmatpush1.bf16.msra.mxu0 0
        %1907 = vmatprep.subr.bf16.mxu0 0
        %1908 = vmatpush1.bf16.msra.mxu0 0
        %1909 = vmatprep.subr.bf16.mxu0 0
        %1910 = vmatpush1.bf16.msra.mxu0 0
        %1911 = vmatprep.subr.bf16.mxu0 0
        %1912 = vmatpush1.bf16.msra.mxu0 0
        %1913 = vmatprep.subr.bf16.mxu0 0
        %1914 = vmatpush1.bf16.msra.mxu0 0
        %1915 = vmatprep.mubr.bf16.mxu0 0
        %1916 = vmatmul.mubr.bf16.gmra.mrb[0].mxu0 %v1878
        %v1917 = vpop.f32.mrb[0].mxu0
        %v1918 = vadd.f32 0.0, %v1917
        %v1919 = vpop.f32.mrb[0].mxu0
        %v1920 = vpop.f32.mrb[0].mxu0
        %v1921 = vpop.f32.mrb[0].mxu0
        %1922 = vdwg.mxu0
        %v1923 = vmul.f32 %v1918, 0.35355338
        %v1924 = vadd.f32 %v1923, %v1626
        %v1925 = vsel %vm764, %v1924, -inf
        %1926 = vmax.xlane.f32.xlu0 %v1925
        %v1927 = vpop.xlane.xlu0 %1926
        %v1928 = vsub.f32 %v1924, %v1927
        %v1929 = vmul.f32 %v1928, 1.442695
        %v1930 = vpow.pop %v1929
        %v1931 = vsel %vm764, %v1930, 0.0
        %1932 = vadd.xlane.f32.xlu0 %v1931
        %v1933 = vpop.xlane.xlu0 %1932
        %v1934 = vrcp.pop %v1933
        %v1935 = vmul.f32 %v1930, %v1934
        %v1936 = vpack.c.bf16 %v1935, %v1935
        %1937 = vrot.lane.b32.xlu0 %v1641, 80
        %v1938 = vpop.permute.xlu0 %1937
        %v1940 = vsel %vm764, %v1936, 0
        %v1943 = vsel %vm768, %v1938, 0
        %1945 = vmatprep.subr.bf16.mxu0 0
        %1946 = vmatpush1.bf16.msra.mxu0 %v1943
        %1947 = vmatprep.subr.bf16.mxu0 0
        %1948 = vmatpush1.bf16.msra.mxu0 0
        %1949 = vmatprep.subr.bf16.mxu0 0
        %1950 = vmatpush1.bf16.msra.mxu0 0
        %1951 = vmatprep.subr.bf16.mxu0 0
        %1952 = vmatpush1.bf16.msra.mxu0 0
        %1953 = vmatprep.subr.bf16.mxu0 0
        %1954 = vmatpush1.bf16.msra.mxu0 0
        %1955 = vmatprep.subr.bf16.mxu0 0
        %1956 = vmatpush1.bf16.msra.mxu0 0
        %1957 = vmatprep.subr.bf16.mxu0 0
        %1958 = vmatpush1.bf16.msra.mxu0 0
        %1959 = vmatprep.subr.bf16.mxu0 0
        %1960 = vmatpush1.bf16.msra.mxu0 0
        %1961 = vmatprep.subr.bf16.mxu0 0
        %1962 = vmatpush1.bf16.msra.mxu0 0
        %1963 = vmatprep.subr.bf16.mxu0 0
        %1964 = vmatpush1.bf16.msra.mxu0 0
        %1965 = vmatprep.subr.bf16.mxu0 0
        %1966 = vmatpush1.bf16.msra.mxu0 0
        %1967 = vmatprep.subr.bf16.mxu0 0
        %1968 = vmatpush1.bf16.msra.mxu0 0
        %1969 = vmatprep.subr.bf16.mxu0 0
        %1970 = vmatpush1.bf16.msra.mxu0 0
        %1971 = vmatprep.subr.bf16.mxu0 0
        %1972 = vmatpush1.bf16.msra.mxu0 0
        %1973 = vmatprep.subr.bf16.mxu0 0
        %1974 = vmatpush1.bf16.msra.mxu0 0
        %1975 = vmatprep.subr.bf16.mxu0 0
        %1976 = vmatpush1.bf16.msra.mxu0 0
        %1977 = vmatprep.mubr.bf16.mxu0 0
        %1978 = vmatmul.mubr.bf16.gmra.mrb[0].mxu0 %v1940
        %v1979 = vpop.f32.mrb[0].mxu0
        %v1980 = vadd.f32 0.0, %v1979
        %v1981 = vpop.f32.mrb[0].mxu0
        %v1982 = vpop.f32.mrb[0].mxu0
        %v1983 = vpop.f32.mrb[0].mxu0
        %1984 = vdwg.mxu0
        %1985 = vrot.lane.b32.xlu0 %v1536, 104
        %v1986 = vpop.permute.xlu0 %1985
        %1988 = vxpose.xlu0.b32.start [1/16] %v1986, 128
        %1989 = vxpose.xlu0.b32.cont [2/16] 0.0, 128
        %1990 = vxpose.xlu0.b32.cont [3/16] 0.0, 128
        %1991 = vxpose.xlu0.b32.cont [4/16] 0.0, 128
        %1992 = vxpose.xlu0.b32.cont [5/16] 0.0, 128
        %1993 = vxpose.xlu0.b32.cont [6/16] 0.0, 128
        %1994 = vxpose.xlu0.b32.cont [7/16] 0.0, 128
        %1995 = vxpose.xlu0.b32.cont [8/16] 0.0, 128
        %1996 = vxpose.xlu0.b32.cont [9/16] 0.0, 128
        %1997 = vxpose.xlu0.b32.cont [10/16] 0.0, 128
        %1998 = vxpose.xlu0.b32.cont [11/16] 0.0, 128
        %1999 = vxpose.xlu0.b32.cont [12/16] 0.0, 128
        %2000 = vxpose.xlu0.b32.cont [13/16] 0.0, 128
        %2001 = vxpose.xlu0.b32.cont [14/16] 0.0, 128
        %2002 = vxpose.xlu0.b32.cont [15/16] 0.0, 128
        %2003 = vxpose.xlu0.b32.end [16/16] 0.0, 128
        %v2004 = vpop.trf.xlu0
        %v2005 = vpop.trf.xlu0
        %v2006 = vpop.trf.xlu0
        %v2007 = vpop.trf.xlu0
        %v2008 = vpop.trf.xlu0
        %v2009 = vpop.trf.xlu0
        %v2010 = vpop.trf.xlu0
        %v2011 = vpop.trf.xlu0
        %v2012 = vpop.trf.xlu0
        %v2013 = vpop.trf.xlu0
        %v2014 = vpop.trf.xlu0
        %v2015 = vpop.trf.xlu0
        %v2016 = vpop.trf.xlu0
        %v2017 = vpop.trf.xlu0
        %v2018 = vpop.trf.xlu0
        %v2019 = vpop.trf.xlu0
        %v2020 = vpack.c.bf16 %v2004, %v2004
        %2021 = vrot.lane.b32.xlu0 %v1573, 104
        %v2022 = vpop.permute.xlu0 %2021
        %v2024 = vsel %vm764, %v2022, 0
        %v2027 = vsel %vm768, %v2020, 0
        %2029 = vmatprep.subr.bf16.mxu0 0
        %2030 = vmatpush1.bf16.msra.mxu0 %v2027
        %2031 = vmatprep.subr.bf16.mxu0 0
        %2032 = vmatpush1.bf16.msra.mxu0 0
        %2033 = vmatprep.subr.bf16.mxu0 0
        %2034 = vmatpush1.bf16.msra.mxu0 0
        %2035 = vmatprep.subr.bf16.mxu0 0
        %2036 = vmatpush1.bf16.msra.mxu0 0
        %2037 = vmatprep.subr.bf16.mxu0 0
        %2038 = vmatpush1.bf16.msra.mxu0 0
        %2039 = vmatprep.subr.bf16.mxu0 0
        %2040 = vmatpush1.bf16.msra.mxu0 0
        %2041 = vmatprep.subr.bf16.mxu0 0
        %2042 = vmatpush1.bf16.msra.mxu0 0
        %2043 = vmatprep.subr.bf16.mxu0 0
        %2044 = vmatpush1.bf16.msra.mxu0 0
        %2045 = vmatprep.subr.bf16.mxu0 0
        %2046 = vmatpush1.bf16.msra.mxu0 0
        %2047 = vmatprep.subr.bf16.mxu0 0
        %2048 = vmatpush1.bf16.msra.mxu0 0
        %2049 = vmatprep.subr.bf16.mxu0 0
        %2050 = vmatpush1.bf16.msra.mxu0 0
        %2051 = vmatprep.subr.bf16.mxu0 0
        %2052 = vmatpush1.bf16.msra.mxu0 0
        %2053 = vmatprep.subr.bf16.mxu0 0
        %2054 = vmatpush1.bf16.msra.mxu0 0
        %2055 = vmatprep.subr.bf16.mxu0 0
        %2056 = vmatpush1.bf16.msra.mxu0 0
        %2057 = vmatprep.subr.bf16.mxu0 0
        %2058 = vmatpush1.bf16.msra.mxu0 0
        %2059 = vmatprep.subr.bf16.mxu0 0
        %2060 = vmatpush1.bf16.msra.mxu0 0
        %2061 = vmatprep.mubr.bf16.mxu0 0
        %2062 = vmatmul.mubr.bf16.gmra.mrb[0].mxu0 %v2024
        %v2063 = vpop.f32.mrb[0].mxu0
        %v2064 = vadd.f32 0.0, %v2063
        %v2065 = vpop.f32.mrb[0].mxu0
        %v2066 = vpop.f32.mrb[0].mxu0
        %v2067 = vpop.f32.mrb[0].mxu0
        %2068 = vdwg.mxu0
        %v2069 = vmul.f32 %v2064, 0.35355338
        %v2070 = vadd.f32 %v2069, %v1626
        %v2071 = vsel %vm764, %v2070, -inf
        %2072 = vmax.xlane.f32.xlu0 %v2071
        %v2073 = vpop.xlane.xlu0 %2072
        %v2074 = vsub.f32 %v2070, %v2073
        %v2075 = vmul.f32 %v2074, 1.442695
        %v2076 = vpow.pop %v2075
        %v2077 = vsel %vm764, %v2076, 0.0
        %2078 = vadd.xlane.f32.xlu0 %v2077
        %v2079 = vpop.xlane.xlu0 %2078
        %v2080 = vrcp.pop %v2079
        %v2081 = vmul.f32 %v2076, %v2080
        %v2082 = vpack.c.bf16 %v2081, %v2081
        %2083 = vrot.lane.b32.xlu0 %v1641, 72
        %v2084 = vpop.permute.xlu0 %2083
        %v2086 = vsel %vm764, %v2082, 0
        %v2089 = vsel %vm768, %v2084, 0
        %2091 = vmatprep.subr.bf16.mxu0 0
        %2092 = vmatpush1.bf16.msra.mxu0 %v2089
        %2093 = vmatprep.subr.bf16.mxu0 0
        %2094 = vmatpush1.bf16.msra.mxu0 0
        %2095 = vmatprep.subr.bf16.mxu0 0
        %2096 = vmatpush1.bf16.msra.mxu0 0
        %2097 = vmatprep.subr.bf16.mxu0 0
        %2098 = vmatpush1.bf16.msra.mxu0 0
        %2099 = vmatprep.subr.bf16.mxu0 0
        %2100 = vmatpush1.bf16.msra.mxu0 0
        %2101 = vmatprep.subr.bf16.mxu0 0
        %2102 = vmatpush1.bf16.msra.mxu0 0
        %2103 = vmatprep.subr.bf16.mxu0 0
        %2104 = vmatpush1.bf16.msra.mxu0 0
        %2105 = vmatprep.subr.bf16.mxu0 0
        %2106 = vmatpush1.bf16.msra.mxu0 0
        %2107 = vmatprep.subr.bf16.mxu0 0
        %2108 = vmatpush1.bf16.msra.mxu0 0
        %2109 = vmatprep.subr.bf16.mxu0 0
        %2110 = vmatpush1.bf16.msra.mxu0 0
        %2111 = vmatprep.subr.bf16.mxu0 0
        %2112 = vmatpush1.bf16.msra.mxu0 0
        %2113 = vmatprep.subr.bf16.mxu0 0
        %2114 = vmatpush1.bf16.msra.mxu0 0
        %2115 = vmatprep.subr.bf16.mxu0 0
        %2116 = vmatpush1.bf16.msra.mxu0 0
        %2117 = vmatprep.subr.bf16.mxu0 0
        %2118 = vmatpush1.bf16.msra.mxu0 0
        %2119 = vmatprep.subr.bf16.mxu0 0
        %2120 = vmatpush1.bf16.msra.mxu0 0
        %2121 = vmatprep.subr.bf16.mxu0 0
        %2122 = vmatpush1.bf16.msra.mxu0 0
        %2123 = vmatprep.mubr.bf16.mxu0 0
        %2124 = vmatmul.mubr.bf16.gmra.mrb[0].mxu0 %v2086
        %v2125 = vpop.f32.mrb[0].mxu0
        %v2126 = vadd.f32 0.0, %v2125
        %v2127 = vpop.f32.mrb[0].mxu0
        %v2128 = vpop.f32.mrb[0].mxu0
        %v2129 = vpop.f32.mrb[0].mxu0
        %2130 = vdwg.mxu0
        %2132 = vrot.lane.b32.xlu0 %v1834, 8
        %v2133 = vpop.permute.xlu0 %2132
        %2136 = vrot.lane.b32.xlu0 %v1980, 16
        %v2137 = vpop.permute.xlu0 %2136
        %2140 = vrot.lane.b32.xlu0 %v2126, 24
        %v2141 = vpop.permute.xlu0 %2140
        %v2143 = vsel %vm764, %v1686, %v2133
        %v2144 = vsel %vm1326, %v2143, %v2137
        %v2145 = vsel %vm1328, %v2144, %v2141
        %v2146 = vld [vmem:[%s8] sm:$0xf]
        %v2147 = vld [vmem:[%s8 + $0x4] sm:$0xf]
        %v2148 = vld [vmem:[%s8 + $0x8] sm:$0xf]
        %v2149 = vld [vmem:[%s8 + $0xc] sm:$0xf]
        %v2150 = vpack.c.bf16 %v2145, %v2145
        %v2155 = vunpack.c.l.b16 %v2146
        %v2156 = vunpack.c.l.b16 %v2147
        %v2157 = vunpack.c.l.b16 %v2148
        %v2158 = vunpack.c.l.b16 %v2149
        %v2159 = vpack.c.b16 %v2156, %v2155
        %v2160 = vpack.c.b16 %v2158, %v2157
        %v2164 = vsel %vm682, %v2150, 0
        %2166 = vmatprep.subr.bf16.mxu0 0
        %2167 = vmatpush1.bf16.msra.mxu0 %v2159
        %2168 = vmatprep.subr.bf16.mxu0 0
        %2169 = vmatpush1.bf16.msra.mxu0 %v2160
        %2170 = vmatprep.subr.bf16.mxu0 0
        %2171 = vmatpush1.bf16.msra.mxu0 0
        %2172 = vmatprep.subr.bf16.mxu0 0
        %2173 = vmatpush1.bf16.msra.mxu0 0
        %2174 = vmatprep.subr.bf16.mxu0 0
        %2175 = vmatpush1.bf16.msra.mxu0 0
        %2176 = vmatprep.subr.bf16.mxu0 0
        %2177 = vmatpush1.bf16.msra.mxu0 0
        %2178 = vmatprep.subr.bf16.mxu0 0
        %2179 = vmatpush1.bf16.msra.mxu0 0
        %2180 = vmatprep.subr.bf16.mxu0 0
        %2181 = vmatpush1.bf16.msra.mxu0 0
        %2182 = vmatprep.subr.bf16.mxu0 0
        %2183 = vmatpush1.bf16.msra.mxu0 0
        %2184 = vmatprep.subr.bf16.mxu0 0
        %2185 = vmatpush1.bf16.msra.mxu0 0
        %2186 = vmatprep.subr.bf16.mxu0 0
        %2187 = vmatpush1.bf16.msra.mxu0 0
        %2188 = vmatprep.subr.bf16.mxu0 0
        %2189 = vmatpush1.bf16.msra.mxu0 0
        %2190 = vmatprep.subr.bf16.mxu0 0
        %2191 = vmatpush1.bf16.msra.mxu0 0
        %2192 = vmatprep.subr.bf16.mxu0 0
        %2193 = vmatpush1.bf16.msra.mxu0 0
        %2194 = vmatprep.subr.bf16.mxu0 0
        %2195 = vmatpush1.bf16.msra.mxu0 0
        %2196 = vmatprep.subr.bf16.mxu0 0
        %2197 = vmatpush1.bf16.msra.mxu0 0
        %2198 = vmatprep.mubr.bf16.mxu0 0
        %2199 = vmatmul.mubr.bf16.gmra.mrb[0].mxu0 %v2164
        %v2200 = vpop.f32.mrb[0].mxu0
        %v2201 = vadd.f32 0.0, %v2200
        %v2202 = vpop.f32.mrb[0].mxu0
        %v2203 = vpop.f32.mrb[0].mxu0
        %v2204 = vpop.f32.mrb[0].mxu0
        %2205 = vdwg.mxu0
        %v2206 = vadd.f32 %v1420, %v2201
        %v2207 = vsel %vm682, %v2206, 0.0
        %2208 = vadd.xlane.f32.xlu0 %v2207
        %v2209 = vpop.xlane.xlu0 %2208
        %v2210 = vmul.f32 %v2209, %v1394
        %v2211 = vsub.f32 %v2206, %v2210
        %v2212 = vmul.f32 %v2211, %v2211
        %v2213 = vsel %vm682, %v2212, 0.0
        %2214 = vadd.xlane.f32.xlu0 %v2213
        %v2215 = vpop.xlane.xlu0 %2214
        %v2216 = vmul.f32 %v2215, %v1394
        %v2217 = vadd.f32 %v2216, 1e-05
        %v2218 = vrsqrt.pop %v2217
        %v2219 = vmul.f32 %v2211, %v2218
        %v2220 = vld [vmem:[%s15] sm:$0x1]
        %v2222 = vlaneseq
        %v2223 = vshrl.u32 %v2222, 7
        %v2224 = vsub.s32 0, %v2223
        %v2225 = vrot.slane %v2220, %v2224
        %v2227 = vmul.f32 %v2219, %v2225
        %v2228 = vld [vmem:[%s16] sm:$0x1]
        %v2230 = vlaneseq
        %v2231 = vshrl.u32 %v2230, 7
        %v2232 = vsub.s32 0, %v2231
        %v2233 = vrot.slane %v2228, %v2232
        %v2235 = vadd.f32 %v2227, %v2233
        %v2236 = vld [vmem:[%s9] sm:$0xf]
        %v2237 = vld [vmem:[%s9 + $0x4] sm:$0xf]
        %v2238 = vld [vmem:[%s9 + $0x8] sm:$0xf]
        %v2239 = vld [vmem:[%s9 + $0xc] sm:$0xf]
        %v2240 = vpack.c.bf16 %v2235, %v2235
        %v2241 = vld [vmem:[%s10] sm:$0x1]
        %v2243 = vlaneseq
        %v2244 = vshrl.u32 %v2243, 7
        %v2245 = vsub.s32 0, %v2244
        %v2246 = vrot.slane %v2241, %v2245
        %v2252 = vunpack.c.l.b16 %v2236
        %v2253 = vunpack.c.l.b16 %v2237
        %v2254 = vunpack.c.l.b16 %v2238
        %v2255 = vunpack.c.l.b16 %v2239
        %v2256 = vpack.c.b16 %v2253, %v2252
        %v2257 = vpack.c.b16 %v2255, %v2254
        %v2261 = vsel %vm682, %v2240, 0
        %2263 = vmatprep.subr.bf16.mxu0 0
        %2264 = vmatpush1.bf16.msra.mxu0 %v2256
        %2265 = vmatprep.subr.bf16.mxu0 0
        %2266 = vmatpush1.bf16.msra.mxu0 %v2257
        %2267 = vmatprep.subr.bf16.mxu0 0
        %2268 = vmatpush1.bf16.msra.mxu0 0
        %2269 = vmatprep.subr.bf16.mxu0 0
        %2270 = vmatpush1.bf16.msra.mxu0 0
        %2271 = vmatprep.subr.bf16.mxu0 0
        %2272 = vmatpush1.bf16.msra.mxu0 0
        %2273 = vmatprep.subr.bf16.mxu0 0
        %2274 = vmatpush1.bf16.msra.mxu0 0
        %2275 = vmatprep.subr.bf16.mxu0 0
        %2276 = vmatpush1.bf16.msra.mxu0 0
        %2277 = vmatprep.subr.bf16.mxu0 0
        %2278 = vmatpush1.bf16.msra.mxu0 0
        %2279 = vmatprep.subr.bf16.mxu0 0
        %2280 = vmatpush1.bf16.msra.mxu0 0
        %2281 = vmatprep.subr.bf16.mxu0 0
        %2282 = vmatpush1.bf16.msra.mxu0 0
        %2283 = vmatprep.subr.bf16.mxu0 0
        %2284 = vmatpush1.bf16.msra.mxu0 0
        %2285 = vmatprep.subr.bf16.mxu0 0
        %2286 = vmatpush1.bf16.msra.mxu0 0
        %2287 = vmatprep.subr.bf16.mxu0 0
        %2288 = vmatpush1.bf16.msra.mxu0 0
        %2289 = vmatprep.subr.bf16.mxu0 0
        %2290 = vmatpush1.bf16.msra.mxu0 0
        %2291 = vmatprep.subr.bf16.mxu0 0
        %2292 = vmatpush1.bf16.msra.mxu0 0
        %2293 = vmatprep.subr.bf16.mxu0 0
        %2294 = vmatpush1.bf16.msra.mxu0 0
        %2295 = vmatprep.mubr.bf16.mxu0 0
        %2296 = vmatmul.mubr.bf16.gmra.mrb[0].mxu0 %v2261
        %v2297 = vpop.f32.mrb[0].mxu0
        %v2298 = vadd.f32 %v2246, %v2297
        %v2299 = vpop.f32.mrb[0].mxu0
        %v2300 = vpop.f32.mrb[0].mxu0
        %v2301 = vpop.f32.mrb[0].mxu0
        %2302 = vdwg.mxu0
        %v2303 = vmax.f32 %v2298, 0.0
        %v2304 = vld [vmem:[%s11] sm:$0xf]
        %v2305 = vld [vmem:[%s11 + $0x4] sm:$0xf]
        %v2306 = vld [vmem:[%s11 + $0x8] sm:$0xf]
        %v2307 = vld [vmem:[%s11 + $0xc] sm:$0xf]
        %v2308 = vld [vmem:[%s11 + $0x10] sm:$0xf]
        %v2309 = vld [vmem:[%s11 + $0x14] sm:$0xf]
        %v2310 = vld [vmem:[%s11 + $0x18] sm:$0xf]
        %v2311 = vld [vmem:[%s11 + $0x1c] sm:$0xf]
        %v2312 = vpack.c.bf16 %v2303, %v2303
        %v2313 = vld [vmem:[%s12] sm:$0x1]
        %v2315 = vlaneseq
        %v2316 = vshrl.u32 %v2315, 7
        %v2317 = vsub.s32 0, %v2316
        %v2318 = vrot.slane %v2313, %v2317
        %v2328 = vunpack.c.l.b16 %v2304
        %v2329 = vunpack.c.l.b16 %v2305
        %v2330 = vunpack.c.l.b16 %v2306
        %v2331 = vunpack.c.l.b16 %v2307
        %v2332 = vunpack.c.l.b16 %v2308
        %v2333 = vunpack.c.l.b16 %v2309
        %v2334 = vunpack.c.l.b16 %v2310
        %v2335 = vunpack.c.l.b16 %v2311
        %v2336 = vpack.c.b16 %v2329, %v2328
        %v2337 = vpack.c.b16 %v2331, %v2330
        %v2338 = vpack.c.b16 %v2333, %v2332
        %v2339 = vpack.c.b16 %v2335, %v2334
        %vm2344 = vcmask 523264
        %v2346 = vsel %vm2344, %v2312, 0
        %2348 = vmatprep.subr.bf16.mxu0 0
        %2349 = vmatpush1.bf16.msra.mxu0 %v2336
        %2350 = vmatprep.subr.bf16.mxu0 0
        %2351 = vmatpush1.bf16.msra.mxu0 %v2337
        %2352 = vmatprep.subr.bf16.mxu0 0
        %2353 = vmatpush1.bf16.msra.mxu0 %v2338
        %2354 = vmatprep.subr.bf16.mxu0 0
        %2355 = vmatpush1.bf16.msra.mxu0 %v2339
        %2356 = vmatprep.subr.bf16.mxu0 0
        %2357 = vmatpush1.bf16.msra.mxu0 0
        %2358 = vmatprep.subr.bf16.mxu0 0
        %2359 = vmatpush1.bf16.msra.mxu0 0
        %2360 = vmatprep.subr.bf16.mxu0 0
        %2361 = vmatpush1.bf16.msra.mxu0 0
        %2362 = vmatprep.subr.bf16.mxu0 0
        %2363 = vmatpush1.bf16.msra.mxu0 0
        %2364 = vmatprep.subr.bf16.mxu0 0
        %2365 = vmatpush1.bf16.msra.mxu0 0
        %2366 = vmatprep.subr.bf16.mxu0 0
        %2367 = vmatpush1.bf16.msra.mxu0 0
        %2368 = vmatprep.subr.bf16.mxu0 0
        %2369 = vmatpush1.bf16.msra.mxu0 0
        %2370 = vmatprep.subr.bf16.mxu0 0
        %2371 = vmatpush1.bf16.msra.mxu0 0
        %2372 = vmatprep.subr.bf16.mxu0 0
        %2373 = vmatpush1.bf16.msra.mxu0 0
        %2374 = vmatprep.subr.bf16.mxu0 0
        %2375 = vmatpush1.bf16.msra.mxu0 0
        %2376 = vmatprep.subr.bf16.mxu0 0
        %2377 = vmatpush1.bf16.msra.mxu0 0
        %2378 = vmatprep.subr.bf16.mxu0 0
        %2379 = vmatpush1.bf16.msra.mxu0 0
        %2380 = vmatprep.mubr.bf16.mxu0 0
        %2381 = vmatmul.mubr.bf16.gmra.mrb[0].mxu0 %v2346
        %v2382 = vpop.f32.mrb[0].mxu0
        %v2383 = vadd.f32 %v2318, %v2382
        %v2384 = vpop.f32.mrb[0].mxu0
        %v2385 = vpop.f32.mrb[0].mxu0
        %v2386 = vpop.f32.mrb[0].mxu0
        %2387 = vdwg.mxu0
        %v2388 = vadd.f32 %v2235, %v2383
        %v2389 = vsel %vm682, %v2388, 0.0
        %2390 = vadd.xlane.f32.xlu0 %v2389
        %v2391 = vpop.xlane.xlu0 %2390
        %v2392 = vmul.f32 %v2391, %v1394
        %v2393 = vsub.f32 %v2388, %v2392
        %v2394 = vmul.f32 %v2393, %v2393
        %v2395 = vsel %vm682, %v2394, 0.0
        %2396 = vadd.xlane.f32.xlu0 %v2395
        %v2397 = vpop.xlane.xlu0 %2396
        %v2398 = vmul.f32 %v2397, %v1394
        %v2399 = vadd.f32 %v2398, 1e-05
        %v2400 = vrsqrt.pop %v2399
        %v2401 = vmul.f32 %v2393, %v2400
        %v2402 = vld [vmem:[%s17] sm:$0x1]
        %v2404 = vlaneseq
        %v2405 = vshrl.u32 %v2404, 7
        %v2406 = vsub.s32 0, %v2405
        %v2407 = vrot.slane %v2402, %v2406
        %v2409 = vmul.f32 %v2401, %v2407
        %v2410 = vld [vmem:[%s18] sm:$0x1]
        %v2412 = vlaneseq
        %v2413 = vshrl.u32 %v2412, 7
        %v2414 = vsub.s32 0, %v2413
        %v2415 = vrot.slane %v2410, %v2414
        %v2417 = vadd.f32 %v2409, %v2415
        %2418 = vst.msk [vmem:[%s628] sm:$0xff] %vm682, %v2417
        %s2419 = sand.u32 %s460, 1
        %s2420 = scalar_lea.sflag [#allocation3], %s2419
        %s2421 = sand.u32 %s460, 1
        %s2422 = smul.addr %s2421, 8
        %s2423 = scalar_lea.vmem [#allocation2], %s2422
        // Predicated region
        $region97: #{transformer_decoder.3} parent=95 // pred_check
          %p2424 = pneg %p470
        $region98: #{transformer_decoder.3} parent=95 // pred_check_branch
          %2426 = sbr.rel (%p2424) target = $region100
        $region99: #{transformer_decoder.3} parent=95 // pred_region
          %s2428 = ssub.s32 128, 128
          %2429 = vsyncadd %s2420, %s2428
          %s2430 = smul.addr %s33, 128
          %s2431 = scalar_lea.hbm %s19, %s2430
          %s2433 = sshll.u32 %s2423, 4
          %s2434 = int_to_ptr.vmem [resolvable:$true] %s2433
          %2436 = dma.vmem_to_hbm [thread:$0]  %s2434, 128, %s2431, %s2420
        $region100: #{transformer_decoder.3} parent=95 // pred_fallthru
          _
      $region96: #{transformer_decoder.3} parent=5 // pred_fallthru
        _
      %p2437 = scmp.le.s32.totalorder 2, %s28
      // Predicated region
      $region101: #{transformer_decoder.3} parent=5 // pred_check
        %p2438 = pneg %p2437
      $region102: #{transformer_decoder.3} parent=5 // pred_check_branch
        %2440 = sbr.rel (%p2438) target = $region104
      $region103: #{transformer_decoder.3} parent=5 // pred_region
        %s2441 = ssub.s32 %s28, 2
        // Predicated region
        $region105: #{transformer_decoder.3} parent=103 // pred_check
          %p2442 = pneg %p476
        $region106: #{transformer_decoder.3} parent=103 // pred_check_branch
          %2444 = sbr.rel (%p2442) target = $region108
        $region107: #{transformer_decoder.3} parent=103 // pred_region
          %s2445 = sand.u32 %s461, 1
          %s2446 = scalar_lea.sflag [#allocation3], %s2445
          %s2447 = sand.u32 %s461, 1
          %s2448 = smul.addr %s2447, 8
          %s2449 = scalar_lea.vmem [#allocation2], %s2448
          %2450 = dma.done %s2446, 128
        $region108: #{transformer_decoder.3} parent=103 // pred_fallthru
          _
      $region104: #{transformer_decoder.3} parent=5 // pred_fallthru
        _
    $region6: #{transformer_decoder.3} parent=1 // loop_footer
      %s32 = sadd.s32 1, %s28
    $region7: #{transformer_decoder.3} parent=1 // loop_footer_branch
      %27 = sbr.rel target = $region3
    $region8: #{transformer_decoder.3} parent=1 // loop_exit
      _
    %2451 = vsyncpa [#allocation3], 1
    %s2452 = scalar_lea.sflag [#allocation3], 1
    %2453 = vsyncpa %s2452, 1

// kernel: transformer_decoder.2
$region0: #{transformer_decoder.2}
  #allocation0 [shape = 'u32[]', space=smem, size = 0x4, offset = 0x4, fixed_abs, tag = 'smem constant byte address 0x4 - core index']
  #allocation1 [shape = 'u32[144,128]{1,0:T(1,128)}', space=vmem, size = 0x12000, scoped, tag = 'internal scratch']
  %s0 = inlined_call_operand.vmem [shape: f32[2,8,32], index: 0, kind: input, shape index: {}]
  %s1 = inlined_call_operand.vmem [shape: f32[2,8,32], index: 1, kind: input, shape index: {}]
  %s2 = inlined_call_operand.vmem [shape: f32[2,1,8], index: 2, kind: input, shape index: {}]
  %s3 = inlined_call_operand.hbm [shape: f32[2,1,8], index: 3, kind: input, shape index: {}]
  %s4 = inlined_call_operand.vmem [shape: bf16[32,96], index: 4, kind: input, shape index: {}]
  %s5 = inlined_call_operand.vmem [shape: bf16[32,32], index: 5, kind: input, shape index: {}]
  %s6 = inlined_call_operand.vmem [shape: bf16[32,32], index: 6, kind: input, shape index: {}]
  %s7 = inlined_call_operand.vmem [shape: bf16[32,64], index: 7, kind: input, shape index: {}]
  %s8 = inlined_call_operand.vmem [shape: bf16[32,32], index: 8, kind: input, shape index: {}]
  %s9 = inlined_call_operand.vmem [shape: bf16[32,64], index: 9, kind: input, shape index: {}]
  %s10 = inlined_call_operand.hbm [shape: f32[1,64], index: 10, kind: input, shape index: {}]
  %s11 = inlined_call_operand.vmem [shape: bf16[64,32], index: 11, kind: input, shape index: {}]
  %s12 = inlined_call_operand.hbm [shape: f32[1,32], index: 12, kind: input, shape index: {}]
  %s13 = inlined_call_operand.hbm [shape: f32[1,32], index: 13, kind: input, shape index: {}]
  %s14 = inlined_call_operand.hbm [shape: f32[1,32], index: 14, kind: input, shape index: {}]
  %s15 = inlined_call_operand.hbm [shape: f32[1,32], index: 15, kind: input, shape index: {}]
  %s16 = inlined_call_operand.hbm [shape: f32[1,32], index: 16, kind: input, shape index: {}]
  %s17 = inlined_call_operand.vmem [shape: f32[1,32], index: 17, kind: input, shape index: {}]
  %s18 = inlined_call_operand.vmem [shape: f32[1,32], index: 18, kind: input, shape index: {}]
  %s19 = inlined_call_operand.vmem [shape: f32[2,8,32], index: 19, kind: output, shape index: {}]
  %s20 = sld [smem:[#allocation0]]
  $region137: #{transformer_decoder.2} parent=0
    _
  %s22 = ssub.s32 1, %s20
  %s23 = scalar_select 0, %s22, %s20
  $region1: #{transformer_decoder.2} parent=0
    #allocation2 [shape = 'u8[1024]{0}', space=vmem, size = 0x400, scoped, tag = 'input window, operand 3']
    #allocation3 [shape = 's32[2]{0}', space=sflag, size = 0x8, scoped, tag = 'scoped memory for transformer_decoder.2']
    #allocation4 [shape = 'u8[512]{0}', space=vmem, size = 0x400, scoped, tag = 'input window, operand 10, single buffered']
    #allocation5 [shape = 's32[1]{0}', space=sflag, size = 0x4, scoped, tag = 'scoped memory for transformer_decoder.2']
    #allocation6 [shape = 'u8[512]{0}', space=vmem, size = 0x400, scoped, tag = 'input window, operand 12, single buffered']
    #allocation7 [shape = 'u8[512]{0}', space=vmem, size = 0x400, scoped, tag = 'input window, operand 13, single buffered']
    #allocation8 [shape = 's32[1]{0}', space=sflag, size = 0x4, scoped, tag = 'scoped memory for transformer_decoder.2']
    #allocation9 [shape = 'u8[512]{0}', space=vmem, size = 0x400, scoped, tag = 'input window, operand 14, single buffered']
    #allocation10 [shape = 'u8[512]{0}', space=vmem, size = 0x400, scoped, tag = 'input window, operand 15, single buffered']
    #allocation11 [shape = 's32[1]{0}', space=sflag, size = 0x4, scoped, tag = 'scoped memory for transformer_decoder.2']
    #allocation12 [shape = 'u8[512]{0}', space=vmem, size = 0x400, scoped, tag = 'input window, operand 16, single buffered']
    %24 = vsyncpa [#allocation3], 0
    %s25 = scalar_lea.sflag [#allocation3], 1
    %26 = vsyncpa %s25, 0
    %27 = vsyncpa [#allocation5], 0
    %28 = vsyncpa [#allocation8], 0
    %29 = vsyncpa [#allocation11], 0
    loop: start=0, step=1, limit=4
    $region2: #{transformer_decoder.2} parent=1 // loop_pre_header
      _
    $region3: #{transformer_decoder.2} parent=1 // loop_header
      %s31 = sphi 0, %s35
      %p32 = scmp.ge.s32.totalorder %s31, 4
      %s41 = sphi 0, %s43
      %s44 = sphi 0, %s41
      %s45 = sphi 0, %s44
      %s61 = sphi 0, %s45
      %s67 = sphi 0, %s69
      %s70 = sphi 0, %s67
      %s71 = sphi 0, %s70
      %s87 = sphi 0, %s71
      %s93 = sphi 0, %s95
      %s96 = sphi 0, %s93
      %s97 = sphi 0, %s96
      %s113 = sphi 0, %s97
      %s119 = sphi 0, %s121
      %s122 = sphi 0, %s119
      %s123 = sphi 0, %s122
      %s139 = sphi 0, %s123
      %s143 = sphi 0, %s143
      %s145 = sphi 0, %s143
      %s146 = sphi 0, %s145
      %s160 = sphi 0, %s146
      %s164 = sphi 0, %s164
      %s166 = sphi 0, %s164
      %s167 = sphi 0, %s166
      %s181 = sphi 0, %s167
      %s185 = sphi 0, %s185
      %s187 = sphi 0, %s185
      %s188 = sphi 0, %s187
      %s202 = sphi 0, %s188
      %s206 = sphi 0, %s206
      %s208 = sphi 0, %s206
      %s209 = sphi 0, %s208
      %s223 = sphi 0, %s209
      %s227 = sphi 0, %s227
      %s229 = sphi 0, %s227
      %s230 = sphi 0, %s229
      %s244 = sphi 0, %s230
      %s248 = sphi 0, %s248
      %s250 = sphi 0, %s248
      %s251 = sphi 0, %s250
      %s265 = sphi 0, %s251
      %s269 = sphi 0, %s269
      %s271 = sphi 0, %s269
      %s272 = sphi 0, %s271
      %s286 = sphi 0, %s272
      %s290 = sphi 0, %s290
      %s292 = sphi 0, %s290
      %s293 = sphi 0, %s292
      %s307 = sphi 0, %s293
      %s311 = sphi 0, %s311
      %s313 = sphi 0, %s311
      %s314 = sphi 0, %s313
      %s328 = sphi 0, %s314
      %s332 = sphi 0, %s332
      %s334 = sphi 0, %s332
      %s335 = sphi 0, %s334
      %s349 = sphi 0, %s335
      %s353 = sphi 0, %s353
      %s355 = sphi 0, %s353
      %s356 = sphi 0, %s355
      %s370 = sphi 0, %s356
      %s374 = sphi 0, %s374
      %s376 = sphi 0, %s374
      %s377 = sphi 0, %s376
      %s391 = sphi 0, %s377
      %s395 = sphi 0, %s395
      %s397 = sphi 0, %s395
      %s398 = sphi 0, %s397
      %s412 = sphi 0, %s398
      %s416 = sphi 0, %s416
      %s418 = sphi 0, %s416
      %s419 = sphi 0, %s418
      %s433 = sphi 0, %s419
      %s437 = sphi 0, %s437
      %s439 = sphi 0, %s437
      %s440 = sphi 0, %s439
      %s454 = sphi 0, %s440
      %s460 = sphi 0, %s462
      %s463 = sphi 0, %s460
      %s464 = sphi 0, %s463
      %s480 = sphi 0, %s464
    $region4: #{transformer_decoder.2} parent=1 // loop_header_branch
      %34 = sbr.rel (%p32) target = $region8
    $region5: #{transformer_decoder.2} parent=1 // loop_body
      %s36 = ssub.s32 %s31, 1
      %s37 = ssub.s32 %s31, 2
      %s38 = sadd.s32 %s31, 1
      %s39 = ssub.s32 %s31, %s38
      %p40 = scmp.eq.s32.totalorder %s39, 0
      %s42 = sadd.s32 %s41, 1
      %s43 = scalar_select %p40, %s41, %s42
      %p46 = pneg %p40
      %p47 = scmp.eq.s32.totalorder %s31, 1
      %p48 = por %p46, %p47
      %p49 = scmp.ne.s32.totalorder %s41, %s44
      %p50 = scmp.eq.s32.totalorder %s31, 0
      %p51 = por %p49, %p50
      %p52 = scmp.ne.s32.totalorder %s41, %s44
      %p53 = scmp.eq.s32.totalorder %s36, 1
      %p54 = por %p52, %p53
      %p55 = scmp.ne.s32.totalorder %s44, %s45
      %p56 = scmp.eq.s32.totalorder %s36, 0
      %p57 = por %p55, %p56
      %p58 = scmp.ne.s32.totalorder %s44, %s45
      %p59 = scmp.eq.s32.totalorder %s37, 1
      %p60 = por %p58, %p59
      %p62 = scmp.ne.s32.totalorder %s45, %s61
      %p63 = scmp.eq.s32.totalorder %s37, 0
      %p64 = por %p62, %p63
      %s65 = ssub.s32 %s31, %s38
      %p66 = scmp.eq.s32.totalorder %s65, 0
      %s68 = sadd.s32 %s67, 1
      %s69 = scalar_select %p66, %s67, %s68
      %p72 = pneg %p66
      %p73 = scmp.eq.s32.totalorder %s31, 1
      %p74 = por %p72, %p73
      %p75 = scmp.ne.s32.totalorder %s67, %s70
      %p76 = scmp.eq.s32.totalorder %s31, 0
      %p77 = por %p75, %p76
      %p78 = scmp.ne.s32.totalorder %s67, %s70
      %p79 = scmp.eq.s32.totalorder %s36, 1
      %p80 = por %p78, %p79
      %p81 = scmp.ne.s32.totalorder %s70, %s71
      %p82 = scmp.eq.s32.totalorder %s36, 0
      %p83 = por %p81, %p82
      %p84 = scmp.ne.s32.totalorder %s70, %s71
      %p85 = scmp.eq.s32.totalorder %s37, 1
      %p86 = por %p84, %p85
      %p88 = scmp.ne.s32.totalorder %s71, %s87
      %p89 = scmp.eq.s32.totalorder %s37, 0
      %p90 = por %p88, %p89
      %s91 = ssub.s32 %s31, %s38
      %p92 = scmp.eq.s32.totalorder %s91, 0
      %s94 = sadd.s32 %s93, 1
      %s95 = scalar_select %p92, %s93, %s94
      %p98 = pneg %p92
      %p99 = scmp.eq.s32.totalorder %s31, 1
      %p100 = por %p98, %p99
      %p101 = scmp.ne.s32.totalorder %s93, %s96
      %p102 = scmp.eq.s32.totalorder %s31, 0
      %p103 = por %p101, %p102
      %p104 = scmp.ne.s32.totalorder %s93, %s96
      %p105 = scmp.eq.s32.totalorder %s36, 1
      %p106 = por %p104, %p105
      %p107 = scmp.ne.s32.totalorder %s96, %s97
      %p108 = scmp.eq.s32.totalorder %s36, 0
      %p109 = por %p107, %p108
      %p110 = scmp.ne.s32.totalorder %s96, %s97
      %p111 = scmp.eq.s32.totalorder %s37, 1
      %p112 = por %p110, %p111
      %p114 = scmp.ne.s32.totalorder %s97, %s113
      %p115 = scmp.eq.s32.totalorder %s37, 0
      %p116 = por %p114, %p115
      %s117 = ssub.s32 %s31, %s38
      %p118 = scmp.eq.s32.totalorder %s117, 0
      %s120 = sadd.s32 %s119, 1
      %s121 = scalar_select %p118, %s119, %s120
      %p124 = pneg %p118
      %p125 = scmp.eq.s32.totalorder %s31, 1
      %p126 = por %p124, %p125
      %p127 = scmp.ne.s32.totalorder %s119, %s122
      %p128 = scmp.eq.s32.totalorder %s31, 0
      %p129 = por %p127, %p128
      %p130 = scmp.ne.s32.totalorder %s119, %s122
      %p131 = scmp.eq.s32.totalorder %s36, 1
      %p132 = por %p130, %p131
      %p133 = scmp.ne.s32.totalorder %s122, %s123
      %p134 = scmp.eq.s32.totalorder %s36, 0
      %p135 = por %p133, %p134
      %p136 = scmp.ne.s32.totalorder %s122, %s123
      %p137 = scmp.eq.s32.totalorder %s37, 1
      %p138 = por %p136, %p137
      %p140 = scmp.ne.s32.totalorder %s123, %s139
      %p141 = scmp.eq.s32.totalorder %s37, 0
      %p142 = por %p140, %p141
      %s144 = sadd.s32 %s143, 1
      %p147 = scmp.eq.s32.totalorder %s31, 1
      %p148 = scmp.ne.s32.totalorder %s143, %s145
      %p149 = scmp.eq.s32.totalorder %s31, 0
      %p150 = por %p148, %p149
      %p151 = scmp.ne.s32.totalorder %s143, %s145
      %p152 = scmp.eq.s32.totalorder %s36, 1
      %p153 = por %p151, %p152
      %p154 = scmp.ne.s32.totalorder %s145, %s146
      %p155 = scmp.eq.s32.totalorder %s36, 0
      %p156 = por %p154, %p155
      %p157 = scmp.ne.s32.totalorder %s145, %s146
      %p158 = scmp.eq.s32.totalorder %s37, 1
      %p159 = por %p157, %p158
      %p161 = scmp.ne.s32.totalorder %s146, %s160
      %p162 = scmp.eq.s32.totalorder %s37, 0
      %p163 = por %p161, %p162
      %s165 = sadd.s32 %s164, 1
      %p168 = scmp.eq.s32.totalorder %s31, 1
      %p169 = scmp.ne.s32.totalorder %s164, %s166
      %p170 = scmp.eq.s32.totalorder %s31, 0
      %p171 = por %p169, %p170
      %p172 = scmp.ne.s32.totalorder %s164, %s166
      %p173 = scmp.eq.s32.totalorder %s36, 1
      %p174 = por %p172, %p173
      %p175 = scmp.ne.s32.totalorder %s166, %s167
      %p176 = scmp.eq.s32.totalorder %s36, 0
      %p177 = por %p175, %p176
      %p178 = scmp.ne.s32.totalorder %s166, %s167
      %p179 = scmp.eq.s32.totalorder %s37, 1
      %p180 = por %p178, %p179
      %p182 = scmp.ne.s32.totalorder %s167, %s181
      %p183 = scmp.eq.s32.totalorder %s37, 0
      %p184 = por %p182, %p183
      %s186 = sadd.s32 %s185, 1
      %p189 = scmp.eq.s32.totalorder %s31, 1
      %p190 = scmp.ne.s32.totalorder %s185, %s187
      %p191 = scmp.eq.s32.totalorder %s31, 0
      %p192 = por %p190, %p191
      %p193 = scmp.ne.s32.totalorder %s185, %s187
      %p194 = scmp.eq.s32.totalorder %s36, 1
      %p195 = por %p193, %p194
      %p196 = scmp.ne.s32.totalorder %s187, %s188
      %p197 = scmp.eq.s32.totalorder %s36, 0
      %p198 = por %p196, %p197
      %p199 = scmp.ne.s32.totalorder %s187, %s188
      %p200 = scmp.eq.s32.totalorder %s37, 1
      %p201 = por %p199, %p200
      %p203 = scmp.ne.s32.totalorder %s188, %s202
      %p204 = scmp.eq.s32.totalorder %s37, 0
      %p205 = por %p203, %p204
      %s207 = sadd.s32 %s206, 1
      %p210 = scmp.eq.s32.totalorder %s31, 1
      %p211 = scmp.ne.s32.totalorder %s206, %s208
      %p212 = scmp.eq.s32.totalorder %s31, 0
      %p213 = por %p211, %p212
      %p214 = scmp.ne.s32.totalorder %s206, %s208
      %p215 = scmp.eq.s32.totalorder %s36, 1
      %p216 = por %p214, %p215
      %p217 = scmp.ne.s32.totalorder %s208, %s209
      %p218 = scmp.eq.s32.totalorder %s36, 0
      %p219 = por %p217, %p218
      %p220 = scmp.ne.s32.totalorder %s208, %s209
      %p221 = scmp.eq.s32.totalorder %s37, 1
      %p222 = por %p220, %p221
      %p224 = scmp.ne.s32.totalorder %s209, %s223
      %p225 = scmp.eq.s32.totalorder %s37, 0
      %p226 = por %p224, %p225
      %s228 = sadd.s32 %s227, 1
      %p231 = scmp.eq.s32.totalorder %s31, 1
      %p232 = scmp.ne.s32.totalorder %s227, %s229
      %p233 = scmp.eq.s32.totalorder %s31, 0
      %p234 = por %p232, %p233
      %p235 = scmp.ne.s32.totalorder %s227, %s229
      %p236 = scmp.eq.s32.totalorder %s36, 1
      %p237 = por %p235, %p236
      %p238 = scmp.ne.s32.totalorder %s229, %s230
      %p239 = scmp.eq.s32.totalorder %s36, 0
      %p240 = por %p238, %p239
      %p241 = scmp.ne.s32.totalorder %s229, %s230
      %p242 = scmp.eq.s32.totalorder %s37, 1
      %p243 = por %p241, %p242
      %p245 = scmp.ne.s32.totalorder %s230, %s244
      %p246 = scmp.eq.s32.totalorder %s37, 0
      %p247 = por %p245, %p246
      %s249 = sadd.s32 %s248, 1
      %p252 = scmp.eq.s32.totalorder %s31, 1
      %p253 = scmp.ne.s32.totalorder %s248, %s250
      %p254 = scmp.eq.s32.totalorder %s31, 0
      %p255 = por %p253, %p254
      %p256 = scmp.ne.s32.totalorder %s248, %s250
      %p257 = scmp.eq.s32.totalorder %s36, 1
      %p258 = por %p256, %p257
      %p259 = scmp.ne.s32.totalorder %s250, %s251
      %p260 = scmp.eq.s32.totalorder %s36, 0
      %p261 = por %p259, %p260
      %p262 = scmp.ne.s32.totalorder %s250, %s251
      %p263 = scmp.eq.s32.totalorder %s37, 1
      %p264 = por %p262, %p263
      %p266 = scmp.ne.s32.totalorder %s251, %s265
      %p267 = scmp.eq.s32.totalorder %s37, 0
      %p268 = por %p266, %p267
      %s270 = sadd.s32 %s269, 1
      %p273 = scmp.eq.s32.totalorder %s31, 1
      %p274 = scmp.ne.s32.totalorder %s269, %s271
      %p275 = scmp.eq.s32.totalorder %s31, 0
      %p276 = por %p274, %p275
      %p277 = scmp.ne.s32.totalorder %s269, %s271
      %p278 = scmp.eq.s32.totalorder %s36, 1
      %p279 = por %p277, %p278
      %p280 = scmp.ne.s32.totalorder %s271, %s272
      %p281 = scmp.eq.s32.totalorder %s36, 0
      %p282 = por %p280, %p281
      %p283 = scmp.ne.s32.totalorder %s271, %s272
      %p284 = scmp.eq.s32.totalorder %s37, 1
      %p285 = por %p283, %p284
      %p287 = scmp.ne.s32.totalorder %s272, %s286
      %p288 = scmp.eq.s32.totalorder %s37, 0
      %p289 = por %p287, %p288
      %s291 = sadd.s32 %s290, 1
      %p294 = scmp.eq.s32.totalorder %s31, 1
      %p295 = scmp.ne.s32.totalorder %s290, %s292
      %p296 = scmp.eq.s32.totalorder %s31, 0
      %p297 = por %p295, %p296
      %p298 = scmp.ne.s32.totalorder %s290, %s292
      %p299 = scmp.eq.s32.totalorder %s36, 1
      %p300 = por %p298, %p299
      %p301 = scmp.ne.s32.totalorder %s292, %s293
      %p302 = scmp.eq.s32.totalorder %s36, 0
      %p303 = por %p301, %p302
      %p304 = scmp.ne.s32.totalorder %s292, %s293
      %p305 = scmp.eq.s32.totalorder %s37, 1
      %p306 = por %p304, %p305
      %p308 = scmp.ne.s32.totalorder %s293, %s307
      %p309 = scmp.eq.s32.totalorder %s37, 0
      %p310 = por %p308, %p309
      %s312 = sadd.s32 %s311, 1
      %p315 = scmp.eq.s32.totalorder %s31, 1
      %p316 = scmp.ne.s32.totalorder %s311, %s313
      %p317 = scmp.eq.s32.totalorder %s31, 0
      %p318 = por %p316, %p317
      %p319 = scmp.ne.s32.totalorder %s311, %s313
      %p320 = scmp.eq.s32.totalorder %s36, 1
      %p321 = por %p319, %p320
      %p322 = scmp.ne.s32.totalorder %s313, %s314
      %p323 = scmp.eq.s32.totalorder %s36, 0
      %p324 = por %p322, %p323
      %p325 = scmp.ne.s32.totalorder %s313, %s314
      %p326 = scmp.eq.s32.totalorder %s37, 1
      %p327 = por %p325, %p326
      %p329 = scmp.ne.s32.totalorder %s314, %s328
      %p330 = scmp.eq.s32.totalorder %s37, 0
      %p331 = por %p329, %p330
      %s333 = sadd.s32 %s332, 1
      %p336 = scmp.eq.s32.totalorder %s31, 1
      %p337 = scmp.ne.s32.totalorder %s332, %s334
      %p338 = scmp.eq.s32.totalorder %s31, 0
      %p339 = por %p337, %p338
      %p340 = scmp.ne.s32.totalorder %s332, %s334
      %p341 = scmp.eq.s32.totalorder %s36, 1
      %p342 = por %p340, %p341
      %p343 = scmp.ne.s32.totalorder %s334, %s335
      %p344 = scmp.eq.s32.totalorder %s36, 0
      %p345 = por %p343, %p344
      %p346 = scmp.ne.s32.totalorder %s334, %s335
      %p347 = scmp.eq.s32.totalorder %s37, 1
      %p348 = por %p346, %p347
      %p350 = scmp.ne.s32.totalorder %s335, %s349
      %p351 = scmp.eq.s32.totalorder %s37, 0
      %p352 = por %p350, %p351
      %s354 = sadd.s32 %s353, 1
      %p357 = scmp.eq.s32.totalorder %s31, 1
      %p358 = scmp.ne.s32.totalorder %s353, %s355
      %p359 = scmp.eq.s32.totalorder %s31, 0
      %p360 = por %p358, %p359
      %p361 = scmp.ne.s32.totalorder %s353, %s355
      %p362 = scmp.eq.s32.totalorder %s36, 1
      %p363 = por %p361, %p362
      %p364 = scmp.ne.s32.totalorder %s355, %s356
      %p365 = scmp.eq.s32.totalorder %s36, 0
      %p366 = por %p364, %p365
      %p367 = scmp.ne.s32.totalorder %s355, %s356
      %p368 = scmp.eq.s32.totalorder %s37, 1
      %p369 = por %p367, %p368
      %p371 = scmp.ne.s32.totalorder %s356, %s370
      %p372 = scmp.eq.s32.totalorder %s37, 0
      %p373 = por %p371, %p372
      %s375 = sadd.s32 %s374, 1
      %p378 = scmp.eq.s32.totalorder %s31, 1
      %p379 = scmp.ne.s32.totalorder %s374, %s376
      %p380 = scmp.eq.s32.totalorder %s31, 0
      %p381 = por %p379, %p380
      %p382 = scmp.ne.s32.totalorder %s374, %s376
      %p383 = scmp.eq.s32.totalorder %s36, 1
      %p384 = por %p382, %p383
      %p385 = scmp.ne.s32.totalorder %s376, %s377
      %p386 = scmp.eq.s32.totalorder %s36, 0
      %p387 = por %p385, %p386
      %p388 = scmp.ne.s32.totalorder %s376, %s377
      %p389 = scmp.eq.s32.totalorder %s37, 1
      %p390 = por %p388, %p389
      %p392 = scmp.ne.s32.totalorder %s377, %s391
      %p393 = scmp.eq.s32.totalorder %s37, 0
      %p394 = por %p392, %p393
      %s396 = sadd.s32 %s395, 1
      %p399 = scmp.eq.s32.totalorder %s31, 1
      %p400 = scmp.ne.s32.totalorder %s395, %s397
      %p401 = scmp.eq.s32.totalorder %s31, 0
      %p402 = por %p400, %p401
      %p403 = scmp.ne.s32.totalorder %s395, %s397
      %p404 = scmp.eq.s32.totalorder %s36, 1
      %p405 = por %p403, %p404
      %p406 = scmp.ne.s32.totalorder %s397, %s398
      %p407 = scmp.eq.s32.totalorder %s36, 0
      %p408 = por %p406, %p407
      %p409 = scmp.ne.s32.totalorder %s397, %s398
      %p410 = scmp.eq.s32.totalorder %s37, 1
      %p411 = por %p409, %p410
      %p413 = scmp.ne.s32.totalorder %s398, %s412
      %p414 = scmp.eq.s32.totalorder %s37, 0
      %p415 = por %p413, %p414
      %s417 = sadd.s32 %s416, 1
      %p420 = scmp.eq.s32.totalorder %s31, 1
      %p421 = scmp.ne.s32.totalorder %s416, %s418
      %p422 = scmp.eq.s32.totalorder %s31, 0
      %p423 = por %p421, %p422
      %p424 = scmp.ne.s32.totalorder %s416, %s418
      %p425 = scmp.eq.s32.totalorder %s36, 1
      %p426 = por %p424, %p425
      %p427 = scmp.ne.s32.totalorder %s418, %s419
      %p428 = scmp.eq.s32.totalorder %s36, 0
      %p429 = por %p427, %p428
      %p430 = scmp.ne.s32.totalorder %s418, %s419
      %p431 = scmp.eq.s32.totalorder %s37, 1
      %p432 = por %p430, %p431
      %p434 = scmp.ne.s32.totalorder %s419, %s433
      %p435 = scmp.eq.s32.totalorder %s37, 0
      %p436 = por %p434, %p435
      %s438 = sadd.s32 %s437, 1
      %p441 = scmp.eq.s32.totalorder %s31, 1
      %p442 = scmp.ne.s32.totalorder %s437, %s439
      %p443 = scmp.eq.s32.totalorder %s31, 0
      %p444 = por %p442, %p443
      %p445 = scmp.ne.s32.totalorder %s437, %s439
      %p446 = scmp.eq.s32.totalorder %s36, 1
      %p447 = por %p445, %p446
      %p448 = scmp.ne.s32.totalorder %s439, %s440
      %p449 = scmp.eq.s32.totalorder %s36, 0
      %p450 = por %p448, %p449
      %p451 = scmp.ne.s32.totalorder %s439, %s440
      %p452 = scmp.eq.s32.totalorder %s37, 1
      %p453 = por %p451, %p452
      %p455 = scmp.ne.s32.totalorder %s440, %s454
      %p456 = scmp.eq.s32.totalorder %s37, 0
      %p457 = por %p455, %p456
      %s458 = ssub.s32 %s31, %s38
      %p459 = scmp.eq.s32.totalorder %s458, 0
      %s461 = sadd.s32 %s460, 1
      %s462 = scalar_select %p459, %s460, %s461
      %p465 = pneg %p459
      %p466 = scmp.eq.s32.totalorder %s31, 1
      %p467 = por %p465, %p466
      %p468 = scmp.ne.s32.totalorder %s460, %s463
      %p469 = scmp.eq.s32.totalorder %s31, 0
      %p470 = por %p468, %p469
      %p471 = scmp.ne.s32.totalorder %s460, %s463
      %p472 = scmp.eq.s32.totalorder %s36, 1
      %p473 = por %p471, %p472
      %p474 = scmp.ne.s32.totalorder %s463, %s464
      %p475 = scmp.eq.s32.totalorder %s36, 0
      %p476 = por %p474, %p475
      %p477 = scmp.ne.s32.totalorder %s463, %s464
      %p478 = scmp.eq.s32.totalorder %s37, 1
      %p479 = por %p477, %p478
      %p481 = scmp.ne.s32.totalorder %s464, %s480
      %p482 = scmp.eq.s32.totalorder %s37, 0
      %p483 = por %p481, %p482
      %p484 = scmp.le.s32.totalorder 1, %s31
      %p485 = scmp.lt.s32.totalorder %s31, 3
      %p486 = pnand %p484, %p485
      %p487 = pneg %p486
      // Predicated region
      $region9: #{transformer_decoder.2} parent=5 // pred_check
        _
      $region10: #{transformer_decoder.2} parent=5 // pred_check_branch
        %489 = sbr.rel (%p486) target = $region12
      $region11: #{transformer_decoder.2} parent=5 // pred_region
        %s490 = ssub.s32 %s31, 1
        // Predicated region
        $region13: #{transformer_decoder.2} parent=11 // pred_check
          %p491 = pneg %p156
        $region14: #{transformer_decoder.2} parent=11 // pred_check_branch
          %493 = sbr.rel (%p491) target = $region16
        $region15: #{transformer_decoder.2} parent=11 // pred_region
          _
        $region16: #{transformer_decoder.2} parent=11 // pred_fallthru
          _
        // Predicated region
        $region17: #{transformer_decoder.2} parent=11 // pred_check
          %p494 = pneg %p177
        $region18: #{transformer_decoder.2} parent=11 // pred_check_branch
          %496 = sbr.rel (%p494) target = $region20
        $region19: #{transformer_decoder.2} parent=11 // pred_region
          _
        $region20: #{transformer_decoder.2} parent=11 // pred_fallthru
          _
        // Predicated region
        $region21: #{transformer_decoder.2} parent=11 // pred_check
          %p497 = pneg %p198
        $region22: #{transformer_decoder.2} parent=11 // pred_check_branch
          %499 = sbr.rel (%p497) target = $region24
        $region23: #{transformer_decoder.2} parent=11 // pred_region
          _
        $region24: #{transformer_decoder.2} parent=11 // pred_fallthru
          _
        // Predicated region
        $region25: #{transformer_decoder.2} parent=11 // pred_check
          %p500 = pneg %p219
        $region26: #{transformer_decoder.2} parent=11 // pred_check_branch
          %502 = sbr.rel (%p500) target = $region28
        $region27: #{transformer_decoder.2} parent=11 // pred_region
          _
        $region28: #{transformer_decoder.2} parent=11 // pred_fallthru
          _
        // Predicated region
        $region29: #{transformer_decoder.2} parent=11 // pred_check
          %p503 = pneg %p240
        $region30: #{transformer_decoder.2} parent=11 // pred_check_branch
          %505 = sbr.rel (%p503) target = $region32
        $region31: #{transformer_decoder.2} parent=11 // pred_region
          _
        $region32: #{transformer_decoder.2} parent=11 // pred_fallthru
          _
        // Predicated region
        $region33: #{transformer_decoder.2} parent=11 // pred_check
          %p506 = pneg %p261
        $region34: #{transformer_decoder.2} parent=11 // pred_check_branch
          %508 = sbr.rel (%p506) target = $region36
        $region35: #{transformer_decoder.2} parent=11 // pred_region
          _
        $region36: #{transformer_decoder.2} parent=11 // pred_fallthru
          _
        // Predicated region
        $region37: #{transformer_decoder.2} parent=11 // pred_check
          %p509 = pneg %p282
        $region38: #{transformer_decoder.2} parent=11 // pred_check_branch
          %511 = sbr.rel (%p509) target = $region40
        $region39: #{transformer_decoder.2} parent=11 // pred_region
          %s513 = ssub.s32 16, 16
          %514 = vsyncadd [#allocation5], %s513
          %s516 = sshll.u32 [#allocation4], 4
          %s517 = int_to_ptr.vmem [resolvable:$true] %s516
          %519 = dma.hbm_to_vmem [thread:$0]  %s10, 16, %s517, [#allocation5]
        $region40: #{transformer_decoder.2} parent=11 // pred_fallthru
          _
        // Predicated region
        $region41: #{transformer_decoder.2} parent=11 // pred_check
          %p520 = pneg %p303
        $region42: #{transformer_decoder.2} parent=11 // pred_check_branch
          %522 = sbr.rel (%p520) target = $region44
        $region43: #{transformer_decoder.2} parent=11 // pred_region
          _
        $region44: #{transformer_decoder.2} parent=11 // pred_fallthru
          _
        // Predicated region
        $region45: #{transformer_decoder.2} parent=11 // pred_check
          %p523 = pneg %p324
        $region46: #{transformer_decoder.2} parent=11 // pred_check_branch
          %525 = sbr.rel (%p523) target = $region48
        $region47: #{transformer_decoder.2} parent=11 // pred_region
          %s527 = ssub.s32 16, 16
          %528 = vsyncadd [#allocation5], %s527
          %s530 = sshll.u32 [#allocation6], 4
          %s531 = int_to_ptr.vmem [resolvable:$true] %s530
          %533 = dma.hbm_to_vmem [thread:$0]  %s12, 16, %s531, [#allocation5]
        $region48: #{transformer_decoder.2} parent=11 // pred_fallthru
          _
        // Predicated region
        $region49: #{transformer_decoder.2} parent=11 // pred_check
          %p534 = pneg %p345
        $region50: #{transformer_decoder.2} parent=11 // pred_check_branch
          %536 = sbr.rel (%p534) target = $region52
        $region51: #{transformer_decoder.2} parent=11 // pred_region
          %s538 = ssub.s32 16, 16
          %539 = vsyncadd [#allocation8], %s538
          %s541 = sshll.u32 [#allocation7], 4
          %s542 = int_to_ptr.vmem [resolvable:$true] %s541
          %544 = dma.hbm_to_vmem [thread:$0]  %s13, 16, %s542, [#allocation8]
        $region52: #{transformer_decoder.2} parent=11 // pred_fallthru
          _
        // Predicated region
        $region53: #{transformer_decoder.2} parent=11 // pred_check
          %p545 = pneg %p366
        $region54: #{transformer_decoder.2} parent=11 // pred_check_branch
          %547 = sbr.rel (%p545) target = $region56
        $region55: #{transformer_decoder.2} parent=11 // pred_region
          %s549 = ssub.s32 16, 16
          %550 = vsyncadd [#allocation8], %s549
          %s552 = sshll.u32 [#allocation9], 4
          %s553 = int_to_ptr.vmem [resolvable:$true] %s552
          %555 = dma.hbm_to_vmem [thread:$0]  %s14, 16, %s553, [#allocation8]
        $region56: #{transformer_decoder.2} parent=11 // pred_fallthru
          _
        // Predicated region
        $region57: #{transformer_decoder.2} parent=11 // pred_check
          %p556 = pneg %p387
        $region58: #{transformer_decoder.2} parent=11 // pred_check_branch
          %558 = sbr.rel (%p556) target = $region60
        $region59: #{transformer_decoder.2} parent=11 // pred_region
          %s560 = ssub.s32 16, 16
          %561 = vsyncadd [#allocation11], %s560
          %s563 = sshll.u32 [#allocation10], 4
          %s564 = int_to_ptr.vmem [resolvable:$true] %s563
          %566 = dma.hbm_to_vmem [thread:$0]  %s15, 16, %s564, [#allocation11]
        $region60: #{transformer_decoder.2} parent=11 // pred_fallthru
          _
        // Predicated region
        $region61: #{transformer_decoder.2} parent=11 // pred_check
          %p567 = pneg %p408
        $region62: #{transformer_decoder.2} parent=11 // pred_check_branch
          %569 = sbr.rel (%p567) target = $region64
        $region63: #{transformer_decoder.2} parent=11 // pred_region
          %s571 = ssub.s32 16, 16
          %572 = vsyncadd [#allocation11], %s571
          %s574 = sshll.u32 [#allocation12], 4
          %s575 = int_to_ptr.vmem [resolvable:$true] %s574
          %577 = dma.hbm_to_vmem [thread:$0]  %s16, 16, %s575, [#allocation11]
        $region64: #{transformer_decoder.2} parent=11 // pred_fallthru
          _
        // Predicated region
        $region65: #{transformer_decoder.2} parent=11 // pred_check
          %p578 = pneg %p429
        $region66: #{transformer_decoder.2} parent=11 // pred_check_branch
          %580 = sbr.rel (%p578) target = $region68
        $region67: #{transformer_decoder.2} parent=11 // pred_region
          _
        $region68: #{transformer_decoder.2} parent=11 // pred_fallthru
          _
        // Predicated region
        $region69: #{transformer_decoder.2} parent=11 // pred_check
          %p581 = pneg %p450
        $region70: #{transformer_decoder.2} parent=11 // pred_check_branch
          %583 = sbr.rel (%p581) target = $region72
        $region71: #{transformer_decoder.2} parent=11 // pred_region
          _
        $region72: #{transformer_decoder.2} parent=11 // pred_fallthru
          _
      $region12: #{transformer_decoder.2} parent=5 // pred_fallthru
        _
      %p584 = scmp.lt.s32.totalorder %s31, 2
      // Predicated region
      $region73: #{transformer_decoder.2} parent=5 // pred_check
        %p585 = pneg %p584
      $region74: #{transformer_decoder.2} parent=5 // pred_check_branch
        %587 = sbr.rel (%p585) target = $region76
      $region75: #{transformer_decoder.2} parent=5 // pred_region
        // Predicated region
        $region77: #{transformer_decoder.2} parent=75 // pred_check
          %p588 = pneg %p51
        $region78: #{transformer_decoder.2} parent=75 // pred_check_branch
          %590 = sbr.rel (%p588) target = $region80
        $region79: #{transformer_decoder.2} parent=75 // pred_region
          %p591 = scmp.lt.s32.totalorder %s31, 1
          %s592 = scalar_select %p591, %s31, 1
          %s593 = smul.addr %s592, 8
          %s594 = scalar_lea.vmem %s0, %s593
        $region80: #{transformer_decoder.2} parent=75 // pred_fallthru
          _
        // Predicated region
        $region81: #{transformer_decoder.2} parent=75 // pred_check
          %p595 = pneg %p77
        $region82: #{transformer_decoder.2} parent=75 // pred_check_branch
          %597 = sbr.rel (%p595) target = $region84
        $region83: #{transformer_decoder.2} parent=75 // pred_region
          %p598 = scmp.lt.s32.totalorder %s31, 1
          %s599 = scalar_select %p598, %s31, 1
          %s600 = smul.addr %s599, 8
          %s601 = scalar_lea.vmem %s1, %s600
        $region84: #{transformer_decoder.2} parent=75 // pred_fallthru
          _
        // Predicated region
        $region85: #{transformer_decoder.2} parent=75 // pred_check
          %p602 = pneg %p103
        $region86: #{transformer_decoder.2} parent=75 // pred_check_branch
          %604 = sbr.rel (%p602) target = $region88
        $region87: #{transformer_decoder.2} parent=75 // pred_region
          %p605 = scmp.lt.s32.totalorder %s31, 1
          %s606 = scalar_select %p605, %s31, 1
          %s607 = scalar_lea.vmem %s2, %s606
        $region88: #{transformer_decoder.2} parent=75 // pred_fallthru
          _
        // Predicated region
        $region89: #{transformer_decoder.2} parent=75 // pred_check
          %p608 = pneg %p129
        $region90: #{transformer_decoder.2} parent=75 // pred_check_branch
          %610 = sbr.rel (%p608) target = $region92
        $region91: #{transformer_decoder.2} parent=75 // pred_region
          %s611 = sand.u32 %s119, 1
          %s612 = scalar_lea.sflag [#allocation3], %s611
          %s613 = sand.u32 %s119, 1
          %s614 = scalar_lea.vmem [#allocation2], %s613
          %s616 = ssub.s32 16, 16
          %617 = vsyncadd %s612, %s616
          %s618 = smul.addr %s31, 16
          %s619 = scalar_lea.hbm %s3, %s618
          %s621 = sshll.u32 %s614, 4
          %s622 = int_to_ptr.vmem [resolvable:$true] %s621
          %624 = dma.hbm_to_vmem [thread:$0]  %s619, 16, %s622, %s612
        $region92: #{transformer_decoder.2} parent=75 // pred_fallthru
          _
      $region76: #{transformer_decoder.2} parent=5 // pred_fallthru
        _
      %p625 = scmp.le.s32.totalorder 1, %s31
      %p626 = scmp.lt.s32.totalorder %s31, 3
      %p627 = pnand %p625, %p626
      %p628 = pneg %p627
      // Predicated region
      $region93: #{transformer_decoder.2} parent=5 // pred_check
        _
      $region94: #{transformer_decoder.2} parent=5 // pred_check_branch
        %630 = sbr.rel (%p627) target = $region96
      $region95: #{transformer_decoder.2} parent=5 // pred_region
        %s631 = ssub.s32 %s31, 1
        %s632 = sand.u32 %s122, 1
        %s633 = scalar_lea.sflag [#allocation3], %s632
        %s634 = sand.u32 %s122, 1
        %s635 = scalar_lea.vmem [#allocation2], %s634
        // Predicated region
        $region97: #{transformer_decoder.2} parent=95 // pred_check
          %p636 = pneg %p135
        $region98: #{transformer_decoder.2} parent=95 // pred_check_branch
          %638 = sbr.rel (%p636) target = $region100
        $region99: #{transformer_decoder.2} parent=95 // pred_region
          %639 = dma.done %s633, 16
        $region100: #{transformer_decoder.2} parent=95 // pred_fallthru
          _
        // Predicated region
        $region101: #{transformer_decoder.2} parent=95 // pred_check
          %p640 = pneg %p282
        $region102: #{transformer_decoder.2} parent=95 // pred_check_branch
          %642 = sbr.rel (%p640) target = $region104
        $region103: #{transformer_decoder.2} parent=95 // pred_region
          %643 = dma.done [#allocation5], 16
        $region104: #{transformer_decoder.2} parent=95 // pred_fallthru
          _
        // Predicated region
        $region105: #{transformer_decoder.2} parent=95 // pred_check
          %p644 = pneg %p324
        $region106: #{transformer_decoder.2} parent=95 // pred_check_branch
          %646 = sbr.rel (%p644) target = $region108
        $region107: #{transformer_decoder.2} parent=95 // pred_region
          %647 = dma.done [#allocation5], 16
        $region108: #{transformer_decoder.2} parent=95 // pred_fallthru
          _
        // Predicated region
        $region109: #{transformer_decoder.2} parent=95 // pred_check
          %p648 = pneg %p345
        $region110: #{transformer_decoder.2} parent=95 // pred_check_branch
          %650 = sbr.rel (%p648) target = $region112
        $region111: #{transformer_decoder.2} parent=95 // pred_region
          %651 = dma.done [#allocation8], 16
        $region112: #{transformer_decoder.2} parent=95 // pred_fallthru
          _
        // Predicated region
        $region113: #{transformer_decoder.2} parent=95 // pred_check
          %p652 = pneg %p366
        $region114: #{transformer_decoder.2} parent=95 // pred_check_branch
          %654 = sbr.rel (%p652) target = $region116
        $region115: #{transformer_decoder.2} parent=95 // pred_region
          %655 = dma.done [#allocation8], 16
        $region116: #{transformer_decoder.2} parent=95 // pred_fallthru
          _
        // Predicated region
        $region117: #{transformer_decoder.2} parent=95 // pred_check
          %p656 = pneg %p387
        $region118: #{transformer_decoder.2} parent=95 // pred_check_branch
          %658 = sbr.rel (%p656) target = $region120
        $region119: #{transformer_decoder.2} parent=95 // pred_region
          %659 = dma.done [#allocation11], 16
        $region120: #{transformer_decoder.2} parent=95 // pred_fallthru
          _
        // Predicated region
        $region121: #{transformer_decoder.2} parent=95 // pred_check
          %p660 = pneg %p408
        $region122: #{transformer_decoder.2} parent=95 // pred_check_branch
          %662 = sbr.rel (%p660) target = $region124
        $region123: #{transformer_decoder.2} parent=95 // pred_region
          %663 = dma.done [#allocation11], 16
        $region124: #{transformer_decoder.2} parent=95 // pred_fallthru
          _
        %p664 = scmp.lt.s32.totalorder %s36, 1
        %s665 = scalar_select %p664, %s36, 1
        %s666 = smul.addr %s665, 8
        %s667 = scalar_lea.vmem %s0, %s666
        %p668 = pneg %p57
        %p669 = pneg %p54
        %p670 = scmp.lt.s32.totalorder %s36, 1
        %s671 = scalar_select %p670, %s36, 1
        %s672 = smul.addr %s671, 8
        %s673 = scalar_lea.vmem %s1, %s672
        %p674 = pneg %p83
        %p675 = pneg %p80
        %p676 = scmp.lt.s32.totalorder %s36, 1
        %s677 = scalar_select %p676, %s36, 1
        %s678 = scalar_lea.vmem %s2, %s677
        %p679 = pneg %p109
        %p680 = pneg %p106
        %s681 = sand.u32 %s122, 1
        %s682 = scalar_lea.sflag [#allocation3], %s681
        %s683 = sand.u32 %s122, 1
        %s684 = scalar_lea.vmem [#allocation2], %s683
        %p685 = pneg %p135
        %p686 = pneg %p132
        %p687 = pneg %p156
        %p688 = pneg %p153
        %p689 = pneg %p177
        %p690 = pneg %p174
        %p691 = pneg %p198
        %p692 = pneg %p195
        %p693 = pneg %p219
        %p694 = pneg %p216
        %p695 = pneg %p240
        %p696 = pneg %p237
        %p697 = pneg %p261
        %p698 = pneg %p258
        %p699 = pneg %p282
        %p700 = pneg %p279
        %p701 = pneg %p303
        %p702 = pneg %p300
        %p703 = pneg %p324
        %p704 = pneg %p321
        %p705 = pneg %p345
        %p706 = pneg %p342
        %p707 = pneg %p366
        %p708 = pneg %p363
        %p709 = pneg %p387
        %p710 = pneg %p384
        %p711 = pneg %p408
        %p712 = pneg %p405
        %p713 = pneg %p429
        %p714 = pneg %p426
        %p715 = pneg %p450
        %p716 = pneg %p447
        %p717 = pneg %p476
        %p718 = pneg %p473
        %p719 = scmp.lt.s32.totalorder %s36, 1
        %s720 = scalar_select %p719, %s36, 1
        %s721 = smul.addr %s720, 8
        %s722 = scalar_lea.vmem %s19, %s721
        %p723 = scmp.lt.s32.totalorder %s36, 1
        %s724 = scalar_select %p723, %s36, 1
        %s725 = smul.addr %s724, 8
        %s726 = scalar_lea.vmem %s0, %s725
        %p727 = scmp.lt.s32.totalorder %s36, 1
        %s728 = scalar_select %p727, %s36, 1
        %s729 = smul.addr %s728, 8
        %s730 = scalar_lea.vmem %s1, %s729
        %p731 = scmp.lt.s32.totalorder %s36, 1
        %s732 = scalar_select %p731, %s36, 1
        %s733 = scalar_lea.vmem %s2, %s732
        %p734 = scmp.lt.s32.totalorder %s36, 1
        %s735 = scalar_select %p734, %s36, 1
        %s736 = smul.addr %s735, 8
        %s737 = scalar_lea.vmem %s19, %s736
        %v739 = vld [vmem:[%s726] sm:$0xff]
        %v740 = vld [vmem:[%s730] sm:$0xff]
        %v741 = vld [vmem:[%s733] sm:$0x1]
        %v742 = vld [vmem:[%s635] sm:$0x1]
        %v743 = vlaneseq
        %v744 = vshrl.u32 %v743, 7
        %v745 = vlaneseq
        %v746 = vand.u32 %v745, 127
        %vm747 = vcmp.eq.f32.partialorder %v741, 0.0
        %v748 = vsel %vm747, -1e+10, 0.0
        %vm749 = vcmp.gt.s32.totalorder %v746, %v744
        %v750 = vsel %vm749, -1e+10, 0.0
        %v752 = vlaneseq
        %v753 = vshrl.u32 %v752, 7
        %v754 = vsub.s32 0, %v753
        %v755 = vrot.slane %v748, %v754
        %v757 = vadd.f32 %v755, %v750
        %vm758 = vcmp.eq.f32.partialorder %v742, 0.0
        %v759 = vsel %vm758, -1e+10, 0.0
        %v760 = vld [vmem:[%s4] sm:$0xf]
        %v761 = vld [vmem:[%s4 + $0x4] sm:$0xf]
        %v762 = vld [vmem:[%s4 + $0x8] sm:$0xf]
        %v763 = vld [vmem:[%s4 + $0xc] sm:$0xf]
        %v764 = vpack.c.bf16 %v739, %v739
        %v769 = vunpack.c.l.b16 %v760
        %v770 = vunpack.c.l.b16 %v761
        %v771 = vunpack.c.l.b16 %v762
        %v772 = vunpack.c.l.b16 %v763
        %v773 = vpack.c.b16 %v770, %v769
        %v774 = vpack.c.b16 %v772, %v771
        %vm777 = vcmask 261120
        %v779 = vsel %vm777, %v764, 0
        %781 = vmatprep.subr.bf16.mxu0 0
        %782 = vmatpush1.bf16.msra.mxu0 %v773
        %783 = vmatprep.subr.bf16.mxu0 0
        %784 = vmatpush1.bf16.msra.mxu0 %v774
        %785 = vmatprep.subr.bf16.mxu0 0
        %786 = vmatpush1.bf16.msra.mxu0 0
        %787 = vmatprep.subr.bf16.mxu0 0
        %788 = vmatpush1.bf16.msra.mxu0 0
        %789 = vmatprep.subr.bf16.mxu0 0
        %790 = vmatpush1.bf16.msra.mxu0 0
        %791 = vmatprep.subr.bf16.mxu0 0
        %792 = vmatpush1.bf16.msra.mxu0 0
        %793 = vmatprep.subr.bf16.mxu0 0
        %794 = vmatpush1.bf16.msra.mxu0 0
        %795 = vmatprep.subr.bf16.mxu0 0
        %796 = vmatpush1.bf16.msra.mxu0 0
        %797 = vmatprep.subr.bf16.mxu0 0
        %798 = vmatpush1.bf16.msra.mxu0 0
        %799 = vmatprep.subr.bf16.mxu0 0
        %800 = vmatpush1.bf16.msra.mxu0 0
        %801 = vmatprep.subr.bf16.mxu0 0
        %802 = vmatpush1.bf16.msra.mxu0 0
        %803 = vmatprep.subr.bf16.mxu0 0
        %804 = vmatpush1.bf16.msra.mxu0 0
        %805 = vmatprep.subr.bf16.mxu0 0
        %806 = vmatpush1.bf16.msra.mxu0 0
        %807 = vmatprep.subr.bf16.mxu0 0
        %808 = vmatpush1.bf16.msra.mxu0 0
        %809 = vmatprep.subr.bf16.mxu0 0
        %810 = vmatpush1.bf16.msra.mxu0 0
        %811 = vmatprep.subr.bf16.mxu0 0
        %812 = vmatpush1.bf16.msra.mxu0 0
        %813 = vmatprep.mubr.bf16.mxu0 0
        %814 = vmatmul.mubr.bf16.gmra.mrb[0].mxu0 %v779
        %v815 = vpop.f32.mrb[0].mxu0
        %v816 = vadd.f32 0.0, %v815
        %v817 = vpop.f32.mrb[0].mxu0
        %v818 = vpop.f32.mrb[0].mxu0
        %v819 = vpop.f32.mrb[0].mxu0
        %820 = vdwg.mxu0
        %822 = vrot.lane.b32.xlu0 %v816, 96
        %v823 = vpop.permute.xlu0 %822
        %825 = vxpose.xlu0.b32.start [1/16] %v823, 128
        %826 = vxpose.xlu0.b32.cont [2/16] 0.0, 128
        %827 = vxpose.xlu0.b32.cont [3/16] 0.0, 128
        %828 = vxpose.xlu0.b32.cont [4/16] 0.0, 128
        %829 = vxpose.xlu0.b32.cont [5/16] 0.0, 128
        %830 = vxpose.xlu0.b32.cont [6/16] 0.0, 128
        %831 = vxpose.xlu0.b32.cont [7/16] 0.0, 128
        %832 = vxpose.xlu0.b32.cont [8/16] 0.0, 128
        %833 = vxpose.xlu0.b32.cont [9/16] 0.0, 128
        %834 = vxpose.xlu0.b32.cont [10/16] 0.0, 128
        %835 = vxpose.xlu0.b32.cont [11/16] 0.0, 128
        %836 = vxpose.xlu0.b32.cont [12/16] 0.0, 128
        %837 = vxpose.xlu0.b32.cont [13/16] 0.0, 128
        %838 = vxpose.xlu0.b32.cont [14/16] 0.0, 128
        %839 = vxpose.xlu0.b32.cont [15/16] 0.0, 128
        %840 = vxpose.xlu0.b32.end [16/16] 0.0, 128
        %v841 = vpop.trf.xlu0
        %v842 = vpop.trf.xlu0
        %v843 = vpop.trf.xlu0
        %v844 = vpop.trf.xlu0
        %v845 = vpop.trf.xlu0
        %v846 = vpop.trf.xlu0
        %v847 = vpop.trf.xlu0
        %v848 = vpop.trf.xlu0
        %v849 = vpop.trf.xlu0
        %v850 = vpop.trf.xlu0
        %v851 = vpop.trf.xlu0
        %v852 = vpop.trf.xlu0
        %v853 = vpop.trf.xlu0
        %v854 = vpop.trf.xlu0
        %v855 = vpop.trf.xlu0
        %v856 = vpop.trf.xlu0
        %v857 = vpack.c.bf16 %v816, %v816
        %v858 = vpack.c.bf16 %v841, %v841
        %vm859 = vcmask 64512
        %v861 = vsel %vm859, %v857, 0
        %vm863 = vcmask 1043456
        %v865 = vsel %vm863, %v858, 0
        %867 = vmatprep.subr.bf16.mxu0 0
        %868 = vmatpush1.bf16.msra.mxu0 %v865
        %869 = vmatprep.subr.bf16.mxu0 0
        %870 = vmatpush1.bf16.msra.mxu0 0
        %871 = vmatprep.subr.bf16.mxu0 0
        %872 = vmatpush1.bf16.msra.mxu0 0
        %873 = vmatprep.subr.bf16.mxu0 0
        %874 = vmatpush1.bf16.msra.mxu0 0
        %875 = vmatprep.subr.bf16.mxu0 0
        %876 = vmatpush1.bf16.msra.mxu0 0
        %877 = vmatprep.subr.bf16.mxu0 0
        %878 = vmatpush1.bf16.msra.mxu0 0
        %879 = vmatprep.subr.bf16.mxu0 0
        %880 = vmatpush1.bf16.msra.mxu0 0
        %881 = vmatprep.subr.bf16.mxu0 0
        %882 = vmatpush1.bf16.msra.mxu0 0
        %883 = vmatprep.subr.bf16.mxu0 0
        %884 = vmatpush1.bf16.msra.mxu0 0
        %885 = vmatprep.subr.bf16.mxu0 0
        %886 = vmatpush1.bf16.msra.mxu0 0
        %887 = vmatprep.subr.bf16.mxu0 0
        %888 = vmatpush1.bf16.msra.mxu0 0
        %889 = vmatprep.subr.bf16.mxu0 0
        %890 = vmatpush1.bf16.msra.mxu0 0
        %891 = vmatprep.subr.bf16.mxu0 0
        %892 = vmatpush1.bf16.msra.mxu0 0
        %893 = vmatprep.subr.bf16.mxu0 0
        %894 = vmatpush1.bf16.msra.mxu0 0
        %895 = vmatprep.subr.bf16.mxu0 0
        %896 = vmatpush1.bf16.msra.mxu0 0
        %897 = vmatprep.subr.bf16.mxu0 0
        %898 = vmatpush1.bf16.msra.mxu0 0
        %899 = vmatprep.mubr.bf16.mxu0 0
        %900 = vmatmul.mubr.bf16.gmra.mrb[0].mxu0 %v861
        %v901 = vpop.f32.mrb[0].mxu0
        %v902 = vadd.f32 0.0, %v901
        %v903 = vpop.f32.mrb[0].mxu0
        %v904 = vpop.f32.mrb[0].mxu0
        %v905 = vpop.f32.mrb[0].mxu0
        %906 = vdwg.mxu0
        %v907 = vmul.f32 %v902, 0.35355338
        %v908 = vadd.f32 %v907, %v757
        %v909 = vsel %vm859, %v908, -inf
        %910 = vmax.xlane.f32.xlu0 %v909
        %v911 = vpop.xlane.xlu0 %910
        %v912 = vsub.f32 %v908, %v911
        %v913 = vmul.f32 %v912, 1.442695
        %v914 = vpow.pop %v913
        %v915 = vsel %vm859, %v914, 0.0
        %916 = vadd.xlane.f32.xlu0 %v915
        %v917 = vpop.xlane.xlu0 %916
        %v918 = vrcp.pop %v917
        %v919 = vmul.f32 %v914, %v918
        %v920 = vpack.c.bf16 %v919, %v919
        %922 = vrot.lane.b32.xlu0 %v857, 64
        %v923 = vpop.permute.xlu0 %922
        %v925 = vsel %vm859, %v920, 0
        %v928 = vsel %vm863, %v923, 0
        %930 = vmatprep.subr.bf16.mxu0 0
        %931 = vmatpush1.bf16.msra.mxu0 %v928
        %932 = vmatprep.subr.bf16.mxu0 0
        %933 = vmatpush1.bf16.msra.mxu0 0
        %934 = vmatprep.subr.bf16.mxu0 0
        %935 = vmatpush1.bf16.msra.mxu0 0
        %936 = vmatprep.subr.bf16.mxu0 0
        %937 = vmatpush1.bf16.msra.mxu0 0
        %938 = vmatprep.subr.bf16.mxu0 0
        %939 = vmatpush1.bf16.msra.mxu0 0
        %940 = vmatprep.subr.bf16.mxu0 0
        %941 = vmatpush1.bf16.msra.mxu0 0
        %942 = vmatprep.subr.bf16.mxu0 0
        %943 = vmatpush1.bf16.msra.mxu0 0
        %944 = vmatprep.subr.bf16.mxu0 0
        %945 = vmatpush1.bf16.msra.mxu0 0
        %946 = vmatprep.subr.bf16.mxu0 0
        %947 = vmatpush1.bf16.msra.mxu0 0
        %948 = vmatprep.subr.bf16.mxu0 0
        %949 = vmatpush1.bf16.msra.mxu0 0
        %950 = vmatprep.subr.bf16.mxu0 0
        %951 = vmatpush1.bf16.msra.mxu0 0
        %952 = vmatprep.subr.bf16.mxu0 0
        %953 = vmatpush1.bf16.msra.mxu0 0
        %954 = vmatprep.subr.bf16.mxu0 0
        %955 = vmatpush1.bf16.msra.mxu0 0
        %956 = vmatprep.subr.bf16.mxu0 0
        %957 = vmatpush1.bf16.msra.mxu0 0
        %958 = vmatprep.subr.bf16.mxu0 0
        %959 = vmatpush1.bf16.msra.mxu0 0
        %960 = vmatprep.subr.bf16.mxu0 0
        %961 = vmatpush1.bf16.msra.mxu0 0
        %962 = vmatprep.mubr.bf16.mxu0 0
        %963 = vmatmul.mubr.bf16.gmra.mrb[0].mxu0 %v925
        %v964 = vpop.f32.mrb[0].mxu0
        %v965 = vadd.f32 0.0, %v964
        %v966 = vpop.f32.mrb[0].mxu0
        %v967 = vpop.f32.mrb[0].mxu0
        %v968 = vpop.f32.mrb[0].mxu0
        %969 = vdwg.mxu0
        %970 = vrot.lane.b32.xlu0 %v816, 88
        %v971 = vpop.permute.xlu0 %970
        %973 = vxpose.xlu0.b32.start [1/16] %v971, 128
        %974 = vxpose.xlu0.b32.cont [2/16] 0.0, 128
        %975 = vxpose.xlu0.b32.cont [3/16] 0.0, 128
        %976 = vxpose.xlu0.b32.cont [4/16] 0.0, 128
        %977 = vxpose.xlu0.b32.cont [5/16] 0.0, 128
        %978 = vxpose.xlu0.b32.cont [6/16] 0.0, 128
        %979 = vxpose.xlu0.b32.cont [7/16] 0.0, 128
        %980 = vxpose.xlu0.b32.cont [8/16] 0.0, 128
        %981 = vxpose.xlu0.b32.cont [9/16] 0.0, 128
        %982 = vxpose.xlu0.b32.cont [10/16] 0.0, 128
        %983 = vxpose.xlu0.b32.cont [11/16] 0.0, 128
        %984 = vxpose.xlu0.b32.cont [12/16] 0.0, 128
        %985 = vxpose.xlu0.b32.cont [13/16] 0.0, 128
        %986 = vxpose.xlu0.b32.cont [14/16] 0.0, 128
        %987 = vxpose.xlu0.b32.cont [15/16] 0.0, 128
        %988 = vxpose.xlu0.b32.end [16/16] 0.0, 128
        %v989 = vpop.trf.xlu0
        %v990 = vpop.trf.xlu0
        %v991 = vpop.trf.xlu0
        %v992 = vpop.trf.xlu0
        %v993 = vpop.trf.xlu0
        %v994 = vpop.trf.xlu0
        %v995 = vpop.trf.xlu0
        %v996 = vpop.trf.xlu0
        %v997 = vpop.trf.xlu0
        %v998 = vpop.trf.xlu0
        %v999 = vpop.trf.xlu0
        %v1000 = vpop.trf.xlu0
        %v1001 = vpop.trf.xlu0
        %v1002 = vpop.trf.xlu0
        %v1003 = vpop.trf.xlu0
        %v1004 = vpop.trf.xlu0
        %v1005 = vpack.c.bf16 %v989, %v989
        %1006 = vrot.lane.b32.xlu0 %v857, 120
        %v1007 = vpop.permute.xlu0 %1006
        %v1009 = vsel %vm859, %v1007, 0
        %v1012 = vsel %vm863, %v1005, 0
        %1014 = vmatprep.subr.bf16.mxu0 0
        %1015 = vmatpush1.bf16.msra.mxu0 %v1012
        %1016 = vmatprep.subr.bf16.mxu0 0
        %1017 = vmatpush1.bf16.msra.mxu0 0
        %1018 = vmatprep.subr.bf16.mxu0 0
        %1019 = vmatpush1.bf16.msra.mxu0 0
        %1020 = vmatprep.subr.bf16.mxu0 0
        %1021 = vmatpush1.bf16.msra.mxu0 0
        %1022 = vmatprep.subr.bf16.mxu0 0
        %1023 = vmatpush1.bf16.msra.mxu0 0
        %1024 = vmatprep.subr.bf16.mxu0 0
        %1025 = vmatpush1.bf16.msra.mxu0 0
        %1026 = vmatprep.subr.bf16.mxu0 0
        %1027 = vmatpush1.bf16.msra.mxu0 0
        %1028 = vmatprep.subr.bf16.mxu0 0
        %1029 = vmatpush1.bf16.msra.mxu0 0
        %1030 = vmatprep.subr.bf16.mxu0 0
        %1031 = vmatpush1.bf16.msra.mxu0 0
        %1032 = vmatprep.subr.bf16.mxu0 0
        %1033 = vmatpush1.bf16.msra.mxu0 0
        %1034 = vmatprep.subr.bf16.mxu0 0
        %1035 = vmatpush1.bf16.msra.mxu0 0
        %1036 = vmatprep.subr.bf16.mxu0 0
        %1037 = vmatpush1.bf16.msra.mxu0 0
        %1038 = vmatprep.subr.bf16.mxu0 0
        %1039 = vmatpush1.bf16.msra.mxu0 0
        %1040 = vmatprep.subr.bf16.mxu0 0
        %1041 = vmatpush1.bf16.msra.mxu0 0
        %1042 = vmatprep.subr.bf16.mxu0 0
        %1043 = vmatpush1.bf16.msra.mxu0 0
        %1044 = vmatprep.subr.bf16.mxu0 0
        %1045 = vmatpush1.bf16.msra.mxu0 0
        %1046 = vmatprep.mubr.bf16.mxu0 0
        %1047 = vmatmul.mubr.bf16.gmra.mrb[0].mxu0 %v1009
        %v1048 = vpop.f32.mrb[0].mxu0
        %v1049 = vadd.f32 0.0, %v1048
        %v1050 = vpop.f32.mrb[0].mxu0
        %v1051 = vpop.f32.mrb[0].mxu0
        %v1052 = vpop.f32.mrb[0].mxu0
        %1053 = vdwg.mxu0
        %v1054 = vmul.f32 %v1049, 0.35355338
        %v1055 = vadd.f32 %v1054, %v757
        %v1056 = vsel %vm859, %v1055, -inf
        %1057 = vmax.xlane.f32.xlu0 %v1056
        %v1058 = vpop.xlane.xlu0 %1057
        %v1059 = vsub.f32 %v1055, %v1058
        %v1060 = vmul.f32 %v1059, 1.442695
        %v1061 = vpow.pop %v1060
        %v1062 = vsel %vm859, %v1061, 0.0
        %1063 = vadd.xlane.f32.xlu0 %v1062
        %v1064 = vpop.xlane.xlu0 %1063
        %v1065 = vrcp.pop %v1064
        %v1066 = vmul.f32 %v1061, %v1065
        %v1067 = vpack.c.bf16 %v1066, %v1066
        %1068 = vrot.lane.b32.xlu0 %v857, 56
        %v1069 = vpop.permute.xlu0 %1068
        %v1071 = vsel %vm859, %v1067, 0
        %v1074 = vsel %vm863, %v1069, 0
        %1076 = vmatprep.subr.bf16.mxu0 0
        %1077 = vmatpush1.bf16.msra.mxu0 %v1074
        %1078 = vmatprep.subr.bf16.mxu0 0
        %1079 = vmatpush1.bf16.msra.mxu0 0
        %1080 = vmatprep.subr.bf16.mxu0 0
        %1081 = vmatpush1.bf16.msra.mxu0 0
        %1082 = vmatprep.subr.bf16.mxu0 0
        %1083 = vmatpush1.bf16.msra.mxu0 0
        %1084 = vmatprep.subr.bf16.mxu0 0
        %1085 = vmatpush1.bf16.msra.mxu0 0
        %1086 = vmatprep.subr.bf16.mxu0 0
        %1087 = vmatpush1.bf16.msra.mxu0 0
        %1088 = vmatprep.subr.bf16.mxu0 0
        %1089 = vmatpush1.bf16.msra.mxu0 0
        %1090 = vmatprep.subr.bf16.mxu0 0
        %1091 = vmatpush1.bf16.msra.mxu0 0
        %1092 = vmatprep.subr.bf16.mxu0 0
        %1093 = vmatpush1.bf16.msra.mxu0 0
        %1094 = vmatprep.subr.bf16.mxu0 0
        %1095 = vmatpush1.bf16.msra.mxu0 0
        %1096 = vmatprep.subr.bf16.mxu0 0
        %1097 = vmatpush1.bf16.msra.mxu0 0
        %1098 = vmatprep.subr.bf16.mxu0 0
        %1099 = vmatpush1.bf16.msra.mxu0 0
        %1100 = vmatprep.subr.bf16.mxu0 0
        %1101 = vmatpush1.bf16.msra.mxu0 0
        %1102 = vmatprep.subr.bf16.mxu0 0
        %1103 = vmatpush1.bf16.msra.mxu0 0
        %1104 = vmatprep.subr.bf16.mxu0 0
        %1105 = vmatpush1.bf16.msra.mxu0 0
        %1106 = vmatprep.subr.bf16.mxu0 0
        %1107 = vmatpush1.bf16.msra.mxu0 0
        %1108 = vmatprep.mubr.bf16.mxu0 0
        %1109 = vmatmul.mubr.bf16.gmra.mrb[0].mxu0 %v1071
        %v1110 = vpop.f32.mrb[0].mxu0
        %v1111 = vadd.f32 0.0, %v1110
        %v1112 = vpop.f32.mrb[0].mxu0
        %v1113 = vpop.f32.mrb[0].mxu0
        %v1114 = vpop.f32.mrb[0].mxu0
        %1115 = vdwg.mxu0
        %1116 = vrot.lane.b32.xlu0 %v816, 80
        %v1117 = vpop.permute.xlu0 %1116
        %1119 = vxpose.xlu0.b32.start [1/16] %v1117, 128
        %1120 = vxpose.xlu0.b32.cont [2/16] 0.0, 128
        %1121 = vxpose.xlu0.b32.cont [3/16] 0.0, 128
        %1122 = vxpose.xlu0.b32.cont [4/16] 0.0, 128
        %1123 = vxpose.xlu0.b32.cont [5/16] 0.0, 128
        %1124 = vxpose.xlu0.b32.cont [6/16] 0.0, 128
        %1125 = vxpose.xlu0.b32.cont [7/16] 0.0, 128
        %1126 = vxpose.xlu0.b32.cont [8/16] 0.0, 128
        %1127 = vxpose.xlu0.b32.cont [9/16] 0.0, 128
        %1128 = vxpose.xlu0.b32.cont [10/16] 0.0, 128
        %1129 = vxpose.xlu0.b32.cont [11/16] 0.0, 128
        %1130 = vxpose.xlu0.b32.cont [12/16] 0.0, 128
        %1131 = vxpose.xlu0.b32.cont [13/16] 0.0, 128
        %1132 = vxpose.xlu0.b32.cont [14/16] 0.0, 128
        %1133 = vxpose.xlu0.b32.cont [15/16] 0.0, 128
        %1134 = vxpose.xlu0.b32.end [16/16] 0.0, 128
        %v1135 = vpop.trf.xlu0
        %v1136 = vpop.trf.xlu0
        %v1137 = vpop.trf.xlu0
        %v1138 = vpop.trf.xlu0
        %v1139 = vpop.trf.xlu0
        %v1140 = vpop.trf.xlu0
        %v1141 = vpop.trf.xlu0
        %v1142 = vpop.trf.xlu0
        %v1143 = vpop.trf.xlu0
        %v1144 = vpop.trf.xlu0
        %v1145 = vpop.trf.xlu0
        %v1146 = vpop.trf.xlu0
        %v1147 = vpop.trf.xlu0
        %v1148 = vpop.trf.xlu0
        %v1149 = vpop.trf.xlu0
        %v1150 = vpop.trf.xlu0
        %v1151 = vpack.c.bf16 %v1135, %v1135
        %1152 = vrot.lane.b32.xlu0 %v857, 112
        %v1153 = vpop.permute.xlu0 %1152
        %v1155 = vsel %vm859, %v1153, 0
        %v1158 = vsel %vm863, %v1151, 0
        %1160 = vmatprep.subr.bf16.mxu0 0
        %1161 = vmatpush1.bf16.msra.mxu0 %v1158
        %1162 = vmatprep.subr.bf16.mxu0 0
        %1163 = vmatpush1.bf16.msra.mxu0 0
        %1164 = vmatprep.subr.bf16.mxu0 0
        %1165 = vmatpush1.bf16.msra.mxu0 0
        %1166 = vmatprep.subr.bf16.mxu0 0
        %1167 = vmatpush1.bf16.msra.mxu0 0
        %1168 = vmatprep.subr.bf16.mxu0 0
        %1169 = vmatpush1.bf16.msra.mxu0 0
        %1170 = vmatprep.subr.bf16.mxu0 0
        %1171 = vmatpush1.bf16.msra.mxu0 0
        %1172 = vmatprep.subr.bf16.mxu0 0
        %1173 = vmatpush1.bf16.msra.mxu0 0
        %1174 = vmatprep.subr.bf16.mxu0 0
        %1175 = vmatpush1.bf16.msra.mxu0 0
        %1176 = vmatprep.subr.bf16.mxu0 0
        %1177 = vmatpush1.bf16.msra.mxu0 0
        %1178 = vmatprep.subr.bf16.mxu0 0
        %1179 = vmatpush1.bf16.msra.mxu0 0
        %1180 = vmatprep.subr.bf16.mxu0 0
        %1181 = vmatpush1.bf16.msra.mxu0 0
        %1182 = vmatprep.subr.bf16.mxu0 0
        %1183 = vmatpush1.bf16.msra.mxu0 0
        %1184 = vmatprep.subr.bf16.mxu0 0
        %1185 = vmatpush1.bf16.msra.mxu0 0
        %1186 = vmatprep.subr.bf16.mxu0 0
        %1187 = vmatpush1.bf16.msra.mxu0 0
        %1188 = vmatprep.subr.bf16.mxu0 0
        %1189 = vmatpush1.bf16.msra.mxu0 0
        %1190 = vmatprep.subr.bf16.mxu0 0
        %1191 = vmatpush1.bf16.msra.mxu0 0
        %1192 = vmatprep.mubr.bf16.mxu0 0
        %1193 = vmatmul.mubr.bf16.gmra.mrb[0].mxu0 %v1155
        %v1194 = vpop.f32.mrb[0].mxu0
        %v1195 = vadd.f32 0.0, %v1194
        %v1196 = vpop.f32.mrb[0].mxu0
        %v1197 = vpop.f32.mrb[0].mxu0
        %v1198 = vpop.f32.mrb[0].mxu0
        %1199 = vdwg.mxu0
        %v1200 = vmul.f32 %v1195, 0.35355338
        %v1201 = vadd.f32 %v1200, %v757
        %v1202 = vsel %vm859, %v1201, -inf
        %1203 = vmax.xlane.f32.xlu0 %v1202
        %v1204 = vpop.xlane.xlu0 %1203
        %v1205 = vsub.f32 %v1201, %v1204
        %v1206 = vmul.f32 %v1205, 1.442695
        %v1207 = vpow.pop %v1206
        %v1208 = vsel %vm859, %v1207, 0.0
        %1209 = vadd.xlane.f32.xlu0 %v1208
        %v1210 = vpop.xlane.xlu0 %1209
        %v1211 = vrcp.pop %v1210
        %v1212 = vmul.f32 %v1207, %v1211
        %v1213 = vpack.c.bf16 %v1212, %v1212
        %1214 = vrot.lane.b32.xlu0 %v857, 48
        %v1215 = vpop.permute.xlu0 %1214
        %v1217 = vsel %vm859, %v1213, 0
        %v1220 = vsel %vm863, %v1215, 0
        %1222 = vmatprep.subr.bf16.mxu0 0
        %1223 = vmatpush1.bf16.msra.mxu0 %v1220
        %1224 = vmatprep.subr.bf16.mxu0 0
        %1225 = vmatpush1.bf16.msra.mxu0 0
        %1226 = vmatprep.subr.bf16.mxu0 0
        %1227 = vmatpush1.bf16.msra.mxu0 0
        %1228 = vmatprep.subr.bf16.mxu0 0
        %1229 = vmatpush1.bf16.msra.mxu0 0
        %1230 = vmatprep.subr.bf16.mxu0 0
        %1231 = vmatpush1.bf16.msra.mxu0 0
        %1232 = vmatprep.subr.bf16.mxu0 0
        %1233 = vmatpush1.bf16.msra.mxu0 0
        %1234 = vmatprep.subr.bf16.mxu0 0
        %1235 = vmatpush1.bf16.msra.mxu0 0
        %1236 = vmatprep.subr.bf16.mxu0 0
        %1237 = vmatpush1.bf16.msra.mxu0 0
        %1238 = vmatprep.subr.bf16.mxu0 0
        %1239 = vmatpush1.bf16.msra.mxu0 0
        %1240 = vmatprep.subr.bf16.mxu0 0
        %1241 = vmatpush1.bf16.msra.mxu0 0
        %1242 = vmatprep.subr.bf16.mxu0 0
        %1243 = vmatpush1.bf16.msra.mxu0 0
        %1244 = vmatprep.subr.bf16.mxu0 0
        %1245 = vmatpush1.bf16.msra.mxu0 0
        %1246 = vmatprep.subr.bf16.mxu0 0
        %1247 = vmatpush1.bf16.msra.mxu0 0
        %1248 = vmatprep.subr.bf16.mxu0 0
        %1249 = vmatpush1.bf16.msra.mxu0 0
        %1250 = vmatprep.subr.bf16.mxu0 0
        %1251 = vmatpush1.bf16.msra.mxu0 0
        %1252 = vmatprep.subr.bf16.mxu0 0
        %1253 = vmatpush1.bf16.msra.mxu0 0
        %1254 = vmatprep.mubr.bf16.mxu0 0
        %1255 = vmatmul.mubr.bf16.gmra.mrb[0].mxu0 %v1217
        %v1256 = vpop.f32.mrb[0].mxu0
        %v1257 = vadd.f32 0.0, %v1256
        %v1258 = vpop.f32.mrb[0].mxu0
        %v1259 = vpop.f32.mrb[0].mxu0
        %v1260 = vpop.f32.mrb[0].mxu0
        %1261 = vdwg.mxu0
        %1262 = vrot.lane.b32.xlu0 %v816, 72
        %v1263 = vpop.permute.xlu0 %1262
        %1265 = vxpose.xlu0.b32.start [1/16] %v1263, 128
        %1266 = vxpose.xlu0.b32.cont [2/16] 0.0, 128
        %1267 = vxpose.xlu0.b32.cont [3/16] 0.0, 128
        %1268 = vxpose.xlu0.b32.cont [4/16] 0.0, 128
        %1269 = vxpose.xlu0.b32.cont [5/16] 0.0, 128
        %1270 = vxpose.xlu0.b32.cont [6/16] 0.0, 128
        %1271 = vxpose.xlu0.b32.cont [7/16] 0.0, 128
        %1272 = vxpose.xlu0.b32.cont [8/16] 0.0, 128
        %1273 = vxpose.xlu0.b32.cont [9/16] 0.0, 128
        %1274 = vxpose.xlu0.b32.cont [10/16] 0.0, 128
        %1275 = vxpose.xlu0.b32.cont [11/16] 0.0, 128
        %1276 = vxpose.xlu0.b32.cont [12/16] 0.0, 128
        %1277 = vxpose.xlu0.b32.cont [13/16] 0.0, 128
        %1278 = vxpose.xlu0.b32.cont [14/16] 0.0, 128
        %1279 = vxpose.xlu0.b32.cont [15/16] 0.0, 128
        %1280 = vxpose.xlu0.b32.end [16/16] 0.0, 128
        %v1281 = vpop.trf.xlu0
        %v1282 = vpop.trf.xlu0
        %v1283 = vpop.trf.xlu0
        %v1284 = vpop.trf.xlu0
        %v1285 = vpop.trf.xlu0
        %v1286 = vpop.trf.xlu0
        %v1287 = vpop.trf.xlu0
        %v1288 = vpop.trf.xlu0
        %v1289 = vpop.trf.xlu0
        %v1290 = vpop.trf.xlu0
        %v1291 = vpop.trf.xlu0
        %v1292 = vpop.trf.xlu0
        %v1293 = vpop.trf.xlu0
        %v1294 = vpop.trf.xlu0
        %v1295 = vpop.trf.xlu0
        %v1296 = vpop.trf.xlu0
        %v1297 = vpack.c.bf16 %v1281, %v1281
        %1298 = vrot.lane.b32.xlu0 %v857, 104
        %v1299 = vpop.permute.xlu0 %1298
        %v1301 = vsel %vm859, %v1299, 0
        %v1304 = vsel %vm863, %v1297, 0
        %1306 = vmatprep.subr.bf16.mxu0 0
        %1307 = vmatpush1.bf16.msra.mxu0 %v1304
        %1308 = vmatprep.subr.bf16.mxu0 0
        %1309 = vmatpush1.bf16.msra.mxu0 0
        %1310 = vmatprep.subr.bf16.mxu0 0
        %1311 = vmatpush1.bf16.msra.mxu0 0
        %1312 = vmatprep.subr.bf16.mxu0 0
        %1313 = vmatpush1.bf16.msra.mxu0 0
        %1314 = vmatprep.subr.bf16.mxu0 0
        %1315 = vmatpush1.bf16.msra.mxu0 0
        %1316 = vmatprep.subr.bf16.mxu0 0
        %1317 = vmatpush1.bf16.msra.mxu0 0
        %1318 = vmatprep.subr.bf16.mxu0 0
        %1319 = vmatpush1.bf16.msra.mxu0 0
        %1320 = vmatprep.subr.bf16.mxu0 0
        %1321 = vmatpush1.bf16.msra.mxu0 0
        %1322 = vmatprep.subr.bf16.mxu0 0
        %1323 = vmatpush1.bf16.msra.mxu0 0
        %1324 = vmatprep.subr.bf16.mxu0 0
        %1325 = vmatpush1.bf16.msra.mxu0 0
        %1326 = vmatprep.subr.bf16.mxu0 0
        %1327 = vmatpush1.bf16.msra.mxu0 0
        %1328 = vmatprep.subr.bf16.mxu0 0
        %1329 = vmatpush1.bf16.msra.mxu0 0
        %1330 = vmatprep.subr.bf16.mxu0 0
        %1331 = vmatpush1.bf16.msra.mxu0 0
        %1332 = vmatprep.subr.bf16.mxu0 0
        %1333 = vmatpush1.bf16.msra.mxu0 0
        %1334 = vmatprep.subr.bf16.mxu0 0
        %1335 = vmatpush1.bf16.msra.mxu0 0
        %1336 = vmatprep.subr.bf16.mxu0 0
        %1337 = vmatpush1.bf16.msra.mxu0 0
        %1338 = vmatprep.mubr.bf16.mxu0 0
        %1339 = vmatmul.mubr.bf16.gmra.mrb[0].mxu0 %v1301
        %v1340 = vpop.f32.mrb[0].mxu0
        %v1341 = vadd.f32 0.0, %v1340
        %v1342 = vpop.f32.mrb[0].mxu0
        %v1343 = vpop.f32.mrb[0].mxu0
        %v1344 = vpop.f32.mrb[0].mxu0
        %1345 = vdwg.mxu0
        %v1346 = vmul.f32 %v1341, 0.35355338
        %v1347 = vadd.f32 %v1346, %v757
        %v1348 = vsel %vm859, %v1347, -inf
        %1349 = vmax.xlane.f32.xlu0 %v1348
        %v1350 = vpop.xlane.xlu0 %1349
        %v1351 = vsub.f32 %v1347, %v1350
        %v1352 = vmul.f32 %v1351, 1.442695
        %v1353 = vpow.pop %v1352
        %v1354 = vsel %vm859, %v1353, 0.0
        %1355 = vadd.xlane.f32.xlu0 %v1354
        %v1356 = vpop.xlane.xlu0 %1355
        %v1357 = vrcp.pop %v1356
        %v1358 = vmul.f32 %v1353, %v1357
        %v1359 = vpack.c.bf16 %v1358, %v1358
        %1360 = vrot.lane.b32.xlu0 %v857, 40
        %v1361 = vpop.permute.xlu0 %1360
        %v1363 = vsel %vm859, %v1359, 0
        %v1366 = vsel %vm863, %v1361, 0
        %1368 = vmatprep.subr.bf16.mxu0 0
        %1369 = vmatpush1.bf16.msra.mxu0 %v1366
        %1370 = vmatprep.subr.bf16.mxu0 0
        %1371 = vmatpush1.bf16.msra.mxu0 0
        %1372 = vmatprep.subr.bf16.mxu0 0
        %1373 = vmatpush1.bf16.msra.mxu0 0
        %1374 = vmatprep.subr.bf16.mxu0 0
        %1375 = vmatpush1.bf16.msra.mxu0 0
        %1376 = vmatprep.subr.bf16.mxu0 0
        %1377 = vmatpush1.bf16.msra.mxu0 0
        %1378 = vmatprep.subr.bf16.mxu0 0
        %1379 = vmatpush1.bf16.msra.mxu0 0
        %1380 = vmatprep.subr.bf16.mxu0 0
        %1381 = vmatpush1.bf16.msra.mxu0 0
        %1382 = vmatprep.subr.bf16.mxu0 0
        %1383 = vmatpush1.bf16.msra.mxu0 0
        %1384 = vmatprep.subr.bf16.mxu0 0
        %1385 = vmatpush1.bf16.msra.mxu0 0
        %1386 = vmatprep.subr.bf16.mxu0 0
        %1387 = vmatpush1.bf16.msra.mxu0 0
        %1388 = vmatprep.subr.bf16.mxu0 0
        %1389 = vmatpush1.bf16.msra.mxu0 0
        %1390 = vmatprep.subr.bf16.mxu0 0
        %1391 = vmatpush1.bf16.msra.mxu0 0
        %1392 = vmatprep.subr.bf16.mxu0 0
        %1393 = vmatpush1.bf16.msra.mxu0 0
        %1394 = vmatprep.subr.bf16.mxu0 0
        %1395 = vmatpush1.bf16.msra.mxu0 0
        %1396 = vmatprep.subr.bf16.mxu0 0
        %1397 = vmatpush1.bf16.msra.mxu0 0
        %1398 = vmatprep.subr.bf16.mxu0 0
        %1399 = vmatpush1.bf16.msra.mxu0 0
        %1400 = vmatprep.mubr.bf16.mxu0 0
        %1401 = vmatmul.mubr.bf16.gmra.mrb[0].mxu0 %v1363
        %v1402 = vpop.f32.mrb[0].mxu0
        %v1403 = vadd.f32 0.0, %v1402
        %v1404 = vpop.f32.mrb[0].mxu0
        %v1405 = vpop.f32.mrb[0].mxu0
        %v1406 = vpop.f32.mrb[0].mxu0
        %1407 = vdwg.mxu0
        %1409 = vrot.lane.b32.xlu0 %v1111, 8
        %v1410 = vpop.permute.xlu0 %1409
        %1413 = vrot.lane.b32.xlu0 %v1257, 16
        %v1414 = vpop.permute.xlu0 %1413
        %1417 = vrot.lane.b32.xlu0 %v1403, 24
        %v1418 = vpop.permute.xlu0 %1417
        %v1420 = vsel %vm859, %v965, %v1410
        %vm1421 = vcmask 130048
        %v1422 = vsel %vm1421, %v1420, %v1414
        %vm1423 = vcmask 195584
        %v1424 = vsel %vm1423, %v1422, %v1418
        %v1425 = vld [vmem:[%s5] sm:$0xf]
        %v1426 = vld [vmem:[%s5 + $0x4] sm:$0xf]
        %v1427 = vld [vmem:[%s5 + $0x8] sm:$0xf]
        %v1428 = vld [vmem:[%s5 + $0xc] sm:$0xf]
        %v1429 = vpack.c.bf16 %v1424, %v1424
        %v1434 = vunpack.c.l.b16 %v1425
        %v1435 = vunpack.c.l.b16 %v1426
        %v1436 = vunpack.c.l.b16 %v1427
        %v1437 = vunpack.c.l.b16 %v1428
        %v1438 = vpack.c.b16 %v1435, %v1434
        %v1439 = vpack.c.b16 %v1437, %v1436
        %v1443 = vsel %vm777, %v1429, 0
        %1445 = vmatprep.subr.bf16.mxu0 0
        %1446 = vmatpush1.bf16.msra.mxu0 %v1438
        %1447 = vmatprep.subr.bf16.mxu0 0
        %1448 = vmatpush1.bf16.msra.mxu0 %v1439
        %1449 = vmatprep.subr.bf16.mxu0 0
        %1450 = vmatpush1.bf16.msra.mxu0 0
        %1451 = vmatprep.subr.bf16.mxu0 0
        %1452 = vmatpush1.bf16.msra.mxu0 0
        %1453 = vmatprep.subr.bf16.mxu0 0
        %1454 = vmatpush1.bf16.msra.mxu0 0
        %1455 = vmatprep.subr.bf16.mxu0 0
        %1456 = vmatpush1.bf16.msra.mxu0 0
        %1457 = vmatprep.subr.bf16.mxu0 0
        %1458 = vmatpush1.bf16.msra.mxu0 0
        %1459 = vmatprep.subr.bf16.mxu0 0
        %1460 = vmatpush1.bf16.msra.mxu0 0
        %1461 = vmatprep.subr.bf16.mxu0 0
        %1462 = vmatpush1.bf16.msra.mxu0 0
        %1463 = vmatprep.subr.bf16.mxu0 0
        %1464 = vmatpush1.bf16.msra.mxu0 0
        %1465 = vmatprep.subr.bf16.mxu0 0
        %1466 = vmatpush1.bf16.msra.mxu0 0
        %1467 = vmatprep.subr.bf16.mxu0 0
        %1468 = vmatpush1.bf16.msra.mxu0 0
        %1469 = vmatprep.subr.bf16.mxu0 0
        %1470 = vmatpush1.bf16.msra.mxu0 0
        %1471 = vmatprep.subr.bf16.mxu0 0
        %1472 = vmatpush1.bf16.msra.mxu0 0
        %1473 = vmatprep.subr.bf16.mxu0 0
        %1474 = vmatpush1.bf16.msra.mxu0 0
        %1475 = vmatprep.subr.bf16.mxu0 0
        %1476 = vmatpush1.bf16.msra.mxu0 0
        %1477 = vmatprep.mubr.bf16.mxu0 0
        %1478 = vmatmul.mubr.bf16.gmra.mrb[0].mxu0 %v1443
        %v1479 = vpop.f32.mrb[0].mxu0
        %v1480 = vadd.f32 0.0, %v1479
        %v1481 = vpop.f32.mrb[0].mxu0
        %v1482 = vpop.f32.mrb[0].mxu0
        %v1483 = vpop.f32.mrb[0].mxu0
        %1484 = vdwg.mxu0
        %v1485 = vadd.f32 %v739, %v1480
        %v1486 = vsel %vm777, %v1485, 0.0
        %1487 = vadd.xlane.f32.xlu0 %v1486
        %v1488 = vpop.xlane.xlu0 %1487
        %v1489 = vrcp.pop 32.0
        %v1490 = vmul.f32 %v1488, %v1489
        %v1491 = vsub.f32 %v1485, %v1490
        %v1492 = vmul.f32 %v1491, %v1491
        %v1493 = vsel %vm777, %v1492, 0.0
        %1494 = vadd.xlane.f32.xlu0 %v1493
        %v1495 = vpop.xlane.xlu0 %1494
        %v1496 = vmul.f32 %v1495, %v1489
        %v1497 = vadd.f32 %v1496, 1e-05
        %v1498 = vrsqrt.pop %v1497
        %v1499 = vmul.f32 %v1491, %v1498
        %v1500 = vld [vmem:[#allocation7] sm:$0x1]
        %v1502 = vlaneseq
        %v1503 = vshrl.u32 %v1502, 7
        %v1504 = vsub.s32 0, %v1503
        %v1505 = vrot.slane %v1500, %v1504
        %v1507 = vmul.f32 %v1499, %v1505
        %v1508 = vld [vmem:[#allocation9] sm:$0x1]
        %v1510 = vlaneseq
        %v1511 = vshrl.u32 %v1510, 7
        %v1512 = vsub.s32 0, %v1511
        %v1513 = vrot.slane %v1508, %v1512
        %v1515 = vadd.f32 %v1507, %v1513
        %v1516 = vld [vmem:[%s6] sm:$0xf]
        %v1517 = vld [vmem:[%s6 + $0x4] sm:$0xf]
        %v1518 = vld [vmem:[%s6 + $0x8] sm:$0xf]
        %v1519 = vld [vmem:[%s6 + $0xc] sm:$0xf]
        %v1520 = vpack.c.bf16 %v1515, %v1515
        %v1525 = vunpack.c.l.b16 %v1516
        %v1526 = vunpack.c.l.b16 %v1517
        %v1527 = vunpack.c.l.b16 %v1518
        %v1528 = vunpack.c.l.b16 %v1519
        %v1529 = vpack.c.b16 %v1526, %v1525
        %v1530 = vpack.c.b16 %v1528, %v1527
        %v1534 = vsel %vm777, %v1520, 0
        %1536 = vmatprep.subr.bf16.mxu0 0
        %1537 = vmatpush1.bf16.msra.mxu0 %v1529
        %1538 = vmatprep.subr.bf16.mxu0 0
        %1539 = vmatpush1.bf16.msra.mxu0 %v1530
        %1540 = vmatprep.subr.bf16.mxu0 0
        %1541 = vmatpush1.bf16.msra.mxu0 0
        %1542 = vmatprep.subr.bf16.mxu0 0
        %1543 = vmatpush1.bf16.msra.mxu0 0
        %1544 = vmatprep.subr.bf16.mxu0 0
        %1545 = vmatpush1.bf16.msra.mxu0 0
        %1546 = vmatprep.subr.bf16.mxu0 0
        %1547 = vmatpush1.bf16.msra.mxu0 0
        %1548 = vmatprep.subr.bf16.mxu0 0
        %1549 = vmatpush1.bf16.msra.mxu0 0
        %1550 = vmatprep.subr.bf16.mxu0 0
        %1551 = vmatpush1.bf16.msra.mxu0 0
        %1552 = vmatprep.subr.bf16.mxu0 0
        %1553 = vmatpush1.bf16.msra.mxu0 0
        %1554 = vmatprep.subr.bf16.mxu0 0
        %1555 = vmatpush1.bf16.msra.mxu0 0
        %1556 = vmatprep.subr.bf16.mxu0 0
        %1557 = vmatpush1.bf16.msra.mxu0 0
        %1558 = vmatprep.subr.bf16.mxu0 0
        %1559 = vmatpush1.bf16.msra.mxu0 0
        %1560 = vmatprep.subr.bf16.mxu0 0
        %1561 = vmatpush1.bf16.msra.mxu0 0
        %1562 = vmatprep.subr.bf16.mxu0 0
        %1563 = vmatpush1.bf16.msra.mxu0 0
        %1564 = vmatprep.subr.bf16.mxu0 0
        %1565 = vmatpush1.bf16.msra.mxu0 0
        %1566 = vmatprep.subr.bf16.mxu0 0
        %1567 = vmatpush1.bf16.msra.mxu0 0
        %1568 = vmatprep.mubr.bf16.mxu0 0
        %1569 = vmatmul.mubr.bf16.gmra.mrb[0].mxu0 %v1534
        %v1570 = vpop.f32.mrb[0].mxu0
        %v1571 = vadd.f32 0.0, %v1570
        %v1572 = vpop.f32.mrb[0].mxu0
        %v1573 = vpop.f32.mrb[0].mxu0
        %v1574 = vpop.f32.mrb[0].mxu0
        %1575 = vdwg.mxu0
        %v1576 = vld [vmem:[%s7] sm:$0xf]
        %v1577 = vld [vmem:[%s7 + $0x4] sm:$0xf]
        %v1578 = vld [vmem:[%s7 + $0x8] sm:$0xf]
        %v1579 = vld [vmem:[%s7 + $0xc] sm:$0xf]
        %v1580 = vpack.c.bf16 %v740, %v740
        %v1585 = vunpack.c.l.b16 %v1576
        %v1586 = vunpack.c.l.b16 %v1577
        %v1587 = vunpack.c.l.b16 %v1578
        %v1588 = vunpack.c.l.b16 %v1579
        %v1589 = vpack.c.b16 %v1586, %v1585
        %v1590 = vpack.c.b16 %v1588, %v1587
        %v1594 = vsel %vm777, %v1580, 0
        %1596 = vmatprep.subr.bf16.mxu0 0
        %1597 = vmatpush1.bf16.msra.mxu0 %v1589
        %1598 = vmatprep.subr.bf16.mxu0 0
        %1599 = vmatpush1.bf16.msra.mxu0 %v1590
        %1600 = vmatprep.subr.bf16.mxu0 0
        %1601 = vmatpush1.bf16.msra.mxu0 0
        %1602 = vmatprep.subr.bf16.mxu0 0
        %1603 = vmatpush1.bf16.msra.mxu0 0
        %1604 = vmatprep.subr.bf16.mxu0 0
        %1605 = vmatpush1.bf16.msra.mxu0 0
        %1606 = vmatprep.subr.bf16.mxu0 0
        %1607 = vmatpush1.bf16.msra.mxu0 0
        %1608 = vmatprep.subr.bf16.mxu0 0
        %1609 = vmatpush1.bf16.msra.mxu0 0
        %1610 = vmatprep.subr.bf16.mxu0 0
        %1611 = vmatpush1.bf16.msra.mxu0 0
        %1612 = vmatprep.subr.bf16.mxu0 0
        %1613 = vmatpush1.bf16.msra.mxu0 0
        %1614 = vmatprep.subr.bf16.mxu0 0
        %1615 = vmatpush1.bf16.msra.mxu0 0
        %1616 = vmatprep.subr.bf16.mxu0 0
        %1617 = vmatpush1.bf16.msra.mxu0 0
        %1618 = vmatprep.subr.bf16.mxu0 0
        %1619 = vmatpush1.bf16.msra.mxu0 0
        %1620 = vmatprep.subr.bf16.mxu0 0
        %1621 = vmatpush1.bf16.msra.mxu0 0
        %1622 = vmatprep.subr.bf16.mxu0 0
        %1623 = vmatpush1.bf16.msra.mxu0 0
        %1624 = vmatprep.subr.bf16.mxu0 0
        %1625 = vmatpush1.bf16.msra.mxu0 0
        %1626 = vmatprep.subr.bf16.mxu0 0
        %1627 = vmatpush1.bf16.msra.mxu0 0
        %1628 = vmatprep.mubr.bf16.mxu0 0
        %1629 = vmatmul.mubr.bf16.gmra.mrb[0].mxu0 %v1594
        %v1630 = vpop.f32.mrb[0].mxu0
        %v1631 = vadd.f32 0.0, %v1630
        %v1632 = vpop.f32.mrb[0].mxu0
        %v1633 = vpop.f32.mrb[0].mxu0
        %v1634 = vpop.f32.mrb[0].mxu0
        %1635 = vdwg.mxu0
        %1636 = vxpose.xlu0.b32.start [1/16] %v1631, 128
        %1637 = vxpose.xlu0.b32.cont [2/16] 0.0, 128
        %1638 = vxpose.xlu0.b32.cont [3/16] 0.0, 128
        %1639 = vxpose.xlu0.b32.cont [4/16] 0.0, 128
        %1640 = vxpose.xlu0.b32.cont [5/16] 0.0, 128
        %1641 = vxpose.xlu0.b32.cont [6/16] 0.0, 128
        %1642 = vxpose.xlu0.b32.cont [7/16] 0.0, 128
        %1643 = vxpose.xlu0.b32.cont [8/16] 0.0, 128
        %1644 = vxpose.xlu0.b32.cont [9/16] 0.0, 128
        %1645 = vxpose.xlu0.b32.cont [10/16] 0.0, 128
        %1646 = vxpose.xlu0.b32.cont [11/16] 0.0, 128
        %1647 = vxpose.xlu0.b32.cont [12/16] 0.0, 128
        %1648 = vxpose.xlu0.b32.cont [13/16] 0.0, 128
        %1649 = vxpose.xlu0.b32.cont [14/16] 0.0, 128
        %1650 = vxpose.xlu0.b32.cont [15/16] 0.0, 128
        %1651 = vxpose.xlu0.b32.end [16/16] 0.0, 128
        %v1652 = vpop.trf.xlu0
        %v1653 = vpop.trf.xlu0
        %v1654 = vpop.trf.xlu0
        %v1655 = vpop.trf.xlu0
        %v1656 = vpop.trf.xlu0
        %v1657 = vpop.trf.xlu0
        %v1658 = vpop.trf.xlu0
        %v1659 = vpop.trf.xlu0
        %v1660 = vpop.trf.xlu0
        %v1661 = vpop.trf.xlu0
        %v1662 = vpop.trf.xlu0
        %v1663 = vpop.trf.xlu0
        %v1664 = vpop.trf.xlu0
        %v1665 = vpop.trf.xlu0
        %v1666 = vpop.trf.xlu0
        %v1667 = vpop.trf.xlu0
        %v1668 = vpack.c.bf16 %v1571, %v1571
        %v1669 = vpack.c.bf16 %v1652, %v1652
        %v1671 = vsel %vm859, %v1668, 0
        %v1674 = vsel %vm863, %v1669, 0
        %1676 = vmatprep.subr.bf16.mxu0 0
        %1677 = vmatpush1.bf16.msra.mxu0 %v1674
        %1678 = vmatprep.subr.bf16.mxu0 0
        %1679 = vmatpush1.bf16.msra.mxu0 0
        %1680 = vmatprep.subr.bf16.mxu0 0
        %1681 = vmatpush1.bf16.msra.mxu0 0
        %1682 = vmatprep.subr.bf16.mxu0 0
        %1683 = vmatpush1.bf16.msra.mxu0 0
        %1684 = vmatprep.subr.bf16.mxu0 0
        %1685 = vmatpush1.bf16.msra.mxu0 0
        %1686 = vmatprep.subr.bf16.mxu0 0
        %1687 = vmatpush1.bf16.msra.mxu0 0
        %1688 = vmatprep.subr.bf16.mxu0 0
        %1689 = vmatpush1.bf16.msra.mxu0 0
        %1690 = vmatprep.subr.bf16.mxu0 0
        %1691 = vmatpush1.bf16.msra.mxu0 0
        %1692 = vmatprep.subr.bf16.mxu0 0
        %1693 = vmatpush1.bf16.msra.mxu0 0
        %1694 = vmatprep.subr.bf16.mxu0 0
        %1695 = vmatpush1.bf16.msra.mxu0 0
        %1696 = vmatprep.subr.bf16.mxu0 0
        %1697 = vmatpush1.bf16.msra.mxu0 0
        %1698 = vmatprep.subr.bf16.mxu0 0
        %1699 = vmatpush1.bf16.msra.mxu0 0
        %1700 = vmatprep.subr.bf16.mxu0 0
        %1701 = vmatpush1.bf16.msra.mxu0 0
        %1702 = vmatprep.subr.bf16.mxu0 0
        %1703 = vmatpush1.bf16.msra.mxu0 0
        %1704 = vmatprep.subr.bf16.mxu0 0
        %1705 = vmatpush1.bf16.msra.mxu0 0
        %1706 = vmatprep.subr.bf16.mxu0 0
        %1707 = vmatpush1.bf16.msra.mxu0 0
        %1708 = vmatprep.mubr.bf16.mxu0 0
        %1709 = vmatmul.mubr.bf16.gmra.mrb[0].mxu0 %v1671
        %v1710 = vpop.f32.mrb[0].mxu0
        %v1711 = vadd.f32 0.0, %v1710
        %v1712 = vpop.f32.mrb[0].mxu0
        %v1713 = vpop.f32.mrb[0].mxu0
        %v1714 = vpop.f32.mrb[0].mxu0
        %1715 = vdwg.mxu0
        %v1716 = vmul.f32 %v1711, 0.35355338
        %v1718 = vlaneseq
        %v1719 = vshrl.u32 %v1718, 7
        %v1720 = vsub.s32 0, %v1719
        %v1721 = vrot.slane %v759, %v1720
        %v1723 = vadd.f32 %v1716, %v1721
        %v1724 = vsel %vm859, %v1723, -inf
        %1725 = vmax.xlane.f32.xlu0 %v1724
        %v1726 = vpop.xlane.xlu0 %1725
        %v1727 = vsub.f32 %v1723, %v1726
        %v1728 = vmul.f32 %v1727, 1.442695
        %v1729 = vpow.pop %v1728
        %v1730 = vsel %vm859, %v1729, 0.0
        %1731 = vadd.xlane.f32.xlu0 %v1730
        %v1732 = vpop.xlane.xlu0 %1731
        %v1733 = vrcp.pop %v1732
        %v1734 = vmul.f32 %v1729, %v1733
        %v1735 = vpack.c.bf16 %v1734, %v1734
        %v1736 = vpack.c.bf16 %v1631, %v1631
        %1738 = vrot.lane.b32.xlu0 %v1736, 96
        %v1739 = vpop.permute.xlu0 %1738
        %v1741 = vsel %vm859, %v1735, 0
        %v1744 = vsel %vm863, %v1739, 0
        %1746 = vmatprep.subr.bf16.mxu0 0
        %1747 = vmatpush1.bf16.msra.mxu0 %v1744
        %1748 = vmatprep.subr.bf16.mxu0 0
        %1749 = vmatpush1.bf16.msra.mxu0 0
        %1750 = vmatprep.subr.bf16.mxu0 0
        %1751 = vmatpush1.bf16.msra.mxu0 0
        %1752 = vmatprep.subr.bf16.mxu0 0
        %1753 = vmatpush1.bf16.msra.mxu0 0
        %1754 = vmatprep.subr.bf16.mxu0 0
        %1755 = vmatpush1.bf16.msra.mxu0 0
        %1756 = vmatprep.subr.bf16.mxu0 0
        %1757 = vmatpush1.bf16.msra.mxu0 0
        %1758 = vmatprep.subr.bf16.mxu0 0
        %1759 = vmatpush1.bf16.msra.mxu0 0
        %1760 = vmatprep.subr.bf16.mxu0 0
        %1761 = vmatpush1.bf16.msra.mxu0 0
        %1762 = vmatprep.subr.bf16.mxu0 0
        %1763 = vmatpush1.bf16.msra.mxu0 0
        %1764 = vmatprep.subr.bf16.mxu0 0
        %1765 = vmatpush1.bf16.msra.mxu0 0
        %1766 = vmatprep.subr.bf16.mxu0 0
        %1767 = vmatpush1.bf16.msra.mxu0 0
        %1768 = vmatprep.subr.bf16.mxu0 0
        %1769 = vmatpush1.bf16.msra.mxu0 0
        %1770 = vmatprep.subr.bf16.mxu0 0
        %1771 = vmatpush1.bf16.msra.mxu0 0
        %1772 = vmatprep.subr.bf16.mxu0 0
        %1773 = vmatpush1.bf16.msra.mxu0 0
        %1774 = vmatprep.subr.bf16.mxu0 0
        %1775 = vmatpush1.bf16.msra.mxu0 0
        %1776 = vmatprep.subr.bf16.mxu0 0
        %1777 = vmatpush1.bf16.msra.mxu0 0
        %1778 = vmatprep.mubr.bf16.mxu0 0
        %1779 = vmatmul.mubr.bf16.gmra.mrb[0].mxu0 %v1741
        %v1780 = vpop.f32.mrb[0].mxu0
        %v1781 = vadd.f32 0.0, %v1780
        %v1782 = vpop.f32.mrb[0].mxu0
        %v1783 = vpop.f32.mrb[0].mxu0
        %v1784 = vpop.f32.mrb[0].mxu0
        %1785 = vdwg.mxu0
        %1787 = vrot.lane.b32.xlu0 %v1631, 120
        %v1788 = vpop.permute.xlu0 %1787
        %1790 = vxpose.xlu0.b32.start [1/16] %v1788, 128
        %1791 = vxpose.xlu0.b32.cont [2/16] 0.0, 128
        %1792 = vxpose.xlu0.b32.cont [3/16] 0.0, 128
        %1793 = vxpose.xlu0.b32.cont [4/16] 0.0, 128
        %1794 = vxpose.xlu0.b32.cont [5/16] 0.0, 128
        %1795 = vxpose.xlu0.b32.cont [6/16] 0.0, 128
        %1796 = vxpose.xlu0.b32.cont [7/16] 0.0, 128
        %1797 = vxpose.xlu0.b32.cont [8/16] 0.0, 128
        %1798 = vxpose.xlu0.b32.cont [9/16] 0.0, 128
        %1799 = vxpose.xlu0.b32.cont [10/16] 0.0, 128
        %1800 = vxpose.xlu0.b32.cont [11/16] 0.0, 128
        %1801 = vxpose.xlu0.b32.cont [12/16] 0.0, 128
        %1802 = vxpose.xlu0.b32.cont [13/16] 0.0, 128
        %1803 = vxpose.xlu0.b32.cont [14/16] 0.0, 128
        %1804 = vxpose.xlu0.b32.cont [15/16] 0.0, 128
        %1805 = vxpose.xlu0.b32.end [16/16] 0.0, 128
        %v1806 = vpop.trf.xlu0
        %v1807 = vpop.trf.xlu0
        %v1808 = vpop.trf.xlu0
        %v1809 = vpop.trf.xlu0
        %v1810 = vpop.trf.xlu0
        %v1811 = vpop.trf.xlu0
        %v1812 = vpop.trf.xlu0
        %v1813 = vpop.trf.xlu0
        %v1814 = vpop.trf.xlu0
        %v1815 = vpop.trf.xlu0
        %v1816 = vpop.trf.xlu0
        %v1817 = vpop.trf.xlu0
        %v1818 = vpop.trf.xlu0
        %v1819 = vpop.trf.xlu0
        %v1820 = vpop.trf.xlu0
        %v1821 = vpop.trf.xlu0
        %v1822 = vpack.c.bf16 %v1806, %v1806
        %1824 = vrot.lane.b32.xlu0 %v1668, 120
        %v1825 = vpop.permute.xlu0 %1824
        %v1827 = vsel %vm859, %v1825, 0
        %v1830 = vsel %vm863, %v1822, 0
        %1832 = vmatprep.subr.bf16.mxu0 0
        %1833 = vmatpush1.bf16.msra.mxu0 %v1830
        %1834 = vmatprep.subr.bf16.mxu0 0
        %1835 = vmatpush1.bf16.msra.mxu0 0
        %1836 = vmatprep.subr.bf16.mxu0 0
        %1837 = vmatpush1.bf16.msra.mxu0 0
        %1838 = vmatprep.subr.bf16.mxu0 0
        %1839 = vmatpush1.bf16.msra.mxu0 0
        %1840 = vmatprep.subr.bf16.mxu0 0
        %1841 = vmatpush1.bf16.msra.mxu0 0
        %1842 = vmatprep.subr.bf16.mxu0 0
        %1843 = vmatpush1.bf16.msra.mxu0 0
        %1844 = vmatprep.subr.bf16.mxu0 0
        %1845 = vmatpush1.bf16.msra.mxu0 0
        %1846 = vmatprep.subr.bf16.mxu0 0
        %1847 = vmatpush1.bf16.msra.mxu0 0
        %1848 = vmatprep.subr.bf16.mxu0 0
        %1849 = vmatpush1.bf16.msra.mxu0 0
        %1850 = vmatprep.subr.bf16.mxu0 0
        %1851 = vmatpush1.bf16.msra.mxu0 0
        %1852 = vmatprep.subr.bf16.mxu0 0
        %1853 = vmatpush1.bf16.msra.mxu0 0
        %1854 = vmatprep.subr.bf16.mxu0 0
        %1855 = vmatpush1.bf16.msra.mxu0 0
        %1856 = vmatprep.subr.bf16.mxu0 0
        %1857 = vmatpush1.bf16.msra.mxu0 0
        %1858 = vmatprep.subr.bf16.mxu0 0
        %1859 = vmatpush1.bf16.msra.mxu0 0
        %1860 = vmatprep.subr.bf16.mxu0 0
        %1861 = vmatpush1.bf16.msra.mxu0 0
        %1862 = vmatprep.subr.bf16.mxu0 0
        %1863 = vmatpush1.bf16.msra.mxu0 0
        %1864 = vmatprep.mubr.bf16.mxu0 0
        %1865 = vmatmul.mubr.bf16.gmra.mrb[0].mxu0 %v1827
        %v1866 = vpop.f32.mrb[0].mxu0
        %v1867 = vadd.f32 0.0, %v1866
        %v1868 = vpop.f32.mrb[0].mxu0
        %v1869 = vpop.f32.mrb[0].mxu0
        %v1870 = vpop.f32.mrb[0].mxu0
        %1871 = vdwg.mxu0
        %v1872 = vmul.f32 %v1867, 0.35355338
        %v1873 = vadd.f32 %v1872, %v1721
        %v1874 = vsel %vm859, %v1873, -inf
        %1875 = vmax.xlane.f32.xlu0 %v1874
        %v1876 = vpop.xlane.xlu0 %1875
        %v1877 = vsub.f32 %v1873, %v1876
        %v1878 = vmul.f32 %v1877, 1.442695
        %v1879 = vpow.pop %v1878
        %v1880 = vsel %vm859, %v1879, 0.0
        %1881 = vadd.xlane.f32.xlu0 %v1880
        %v1882 = vpop.xlane.xlu0 %1881
        %v1883 = vrcp.pop %v1882
        %v1884 = vmul.f32 %v1879, %v1883
        %v1885 = vpack.c.bf16 %v1884, %v1884
        %1886 = vrot.lane.b32.xlu0 %v1736, 88
        %v1887 = vpop.permute.xlu0 %1886
        %v1889 = vsel %vm859, %v1885, 0
        %v1892 = vsel %vm863, %v1887, 0
        %1894 = vmatprep.subr.bf16.mxu0 0
        %1895 = vmatpush1.bf16.msra.mxu0 %v1892
        %1896 = vmatprep.subr.bf16.mxu0 0
        %1897 = vmatpush1.bf16.msra.mxu0 0
        %1898 = vmatprep.subr.bf16.mxu0 0
        %1899 = vmatpush1.bf16.msra.mxu0 0
        %1900 = vmatprep.subr.bf16.mxu0 0
        %1901 = vmatpush1.bf16.msra.mxu0 0
        %1902 = vmatprep.subr.bf16.mxu0 0
        %1903 = vmatpush1.bf16.msra.mxu0 0
        %1904 = vmatprep.subr.bf16.mxu0 0
        %1905 = vmatpush1.bf16.msra.mxu0 0
        %1906 = vmatprep.subr.bf16.mxu0 0
        %1907 = vmatpush1.bf16.msra.mxu0 0
        %1908 = vmatprep.subr.bf16.mxu0 0
        %1909 = vmatpush1.bf16.msra.mxu0 0
        %1910 = vmatprep.subr.bf16.mxu0 0
        %1911 = vmatpush1.bf16.msra.mxu0 0
        %1912 = vmatprep.subr.bf16.mxu0 0
        %1913 = vmatpush1.bf16.msra.mxu0 0
        %1914 = vmatprep.subr.bf16.mxu0 0
        %1915 = vmatpush1.bf16.msra.mxu0 0
        %1916 = vmatprep.subr.bf16.mxu0 0
        %1917 = vmatpush1.bf16.msra.mxu0 0
        %1918 = vmatprep.subr.bf16.mxu0 0
        %1919 = vmatpush1.bf16.msra.mxu0 0
        %1920 = vmatprep.subr.bf16.mxu0 0
        %1921 = vmatpush1.bf16.msra.mxu0 0
        %1922 = vmatprep.subr.bf16.mxu0 0
        %1923 = vmatpush1.bf16.msra.mxu0 0
        %1924 = vmatprep.subr.bf16.mxu0 0
        %1925 = vmatpush1.bf16.msra.mxu0 0
        %1926 = vmatprep.mubr.bf16.mxu0 0
        %1927 = vmatmul.mubr.bf16.gmra.mrb[0].mxu0 %v1889
        %v1928 = vpop.f32.mrb[0].mxu0
        %v1929 = vadd.f32 0.0, %v1928
        %v1930 = vpop.f32.mrb[0].mxu0
        %v1931 = vpop.f32.mrb[0].mxu0
        %v1932 = vpop.f32.mrb[0].mxu0
        %1933 = vdwg.mxu0
        %1934 = vrot.lane.b32.xlu0 %v1631, 112
        %v1935 = vpop.permute.xlu0 %1934
        %1937 = vxpose.xlu0.b32.start [1/16] %v1935, 128
        %1938 = vxpose.xlu0.b32.cont [2/16] 0.0, 128
        %1939 = vxpose.xlu0.b32.cont [3/16] 0.0, 128
        %1940 = vxpose.xlu0.b32.cont [4/16] 0.0, 128
        %1941 = vxpose.xlu0.b32.cont [5/16] 0.0, 128
        %1942 = vxpose.xlu0.b32.cont [6/16] 0.0, 128
        %1943 = vxpose.xlu0.b32.cont [7/16] 0.0, 128
        %1944 = vxpose.xlu0.b32.cont [8/16] 0.0, 128
        %1945 = vxpose.xlu0.b32.cont [9/16] 0.0, 128
        %1946 = vxpose.xlu0.b32.cont [10/16] 0.0, 128
        %1947 = vxpose.xlu0.b32.cont [11/16] 0.0, 128
        %1948 = vxpose.xlu0.b32.cont [12/16] 0.0, 128
        %1949 = vxpose.xlu0.b32.cont [13/16] 0.0, 128
        %1950 = vxpose.xlu0.b32.cont [14/16] 0.0, 128
        %1951 = vxpose.xlu0.b32.cont [15/16] 0.0, 128
        %1952 = vxpose.xlu0.b32.end [16/16] 0.0, 128
        %v1953 = vpop.trf.xlu0
        %v1954 = vpop.trf.xlu0
        %v1955 = vpop.trf.xlu0
        %v1956 = vpop.trf.xlu0
        %v1957 = vpop.trf.xlu0
        %v1958 = vpop.trf.xlu0
        %v1959 = vpop.trf.xlu0
        %v1960 = vpop.trf.xlu0
        %v1961 = vpop.trf.xlu0
        %v1962 = vpop.trf.xlu0
        %v1963 = vpop.trf.xlu0
        %v1964 = vpop.trf.xlu0
        %v1965 = vpop.trf.xlu0
        %v1966 = vpop.trf.xlu0
        %v1967 = vpop.trf.xlu0
        %v1968 = vpop.trf.xlu0
        %v1969 = vpack.c.bf16 %v1953, %v1953
        %1970 = vrot.lane.b32.xlu0 %v1668, 112
        %v1971 = vpop.permute.xlu0 %1970
        %v1973 = vsel %vm859, %v1971, 0
        %v1976 = vsel %vm863, %v1969, 0
        %1978 = vmatprep.subr.bf16.mxu0 0
        %1979 = vmatpush1.bf16.msra.mxu0 %v1976
        %1980 = vmatprep.subr.bf16.mxu0 0
        %1981 = vmatpush1.bf16.msra.mxu0 0
        %1982 = vmatprep.subr.bf16.mxu0 0
        %1983 = vmatpush1.bf16.msra.mxu0 0
        %1984 = vmatprep.subr.bf16.mxu0 0
        %1985 = vmatpush1.bf16.msra.mxu0 0
        %1986 = vmatprep.subr.bf16.mxu0 0
        %1987 = vmatpush1.bf16.msra.mxu0 0
        %1988 = vmatprep.subr.bf16.mxu0 0
        %1989 = vmatpush1.bf16.msra.mxu0 0
        %1990 = vmatprep.subr.bf16.mxu0 0
        %1991 = vmatpush1.bf16.msra.mxu0 0
        %1992 = vmatprep.subr.bf16.mxu0 0
        %1993 = vmatpush1.bf16.msra.mxu0 0
        %1994 = vmatprep.subr.bf16.mxu0 0
        %1995 = vmatpush1.bf16.msra.mxu0 0
        %1996 = vmatprep.subr.bf16.mxu0 0
        %1997 = vmatpush1.bf16.msra.mxu0 0
        %1998 = vmatprep.subr.bf16.mxu0 0
        %1999 = vmatpush1.bf16.msra.mxu0 0
        %2000 = vmatprep.subr.bf16.mxu0 0
        %2001 = vmatpush1.bf16.msra.mxu0 0
        %2002 = vmatprep.subr.bf16.mxu0 0
        %2003 = vmatpush1.bf16.msra.mxu0 0
        %2004 = vmatprep.subr.bf16.mxu0 0
        %2005 = vmatpush1.bf16.msra.mxu0 0
        %2006 = vmatprep.subr.bf16.mxu0 0
        %2007 = vmatpush1.bf16.msra.mxu0 0
        %2008 = vmatprep.subr.bf16.mxu0 0
        %2009 = vmatpush1.bf16.msra.mxu0 0
        %2010 = vmatprep.mubr.bf16.mxu0 0
        %2011 = vmatmul.mubr.bf16.gmra.mrb[0].mxu0 %v1973
        %v2012 = vpop.f32.mrb[0].mxu0
        %v2013 = vadd.f32 0.0, %v2012
        %v2014 = vpop.f32.mrb[0].mxu0
        %v2015 = vpop.f32.mrb[0].mxu0
        %v2016 = vpop.f32.mrb[0].mxu0
        %2017 = vdwg.mxu0
        %v2018 = vmul.f32 %v2013, 0.35355338
        %v2019 = vadd.f32 %v2018, %v1721
        %v2020 = vsel %vm859, %v2019, -inf
        %2021 = vmax.xlane.f32.xlu0 %v2020
        %v2022 = vpop.xlane.xlu0 %2021
        %v2023 = vsub.f32 %v2019, %v2022
        %v2024 = vmul.f32 %v2023, 1.442695
        %v2025 = vpow.pop %v2024
        %v2026 = vsel %vm859, %v2025, 0.0
        %2027 = vadd.xlane.f32.xlu0 %v2026
        %v2028 = vpop.xlane.xlu0 %2027
        %v2029 = vrcp.pop %v2028
        %v2030 = vmul.f32 %v2025, %v2029
        %v2031 = vpack.c.bf16 %v2030, %v2030
        %2032 = vrot.lane.b32.xlu0 %v1736, 80
        %v2033 = vpop.permute.xlu0 %2032
        %v2035 = vsel %vm859, %v2031, 0
        %v2038 = vsel %vm863, %v2033, 0
        %2040 = vmatprep.subr.bf16.mxu0 0
        %2041 = vmatpush1.bf16.msra.mxu0 %v2038
        %2042 = vmatprep.subr.bf16.mxu0 0
        %2043 = vmatpush1.bf16.msra.mxu0 0
        %2044 = vmatprep.subr.bf16.mxu0 0
        %2045 = vmatpush1.bf16.msra.mxu0 0
        %2046 = vmatprep.subr.bf16.mxu0 0
        %2047 = vmatpush1.bf16.msra.mxu0 0
        %2048 = vmatprep.subr.bf16.mxu0 0
        %2049 = vmatpush1.bf16.msra.mxu0 0
        %2050 = vmatprep.subr.bf16.mxu0 0
        %2051 = vmatpush1.bf16.msra.mxu0 0
        %2052 = vmatprep.subr.bf16.mxu0 0
        %2053 = vmatpush1.bf16.msra.mxu0 0
        %2054 = vmatprep.subr.bf16.mxu0 0
        %2055 = vmatpush1.bf16.msra.mxu0 0
        %2056 = vmatprep.subr.bf16.mxu0 0
        %2057 = vmatpush1.bf16.msra.mxu0 0
        %2058 = vmatprep.subr.bf16.mxu0 0
        %2059 = vmatpush1.bf16.msra.mxu0 0
        %2060 = vmatprep.subr.bf16.mxu0 0
        %2061 = vmatpush1.bf16.msra.mxu0 0
        %2062 = vmatprep.subr.bf16.mxu0 0
        %2063 = vmatpush1.bf16.msra.mxu0 0
        %2064 = vmatprep.subr.bf16.mxu0 0
        %2065 = vmatpush1.bf16.msra.mxu0 0
        %2066 = vmatprep.subr.bf16.mxu0 0
        %2067 = vmatpush1.bf16.msra.mxu0 0
        %2068 = vmatprep.subr.bf16.mxu0 0
        %2069 = vmatpush1.bf16.msra.mxu0 0
        %2070 = vmatprep.subr.bf16.mxu0 0
        %2071 = vmatpush1.bf16.msra.mxu0 0
        %2072 = vmatprep.mubr.bf16.mxu0 0
        %2073 = vmatmul.mubr.bf16.gmra.mrb[0].mxu0 %v2035
        %v2074 = vpop.f32.mrb[0].mxu0
        %v2075 = vadd.f32 0.0, %v2074
        %v2076 = vpop.f32.mrb[0].mxu0
        %v2077 = vpop.f32.mrb[0].mxu0
        %v2078 = vpop.f32.mrb[0].mxu0
        %2079 = vdwg.mxu0
        %2080 = vrot.lane.b32.xlu0 %v1631, 104
        %v2081 = vpop.permute.xlu0 %2080
        %2083 = vxpose.xlu0.b32.start [1/16] %v2081, 128
        %2084 = vxpose.xlu0.b32.cont [2/16] 0.0, 128
        %2085 = vxpose.xlu0.b32.cont [3/16] 0.0, 128
        %2086 = vxpose.xlu0.b32.cont [4/16] 0.0, 128
        %2087 = vxpose.xlu0.b32.cont [5/16] 0.0, 128
        %2088 = vxpose.xlu0.b32.cont [6/16] 0.0, 128
        %2089 = vxpose.xlu0.b32.cont [7/16] 0.0, 128
        %2090 = vxpose.xlu0.b32.cont [8/16] 0.0, 128
        %2091 = vxpose.xlu0.b32.cont [9/16] 0.0, 128
        %2092 = vxpose.xlu0.b32.cont [10/16] 0.0, 128
        %2093 = vxpose.xlu0.b32.cont [11/16] 0.0, 128
        %2094 = vxpose.xlu0.b32.cont [12/16] 0.0, 128
        %2095 = vxpose.xlu0.b32.cont [13/16] 0.0, 128
        %2096 = vxpose.xlu0.b32.cont [14/16] 0.0, 128
        %2097 = vxpose.xlu0.b32.cont [15/16] 0.0, 128
        %2098 = vxpose.xlu0.b32.end [16/16] 0.0, 128
        %v2099 = vpop.trf.xlu0
        %v2100 = vpop.trf.xlu0
        %v2101 = vpop.trf.xlu0
        %v2102 = vpop.trf.xlu0
        %v2103 = vpop.trf.xlu0
        %v2104 = vpop.trf.xlu0
        %v2105 = vpop.trf.xlu0
        %v2106 = vpop.trf.xlu0
        %v2107 = vpop.trf.xlu0
        %v2108 = vpop.trf.xlu0
        %v2109 = vpop.trf.xlu0
        %v2110 = vpop.trf.xlu0
        %v2111 = vpop.trf.xlu0
        %v2112 = vpop.trf.xlu0
        %v2113 = vpop.trf.xlu0
        %v2114 = vpop.trf.xlu0
        %v2115 = vpack.c.bf16 %v2099, %v2099
        %2116 = vrot.lane.b32.xlu0 %v1668, 104
        %v2117 = vpop.permute.xlu0 %2116
        %v2119 = vsel %vm859, %v2117, 0
        %v2122 = vsel %vm863, %v2115, 0
        %2124 = vmatprep.subr.bf16.mxu0 0
        %2125 = vmatpush1.bf16.msra.mxu0 %v2122
        %2126 = vmatprep.subr.bf16.mxu0 0
        %2127 = vmatpush1.bf16.msra.mxu0 0
        %2128 = vmatprep.subr.bf16.mxu0 0
        %2129 = vmatpush1.bf16.msra.mxu0 0
        %2130 = vmatprep.subr.bf16.mxu0 0
        %2131 = vmatpush1.bf16.msra.mxu0 0
        %2132 = vmatprep.subr.bf16.mxu0 0
        %2133 = vmatpush1.bf16.msra.mxu0 0
        %2134 = vmatprep.subr.bf16.mxu0 0
        %2135 = vmatpush1.bf16.msra.mxu0 0
        %2136 = vmatprep.subr.bf16.mxu0 0
        %2137 = vmatpush1.bf16.msra.mxu0 0
        %2138 = vmatprep.subr.bf16.mxu0 0
        %2139 = vmatpush1.bf16.msra.mxu0 0
        %2140 = vmatprep.subr.bf16.mxu0 0
        %2141 = vmatpush1.bf16.msra.mxu0 0
        %2142 = vmatprep.subr.bf16.mxu0 0
        %2143 = vmatpush1.bf16.msra.mxu0 0
        %2144 = vmatprep.subr.bf16.mxu0 0
        %2145 = vmatpush1.bf16.msra.mxu0 0
        %2146 = vmatprep.subr.bf16.mxu0 0
        %2147 = vmatpush1.bf16.msra.mxu0 0
        %2148 = vmatprep.subr.bf16.mxu0 0
        %2149 = vmatpush1.bf16.msra.mxu0 0
        %2150 = vmatprep.subr.bf16.mxu0 0
        %2151 = vmatpush1.bf16.msra.mxu0 0
        %2152 = vmatprep.subr.bf16.mxu0 0
        %2153 = vmatpush1.bf16.msra.mxu0 0
        %2154 = vmatprep.subr.bf16.mxu0 0
        %2155 = vmatpush1.bf16.msra.mxu0 0
        %2156 = vmatprep.mubr.bf16.mxu0 0
        %2157 = vmatmul.mubr.bf16.gmra.mrb[0].mxu0 %v2119
        %v2158 = vpop.f32.mrb[0].mxu0
        %v2159 = vadd.f32 0.0, %v2158
        %v2160 = vpop.f32.mrb[0].mxu0
        %v2161 = vpop.f32.mrb[0].mxu0
        %v2162 = vpop.f32.mrb[0].mxu0
        %2163 = vdwg.mxu0
        %v2164 = vmul.f32 %v2159, 0.35355338
        %v2165 = vadd.f32 %v2164, %v1721
        %v2166 = vsel %vm859, %v2165, -inf
        %2167 = vmax.xlane.f32.xlu0 %v2166
        %v2168 = vpop.xlane.xlu0 %2167
        %v2169 = vsub.f32 %v2165, %v2168
        %v2170 = vmul.f32 %v2169, 1.442695
        %v2171 = vpow.pop %v2170
        %v2172 = vsel %vm859, %v2171, 0.0
        %2173 = vadd.xlane.f32.xlu0 %v2172
        %v2174 = vpop.xlane.xlu0 %2173
        %v2175 = vrcp.pop %v2174
        %v2176 = vmul.f32 %v2171, %v2175
        %v2177 = vpack.c.bf16 %v2176, %v2176
        %2178 = vrot.lane.b32.xlu0 %v1736, 72
        %v2179 = vpop.permute.xlu0 %2178
        %v2181 = vsel %vm859, %v2177, 0
        %v2184 = vsel %vm863, %v2179, 0
        %2186 = vmatprep.subr.bf16.mxu0 0
        %2187 = vmatpush1.bf16.msra.mxu0 %v2184
        %2188 = vmatprep.subr.bf16.mxu0 0
        %2189 = vmatpush1.bf16.msra.mxu0 0
        %2190 = vmatprep.subr.bf16.mxu0 0
        %2191 = vmatpush1.bf16.msra.mxu0 0
        %2192 = vmatprep.subr.bf16.mxu0 0
        %2193 = vmatpush1.bf16.msra.mxu0 0
        %2194 = vmatprep.subr.bf16.mxu0 0
        %2195 = vmatpush1.bf16.msra.mxu0 0
        %2196 = vmatprep.subr.bf16.mxu0 0
        %2197 = vmatpush1.bf16.msra.mxu0 0
        %2198 = vmatprep.subr.bf16.mxu0 0
        %2199 = vmatpush1.bf16.msra.mxu0 0
        %2200 = vmatprep.subr.bf16.mxu0 0
        %2201 = vmatpush1.bf16.msra.mxu0 0
        %2202 = vmatprep.subr.bf16.mxu0 0
        %2203 = vmatpush1.bf16.msra.mxu0 0
        %2204 = vmatprep.subr.bf16.mxu0 0
        %2205 = vmatpush1.bf16.msra.mxu0 0
        %2206 = vmatprep.subr.bf16.mxu0 0
        %2207 = vmatpush1.bf16.msra.mxu0 0
        %2208 = vmatprep.subr.bf16.mxu0 0
        %2209 = vmatpush1.bf16.msra.mxu0 0
        %2210 = vmatprep.subr.bf16.mxu0 0
        %2211 = vmatpush1.bf16.msra.mxu0 0
        %2212 = vmatprep.subr.bf16.mxu0 0
        %2213 = vmatpush1.bf16.msra.mxu0 0
        %2214 = vmatprep.subr.bf16.mxu0 0
        %2215 = vmatpush1.bf16.msra.mxu0 0
        %2216 = vmatprep.subr.bf16.mxu0 0
        %2217 = vmatpush1.bf16.msra.mxu0 0
        %2218 = vmatprep.mubr.bf16.mxu0 0
        %2219 = vmatmul.mubr.bf16.gmra.mrb[0].mxu0 %v2181
        %v2220 = vpop.f32.mrb[0].mxu0
        %v2221 = vadd.f32 0.0, %v2220
        %v2222 = vpop.f32.mrb[0].mxu0
        %v2223 = vpop.f32.mrb[0].mxu0
        %v2224 = vpop.f32.mrb[0].mxu0
        %2225 = vdwg.mxu0
        %2227 = vrot.lane.b32.xlu0 %v1929, 8
        %v2228 = vpop.permute.xlu0 %2227
        %2231 = vrot.lane.b32.xlu0 %v2075, 16
        %v2232 = vpop.permute.xlu0 %2231
        %2235 = vrot.lane.b32.xlu0 %v2221, 24
        %v2236 = vpop.permute.xlu0 %2235
        %v2238 = vsel %vm859, %v1781, %v2228
        %v2239 = vsel %vm1421, %v2238, %v2232
        %v2240 = vsel %vm1423, %v2239, %v2236
        %v2241 = vld [vmem:[%s8] sm:$0xf]
        %v2242 = vld [vmem:[%s8 + $0x4] sm:$0xf]
        %v2243 = vld [vmem:[%s8 + $0x8] sm:$0xf]
        %v2244 = vld [vmem:[%s8 + $0xc] sm:$0xf]
        %v2245 = vpack.c.bf16 %v2240, %v2240
        %v2250 = vunpack.c.l.b16 %v2241
        %v2251 = vunpack.c.l.b16 %v2242
        %v2252 = vunpack.c.l.b16 %v2243
        %v2253 = vunpack.c.l.b16 %v2244
        %v2254 = vpack.c.b16 %v2251, %v2250
        %v2255 = vpack.c.b16 %v2253, %v2252
        %v2259 = vsel %vm777, %v2245, 0
        %2261 = vmatprep.subr.bf16.mxu0 0
        %2262 = vmatpush1.bf16.msra.mxu0 %v2254
        %2263 = vmatprep.subr.bf16.mxu0 0
        %2264 = vmatpush1.bf16.msra.mxu0 %v2255
        %2265 = vmatprep.subr.bf16.mxu0 0
        %2266 = vmatpush1.bf16.msra.mxu0 0
        %2267 = vmatprep.subr.bf16.mxu0 0
        %2268 = vmatpush1.bf16.msra.mxu0 0
        %2269 = vmatprep.subr.bf16.mxu0 0
        %2270 = vmatpush1.bf16.msra.mxu0 0
        %2271 = vmatprep.subr.bf16.mxu0 0
        %2272 = vmatpush1.bf16.msra.mxu0 0
        %2273 = vmatprep.subr.bf16.mxu0 0
        %2274 = vmatpush1.bf16.msra.mxu0 0
        %2275 = vmatprep.subr.bf16.mxu0 0
        %2276 = vmatpush1.bf16.msra.mxu0 0
        %2277 = vmatprep.subr.bf16.mxu0 0
        %2278 = vmatpush1.bf16.msra.mxu0 0
        %2279 = vmatprep.subr.bf16.mxu0 0
        %2280 = vmatpush1.bf16.msra.mxu0 0
        %2281 = vmatprep.subr.bf16.mxu0 0
        %2282 = vmatpush1.bf16.msra.mxu0 0
        %2283 = vmatprep.subr.bf16.mxu0 0
        %2284 = vmatpush1.bf16.msra.mxu0 0
        %2285 = vmatprep.subr.bf16.mxu0 0
        %2286 = vmatpush1.bf16.msra.mxu0 0
        %2287 = vmatprep.subr.bf16.mxu0 0
        %2288 = vmatpush1.bf16.msra.mxu0 0
        %2289 = vmatprep.subr.bf16.mxu0 0
        %2290 = vmatpush1.bf16.msra.mxu0 0
        %2291 = vmatprep.subr.bf16.mxu0 0
        %2292 = vmatpush1.bf16.msra.mxu0 0
        %2293 = vmatprep.mubr.bf16.mxu0 0
        %2294 = vmatmul.mubr.bf16.gmra.mrb[0].mxu0 %v2259
        %v2295 = vpop.f32.mrb[0].mxu0
        %v2296 = vadd.f32 0.0, %v2295
        %v2297 = vpop.f32.mrb[0].mxu0
        %v2298 = vpop.f32.mrb[0].mxu0
        %v2299 = vpop.f32.mrb[0].mxu0
        %2300 = vdwg.mxu0
        %v2301 = vadd.f32 %v1515, %v2296
        %v2302 = vsel %vm777, %v2301, 0.0
        %2303 = vadd.xlane.f32.xlu0 %v2302
        %v2304 = vpop.xlane.xlu0 %2303
        %v2305 = vmul.f32 %v2304, %v1489
        %v2306 = vsub.f32 %v2301, %v2305
        %v2307 = vmul.f32 %v2306, %v2306
        %v2308 = vsel %vm777, %v2307, 0.0
        %2309 = vadd.xlane.f32.xlu0 %v2308
        %v2310 = vpop.xlane.xlu0 %2309
        %v2311 = vmul.f32 %v2310, %v1489
        %v2312 = vadd.f32 %v2311, 1e-05
        %v2313 = vrsqrt.pop %v2312
        %v2314 = vmul.f32 %v2306, %v2313
        %v2315 = vld [vmem:[#allocation10] sm:$0x1]
        %v2317 = vlaneseq
        %v2318 = vshrl.u32 %v2317, 7
        %v2319 = vsub.s32 0, %v2318
        %v2320 = vrot.slane %v2315, %v2319
        %v2322 = vmul.f32 %v2314, %v2320
        %v2323 = vld [vmem:[#allocation12] sm:$0x1]
        %v2325 = vlaneseq
        %v2326 = vshrl.u32 %v2325, 7
        %v2327 = vsub.s32 0, %v2326
        %v2328 = vrot.slane %v2323, %v2327
        %v2330 = vadd.f32 %v2322, %v2328
        %v2331 = vld [vmem:[%s9] sm:$0xf]
        %v2332 = vld [vmem:[%s9 + $0x4] sm:$0xf]
        %v2333 = vld [vmem:[%s9 + $0x8] sm:$0xf]
        %v2334 = vld [vmem:[%s9 + $0xc] sm:$0xf]
        %v2335 = vpack.c.bf16 %v2330, %v2330
        %v2336 = vld [vmem:[#allocation4] sm:$0x1]
        %v2338 = vlaneseq
        %v2339 = vshrl.u32 %v2338, 7
        %v2340 = vsub.s32 0, %v2339
        %v2341 = vrot.slane %v2336, %v2340
        %v2347 = vunpack.c.l.b16 %v2331
        %v2348 = vunpack.c.l.b16 %v2332
        %v2349 = vunpack.c.l.b16 %v2333
        %v2350 = vunpack.c.l.b16 %v2334
        %v2351 = vpack.c.b16 %v2348, %v2347
        %v2352 = vpack.c.b16 %v2350, %v2349
        %v2356 = vsel %vm777, %v2335, 0
        %2358 = vmatprep.subr.bf16.mxu0 0
        %2359 = vmatpush1.bf16.msra.mxu0 %v2351
        %2360 = vmatprep.subr.bf16.mxu0 0
        %2361 = vmatpush1.bf16.msra.mxu0 %v2352
        %2362 = vmatprep.subr.bf16.mxu0 0
        %2363 = vmatpush1.bf16.msra.mxu0 0
        %2364 = vmatprep.subr.bf16.mxu0 0
        %2365 = vmatpush1.bf16.msra.mxu0 0
        %2366 = vmatprep.subr.bf16.mxu0 0
        %2367 = vmatpush1.bf16.msra.mxu0 0
        %2368 = vmatprep.subr.bf16.mxu0 0
        %2369 = vmatpush1.bf16.msra.mxu0 0
        %2370 = vmatprep.subr.bf16.mxu0 0
        %2371 = vmatpush1.bf16.msra.mxu0 0
        %2372 = vmatprep.subr.bf16.mxu0 0
        %2373 = vmatpush1.bf16.msra.mxu0 0
        %2374 = vmatprep.subr.bf16.mxu0 0
        %2375 = vmatpush1.bf16.msra.mxu0 0
        %2376 = vmatprep.subr.bf16.mxu0 0
        %2377 = vmatpush1.bf16.msra.mxu0 0
        %2378 = vmatprep.subr.bf16.mxu0 0
        %2379 = vmatpush1.bf16.msra.mxu0 0
        %2380 = vmatprep.subr.bf16.mxu0 0
        %2381 = vmatpush1.bf16.msra.mxu0 0
        %2382 = vmatprep.subr.bf16.mxu0 0
        %2383 = vmatpush1.bf16.msra.mxu0 0
        %2384 = vmatprep.subr.bf16.mxu0 0
        %2385 = vmatpush1.bf16.msra.mxu0 0
        %2386 = vmatprep.subr.bf16.mxu0 0
        %2387 = vmatpush1.bf16.msra.mxu0 0
        %2388 = vmatprep.subr.bf16.mxu0 0
        %2389 = vmatpush1.bf16.msra.mxu0 0
        %2390 = vmatprep.mubr.bf16.mxu0 0
        %2391 = vmatmul.mubr.bf16.gmra.mrb[0].mxu0 %v2356
        %v2392 = vpop.f32.mrb[0].mxu0
        %v2393 = vadd.f32 %v2341, %v2392
        %v2394 = vpop.f32.mrb[0].mxu0
        %v2395 = vpop.f32.mrb[0].mxu0
        %v2396 = vpop.f32.mrb[0].mxu0
        %2397 = vdwg.mxu0
        %v2398 = vmax.f32 %v2393, 0.0
        %v2399 = vld [vmem:[%s11] sm:$0xf]
        %v2400 = vld [vmem:[%s11 + $0x4] sm:$0xf]
        %v2401 = vld [vmem:[%s11 + $0x8] sm:$0xf]
        %v2402 = vld [vmem:[%s11 + $0xc] sm:$0xf]
        %v2403 = vld [vmem:[%s11 + $0x10] sm:$0xf]
        %v2404 = vld [vmem:[%s11 + $0x14] sm:$0xf]
        %v2405 = vld [vmem:[%s11 + $0x18] sm:$0xf]
        %v2406 = vld [vmem:[%s11 + $0x1c] sm:$0xf]
        %v2407 = vpack.c.bf16 %v2398, %v2398
        %v2408 = vld [vmem:[#allocation6] sm:$0x1]
        %v2410 = vlaneseq
        %v2411 = vshrl.u32 %v2410, 7
        %v2412 = vsub.s32 0, %v2411
        %v2413 = vrot.slane %v2408, %v2412
        %v2423 = vunpack.c.l.b16 %v2399
        %v2424 = vunpack.c.l.b16 %v2400
        %v2425 = vunpack.c.l.b16 %v2401
        %v2426 = vunpack.c.l.b16 %v2402
        %v2427 = vunpack.c.l.b16 %v2403
        %v2428 = vunpack.c.l.b16 %v2404
        %v2429 = vunpack.c.l.b16 %v2405
        %v2430 = vunpack.c.l.b16 %v2406
        %v2431 = vpack.c.b16 %v2424, %v2423
        %v2432 = vpack.c.b16 %v2426, %v2425
        %v2433 = vpack.c.b16 %v2428, %v2427
        %v2434 = vpack.c.b16 %v2430, %v2429
        %vm2439 = vcmask 523264
        %v2441 = vsel %vm2439, %v2407, 0
        %2443 = vmatprep.subr.bf16.mxu0 0
        %2444 = vmatpush1.bf16.msra.mxu0 %v2431
        %2445 = vmatprep.subr.bf16.mxu0 0
        %2446 = vmatpush1.bf16.msra.mxu0 %v2432
        %2447 = vmatprep.subr.bf16.mxu0 0
        %2448 = vmatpush1.bf16.msra.mxu0 %v2433
        %2449 = vmatprep.subr.bf16.mxu0 0
        %2450 = vmatpush1.bf16.msra.mxu0 %v2434
        %2451 = vmatprep.subr.bf16.mxu0 0
        %2452 = vmatpush1.bf16.msra.mxu0 0
        %2453 = vmatprep.subr.bf16.mxu0 0
        %2454 = vmatpush1.bf16.msra.mxu0 0
        %2455 = vmatprep.subr.bf16.mxu0 0
        %2456 = vmatpush1.bf16.msra.mxu0 0
        %2457 = vmatprep.subr.bf16.mxu0 0
        %2458 = vmatpush1.bf16.msra.mxu0 0
        %2459 = vmatprep.subr.bf16.mxu0 0
        %2460 = vmatpush1.bf16.msra.mxu0 0
        %2461 = vmatprep.subr.bf16.mxu0 0
        %2462 = vmatpush1.bf16.msra.mxu0 0
        %2463 = vmatprep.subr.bf16.mxu0 0
        %2464 = vmatpush1.bf16.msra.mxu0 0
        %2465 = vmatprep.subr.bf16.mxu0 0
        %2466 = vmatpush1.bf16.msra.mxu0 0
        %2467 = vmatprep.subr.bf16.mxu0 0
        %2468 = vmatpush1.bf16.msra.mxu0 0
        %2469 = vmatprep.subr.bf16.mxu0 0
        %2470 = vmatpush1.bf16.msra.mxu0 0
        %2471 = vmatprep.subr.bf16.mxu0 0
        %2472 = vmatpush1.bf16.msra.mxu0 0
        %2473 = vmatprep.subr.bf16.mxu0 0
        %2474 = vmatpush1.bf16.msra.mxu0 0
        %2475 = vmatprep.mubr.bf16.mxu0 0
        %2476 = vmatmul.mubr.bf16.gmra.mrb[0].mxu0 %v2441
        %v2477 = vpop.f32.mrb[0].mxu0
        %v2478 = vadd.f32 %v2413, %v2477
        %v2479 = vpop.f32.mrb[0].mxu0
        %v2480 = vpop.f32.mrb[0].mxu0
        %v2481 = vpop.f32.mrb[0].mxu0
        %2482 = vdwg.mxu0
        %v2483 = vadd.f32 %v2330, %v2478
        %v2484 = vsel %vm777, %v2483, 0.0
        %2485 = vadd.xlane.f32.xlu0 %v2484
        %v2486 = vpop.xlane.xlu0 %2485
        %v2487 = vmul.f32 %v2486, %v1489
        %v2488 = vsub.f32 %v2483, %v2487
        %v2489 = vmul.f32 %v2488, %v2488
        %v2490 = vsel %vm777, %v2489, 0.0
        %2491 = vadd.xlane.f32.xlu0 %v2490
        %v2492 = vpop.xlane.xlu0 %2491
        %v2493 = vmul.f32 %v2492, %v1489
        %v2494 = vadd.f32 %v2493, 1e-05
        %v2495 = vrsqrt.pop %v2494
        %v2496 = vmul.f32 %v2488, %v2495
        %v2497 = vld [vmem:[%s17] sm:$0x1]
        %v2499 = vlaneseq
        %v2500 = vshrl.u32 %v2499, 7
        %v2501 = vsub.s32 0, %v2500
        %v2502 = vrot.slane %v2497, %v2501
        %v2504 = vmul.f32 %v2496, %v2502
        %v2505 = vld [vmem:[%s18] sm:$0x1]
        %v2507 = vlaneseq
        %v2508 = vshrl.u32 %v2507, 7
        %v2509 = vsub.s32 0, %v2508
        %v2510 = vrot.slane %v2505, %v2509
        %v2512 = vadd.f32 %v2504, %v2510
        %2513 = vst.msk [vmem:[%s737] sm:$0xff] %vm777, %v2512
        %p2514 = scmp.lt.s32.totalorder %s36, 1
        %s2515 = scalar_select %p2514, %s36, 1
        %s2516 = smul.addr %s2515, 8
        %s2517 = scalar_lea.vmem %s19, %s2516
        // Predicated region
        $region125: #{transformer_decoder.2} parent=95 // pred_check
          %p2518 = pneg %p473
        $region126: #{transformer_decoder.2} parent=95 // pred_check_branch
          %2520 = sbr.rel (%p2518) target = $region128
        $region127: #{transformer_decoder.2} parent=95 // pred_region
          _
        $region128: #{transformer_decoder.2} parent=95 // pred_fallthru
          _
      $region96: #{transformer_decoder.2} parent=5 // pred_fallthru
        _
      %p2521 = scmp.le.s32.totalorder 2, %s31
      // Predicated region
      $region129: #{transformer_decoder.2} parent=5 // pred_check
        %p2522 = pneg %p2521
      $region130: #{transformer_decoder.2} parent=5 // pred_check_branch
        %2524 = sbr.rel (%p2522) target = $region132
      $region131: #{transformer_decoder.2} parent=5 // pred_region
        %s2525 = ssub.s32 %s31, 2
        // Predicated region
        $region133: #{transformer_decoder.2} parent=131 // pred_check
          %p2526 = pneg %p479
        $region134: #{transformer_decoder.2} parent=131 // pred_check_branch
          %2528 = sbr.rel (%p2526) target = $region136
        $region135: #{transformer_decoder.2} parent=131 // pred_region
          %p2529 = scmp.lt.s32.totalorder %s37, 1
          %s2530 = scalar_select %p2529, %s37, 1
          %s2531 = smul.addr %s2530, 8
          %s2532 = scalar_lea.vmem %s19, %s2531
        $region136: #{transformer_decoder.2} parent=131 // pred_fallthru
          _
      $region132: #{transformer_decoder.2} parent=5 // pred_fallthru
        _
    $region6: #{transformer_decoder.2} parent=1 // loop_footer
      %s35 = sadd.s32 1, %s31
    $region7: #{transformer_decoder.2} parent=1 // loop_footer_branch
      %30 = sbr.rel target = $region3
    $region8: #{transformer_decoder.2} parent=1 // loop_exit
      _
    %2533 = vsyncpa [#allocation3], 1
    %s2534 = scalar_lea.sflag [#allocation3], 1
    %2535 = vsyncpa %s2534, 1
    %2536 = vsyncpa [#allocation5], 1
    %2537 = vsyncpa [#allocation8], 1
    %2538 = vsyncpa [#allocation11], 1

</llo_original>
